<compile_context>
chip_gen: v7x
topology: tpu7x:2x2x1
jax: 0.10.0
libtpu: 0.0.40
codegen_flags: <defaults>
</compile_context>

<pallas_src>
import functools

import jax
import jax.numpy as jnp
from jax.experimental import pallas as pl
from jax.experimental.pallas import tpu as pltpu

LANE = 128


def _round_up(x, m):
    return (x + m - 1) // m * m


def attn_decoder_kernel(tok_ref,                               # scalar prefetch (SMEM)
                        emb_ref, h0_ref, enc_ref,              # (V,H), (1,H), (L_pad,H)
                        wattn_e_ref, wattn_h_ref, battn_ref,   # (H,L_pad) x2, (1,L_pad)
                        wcomb_e_ref, wcomb_a_ref, bcomb_ref,   # (H,H) x2, (1,H)
                        wih_ref, bih_ref,                      # (H,3H), (1,3H)  r|z|n
                        whh_ref, bhh_ref,                      # (H,3H), (1,3H)  r|z|n
                        wout_ref, bout_ref,                    # (H,V_pad), (1,V_pad)
                        logp_ref, newh_ref, attnw_ref,         # (Tb,V_pad), (1,H), (Tb,L_pad)
                        *, steps_per_chunk, seq_len, hidden_size):
    H = hidden_size
    c = pl.program_id(0)

    # hidden state is carried in the constant-index newh output block
    @pl.when(c == 0)
    def _():
        newh_ref[...] = h0_ref[...]

    wd = wout_ref.dtype  # weight dtype (f32 or bf16); only matmul operands use it

    for i in range(steps_per_chunk):                 # static unroll (Tb small)
        t = c * steps_per_chunk + i
        tok = tok_ref[t]

        # embedding(input) -> (1, H); whole table is VMEM-resident, row select in-kernel
        embedded = emb_ref[pl.ds(tok, 1), :].astype(jnp.float32)
        # dropout(p=0.1) is identity in eval mode
        # TODO(synk): training-mode dropout not implemented in-kernel
        h = newh_ref[...]                            # (1, H)

        # attn_weights = softmax(attn(cat(embedded, hidden)))  -- split matmuls, no concat
        attn_logits = (
            jnp.dot(embedded.astype(wd), wattn_e_ref[...], preferred_element_type=jnp.float32)
            + jnp.dot(h.astype(wd), wattn_h_ref[...], preferred_element_type=jnp.float32)
            + battn_ref[...])                        # (1, L_pad); pad lanes have bias -1e30
        m = jnp.max(attn_logits, axis=1, keepdims=True)
        e = jnp.exp(attn_logits - m)                 # pad lanes underflow to exactly 0
        attn_w = e * pl.reciprocal(jnp.sum(e, axis=1, keepdims=True), approx=True)
        attnw_ref[pl.ds(i, 1), :] = attn_w

        # attn_applied = attn_w @ encoder_outputs (padded rows of enc are zero)
        attn_applied = jnp.dot(attn_w, enc_ref[...], preferred_element_type=jnp.float32)

        # relu(attn_combine(cat(embedded, attn_applied)))  -- split matmuls
        x = jnp.maximum(
            jnp.dot(embedded.astype(wd), wcomb_e_ref[...], preferred_element_type=jnp.float32)
            + jnp.dot(attn_applied.astype(wd), wcomb_a_ref[...],
                      preferred_element_type=jnp.float32)
            + bcomb_ref[...],
            0.0)                                     # (1, H)

        # single-step GRU cell, PyTorch gate order r | z | n
        gi = jnp.dot(x.astype(wd), wih_ref[...], preferred_element_type=jnp.float32) + bih_ref[...]
        gh = jnp.dot(h.astype(wd), whh_ref[...], preferred_element_type=jnp.float32) + bhh_ref[...]
        r = jax.nn.sigmoid(gi[:, 0:H] + gh[:, 0:H])
        z = jax.nn.sigmoid(gi[:, H:2 * H] + gh[:, H:2 * H])
        # b_hn (inside gh) must stay under r*(...) -- GRU parity with PyTorch
        n = jnp.tanh(gi[:, 2 * H:3 * H] + r * gh[:, 2 * H:3 * H])
        h_new = (1.0 - z) * n + z * h

        # only real (t < seq_len) steps advance the carried hidden state
        newh_ref[...] = jnp.where(t < seq_len, h_new, h)

        # log_softmax(out(h_new)); padded vocab lanes carry bias -1e30 -> exp underflows to 0
        logits = (jnp.dot(h_new.astype(wd), wout_ref[...], preferred_element_type=jnp.float32)
                  + bout_ref[...])
        mo = jnp.max(logits, axis=1, keepdims=True)
        sh = logits - mo
        lse = jnp.log(jnp.sum(jnp.exp(sh), axis=1, keepdims=True))
        logp_ref[pl.ds(i, 1), :] = sh - lse


def pack_params(params, max_length, weight_dtype=jnp.float32):
    """One-time re-layout of PyTorch-layout parameters (hoisted out of the decode loop).

    Weight matrices are transposed/split/lane-padded (and optionally cast to bf16);
    biases stay f32; pad lanes of attention / output biases are -1e30 so softmax /
    log-softmax ignore them."""
    f32 = jnp.float32
    emb = jnp.asarray(params['emb'], f32)
    V, H = emb.shape
    L = int(max_length)
    L_pad = _round_up(L, LANE)
    V_pad = _round_up(V, LANE)
    NEG = -1e30

    W_attn_t = jnp.asarray(params['W_attn'], f32).T   # (2H, L)
    W_comb_t = jnp.asarray(params['W_comb'], f32).T   # (2H, H)

    def pad_lanes(x, n, fill=0.0):
        out = jnp.full((x.shape[0], n), fill, f32)
        return out.at[:, :x.shape[1]].set(x)

    return {
        'dims': (int(H), int(V), L, int(V_pad), int(L_pad)),
        'emb':      emb.astype(weight_dtype),                                      # (V, H)
        'W_attn_e': pad_lanes(W_attn_t[:H], L_pad).astype(weight_dtype),           # (H, L_pad)
        'W_attn_h': pad_lanes(W_attn_t[H:], L_pad).astype(weight_dtype),           # (H, L_pad)
        'b_attn':   pad_lanes(jnp.asarray(params['b_attn'], f32).reshape(1, L), L_pad, NEG),
        'W_comb_e': W_comb_t[:H].astype(weight_dtype),                             # (H, H)
        'W_comb_a': W_comb_t[H:].astype(weight_dtype),                             # (H, H)
        'b_comb':   jnp.asarray(params['b_comb'], f32).reshape(1, H),
        'W_ih':     jnp.asarray(params['W_ih'], f32).T.astype(weight_dtype),       # (H, 3H) r|z|n
        'b_ih':     jnp.asarray(params['b_ih'], f32).reshape(1, 3 * H),
        'W_hh':     jnp.asarray(params['W_hh'], f32).T.astype(weight_dtype),       # (H, 3H) r|z|n
        'b_hh':     jnp.asarray(params['b_hh'], f32).reshape(1, 3 * H),
        'W_out':    pad_lanes(jnp.asarray(params['W_out'], f32).T, V_pad).astype(weight_dtype),
        'b_out':    pad_lanes(jnp.asarray(params['b_out'], f32).reshape(1, V), V_pad, NEG),
    }


def attn_decoder_decode(tokens, hidden, encoder_outputs, packed, steps_per_chunk=8):
    """Run T decoder steps (teacher forcing) in one pallas_call.

    Returns (log_probs (T,V), final_hidden (1,H), attn_weights (T,L))."""
    H, V, L, V_pad, L_pad = packed['dims']
    # NOTE: clip silently remaps out-of-range token ids (PyTorch embedding would raise).
    tok = jnp.clip(jnp.asarray(tokens, jnp.int32).reshape(-1), 0, V - 1)
    T = int(tok.shape[0])
    Tb = int(steps_per_chunk)
    num_chunks = max(1, (T + Tb - 1) // Tb)
    T_pad = num_chunks * Tb
    tok_pad = jnp.zeros((T_pad,), jnp.int32).at[:T].set(tok)

    h0 = jnp.asarray(hidden, jnp.float32).reshape(1, H)
    enc = jnp.zeros((L_pad, H), jnp.float32).at[:L, :].set(
        jnp.asarray(encoder_outputs, jnp.float32).reshape(L, H))

    const = lambda c, tok_ref: (0, 0)
    row = lambda c, tok_ref: (c, 0)

    in_specs = [
        pl.BlockSpec((V, H), const),                 # embedding table (VMEM-resident)
        pl.BlockSpec((1, H), const),                 # initial hidden
        pl.BlockSpec((L_pad, H), const),             # encoder outputs (rows >= L are zero)
        pl.BlockSpec((H, L_pad), const), pl.BlockSpec((H, L_pad), const),
        pl.BlockSpec((1, L_pad), const),
        pl.BlockSpec((H, H), const), pl.BlockSpec((H, H), const),
        pl.BlockSpec((1, H), const),
        pl.BlockSpec((H, 3 * H), const), pl.BlockSpec((1, 3 * H), const),
        pl.BlockSpec((H, 3 * H), const), pl.BlockSpec((1, 3 * H), const),
        pl.BlockSpec((H, V_pad), const), pl.BlockSpec((1, V_pad), const),
    ]
    out_specs = (
        pl.BlockSpec((Tb, V_pad), row),              # log-probs (lane/sublane dense)
        pl.BlockSpec((1, H), const),                 # carried hidden -> final hidden
        pl.BlockSpec((Tb, L_pad), row),              # attention weights
    )
    out_shape = (
        jax.ShapeDtypeStruct((T_pad, V_pad), jnp.float32),
        jax.ShapeDtypeStruct((1, H), jnp.float32),
        jax.ShapeDtypeStruct((T_pad, L_pad), jnp.float32),
    )
    grid_spec = pltpu.PrefetchScalarGridSpec(
        num_scalar_prefetch=1,
        grid=(num_chunks,),
        in_specs=in_specs,
        out_specs=out_specs,
    )
    kernel = functools.partial(attn_decoder_kernel,
                               steps_per_chunk=Tb, seq_len=T, hidden_size=H)
    logp_pad, newh, attnw_pad = pl.pallas_call(
        kernel,
        out_shape=out_shape,
        grid_spec=grid_spec,
        compiler_params=pltpu.CompilerParams(
            dimension_semantics=("arbitrary",),
            vmem_limit_bytes=32 * 1024 * 1024),
    )(tok_pad,
      packed['emb'], h0, enc,
      packed['W_attn_e'], packed['W_attn_h'], packed['b_attn'],
      packed['W_comb_e'], packed['W_comb_a'], packed['b_comb'],
      packed['W_ih'], packed['b_ih'],
      packed['W_hh'], packed['b_hh'],
      packed['W_out'], packed['b_out'])
    # slice padded lanes / padded timesteps back off outside the pallas_call
    return logp_pad[:T, :V], newh, attnw_pad[:T, :L]


def attn_decoder_forward(token, hidden, encoder_outputs, packed):
    """PyTorch-equivalent single step: returns (log_probs (1,V), hidden (1,1,H), attn (1,L))."""
    tokens = jnp.asarray(token, jnp.int32).reshape(1)
    logp, newh, attnw = attn_decoder_decode(tokens, hidden, encoder_outputs, packed)
    H = newh.shape[-1]
    return logp, newh.reshape(1, 1, H), attnw


def _ref_step(tok, h, enc, p):
    """Pure-JAX reference in original PyTorch layout (for correctness check)."""
    H = h.shape[-1]
    emb = p['emb'][tok].reshape(1, H)
    cat1 = jnp.concatenate([emb, h], axis=1)
    attn_w = jax.nn.softmax(cat1 @ p['W_attn'].T + p['b_attn'], axis=1)
    attn_applied = attn_w @ enc
    cat2 = jnp.concatenate([emb, attn_applied], axis=1)
    x = jax.nn.relu(cat2 @ p['W_comb'].T + p['b_comb'])
    gi = x @ p['W_ih'].T + p['b_ih']
    gh = h @ p['W_hh'].T + p['b_hh']
    r = jax.nn.sigmoid(gi[:, :H] + gh[:, :H])
    z = jax.nn.sigmoid(gi[:, H:2 * H] + gh[:, H:2 * H])
    n = jnp.tanh(gi[:, 2 * H:] + r * gh[:, 2 * H:])
    h_new = (1.0 - z) * n + z * h
    logp = jax.nn.log_softmax(h_new @ p['W_out'].T + p['b_out'], axis=1)
    return logp, h_new, attn_w


def _ref_decode(tokens, hidden, enc, params):
    h = hidden.reshape(1, -1)
    lps, aws = [], []
    for t in range(len(tokens)):
        lp, h, aw = _ref_step(int(tokens[t]), h, enc, params)
        lps.append(lp)
        aws.append(aw)
    return jnp.concatenate(lps, axis=0), h, jnp.concatenate(aws, axis=0)


if __name__ == "__main__":
    # small shapes consistent with the module: hidden_size=32, vocab=48, max_length=10
    H, V, L, T = 32, 48, 10, 6
    key = jax.random.PRNGKey(0)
    ks = jax.random.split(key, 14)
    s = 0.1
    params = {
        'emb':    jax.random.normal(ks[0], (V, H), jnp.float32) * s,
        'W_attn': jax.random.normal(ks[1], (L, 2 * H), jnp.float32) * s,
        'b_attn': jax.random.normal(ks[2], (L,), jnp.float32) * s,
        'W_comb': jax.random.normal(ks[3], (H, 2 * H), jnp.float32) * s,
        'b_comb': jax.random.normal(ks[4], (H,), jnp.float32) * s,
        'W_ih':   jax.random.normal(ks[5], (3 * H, H), jnp.float32) * s,
        'b_ih':   jax.random.normal(ks[6], (3 * H,), jnp.float32) * s,
        'W_hh':   jax.random.normal(ks[7], (3 * H, H), jnp.float32) * s,
        'b_hh':   jax.random.normal(ks[8], (3 * H,), jnp.float32) * s,
        'W_out':  jax.random.normal(ks[9], (V, H), jnp.float32) * s,
        'b_out':  jax.random.normal(ks[10], (V,), jnp.float32) * s,
    }
    encoder_outputs = jax.random.normal(ks[11], (L, H), jnp.float32)
    tokens = jax.random.randint(ks[12], (T,), 0, V, dtype=jnp.int32)
    tokens_long = jax.random.randint(ks[13], (20,), 0, V, dtype=jnp.int32)  # multi-chunk case
    hidden = jnp.zeros((1, 1, H), jnp.float32)                              # initHidden()

    packed = pack_params(params, max_length=L)                              # one-time re-layout

    # --- single-chunk decode (T=6) ---
    logp, final_h, attn_w = attn_decoder_decode(tokens, hidden, encoder_outputs, packed)
    jax.block_until_ready((logp, final_h, attn_w))
    assert logp.shape == (T, V) and final_h.shape == (1, H) and attn_w.shape == (T, L)

    ref_logp, ref_h, ref_attn = _ref_decode(tokens, hidden, encoder_outputs, params)
    assert float(jnp.max(jnp.abs(logp - ref_logp))) < 5e-3
    assert float(jnp.max(jnp.abs(final_h - ref_h))) < 5e-3
    assert float(jnp.max(jnp.abs(attn_w - ref_attn))) < 5e-3

    # --- multi-chunk decode (T=20 -> 3 grid steps, hidden carried across chunks) ---
    logp2, final_h2, attn_w2 = attn_decoder_decode(tokens_long, hidden, encoder_outputs, packed)
    jax.block_until_ready((logp2, final_h2, attn_w2))
    ref_logp2, ref_h2, ref_attn2 = _ref_decode(tokens_long, hidden, encoder_outputs, params)
    assert float(jnp.max(jnp.abs(logp2 - ref_logp2))) < 5e-3
    assert float(jnp.max(jnp.abs(final_h2 - ref_h2))) < 5e-3
    assert float(jnp.max(jnp.abs(attn_w2 - ref_attn2))) < 5e-3

    # --- single-step API matching the PyTorch forward signature ---
    out1, new_hidden1, attn1 = attn_decoder_forward(int(tokens[0]), hidden,
                                                    encoder_outputs, packed)
    jax.block_until_ready((out1, new_hidden1, attn1))
    assert out1.shape == (1, V) and new_hidden1.shape == (1, 1, H) and attn1.shape == (1, L)
    assert float(jnp.max(jnp.abs(out1 - ref_logp[0:1]))) < 5e-3

    # --- bf16 weight packing (halves weight DMA/VMEM; activations stay f32) ---
    packed_bf16 = pack_params(params, max_length=L, weight_dtype=jnp.bfloat16)
    logp_bf, h_bf, attn_bf = attn_decoder_decode(tokens, hidden, encoder_outputs, packed_bf16)
    jax.block_until_ready((logp_bf, h_bf, attn_bf))
    assert float(jnp.max(jnp.abs(logp_bf - ref_logp))) < 5e-2
    assert float(jnp.max(jnp.abs(attn_bf - ref_attn))) < 5e-2

    print("KERNEL_OK")
</pallas_src>

<mosaic_0001>
module attributes {stable_mosaic.version = 11 : i64} {
  func.func @attn_decoder_kernel(%arg0: i32, %arg1: memref<8xi32, #tpu.memory_space<smem>>, %arg2: memref<48x32xf32, #tpu.memory_space<vmem>>, %arg3: memref<1x32xf32, #tpu.memory_space<vmem>>, %arg4: memref<128x32xf32, #tpu.memory_space<vmem>>, %arg5: memref<32x128xf32, #tpu.memory_space<vmem>>, %arg6: memref<32x128xf32, #tpu.memory_space<vmem>>, %arg7: memref<1x128xf32, #tpu.memory_space<vmem>>, %arg8: memref<32x32xf32, #tpu.memory_space<vmem>>, %arg9: memref<32x32xf32, #tpu.memory_space<vmem>>, %arg10: memref<1x32xf32, #tpu.memory_space<vmem>>, %arg11: memref<32x96xf32, #tpu.memory_space<vmem>>, %arg12: memref<1x96xf32, #tpu.memory_space<vmem>>, %arg13: memref<32x96xf32, #tpu.memory_space<vmem>>, %arg14: memref<1x96xf32, #tpu.memory_space<vmem>>, %arg15: memref<32x128xf32, #tpu.memory_space<vmem>>, %arg16: memref<1x128xf32, #tpu.memory_space<vmem>>, %arg17: memref<8x128xf32, #tpu.memory_space<vmem>>, %arg18: memref<1x32xf32, #tpu.memory_space<vmem>>, %arg19: memref<8x128xf32, #tpu.memory_space<vmem>>) attributes {dimension_semantics = [#tpu.dimension_semantics<arbitrary>], iteration_bounds = array<i64: 1>, scalar_prefetch = 1 : i64, scratch_operands = 0 : i64, tpu.core_type = #tpu.core_type<tc>, window_params = [{pipeline_mode = #tpu.pipeline_mode<synchronous>, transform_indices = @transform_0, window_bounds = array<i64: 48, 32>}, {pipeline_mode = #tpu.pipeline_mode<synchronous>, transform_indices = @transform_1, window_bounds = array<i64: 1, 32>}, {pipeline_mode = #tpu.pipeline_mode<synchronous>, transform_indices = @transform_2, window_bounds = array<i64: 128, 32>}, {pipeline_mode = #tpu.pipeline_mode<synchronous>, transform_indices = @transform_3, window_bounds = array<i64: 32, 128>}, {pipeline_mode = #tpu.pipeline_mode<synchronous>, transform_indices = @transform_4, window_bounds = array<i64: 32, 128>}, {pipeline_mode = #tpu.pipeline_mode<synchronous>, transform_indices = @transform_5, window_bounds = array<i64: 1, 128>}, {pipeline_mode = #tpu.pipeline_mode<synchronous>, transform_indices = @transform_6, window_bounds = array<i64: 32, 32>}, {pipeline_mode = #tpu.pipeline_mode<synchronous>, transform_indices = @transform_7, window_bounds = array<i64: 32, 32>}, {pipeline_mode = #tpu.pipeline_mode<synchronous>, transform_indices = @transform_8, window_bounds = array<i64: 1, 32>}, {pipeline_mode = #tpu.pipeline_mode<synchronous>, transform_indices = @transform_9, window_bounds = array<i64: 32, 96>}, {pipeline_mode = #tpu.pipeline_mode<synchronous>, transform_indices = @transform_10, window_bounds = array<i64: 1, 96>}, {pipeline_mode = #tpu.pipeline_mode<synchronous>, transform_indices = @transform_11, window_bounds = array<i64: 32, 96>}, {pipeline_mode = #tpu.pipeline_mode<synchronous>, transform_indices = @transform_12, window_bounds = array<i64: 1, 96>}, {pipeline_mode = #tpu.pipeline_mode<synchronous>, transform_indices = @transform_13, window_bounds = array<i64: 32, 128>}, {pipeline_mode = #tpu.pipeline_mode<synchronous>, transform_indices = @transform_14, window_bounds = array<i64: 1, 128>}, {transform_indices = @transform_15, window_bounds = array<i64: 8, 128>}, {pipeline_mode = #tpu.pipeline_mode<synchronous>, transform_indices = @transform_16, window_bounds = array<i64: 1, 32>}, {transform_indices = @transform_17, window_bounds = array<i64: 8, 128>}]} {
    %c0_i32 = arith.constant 0 : i32
    %0 = arith.cmpi eq, %arg0, %c0_i32 : i32
    %1 = arith.extui %0 : i1 to i32
    %c0_i32_0 = arith.constant 0 : i32
    %2 = arith.cmpi ne, %1, %c0_i32_0 : i32
    scf.if %2 {
      %c0_416 = arith.constant 0 : index
      %c0_417 = arith.constant 0 : index
      %707 = vector.load %arg3[%c0_416, %c0_417] : memref<1x32xf32, #tpu.memory_space<vmem>>, vector<1x32xf32>
      %c0_418 = arith.constant 0 : index
      %c0_419 = arith.constant 0 : index
      %708 = vector.load %arg18[%c0_418, %c0_419] : memref<1x32xf32, #tpu.memory_space<vmem>>, vector<1x32xf32>
      tpu.vector_store %arg18[%c0_418, %c0_419], %707 {strides = array<i32>} : memref<1x32xf32, #tpu.memory_space<vmem>>, vector<1x32xf32>,
    } else {
    }
    %c8_i32 = arith.constant 8 : i32
    %3 = arith.muli %arg0, %c8_i32 : i32
    %c0_i32_1 = arith.constant 0 : i32
    %4 = arith.addi %3, %c0_i32_1 : i32
    %5 = arith.index_cast %4 : i32 to index
    %6 = memref.load %arg1[%5] : memref<8xi32, #tpu.memory_space<smem>>
    %7 = arith.index_cast %6 : i32 to index
    %c0 = arith.constant 0 : index
    %8 = vector.load %arg2[%7, %c0] : memref<48x32xf32, #tpu.memory_space<vmem>>, vector<1x32xf32>
    %c0_2 = arith.constant 0 : index
    %c0_3 = arith.constant 0 : index
    %9 = vector.load %arg18[%c0_2, %c0_3] : memref<1x32xf32, #tpu.memory_space<vmem>>, vector<1x32xf32>
    %c0_4 = arith.constant 0 : index
    %c0_5 = arith.constant 0 : index
    %10 = vector.load %arg5[%c0_4, %c0_5] : memref<32x128xf32, #tpu.memory_space<vmem>>, vector<32x128xf32>
    %cst = arith.constant dense<0.000000e+00> : vector<1x128xf32>
    %11 = tpu.matmul %8, %10, %cst {dimension_numbers = #tpu.dot_dimension_numbers<[1], [0], [0], [1], [0, 0, 1, 1], [], []>} : vector<1x32xf32>, vector<32x128xf32>, vector<1x128xf32> -> vector<1x128xf32>
    %c0_6 = arith.constant 0 : index
    %c0_7 = arith.constant 0 : index
    %12 = vector.load %arg6[%c0_6, %c0_7] : memref<32x128xf32, #tpu.memory_space<vmem>>, vector<32x128xf32>
    %cst_8 = arith.constant dense<0.000000e+00> : vector<1x128xf32>
    %13 = tpu.matmul %9, %12, %cst_8 {dimension_numbers = #tpu.dot_dimension_numbers<[1], [0], [0], [1], [0, 0, 1, 1], [], []>} : vector<1x32xf32>, vector<32x128xf32>, vector<1x128xf32> -> vector<1x128xf32>
    %14 = arith.addf %11, %13 : vector<1x128xf32>
    %c0_9 = arith.constant 0 : index
    %c0_10 = arith.constant 0 : index
    %15 = vector.load %arg7[%c0_9, %c0_10] : memref<1x128xf32, #tpu.memory_space<vmem>>, vector<1x128xf32>
    %16 = arith.addf %14, %15 : vector<1x128xf32>
    %cst_11 = arith.constant dense<0xFF800000> : vector<1xf32>
    %17 = vector.multi_reduction <maximumf>, %16, %cst_11 [1] : vector<1x128xf32> to vector<1xf32>
    %18 = vector.shape_cast %17 : vector<1xf32> to vector<1x1xf32>
    %19 = vector.broadcast %18 : vector<1x1xf32> to vector<1x128xf32>
    %20 = arith.subf %16, %19 : vector<1x128xf32>
    %21 = math.exp %20 : vector<1x128xf32>
    %cst_12 = arith.constant dense<0.000000e+00> : vector<1xf32>
    %22 = vector.multi_reduction <add>, %21, %cst_12 [1] : vector<1x128xf32> to vector<1xf32>
    %23 = vector.shape_cast %22 : vector<1xf32> to vector<1x1xf32>
    %24 = tpu.reciprocal %23 {approx = true} : vector<1x1xf32> -> vector<1x1xf32>
    %25 = vector.broadcast %24 : vector<1x1xf32> to vector<1x128xf32>
    %26 = arith.mulf %21, %25 : vector<1x128xf32>
    %c0_13 = arith.constant 0 : index
    %c0_14 = arith.constant 0 : index
    %27 = vector.load %arg19[%c0_13, %c0_14] : memref<8x128xf32, #tpu.memory_space<vmem>>, vector<1x128xf32>
    tpu.vector_store %arg19[%c0_13, %c0_14], %26 {strides = array<i32>} : memref<8x128xf32, #tpu.memory_space<vmem>>, vector<1x128xf32>,
    %c0_15 = arith.constant 0 : index
    %c0_16 = arith.constant 0 : index
    %28 = vector.load %arg4[%c0_15, %c0_16] : memref<128x32xf32, #tpu.memory_space<vmem>>, vector<128x32xf32>
    %cst_17 = arith.constant dense<0.000000e+00> : vector<1x32xf32>
    %29 = tpu.matmul %26, %28, %cst_17 {dimension_numbers = #tpu.dot_dimension_numbers<[1], [0], [0], [1], [0, 0, 1, 1], [], []>} : vector<1x128xf32>, vector<128x32xf32>, vector<1x32xf32> -> vector<1x32xf32>
    %c0_18 = arith.constant 0 : index
    %c0_19 = arith.constant 0 : index
    %30 = vector.load %arg8[%c0_18, %c0_19] : memref<32x32xf32, #tpu.memory_space<vmem>>, vector<32x32xf32>
    %cst_20 = arith.constant dense<0.000000e+00> : vector<1x32xf32>
    %31 = tpu.matmul %8, %30, %cst_20 {dimension_numbers = #tpu.dot_dimension_numbers<[1], [0], [0], [1], [0, 0, 1, 1], [], []>} : vector<1x32xf32>, vector<32x32xf32>, vector<1x32xf32> -> vector<1x32xf32>
    %c0_21 = arith.constant 0 : index
    %c0_22 = arith.constant 0 : index
    %32 = vector.load %arg9[%c0_21, %c0_22] : memref<32x32xf32, #tpu.memory_space<vmem>>, vector<32x32xf32>
    %cst_23 = arith.constant dense<0.000000e+00> : vector<1x32xf32>
    %33 = tpu.matmul %29, %32, %cst_23 {dimension_numbers = #tpu.dot_dimension_numbers<[1], [0], [0], [1], [0, 0, 1, 1], [], []>} : vector<1x32xf32>, vector<32x32xf32>, vector<1x32xf32> -> vector<1x32xf32>
    %34 = arith.addf %31, %33 : vector<1x32xf32>
    %c0_24 = arith.constant 0 : index
    %c0_25 = arith.constant 0 : index
    %35 = vector.load %arg10[%c0_24, %c0_25] : memref<1x32xf32, #tpu.memory_space<vmem>>, vector<1x32xf32>
    %36 = arith.addf %34, %35 : vector<1x32xf32>
    %cst_26 = arith.constant 0.000000e+00 : f32
    %37 = vector.broadcast %cst_26 : f32 to vector<1x32xf32>
    %38 = arith.maximumf %36, %37 : vector<1x32xf32>
    %c0_27 = arith.constant 0 : index
    %c0_28 = arith.constant 0 : index
    %39 = vector.load %arg11[%c0_27, %c0_28] : memref<32x96xf32, #tpu.memory_space<vmem>>, vector<32x96xf32>
    %cst_29 = arith.constant dense<0.000000e+00> : vector<1x96xf32>
    %40 = tpu.matmul %38, %39, %cst_29 {dimension_numbers = #tpu.dot_dimension_numbers<[1], [0], [0], [1], [0, 0, 1, 1], [], []>} : vector<1x32xf32>, vector<32x96xf32>, vector<1x96xf32> -> vector<1x96xf32>
    %c0_30 = arith.constant 0 : index
    %c0_31 = arith.constant 0 : index
    %41 = vector.load %arg12[%c0_30, %c0_31] : memref<1x96xf32, #tpu.memory_space<vmem>>, vector<1x96xf32>
    %42 = arith.addf %40, %41 : vector<1x96xf32>
    %c0_32 = arith.constant 0 : index
    %c0_33 = arith.constant 0 : index
    %43 = vector.load %arg13[%c0_32, %c0_33] : memref<32x96xf32, #tpu.memory_space<vmem>>, vector<32x96xf32>
    %cst_34 = arith.constant dense<0.000000e+00> : vector<1x96xf32>
    %44 = tpu.matmul %9, %43, %cst_34 {dimension_numbers = #tpu.dot_dimension_numbers<[1], [0], [0], [1], [0, 0, 1, 1], [], []>} : vector<1x32xf32>, vector<32x96xf32>, vector<1x96xf32> -> vector<1x96xf32>
    %c0_35 = arith.constant 0 : index
    %c0_36 = arith.constant 0 : index
    %45 = vector.load %arg14[%c0_35, %c0_36] : memref<1x96xf32, #tpu.memory_space<vmem>>, vector<1x96xf32>
    %46 = arith.addf %44, %45 : vector<1x96xf32>
    %47 = vector.extract_strided_slice %42 {offsets = [0, 0], sizes = [1, 32], strides = [1, 1]} : vector<1x96xf32> to vector<1x32xf32>
    %48 = vector.extract_strided_slice %46 {offsets = [0, 0], sizes = [1, 32], strides = [1, 1]} : vector<1x96xf32> to vector<1x32xf32>
    %49 = arith.addf %47, %48 : vector<1x32xf32>
    %50 = arith.negf %49 : vector<1x32xf32>
    %51 = math.exp %50 : vector<1x32xf32>
    %cst_37 = arith.constant 1.000000e+00 : f32
    %52 = vector.broadcast %cst_37 : f32 to vector<1x32xf32>
    %53 = arith.addf %52, %51 : vector<1x32xf32>
    %54 = arith.divf %52, %53 : vector<1x32xf32>
    %55 = vector.extract_strided_slice %42 {offsets = [0, 32], sizes = [1, 32], strides = [1, 1]} : vector<1x96xf32> to vector<1x32xf32>
    %56 = vector.extract_strided_slice %46 {offsets = [0, 32], sizes = [1, 32], strides = [1, 1]} : vector<1x96xf32> to vector<1x32xf32>
    %57 = arith.addf %55, %56 : vector<1x32xf32>
    %58 = arith.negf %57 : vector<1x32xf32>
    %59 = math.exp %58 : vector<1x32xf32>
    %cst_38 = arith.constant 1.000000e+00 : f32
    %60 = vector.broadcast %cst_38 : f32 to vector<1x32xf32>
    %61 = arith.addf %60, %59 : vector<1x32xf32>
    %62 = arith.divf %60, %61 : vector<1x32xf32>
    %63 = vector.extract_strided_slice %42 {offsets = [0, 64], sizes = [1, 32], strides = [1, 1]} : vector<1x96xf32> to vector<1x32xf32>
    %64 = vector.extract_strided_slice %46 {offsets = [0, 64], sizes = [1, 32], strides = [1, 1]} : vector<1x96xf32> to vector<1x32xf32>
    %65 = arith.mulf %54, %64 : vector<1x32xf32>
    %66 = arith.addf %63, %65 : vector<1x32xf32>
    %67 = math.tanh %66 : vector<1x32xf32>
    %cst_39 = arith.constant 1.000000e+00 : f32
    %68 = vector.broadcast %cst_39 : f32 to vector<1x32xf32>
    %69 = arith.subf %68, %62 : vector<1x32xf32>
    %70 = arith.mulf %69, %67 : vector<1x32xf32>
    %71 = arith.mulf %62, %9 : vector<1x32xf32>
    %72 = arith.addf %70, %71 : vector<1x32xf32>
    %c6_i32 = arith.constant 6 : i32
    %73 = arith.cmpi slt, %4, %c6_i32 : i32
    %74 = arith.select %73, %72, %9 : vector<1x32xf32>
    %c0_40 = arith.constant 0 : index
    %c0_41 = arith.constant 0 : index
    %75 = vector.load %arg18[%c0_40, %c0_41] : memref<1x32xf32, #tpu.memory_space<vmem>>, vector<1x32xf32>
    tpu.vector_store %arg18[%c0_40, %c0_41], %74 {strides = array<i32>} : memref<1x32xf32, #tpu.memory_space<vmem>>, vector<1x32xf32>,
    %c0_42 = arith.constant 0 : index
    %c0_43 = arith.constant 0 : index
    %76 = vector.load %arg15[%c0_42, %c0_43] : memref<32x128xf32, #tpu.memory_space<vmem>>, vector<32x128xf32>
    %cst_44 = arith.constant dense<0.000000e+00> : vector<1x128xf32>
    %77 = tpu.matmul %72, %76, %cst_44 {dimension_numbers = #tpu.dot_dimension_numbers<[1], [0], [0], [1], [0, 0, 1, 1], [], []>} : vector<1x32xf32>, vector<32x128xf32>, vector<1x128xf32> -> vector<1x128xf32>
    %c0_45 = arith.constant 0 : index
    %c0_46 = arith.constant 0 : index
    %78 = vector.load %arg16[%c0_45, %c0_46] : memref<1x128xf32, #tpu.memory_space<vmem>>, vector<1x128xf32>
    %79 = arith.addf %77, %78 : vector<1x128xf32>
    %cst_47 = arith.constant dense<0xFF800000> : vector<1xf32>
    %80 = vector.multi_reduction <maximumf>, %79, %cst_47 [1] : vector<1x128xf32> to vector<1xf32>
    %81 = vector.shape_cast %80 : vector<1xf32> to vector<1x1xf32>
    %82 = vector.broadcast %81 : vector<1x1xf32> to vector<1x128xf32>
    %83 = arith.subf %79, %82 : vector<1x128xf32>
    %84 = math.exp %83 : vector<1x128xf32>
    %cst_48 = arith.constant dense<0.000000e+00> : vector<1xf32>
    %85 = vector.multi_reduction <add>, %84, %cst_48 [1] : vector<1x128xf32> to vector<1xf32>
    %86 = vector.shape_cast %85 : vector<1xf32> to vector<1x1xf32>
    %87 = math.log %86 : vector<1x1xf32>
    %88 = vector.broadcast %87 : vector<1x1xf32> to vector<1x128xf32>
    %89 = arith.subf %83, %88 : vector<1x128xf32>
    %c0_49 = arith.constant 0 : index
    %c0_50 = arith.constant 0 : index
    %90 = vector.load %arg17[%c0_49, %c0_50] : memref<8x128xf32, #tpu.memory_space<vmem>>, vector<1x128xf32>
    tpu.vector_store %arg17[%c0_49, %c0_50], %89 {strides = array<i32>} : memref<8x128xf32, #tpu.memory_space<vmem>>, vector<1x128xf32>,
    %c8_i32_51 = arith.constant 8 : i32
    %91 = arith.muli %arg0, %c8_i32_51 : i32
    %c1_i32 = arith.constant 1 : i32
    %92 = arith.addi %91, %c1_i32 : i32
    %93 = arith.index_cast %92 : i32 to index
    %94 = memref.load %arg1[%93] : memref<8xi32, #tpu.memory_space<smem>>
    %95 = arith.index_cast %94 : i32 to index
    %c0_52 = arith.constant 0 : index
    %96 = vector.load %arg2[%95, %c0_52] : memref<48x32xf32, #tpu.memory_space<vmem>>, vector<1x32xf32>
    %c0_53 = arith.constant 0 : index
    %c0_54 = arith.constant 0 : index
    %97 = vector.load %arg18[%c0_53, %c0_54] : memref<1x32xf32, #tpu.memory_space<vmem>>, vector<1x32xf32>
    %c0_55 = arith.constant 0 : index
    %c0_56 = arith.constant 0 : index
    %98 = vector.load %arg5[%c0_55, %c0_56] : memref<32x128xf32, #tpu.memory_space<vmem>>, vector<32x128xf32>
    %cst_57 = arith.constant dense<0.000000e+00> : vector<1x128xf32>
    %99 = tpu.matmul %96, %98, %cst_57 {dimension_numbers = #tpu.dot_dimension_numbers<[1], [0], [0], [1], [0, 0, 1, 1], [], []>} : vector<1x32xf32>, vector<32x128xf32>, vector<1x128xf32> -> vector<1x128xf32>
    %c0_58 = arith.constant 0 : index
    %c0_59 = arith.constant 0 : index
    %100 = vector.load %arg6[%c0_58, %c0_59] : memref<32x128xf32, #tpu.memory_space<vmem>>, vector<32x128xf32>
    %cst_60 = arith.constant dense<0.000000e+00> : vector<1x128xf32>
    %101 = tpu.matmul %97, %100, %cst_60 {dimension_numbers = #tpu.dot_dimension_numbers<[1], [0], [0], [1], [0, 0, 1, 1], [], []>} : vector<1x32xf32>, vector<32x128xf32>, vector<1x128xf32> -> vector<1x128xf32>
    %102 = arith.addf %99, %101 : vector<1x128xf32>
    %c0_61 = arith.constant 0 : index
    %c0_62 = arith.constant 0 : index
    %103 = vector.load %arg7[%c0_61, %c0_62] : memref<1x128xf32, #tpu.memory_space<vmem>>, vector<1x128xf32>
    %104 = arith.addf %102, %103 : vector<1x128xf32>
    %cst_63 = arith.constant dense<0xFF800000> : vector<1xf32>
    %105 = vector.multi_reduction <maximumf>, %104, %cst_63 [1] : vector<1x128xf32> to vector<1xf32>
    %106 = vector.shape_cast %105 : vector<1xf32> to vector<1x1xf32>
    %107 = vector.broadcast %106 : vector<1x1xf32> to vector<1x128xf32>
    %108 = arith.subf %104, %107 : vector<1x128xf32>
    %109 = math.exp %108 : vector<1x128xf32>
    %cst_64 = arith.constant dense<0.000000e+00> : vector<1xf32>
    %110 = vector.multi_reduction <add>, %109, %cst_64 [1] : vector<1x128xf32> to vector<1xf32>
    %111 = vector.shape_cast %110 : vector<1xf32> to vector<1x1xf32>
    %112 = tpu.reciprocal %111 {approx = true} : vector<1x1xf32> -> vector<1x1xf32>
    %113 = vector.broadcast %112 : vector<1x1xf32> to vector<1x128xf32>
    %114 = arith.mulf %109, %113 : vector<1x128xf32>
    %c1 = arith.constant 1 : index
    %c0_65 = arith.constant 0 : index
    %115 = vector.load %arg19[%c1, %c0_65] : memref<8x128xf32, #tpu.memory_space<vmem>>, vector<1x128xf32>
    tpu.vector_store %arg19[%c1, %c0_65], %114 {strides = array<i32>} : memref<8x128xf32, #tpu.memory_space<vmem>>, vector<1x128xf32>,
    %c0_66 = arith.constant 0 : index
    %c0_67 = arith.constant 0 : index
    %116 = vector.load %arg4[%c0_66, %c0_67] : memref<128x32xf32, #tpu.memory_space<vmem>>, vector<128x32xf32>
    %cst_68 = arith.constant dense<0.000000e+00> : vector<1x32xf32>
    %117 = tpu.matmul %114, %116, %cst_68 {dimension_numbers = #tpu.dot_dimension_numbers<[1], [0], [0], [1], [0, 0, 1, 1], [], []>} : vector<1x128xf32>, vector<128x32xf32>, vector<1x32xf32> -> vector<1x32xf32>
    %c0_69 = arith.constant 0 : index
    %c0_70 = arith.constant 0 : index
    %118 = vector.load %arg8[%c0_69, %c0_70] : memref<32x32xf32, #tpu.memory_space<vmem>>, vector<32x32xf32>
    %cst_71 = arith.constant dense<0.000000e+00> : vector<1x32xf32>
    %119 = tpu.matmul %96, %118, %cst_71 {dimension_numbers = #tpu.dot_dimension_numbers<[1], [0], [0], [1], [0, 0, 1, 1], [], []>} : vector<1x32xf32>, vector<32x32xf32>, vector<1x32xf32> -> vector<1x32xf32>
    %c0_72 = arith.constant 0 : index
    %c0_73 = arith.constant 0 : index
    %120 = vector.load %arg9[%c0_72, %c0_73] : memref<32x32xf32, #tpu.memory_space<vmem>>, vector<32x32xf32>
    %cst_74 = arith.constant dense<0.000000e+00> : vector<1x32xf32>
    %121 = tpu.matmul %117, %120, %cst_74 {dimension_numbers = #tpu.dot_dimension_numbers<[1], [0], [0], [1], [0, 0, 1, 1], [], []>} : vector<1x32xf32>, vector<32x32xf32>, vector<1x32xf32> -> vector<1x32xf32>
    %122 = arith.addf %119, %121 : vector<1x32xf32>
    %c0_75 = arith.constant 0 : index
    %c0_76 = arith.constant 0 : index
    %123 = vector.load %arg10[%c0_75, %c0_76] : memref<1x32xf32, #tpu.memory_space<vmem>>, vector<1x32xf32>
    %124 = arith.addf %122, %123 : vector<1x32xf32>
    %cst_77 = arith.constant 0.000000e+00 : f32
    %125 = vector.broadcast %cst_77 : f32 to vector<1x32xf32>
    %126 = arith.maximumf %124, %125 : vector<1x32xf32>
    %c0_78 = arith.constant 0 : index
    %c0_79 = arith.constant 0 : index
    %127 = vector.load %arg11[%c0_78, %c0_79] : memref<32x96xf32, #tpu.memory_space<vmem>>, vector<32x96xf32>
    %cst_80 = arith.constant dense<0.000000e+00> : vector<1x96xf32>
    %128 = tpu.matmul %126, %127, %cst_80 {dimension_numbers = #tpu.dot_dimension_numbers<[1], [0], [0], [1], [0, 0, 1, 1], [], []>} : vector<1x32xf32>, vector<32x96xf32>, vector<1x96xf32> -> vector<1x96xf32>
    %c0_81 = arith.constant 0 : index
    %c0_82 = arith.constant 0 : index
    %129 = vector.load %arg12[%c0_81, %c0_82] : memref<1x96xf32, #tpu.memory_space<vmem>>, vector<1x96xf32>
    %130 = arith.addf %128, %129 : vector<1x96xf32>
    %c0_83 = arith.constant 0 : index
    %c0_84 = arith.constant 0 : index
    %131 = vector.load %arg13[%c0_83, %c0_84] : memref<32x96xf32, #tpu.memory_space<vmem>>, vector<32x96xf32>
    %cst_85 = arith.constant dense<0.000000e+00> : vector<1x96xf32>
    %132 = tpu.matmul %97, %131, %cst_85 {dimension_numbers = #tpu.dot_dimension_numbers<[1], [0], [0], [1], [0, 0, 1, 1], [], []>} : vector<1x32xf32>, vector<32x96xf32>, vector<1x96xf32> -> vector<1x96xf32>
    %c0_86 = arith.constant 0 : index
    %c0_87 = arith.constant 0 : index
    %133 = vector.load %arg14[%c0_86, %c0_87] : memref<1x96xf32, #tpu.memory_space<vmem>>, vector<1x96xf32>
    %134 = arith.addf %132, %133 : vector<1x96xf32>
    %135 = vector.extract_strided_slice %130 {offsets = [0, 0], sizes = [1, 32], strides = [1, 1]} : vector<1x96xf32> to vector<1x32xf32>
    %136 = vector.extract_strided_slice %134 {offsets = [0, 0], sizes = [1, 32], strides = [1, 1]} : vector<1x96xf32> to vector<1x32xf32>
    %137 = arith.addf %135, %136 : vector<1x32xf32>
    %138 = arith.negf %137 : vector<1x32xf32>
    %139 = math.exp %138 : vector<1x32xf32>
    %cst_88 = arith.constant 1.000000e+00 : f32
    %140 = vector.broadcast %cst_88 : f32 to vector<1x32xf32>
    %141 = arith.addf %140, %139 : vector<1x32xf32>
    %142 = arith.divf %140, %141 : vector<1x32xf32>
    %143 = vector.extract_strided_slice %130 {offsets = [0, 32], sizes = [1, 32], strides = [1, 1]} : vector<1x96xf32> to vector<1x32xf32>
    %144 = vector.extract_strided_slice %134 {offsets = [0, 32], sizes = [1, 32], strides = [1, 1]} : vector<1x96xf32> to vector<1x32xf32>
    %145 = arith.addf %143, %144 : vector<1x32xf32>
    %146 = arith.negf %145 : vector<1x32xf32>
    %147 = math.exp %146 : vector<1x32xf32>
    %cst_89 = arith.constant 1.000000e+00 : f32
    %148 = vector.broadcast %cst_89 : f32 to vector<1x32xf32>
    %149 = arith.addf %148, %147 : vector<1x32xf32>
    %150 = arith.divf %148, %149 : vector<1x32xf32>
    %151 = vector.extract_strided_slice %130 {offsets = [0, 64], sizes = [1, 32], strides = [1, 1]} : vector<1x96xf32> to vector<1x32xf32>
    %152 = vector.extract_strided_slice %134 {offsets = [0, 64], sizes = [1, 32], strides = [1, 1]} : vector<1x96xf32> to vector<1x32xf32>
    %153 = arith.mulf %142, %152 : vector<1x32xf32>
    %154 = arith.addf %151, %153 : vector<1x32xf32>
    %155 = math.tanh %154 : vector<1x32xf32>
    %cst_90 = arith.constant 1.000000e+00 : f32
    %156 = vector.broadcast %cst_90 : f32 to vector<1x32xf32>
    %157 = arith.subf %156, %150 : vector<1x32xf32>
    %158 = arith.mulf %157, %155 : vector<1x32xf32>
    %159 = arith.mulf %150, %97 : vector<1x32xf32>
    %160 = arith.addf %158, %159 : vector<1x32xf32>
    %c6_i32_91 = arith.constant 6 : i32
    %161 = arith.cmpi slt, %92, %c6_i32_91 : i32
    %162 = arith.select %161, %160, %97 : vector<1x32xf32>
    %c0_92 = arith.constant 0 : index
    %c0_93 = arith.constant 0 : index
    %163 = vector.load %arg18[%c0_92, %c0_93] : memref<1x32xf32, #tpu.memory_space<vmem>>, vector<1x32xf32>
    tpu.vector_store %arg18[%c0_92, %c0_93], %162 {strides = array<i32>} : memref<1x32xf32, #tpu.memory_space<vmem>>, vector<1x32xf32>,
    %c0_94 = arith.constant 0 : index
    %c0_95 = arith.constant 0 : index
    %164 = vector.load %arg15[%c0_94, %c0_95] : memref<32x128xf32, #tpu.memory_space<vmem>>, vector<32x128xf32>
    %cst_96 = arith.constant dense<0.000000e+00> : vector<1x128xf32>
    %165 = tpu.matmul %160, %164, %cst_96 {dimension_numbers = #tpu.dot_dimension_numbers<[1], [0], [0], [1], [0, 0, 1, 1], [], []>} : vector<1x32xf32>, vector<32x128xf32>, vector<1x128xf32> -> vector<1x128xf32>
    %c0_97 = arith.constant 0 : index
    %c0_98 = arith.constant 0 : index
    %166 = vector.load %arg16[%c0_97, %c0_98] : memref<1x128xf32, #tpu.memory_space<vmem>>, vector<1x128xf32>
    %167 = arith.addf %165, %166 : vector<1x128xf32>
    %cst_99 = arith.constant dense<0xFF800000> : vector<1xf32>
    %168 = vector.multi_reduction <maximumf>, %167, %cst_99 [1] : vector<1x128xf32> to vector<1xf32>
    %169 = vector.shape_cast %168 : vector<1xf32> to vector<1x1xf32>
    %170 = vector.broadcast %169 : vector<1x1xf32> to vector<1x128xf32>
    %171 = arith.subf %167, %170 : vector<1x128xf32>
    %172 = math.exp %171 : vector<1x128xf32>
    %cst_100 = arith.constant dense<0.000000e+00> : vector<1xf32>
    %173 = vector.multi_reduction <add>, %172, %cst_100 [1] : vector<1x128xf32> to vector<1xf32>
    %174 = vector.shape_cast %173 : vector<1xf32> to vector<1x1xf32>
    %175 = math.log %174 : vector<1x1xf32>
    %176 = vector.broadcast %175 : vector<1x1xf32> to vector<1x128xf32>
    %177 = arith.subf %171, %176 : vector<1x128xf32>
    %c1_101 = arith.constant 1 : index
    %c0_102 = arith.constant 0 : index
    %178 = vector.load %arg17[%c1_101, %c0_102] : memref<8x128xf32, #tpu.memory_space<vmem>>, vector<1x128xf32>
    tpu.vector_store %arg17[%c1_101, %c0_102], %177 {strides = array<i32>} : memref<8x128xf32, #tpu.memory_space<vmem>>, vector<1x128xf32>,
    %c8_i32_103 = arith.constant 8 : i32
    %179 = arith.muli %arg0, %c8_i32_103 : i32
    %c2_i32 = arith.constant 2 : i32
    %180 = arith.addi %179, %c2_i32 : i32
    %181 = arith.index_cast %180 : i32 to index
    %182 = memref.load %arg1[%181] : memref<8xi32, #tpu.memory_space<smem>>
    %183 = arith.index_cast %182 : i32 to index
    %c0_104 = arith.constant 0 : index
    %184 = vector.load %arg2[%183, %c0_104] : memref<48x32xf32, #tpu.memory_space<vmem>>, vector<1x32xf32>
    %c0_105 = arith.constant 0 : index
    %c0_106 = arith.constant 0 : index
    %185 = vector.load %arg18[%c0_105, %c0_106] : memref<1x32xf32, #tpu.memory_space<vmem>>, vector<1x32xf32>
    %c0_107 = arith.constant 0 : index
    %c0_108 = arith.constant 0 : index
    %186 = vector.load %arg5[%c0_107, %c0_108] : memref<32x128xf32, #tpu.memory_space<vmem>>, vector<32x128xf32>
    %cst_109 = arith.constant dense<0.000000e+00> : vector<1x128xf32>
    %187 = tpu.matmul %184, %186, %cst_109 {dimension_numbers = #tpu.dot_dimension_numbers<[1], [0], [0], [1], [0, 0, 1, 1], [], []>} : vector<1x32xf32>, vector<32x128xf32>, vector<1x128xf32> -> vector<1x128xf32>
    %c0_110 = arith.constant 0 : index
    %c0_111 = arith.constant 0 : index
    %188 = vector.load %arg6[%c0_110, %c0_111] : memref<32x128xf32, #tpu.memory_space<vmem>>, vector<32x128xf32>
    %cst_112 = arith.constant dense<0.000000e+00> : vector<1x128xf32>
    %189 = tpu.matmul %185, %188, %cst_112 {dimension_numbers = #tpu.dot_dimension_numbers<[1], [0], [0], [1], [0, 0, 1, 1], [], []>} : vector<1x32xf32>, vector<32x128xf32>, vector<1x128xf32> -> vector<1x128xf32>
    %190 = arith.addf %187, %189 : vector<1x128xf32>
    %c0_113 = arith.constant 0 : index
    %c0_114 = arith.constant 0 : index
    %191 = vector.load %arg7[%c0_113, %c0_114] : memref<1x128xf32, #tpu.memory_space<vmem>>, vector<1x128xf32>
    %192 = arith.addf %190, %191 : vector<1x128xf32>
    %cst_115 = arith.constant dense<0xFF800000> : vector<1xf32>
    %193 = vector.multi_reduction <maximumf>, %192, %cst_115 [1] : vector<1x128xf32> to vector<1xf32>
    %194 = vector.shape_cast %193 : vector<1xf32> to vector<1x1xf32>
    %195 = vector.broadcast %194 : vector<1x1xf32> to vector<1x128xf32>
    %196 = arith.subf %192, %195 : vector<1x128xf32>
    %197 = math.exp %196 : vector<1x128xf32>
    %cst_116 = arith.constant dense<0.000000e+00> : vector<1xf32>
    %198 = vector.multi_reduction <add>, %197, %cst_116 [1] : vector<1x128xf32> to vector<1xf32>
    %199 = vector.shape_cast %198 : vector<1xf32> to vector<1x1xf32>
    %200 = tpu.reciprocal %199 {approx = true} : vector<1x1xf32> -> vector<1x1xf32>
    %201 = vector.broadcast %200 : vector<1x1xf32> to vector<1x128xf32>
    %202 = arith.mulf %197, %201 : vector<1x128xf32>
    %c2 = arith.constant 2 : index
    %c0_117 = arith.constant 0 : index
    %203 = vector.load %arg19[%c2, %c0_117] : memref<8x128xf32, #tpu.memory_space<vmem>>, vector<1x128xf32>
    tpu.vector_store %arg19[%c2, %c0_117], %202 {strides = array<i32>} : memref<8x128xf32, #tpu.memory_space<vmem>>, vector<1x128xf32>,
    %c0_118 = arith.constant 0 : index
    %c0_119 = arith.constant 0 : index
    %204 = vector.load %arg4[%c0_118, %c0_119] : memref<128x32xf32, #tpu.memory_space<vmem>>, vector<128x32xf32>
    %cst_120 = arith.constant dense<0.000000e+00> : vector<1x32xf32>
    %205 = tpu.matmul %202, %204, %cst_120 {dimension_numbers = #tpu.dot_dimension_numbers<[1], [0], [0], [1], [0, 0, 1, 1], [], []>} : vector<1x128xf32>, vector<128x32xf32>, vector<1x32xf32> -> vector<1x32xf32>
    %c0_121 = arith.constant 0 : index
    %c0_122 = arith.constant 0 : index
    %206 = vector.load %arg8[%c0_121, %c0_122] : memref<32x32xf32, #tpu.memory_space<vmem>>, vector<32x32xf32>
    %cst_123 = arith.constant dense<0.000000e+00> : vector<1x32xf32>
    %207 = tpu.matmul %184, %206, %cst_123 {dimension_numbers = #tpu.dot_dimension_numbers<[1], [0], [0], [1], [0, 0, 1, 1], [], []>} : vector<1x32xf32>, vector<32x32xf32>, vector<1x32xf32> -> vector<1x32xf32>
    %c0_124 = arith.constant 0 : index
    %c0_125 = arith.constant 0 : index
    %208 = vector.load %arg9[%c0_124, %c0_125] : memref<32x32xf32, #tpu.memory_space<vmem>>, vector<32x32xf32>
    %cst_126 = arith.constant dense<0.000000e+00> : vector<1x32xf32>
    %209 = tpu.matmul %205, %208, %cst_126 {dimension_numbers = #tpu.dot_dimension_numbers<[1], [0], [0], [1], [0, 0, 1, 1], [], []>} : vector<1x32xf32>, vector<32x32xf32>, vector<1x32xf32> -> vector<1x32xf32>
    %210 = arith.addf %207, %209 : vector<1x32xf32>
    %c0_127 = arith.constant 0 : index
    %c0_128 = arith.constant 0 : index
    %211 = vector.load %arg10[%c0_127, %c0_128] : memref<1x32xf32, #tpu.memory_space<vmem>>, vector<1x32xf32>
    %212 = arith.addf %210, %211 : vector<1x32xf32>
    %cst_129 = arith.constant 0.000000e+00 : f32
    %213 = vector.broadcast %cst_129 : f32 to vector<1x32xf32>
    %214 = arith.maximumf %212, %213 : vector<1x32xf32>
    %c0_130 = arith.constant 0 : index
    %c0_131 = arith.constant 0 : index
    %215 = vector.load %arg11[%c0_130, %c0_131] : memref<32x96xf32, #tpu.memory_space<vmem>>, vector<32x96xf32>
    %cst_132 = arith.constant dense<0.000000e+00> : vector<1x96xf32>
    %216 = tpu.matmul %214, %215, %cst_132 {dimension_numbers = #tpu.dot_dimension_numbers<[1], [0], [0], [1], [0, 0, 1, 1], [], []>} : vector<1x32xf32>, vector<32x96xf32>, vector<1x96xf32> -> vector<1x96xf32>
    %c0_133 = arith.constant 0 : index
    %c0_134 = arith.constant 0 : index
    %217 = vector.load %arg12[%c0_133, %c0_134] : memref<1x96xf32, #tpu.memory_space<vmem>>, vector<1x96xf32>
    %218 = arith.addf %216, %217 : vector<1x96xf32>
    %c0_135 = arith.constant 0 : index
    %c0_136 = arith.constant 0 : index
    %219 = vector.load %arg13[%c0_135, %c0_136] : memref<32x96xf32, #tpu.memory_space<vmem>>, vector<32x96xf32>
    %cst_137 = arith.constant dense<0.000000e+00> : vector<1x96xf32>
    %220 = tpu.matmul %185, %219, %cst_137 {dimension_numbers = #tpu.dot_dimension_numbers<[1], [0], [0], [1], [0, 0, 1, 1], [], []>} : vector<1x32xf32>, vector<32x96xf32>, vector<1x96xf32> -> vector<1x96xf32>
    %c0_138 = arith.constant 0 : index
    %c0_139 = arith.constant 0 : index
    %221 = vector.load %arg14[%c0_138, %c0_139] : memref<1x96xf32, #tpu.memory_space<vmem>>, vector<1x96xf32>
    %222 = arith.addf %220, %221 : vector<1x96xf32>
    %223 = vector.extract_strided_slice %218 {offsets = [0, 0], sizes = [1, 32], strides = [1, 1]} : vector<1x96xf32> to vector<1x32xf32>
    %224 = vector.extract_strided_slice %222 {offsets = [0, 0], sizes = [1, 32], strides = [1, 1]} : vector<1x96xf32> to vector<1x32xf32>
    %225 = arith.addf %223, %224 : vector<1x32xf32>
    %226 = arith.negf %225 : vector<1x32xf32>
    %227 = math.exp %226 : vector<1x32xf32>
    %cst_140 = arith.constant 1.000000e+00 : f32
    %228 = vector.broadcast %cst_140 : f32 to vector<1x32xf32>
    %229 = arith.addf %228, %227 : vector<1x32xf32>
    %230 = arith.divf %228, %229 : vector<1x32xf32>
    %231 = vector.extract_strided_slice %218 {offsets = [0, 32], sizes = [1, 32], strides = [1, 1]} : vector<1x96xf32> to vector<1x32xf32>
    %232 = vector.extract_strided_slice %222 {offsets = [0, 32], sizes = [1, 32], strides = [1, 1]} : vector<1x96xf32> to vector<1x32xf32>
    %233 = arith.addf %231, %232 : vector<1x32xf32>
    %234 = arith.negf %233 : vector<1x32xf32>
    %235 = math.exp %234 : vector<1x32xf32>
    %cst_141 = arith.constant 1.000000e+00 : f32
    %236 = vector.broadcast %cst_141 : f32 to vector<1x32xf32>
    %237 = arith.addf %236, %235 : vector<1x32xf32>
    %238 = arith.divf %236, %237 : vector<1x32xf32>
    %239 = vector.extract_strided_slice %218 {offsets = [0, 64], sizes = [1, 32], strides = [1, 1]} : vector<1x96xf32> to vector<1x32xf32>
    %240 = vector.extract_strided_slice %222 {offsets = [0, 64], sizes = [1, 32], strides = [1, 1]} : vector<1x96xf32> to vector<1x32xf32>
    %241 = arith.mulf %230, %240 : vector<1x32xf32>
    %242 = arith.addf %239, %241 : vector<1x32xf32>
    %243 = math.tanh %242 : vector<1x32xf32>
    %cst_142 = arith.constant 1.000000e+00 : f32
    %244 = vector.broadcast %cst_142 : f32 to vector<1x32xf32>
    %245 = arith.subf %244, %238 : vector<1x32xf32>
    %246 = arith.mulf %245, %243 : vector<1x32xf32>
    %247 = arith.mulf %238, %185 : vector<1x32xf32>
    %248 = arith.addf %246, %247 : vector<1x32xf32>
    %c6_i32_143 = arith.constant 6 : i32
    %249 = arith.cmpi slt, %180, %c6_i32_143 : i32
    %250 = arith.select %249, %248, %185 : vector<1x32xf32>
    %c0_144 = arith.constant 0 : index
    %c0_145 = arith.constant 0 : index
    %251 = vector.load %arg18[%c0_144, %c0_145] : memref<1x32xf32, #tpu.memory_space<vmem>>, vector<1x32xf32>
    tpu.vector_store %arg18[%c0_144, %c0_145], %250 {strides = array<i32>} : memref<1x32xf32, #tpu.memory_space<vmem>>, vector<1x32xf32>,
    %c0_146 = arith.constant 0 : index
    %c0_147 = arith.constant 0 : index
    %252 = vector.load %arg15[%c0_146, %c0_147] : memref<32x128xf32, #tpu.memory_space<vmem>>, vector<32x128xf32>
    %cst_148 = arith.constant dense<0.000000e+00> : vector<1x128xf32>
    %253 = tpu.matmul %248, %252, %cst_148 {dimension_numbers = #tpu.dot_dimension_numbers<[1], [0], [0], [1], [0, 0, 1, 1], [], []>} : vector<1x32xf32>, vector<32x128xf32>, vector<1x128xf32> -> vector<1x128xf32>
    %c0_149 = arith.constant 0 : index
    %c0_150 = arith.constant 0 : index
    %254 = vector.load %arg16[%c0_149, %c0_150] : memref<1x128xf32, #tpu.memory_space<vmem>>, vector<1x128xf32>
    %255 = arith.addf %253, %254 : vector<1x128xf32>
    %cst_151 = arith.constant dense<0xFF800000> : vector<1xf32>
    %256 = vector.multi_reduction <maximumf>, %255, %cst_151 [1] : vector<1x128xf32> to vector<1xf32>
    %257 = vector.shape_cast %256 : vector<1xf32> to vector<1x1xf32>
    %258 = vector.broadcast %257 : vector<1x1xf32> to vector<1x128xf32>
    %259 = arith.subf %255, %258 : vector<1x128xf32>
    %260 = math.exp %259 : vector<1x128xf32>
    %cst_152 = arith.constant dense<0.000000e+00> : vector<1xf32>
    %261 = vector.multi_reduction <add>, %260, %cst_152 [1] : vector<1x128xf32> to vector<1xf32>
    %262 = vector.shape_cast %261 : vector<1xf32> to vector<1x1xf32>
    %263 = math.log %262 : vector<1x1xf32>
    %264 = vector.broadcast %263 : vector<1x1xf32> to vector<1x128xf32>
    %265 = arith.subf %259, %264 : vector<1x128xf32>
    %c2_153 = arith.constant 2 : index
    %c0_154 = arith.constant 0 : index
    %266 = vector.load %arg17[%c2_153, %c0_154] : memref<8x128xf32, #tpu.memory_space<vmem>>, vector<1x128xf32>
    tpu.vector_store %arg17[%c2_153, %c0_154], %265 {strides = array<i32>} : memref<8x128xf32, #tpu.memory_space<vmem>>, vector<1x128xf32>,
    %c8_i32_155 = arith.constant 8 : i32
    %267 = arith.muli %arg0, %c8_i32_155 : i32
    %c3_i32 = arith.constant 3 : i32
    %268 = arith.addi %267, %c3_i32 : i32
    %269 = arith.index_cast %268 : i32 to index
    %270 = memref.load %arg1[%269] : memref<8xi32, #tpu.memory_space<smem>>
    %271 = arith.index_cast %270 : i32 to index
    %c0_156 = arith.constant 0 : index
    %272 = vector.load %arg2[%271, %c0_156] : memref<48x32xf32, #tpu.memory_space<vmem>>, vector<1x32xf32>
    %c0_157 = arith.constant 0 : index
    %c0_158 = arith.constant 0 : index
    %273 = vector.load %arg18[%c0_157, %c0_158] : memref<1x32xf32, #tpu.memory_space<vmem>>, vector<1x32xf32>
    %c0_159 = arith.constant 0 : index
    %c0_160 = arith.constant 0 : index
    %274 = vector.load %arg5[%c0_159, %c0_160] : memref<32x128xf32, #tpu.memory_space<vmem>>, vector<32x128xf32>
    %cst_161 = arith.constant dense<0.000000e+00> : vector<1x128xf32>
    %275 = tpu.matmul %272, %274, %cst_161 {dimension_numbers = #tpu.dot_dimension_numbers<[1], [0], [0], [1], [0, 0, 1, 1], [], []>} : vector<1x32xf32>, vector<32x128xf32>, vector<1x128xf32> -> vector<1x128xf32>
    %c0_162 = arith.constant 0 : index
    %c0_163 = arith.constant 0 : index
    %276 = vector.load %arg6[%c0_162, %c0_163] : memref<32x128xf32, #tpu.memory_space<vmem>>, vector<32x128xf32>
    %cst_164 = arith.constant dense<0.000000e+00> : vector<1x128xf32>
    %277 = tpu.matmul %273, %276, %cst_164 {dimension_numbers = #tpu.dot_dimension_numbers<[1], [0], [0], [1], [0, 0, 1, 1], [], []>} : vector<1x32xf32>, vector<32x128xf32>, vector<1x128xf32> -> vector<1x128xf32>
    %278 = arith.addf %275, %277 : vector<1x128xf32>
    %c0_165 = arith.constant 0 : index
    %c0_166 = arith.constant 0 : index
    %279 = vector.load %arg7[%c0_165, %c0_166] : memref<1x128xf32, #tpu.memory_space<vmem>>, vector<1x128xf32>
    %280 = arith.addf %278, %279 : vector<1x128xf32>
    %cst_167 = arith.constant dense<0xFF800000> : vector<1xf32>
    %281 = vector.multi_reduction <maximumf>, %280, %cst_167 [1] : vector<1x128xf32> to vector<1xf32>
    %282 = vector.shape_cast %281 : vector<1xf32> to vector<1x1xf32>
    %283 = vector.broadcast %282 : vector<1x1xf32> to vector<1x128xf32>
    %284 = arith.subf %280, %283 : vector<1x128xf32>
    %285 = math.exp %284 : vector<1x128xf32>
    %cst_168 = arith.constant dense<0.000000e+00> : vector<1xf32>
    %286 = vector.multi_reduction <add>, %285, %cst_168 [1] : vector<1x128xf32> to vector<1xf32>
    %287 = vector.shape_cast %286 : vector<1xf32> to vector<1x1xf32>
    %288 = tpu.reciprocal %287 {approx = true} : vector<1x1xf32> -> vector<1x1xf32>
    %289 = vector.broadcast %288 : vector<1x1xf32> to vector<1x128xf32>
    %290 = arith.mulf %285, %289 : vector<1x128xf32>
    %c3 = arith.constant 3 : index
    %c0_169 = arith.constant 0 : index
    %291 = vector.load %arg19[%c3, %c0_169] : memref<8x128xf32, #tpu.memory_space<vmem>>, vector<1x128xf32>
    tpu.vector_store %arg19[%c3, %c0_169], %290 {strides = array<i32>} : memref<8x128xf32, #tpu.memory_space<vmem>>, vector<1x128xf32>,
    %c0_170 = arith.constant 0 : index
    %c0_171 = arith.constant 0 : index
    %292 = vector.load %arg4[%c0_170, %c0_171] : memref<128x32xf32, #tpu.memory_space<vmem>>, vector<128x32xf32>
    %cst_172 = arith.constant dense<0.000000e+00> : vector<1x32xf32>
    %293 = tpu.matmul %290, %292, %cst_172 {dimension_numbers = #tpu.dot_dimension_numbers<[1], [0], [0], [1], [0, 0, 1, 1], [], []>} : vector<1x128xf32>, vector<128x32xf32>, vector<1x32xf32> -> vector<1x32xf32>
    %c0_173 = arith.constant 0 : index
    %c0_174 = arith.constant 0 : index
    %294 = vector.load %arg8[%c0_173, %c0_174] : memref<32x32xf32, #tpu.memory_space<vmem>>, vector<32x32xf32>
    %cst_175 = arith.constant dense<0.000000e+00> : vector<1x32xf32>
    %295 = tpu.matmul %272, %294, %cst_175 {dimension_numbers = #tpu.dot_dimension_numbers<[1], [0], [0], [1], [0, 0, 1, 1], [], []>} : vector<1x32xf32>, vector<32x32xf32>, vector<1x32xf32> -> vector<1x32xf32>
    %c0_176 = arith.constant 0 : index
    %c0_177 = arith.constant 0 : index
    %296 = vector.load %arg9[%c0_176, %c0_177] : memref<32x32xf32, #tpu.memory_space<vmem>>, vector<32x32xf32>
    %cst_178 = arith.constant dense<0.000000e+00> : vector<1x32xf32>
    %297 = tpu.matmul %293, %296, %cst_178 {dimension_numbers = #tpu.dot_dimension_numbers<[1], [0], [0], [1], [0, 0, 1, 1], [], []>} : vector<1x32xf32>, vector<32x32xf32>, vector<1x32xf32> -> vector<1x32xf32>
    %298 = arith.addf %295, %297 : vector<1x32xf32>
    %c0_179 = arith.constant 0 : index
    %c0_180 = arith.constant 0 : index
    %299 = vector.load %arg10[%c0_179, %c0_180] : memref<1x32xf32, #tpu.memory_space<vmem>>, vector<1x32xf32>
    %300 = arith.addf %298, %299 : vector<1x32xf32>
    %cst_181 = arith.constant 0.000000e+00 : f32
    %301 = vector.broadcast %cst_181 : f32 to vector<1x32xf32>
    %302 = arith.maximumf %300, %301 : vector<1x32xf32>
    %c0_182 = arith.constant 0 : index
    %c0_183 = arith.constant 0 : index
    %303 = vector.load %arg11[%c0_182, %c0_183] : memref<32x96xf32, #tpu.memory_space<vmem>>, vector<32x96xf32>
    %cst_184 = arith.constant dense<0.000000e+00> : vector<1x96xf32>
    %304 = tpu.matmul %302, %303, %cst_184 {dimension_numbers = #tpu.dot_dimension_numbers<[1], [0], [0], [1], [0, 0, 1, 1], [], []>} : vector<1x32xf32>, vector<32x96xf32>, vector<1x96xf32> -> vector<1x96xf32>
    %c0_185 = arith.constant 0 : index
    %c0_186 = arith.constant 0 : index
    %305 = vector.load %arg12[%c0_185, %c0_186] : memref<1x96xf32, #tpu.memory_space<vmem>>, vector<1x96xf32>
    %306 = arith.addf %304, %305 : vector<1x96xf32>
    %c0_187 = arith.constant 0 : index
    %c0_188 = arith.constant 0 : index
    %307 = vector.load %arg13[%c0_187, %c0_188] : memref<32x96xf32, #tpu.memory_space<vmem>>, vector<32x96xf32>
    %cst_189 = arith.constant dense<0.000000e+00> : vector<1x96xf32>
    %308 = tpu.matmul %273, %307, %cst_189 {dimension_numbers = #tpu.dot_dimension_numbers<[1], [0], [0], [1], [0, 0, 1, 1], [], []>} : vector<1x32xf32>, vector<32x96xf32>, vector<1x96xf32> -> vector<1x96xf32>
    %c0_190 = arith.constant 0 : index
    %c0_191 = arith.constant 0 : index
    %309 = vector.load %arg14[%c0_190, %c0_191] : memref<1x96xf32, #tpu.memory_space<vmem>>, vector<1x96xf32>
    %310 = arith.addf %308, %309 : vector<1x96xf32>
    %311 = vector.extract_strided_slice %306 {offsets = [0, 0], sizes = [1, 32], strides = [1, 1]} : vector<1x96xf32> to vector<1x32xf32>
    %312 = vector.extract_strided_slice %310 {offsets = [0, 0], sizes = [1, 32], strides = [1, 1]} : vector<1x96xf32> to vector<1x32xf32>
    %313 = arith.addf %311, %312 : vector<1x32xf32>
    %314 = arith.negf %313 : vector<1x32xf32>
    %315 = math.exp %314 : vector<1x32xf32>
    %cst_192 = arith.constant 1.000000e+00 : f32
    %316 = vector.broadcast %cst_192 : f32 to vector<1x32xf32>
    %317 = arith.addf %316, %315 : vector<1x32xf32>
    %318 = arith.divf %316, %317 : vector<1x32xf32>
    %319 = vector.extract_strided_slice %306 {offsets = [0, 32], sizes = [1, 32], strides = [1, 1]} : vector<1x96xf32> to vector<1x32xf32>
    %320 = vector.extract_strided_slice %310 {offsets = [0, 32], sizes = [1, 32], strides = [1, 1]} : vector<1x96xf32> to vector<1x32xf32>
    %321 = arith.addf %319, %320 : vector<1x32xf32>
    %322 = arith.negf %321 : vector<1x32xf32>
    %323 = math.exp %322 : vector<1x32xf32>
    %cst_193 = arith.constant 1.000000e+00 : f32
    %324 = vector.broadcast %cst_193 : f32 to vector<1x32xf32>
    %325 = arith.addf %324, %323 : vector<1x32xf32>
    %326 = arith.divf %324, %325 : vector<1x32xf32>
    %327 = vector.extract_strided_slice %306 {offsets = [0, 64], sizes = [1, 32], strides = [1, 1]} : vector<1x96xf32> to vector<1x32xf32>
    %328 = vector.extract_strided_slice %310 {offsets = [0, 64], sizes = [1, 32], strides = [1, 1]} : vector<1x96xf32> to vector<1x32xf32>
    %329 = arith.mulf %318, %328 : vector<1x32xf32>
    %330 = arith.addf %327, %329 : vector<1x32xf32>
    %331 = math.tanh %330 : vector<1x32xf32>
    %cst_194 = arith.constant 1.000000e+00 : f32
    %332 = vector.broadcast %cst_194 : f32 to vector<1x32xf32>
    %333 = arith.subf %332, %326 : vector<1x32xf32>
    %334 = arith.mulf %333, %331 : vector<1x32xf32>
    %335 = arith.mulf %326, %273 : vector<1x32xf32>
    %336 = arith.addf %334, %335 : vector<1x32xf32>
    %c6_i32_195 = arith.constant 6 : i32
    %337 = arith.cmpi slt, %268, %c6_i32_195 : i32
    %338 = arith.select %337, %336, %273 : vector<1x32xf32>
    %c0_196 = arith.constant 0 : index
    %c0_197 = arith.constant 0 : index
    %339 = vector.load %arg18[%c0_196, %c0_197] : memref<1x32xf32, #tpu.memory_space<vmem>>, vector<1x32xf32>
    tpu.vector_store %arg18[%c0_196, %c0_197], %338 {strides = array<i32>} : memref<1x32xf32, #tpu.memory_space<vmem>>, vector<1x32xf32>,
    %c0_198 = arith.constant 0 : index
    %c0_199 = arith.constant 0 : index
    %340 = vector.load %arg15[%c0_198, %c0_199] : memref<32x128xf32, #tpu.memory_space<vmem>>, vector<32x128xf32>
    %cst_200 = arith.constant dense<0.000000e+00> : vector<1x128xf32>
    %341 = tpu.matmul %336, %340, %cst_200 {dimension_numbers = #tpu.dot_dimension_numbers<[1], [0], [0], [1], [0, 0, 1, 1], [], []>} : vector<1x32xf32>, vector<32x128xf32>, vector<1x128xf32> -> vector<1x128xf32>
    %c0_201 = arith.constant 0 : index
    %c0_202 = arith.constant 0 : index
    %342 = vector.load %arg16[%c0_201, %c0_202] : memref<1x128xf32, #tpu.memory_space<vmem>>, vector<1x128xf32>
    %343 = arith.addf %341, %342 : vector<1x128xf32>
    %cst_203 = arith.constant dense<0xFF800000> : vector<1xf32>
    %344 = vector.multi_reduction <maximumf>, %343, %cst_203 [1] : vector<1x128xf32> to vector<1xf32>
    %345 = vector.shape_cast %344 : vector<1xf32> to vector<1x1xf32>
    %346 = vector.broadcast %345 : vector<1x1xf32> to vector<1x128xf32>
    %347 = arith.subf %343, %346 : vector<1x128xf32>
    %348 = math.exp %347 : vector<1x128xf32>
    %cst_204 = arith.constant dense<0.000000e+00> : vector<1xf32>
    %349 = vector.multi_reduction <add>, %348, %cst_204 [1] : vector<1x128xf32> to vector<1xf32>
    %350 = vector.shape_cast %349 : vector<1xf32> to vector<1x1xf32>
    %351 = math.log %350 : vector<1x1xf32>
    %352 = vector.broadcast %351 : vector<1x1xf32> to vector<1x128xf32>
    %353 = arith.subf %347, %352 : vector<1x128xf32>
    %c3_205 = arith.constant 3 : index
    %c0_206 = arith.constant 0 : index
    %354 = vector.load %arg17[%c3_205, %c0_206] : memref<8x128xf32, #tpu.memory_space<vmem>>, vector<1x128xf32>
    tpu.vector_store %arg17[%c3_205, %c0_206], %353 {strides = array<i32>} : memref<8x128xf32, #tpu.memory_space<vmem>>, vector<1x128xf32>,
    %c8_i32_207 = arith.constant 8 : i32
    %355 = arith.muli %arg0, %c8_i32_207 : i32
    %c4_i32 = arith.constant 4 : i32
    %356 = arith.addi %355, %c4_i32 : i32
    %357 = arith.index_cast %356 : i32 to index
    %358 = memref.load %arg1[%357] : memref<8xi32, #tpu.memory_space<smem>>
    %359 = arith.index_cast %358 : i32 to index
    %c0_208 = arith.constant 0 : index
    %360 = vector.load %arg2[%359, %c0_208] : memref<48x32xf32, #tpu.memory_space<vmem>>, vector<1x32xf32>
    %c0_209 = arith.constant 0 : index
    %c0_210 = arith.constant 0 : index
    %361 = vector.load %arg18[%c0_209, %c0_210] : memref<1x32xf32, #tpu.memory_space<vmem>>, vector<1x32xf32>
    %c0_211 = arith.constant 0 : index
    %c0_212 = arith.constant 0 : index
    %362 = vector.load %arg5[%c0_211, %c0_212] : memref<32x128xf32, #tpu.memory_space<vmem>>, vector<32x128xf32>
    %cst_213 = arith.constant dense<0.000000e+00> : vector<1x128xf32>
    %363 = tpu.matmul %360, %362, %cst_213 {dimension_numbers = #tpu.dot_dimension_numbers<[1], [0], [0], [1], [0, 0, 1, 1], [], []>} : vector<1x32xf32>, vector<32x128xf32>, vector<1x128xf32> -> vector<1x128xf32>
    %c0_214 = arith.constant 0 : index
    %c0_215 = arith.constant 0 : index
    %364 = vector.load %arg6[%c0_214, %c0_215] : memref<32x128xf32, #tpu.memory_space<vmem>>, vector<32x128xf32>
    %cst_216 = arith.constant dense<0.000000e+00> : vector<1x128xf32>
    %365 = tpu.matmul %361, %364, %cst_216 {dimension_numbers = #tpu.dot_dimension_numbers<[1], [0], [0], [1], [0, 0, 1, 1], [], []>} : vector<1x32xf32>, vector<32x128xf32>, vector<1x128xf32> -> vector<1x128xf32>
    %366 = arith.addf %363, %365 : vector<1x128xf32>
    %c0_217 = arith.constant 0 : index
    %c0_218 = arith.constant 0 : index
    %367 = vector.load %arg7[%c0_217, %c0_218] : memref<1x128xf32, #tpu.memory_space<vmem>>, vector<1x128xf32>
    %368 = arith.addf %366, %367 : vector<1x128xf32>
    %cst_219 = arith.constant dense<0xFF800000> : vector<1xf32>
    %369 = vector.multi_reduction <maximumf>, %368, %cst_219 [1] : vector<1x128xf32> to vector<1xf32>
    %370 = vector.shape_cast %369 : vector<1xf32> to vector<1x1xf32>
    %371 = vector.broadcast %370 : vector<1x1xf32> to vector<1x128xf32>
    %372 = arith.subf %368, %371 : vector<1x128xf32>
    %373 = math.exp %372 : vector<1x128xf32>
    %cst_220 = arith.constant dense<0.000000e+00> : vector<1xf32>
    %374 = vector.multi_reduction <add>, %373, %cst_220 [1] : vector<1x128xf32> to vector<1xf32>
    %375 = vector.shape_cast %374 : vector<1xf32> to vector<1x1xf32>
    %376 = tpu.reciprocal %375 {approx = true} : vector<1x1xf32> -> vector<1x1xf32>
    %377 = vector.broadcast %376 : vector<1x1xf32> to vector<1x128xf32>
    %378 = arith.mulf %373, %377 : vector<1x128xf32>
    %c4 = arith.constant 4 : index
    %c0_221 = arith.constant 0 : index
    %379 = vector.load %arg19[%c4, %c0_221] : memref<8x128xf32, #tpu.memory_space<vmem>>, vector<1x128xf32>
    tpu.vector_store %arg19[%c4, %c0_221], %378 {strides = array<i32>} : memref<8x128xf32, #tpu.memory_space<vmem>>, vector<1x128xf32>,
    %c0_222 = arith.constant 0 : index
    %c0_223 = arith.constant 0 : index
    %380 = vector.load %arg4[%c0_222, %c0_223] : memref<128x32xf32, #tpu.memory_space<vmem>>, vector<128x32xf32>
    %cst_224 = arith.constant dense<0.000000e+00> : vector<1x32xf32>
    %381 = tpu.matmul %378, %380, %cst_224 {dimension_numbers = #tpu.dot_dimension_numbers<[1], [0], [0], [1], [0, 0, 1, 1], [], []>} : vector<1x128xf32>, vector<128x32xf32>, vector<1x32xf32> -> vector<1x32xf32>
    %c0_225 = arith.constant 0 : index
    %c0_226 = arith.constant 0 : index
    %382 = vector.load %arg8[%c0_225, %c0_226] : memref<32x32xf32, #tpu.memory_space<vmem>>, vector<32x32xf32>
    %cst_227 = arith.constant dense<0.000000e+00> : vector<1x32xf32>
    %383 = tpu.matmul %360, %382, %cst_227 {dimension_numbers = #tpu.dot_dimension_numbers<[1], [0], [0], [1], [0, 0, 1, 1], [], []>} : vector<1x32xf32>, vector<32x32xf32>, vector<1x32xf32> -> vector<1x32xf32>
    %c0_228 = arith.constant 0 : index
    %c0_229 = arith.constant 0 : index
    %384 = vector.load %arg9[%c0_228, %c0_229] : memref<32x32xf32, #tpu.memory_space<vmem>>, vector<32x32xf32>
    %cst_230 = arith.constant dense<0.000000e+00> : vector<1x32xf32>
    %385 = tpu.matmul %381, %384, %cst_230 {dimension_numbers = #tpu.dot_dimension_numbers<[1], [0], [0], [1], [0, 0, 1, 1], [], []>} : vector<1x32xf32>, vector<32x32xf32>, vector<1x32xf32> -> vector<1x32xf32>
    %386 = arith.addf %383, %385 : vector<1x32xf32>
    %c0_231 = arith.constant 0 : index
    %c0_232 = arith.constant 0 : index
    %387 = vector.load %arg10[%c0_231, %c0_232] : memref<1x32xf32, #tpu.memory_space<vmem>>, vector<1x32xf32>
    %388 = arith.addf %386, %387 : vector<1x32xf32>
    %cst_233 = arith.constant 0.000000e+00 : f32
    %389 = vector.broadcast %cst_233 : f32 to vector<1x32xf32>
    %390 = arith.maximumf %388, %389 : vector<1x32xf32>
    %c0_234 = arith.constant 0 : index
    %c0_235 = arith.constant 0 : index
    %391 = vector.load %arg11[%c0_234, %c0_235] : memref<32x96xf32, #tpu.memory_space<vmem>>, vector<32x96xf32>
    %cst_236 = arith.constant dense<0.000000e+00> : vector<1x96xf32>
    %392 = tpu.matmul %390, %391, %cst_236 {dimension_numbers = #tpu.dot_dimension_numbers<[1], [0], [0], [1], [0, 0, 1, 1], [], []>} : vector<1x32xf32>, vector<32x96xf32>, vector<1x96xf32> -> vector<1x96xf32>
    %c0_237 = arith.constant 0 : index
    %c0_238 = arith.constant 0 : index
    %393 = vector.load %arg12[%c0_237, %c0_238] : memref<1x96xf32, #tpu.memory_space<vmem>>, vector<1x96xf32>
    %394 = arith.addf %392, %393 : vector<1x96xf32>
    %c0_239 = arith.constant 0 : index
    %c0_240 = arith.constant 0 : index
    %395 = vector.load %arg13[%c0_239, %c0_240] : memref<32x96xf32, #tpu.memory_space<vmem>>, vector<32x96xf32>
    %cst_241 = arith.constant dense<0.000000e+00> : vector<1x96xf32>
    %396 = tpu.matmul %361, %395, %cst_241 {dimension_numbers = #tpu.dot_dimension_numbers<[1], [0], [0], [1], [0, 0, 1, 1], [], []>} : vector<1x32xf32>, vector<32x96xf32>, vector<1x96xf32> -> vector<1x96xf32>
    %c0_242 = arith.constant 0 : index
    %c0_243 = arith.constant 0 : index
    %397 = vector.load %arg14[%c0_242, %c0_243] : memref<1x96xf32, #tpu.memory_space<vmem>>, vector<1x96xf32>
    %398 = arith.addf %396, %397 : vector<1x96xf32>
    %399 = vector.extract_strided_slice %394 {offsets = [0, 0], sizes = [1, 32], strides = [1, 1]} : vector<1x96xf32> to vector<1x32xf32>
    %400 = vector.extract_strided_slice %398 {offsets = [0, 0], sizes = [1, 32], strides = [1, 1]} : vector<1x96xf32> to vector<1x32xf32>
    %401 = arith.addf %399, %400 : vector<1x32xf32>
    %402 = arith.negf %401 : vector<1x32xf32>
    %403 = math.exp %402 : vector<1x32xf32>
    %cst_244 = arith.constant 1.000000e+00 : f32
    %404 = vector.broadcast %cst_244 : f32 to vector<1x32xf32>
    %405 = arith.addf %404, %403 : vector<1x32xf32>
    %406 = arith.divf %404, %405 : vector<1x32xf32>
    %407 = vector.extract_strided_slice %394 {offsets = [0, 32], sizes = [1, 32], strides = [1, 1]} : vector<1x96xf32> to vector<1x32xf32>
    %408 = vector.extract_strided_slice %398 {offsets = [0, 32], sizes = [1, 32], strides = [1, 1]} : vector<1x96xf32> to vector<1x32xf32>
    %409 = arith.addf %407, %408 : vector<1x32xf32>
    %410 = arith.negf %409 : vector<1x32xf32>
    %411 = math.exp %410 : vector<1x32xf32>
    %cst_245 = arith.constant 1.000000e+00 : f32
    %412 = vector.broadcast %cst_245 : f32 to vector<1x32xf32>
    %413 = arith.addf %412, %411 : vector<1x32xf32>
    %414 = arith.divf %412, %413 : vector<1x32xf32>
    %415 = vector.extract_strided_slice %394 {offsets = [0, 64], sizes = [1, 32], strides = [1, 1]} : vector<1x96xf32> to vector<1x32xf32>
    %416 = vector.extract_strided_slice %398 {offsets = [0, 64], sizes = [1, 32], strides = [1, 1]} : vector<1x96xf32> to vector<1x32xf32>
    %417 = arith.mulf %406, %416 : vector<1x32xf32>
    %418 = arith.addf %415, %417 : vector<1x32xf32>
    %419 = math.tanh %418 : vector<1x32xf32>
    %cst_246 = arith.constant 1.000000e+00 : f32
    %420 = vector.broadcast %cst_246 : f32 to vector<1x32xf32>
    %421 = arith.subf %420, %414 : vector<1x32xf32>
    %422 = arith.mulf %421, %419 : vector<1x32xf32>
    %423 = arith.mulf %414, %361 : vector<1x32xf32>
    %424 = arith.addf %422, %423 : vector<1x32xf32>
    %c6_i32_247 = arith.constant 6 : i32
    %425 = arith.cmpi slt, %356, %c6_i32_247 : i32
    %426 = arith.select %425, %424, %361 : vector<1x32xf32>
    %c0_248 = arith.constant 0 : index
    %c0_249 = arith.constant 0 : index
    %427 = vector.load %arg18[%c0_248, %c0_249] : memref<1x32xf32, #tpu.memory_space<vmem>>, vector<1x32xf32>
    tpu.vector_store %arg18[%c0_248, %c0_249], %426 {strides = array<i32>} : memref<1x32xf32, #tpu.memory_space<vmem>>, vector<1x32xf32>,
    %c0_250 = arith.constant 0 : index
    %c0_251 = arith.constant 0 : index
    %428 = vector.load %arg15[%c0_250, %c0_251] : memref<32x128xf32, #tpu.memory_space<vmem>>, vector<32x128xf32>
    %cst_252 = arith.constant dense<0.000000e+00> : vector<1x128xf32>
    %429 = tpu.matmul %424, %428, %cst_252 {dimension_numbers = #tpu.dot_dimension_numbers<[1], [0], [0], [1], [0, 0, 1, 1], [], []>} : vector<1x32xf32>, vector<32x128xf32>, vector<1x128xf32> -> vector<1x128xf32>
    %c0_253 = arith.constant 0 : index
    %c0_254 = arith.constant 0 : index
    %430 = vector.load %arg16[%c0_253, %c0_254] : memref<1x128xf32, #tpu.memory_space<vmem>>, vector<1x128xf32>
    %431 = arith.addf %429, %430 : vector<1x128xf32>
    %cst_255 = arith.constant dense<0xFF800000> : vector<1xf32>
    %432 = vector.multi_reduction <maximumf>, %431, %cst_255 [1] : vector<1x128xf32> to vector<1xf32>
    %433 = vector.shape_cast %432 : vector<1xf32> to vector<1x1xf32>
    %434 = vector.broadcast %433 : vector<1x1xf32> to vector<1x128xf32>
    %435 = arith.subf %431, %434 : vector<1x128xf32>
    %436 = math.exp %435 : vector<1x128xf32>
    %cst_256 = arith.constant dense<0.000000e+00> : vector<1xf32>
    %437 = vector.multi_reduction <add>, %436, %cst_256 [1] : vector<1x128xf32> to vector<1xf32>
    %438 = vector.shape_cast %437 : vector<1xf32> to vector<1x1xf32>
    %439 = math.log %438 : vector<1x1xf32>
    %440 = vector.broadcast %439 : vector<1x1xf32> to vector<1x128xf32>
    %441 = arith.subf %435, %440 : vector<1x128xf32>
    %c4_257 = arith.constant 4 : index
    %c0_258 = arith.constant 0 : index
    %442 = vector.load %arg17[%c4_257, %c0_258] : memref<8x128xf32, #tpu.memory_space<vmem>>, vector<1x128xf32>
    tpu.vector_store %arg17[%c4_257, %c0_258], %441 {strides = array<i32>} : memref<8x128xf32, #tpu.memory_space<vmem>>, vector<1x128xf32>,
    %c8_i32_259 = arith.constant 8 : i32
    %443 = arith.muli %arg0, %c8_i32_259 : i32
    %c5_i32 = arith.constant 5 : i32
    %444 = arith.addi %443, %c5_i32 : i32
    %445 = arith.index_cast %444 : i32 to index
    %446 = memref.load %arg1[%445] : memref<8xi32, #tpu.memory_space<smem>>
    %447 = arith.index_cast %446 : i32 to index
    %c0_260 = arith.constant 0 : index
    %448 = vector.load %arg2[%447, %c0_260] : memref<48x32xf32, #tpu.memory_space<vmem>>, vector<1x32xf32>
    %c0_261 = arith.constant 0 : index
    %c0_262 = arith.constant 0 : index
    %449 = vector.load %arg18[%c0_261, %c0_262] : memref<1x32xf32, #tpu.memory_space<vmem>>, vector<1x32xf32>
    %c0_263 = arith.constant 0 : index
    %c0_264 = arith.constant 0 : index
    %450 = vector.load %arg5[%c0_263, %c0_264] : memref<32x128xf32, #tpu.memory_space<vmem>>, vector<32x128xf32>
    %cst_265 = arith.constant dense<0.000000e+00> : vector<1x128xf32>
    %451 = tpu.matmul %448, %450, %cst_265 {dimension_numbers = #tpu.dot_dimension_numbers<[1], [0], [0], [1], [0, 0, 1, 1], [], []>} : vector<1x32xf32>, vector<32x128xf32>, vector<1x128xf32> -> vector<1x128xf32>
    %c0_266 = arith.constant 0 : index
    %c0_267 = arith.constant 0 : index
    %452 = vector.load %arg6[%c0_266, %c0_267] : memref<32x128xf32, #tpu.memory_space<vmem>>, vector<32x128xf32>
    %cst_268 = arith.constant dense<0.000000e+00> : vector<1x128xf32>
    %453 = tpu.matmul %449, %452, %cst_268 {dimension_numbers = #tpu.dot_dimension_numbers<[1], [0], [0], [1], [0, 0, 1, 1], [], []>} : vector<1x32xf32>, vector<32x128xf32>, vector<1x128xf32> -> vector<1x128xf32>
    %454 = arith.addf %451, %453 : vector<1x128xf32>
    %c0_269 = arith.constant 0 : index
    %c0_270 = arith.constant 0 : index
    %455 = vector.load %arg7[%c0_269, %c0_270] : memref<1x128xf32, #tpu.memory_space<vmem>>, vector<1x128xf32>
    %456 = arith.addf %454, %455 : vector<1x128xf32>
    %cst_271 = arith.constant dense<0xFF800000> : vector<1xf32>
    %457 = vector.multi_reduction <maximumf>, %456, %cst_271 [1] : vector<1x128xf32> to vector<1xf32>
    %458 = vector.shape_cast %457 : vector<1xf32> to vector<1x1xf32>
    %459 = vector.broadcast %458 : vector<1x1xf32> to vector<1x128xf32>
    %460 = arith.subf %456, %459 : vector<1x128xf32>
    %461 = math.exp %460 : vector<1x128xf32>
    %cst_272 = arith.constant dense<0.000000e+00> : vector<1xf32>
    %462 = vector.multi_reduction <add>, %461, %cst_272 [1] : vector<1x128xf32> to vector<1xf32>
    %463 = vector.shape_cast %462 : vector<1xf32> to vector<1x1xf32>
    %464 = tpu.reciprocal %463 {approx = true} : vector<1x1xf32> -> vector<1x1xf32>
    %465 = vector.broadcast %464 : vector<1x1xf32> to vector<1x128xf32>
    %466 = arith.mulf %461, %465 : vector<1x128xf32>
    %c5 = arith.constant 5 : index
    %c0_273 = arith.constant 0 : index
    %467 = vector.load %arg19[%c5, %c0_273] : memref<8x128xf32, #tpu.memory_space<vmem>>, vector<1x128xf32>
    tpu.vector_store %arg19[%c5, %c0_273], %466 {strides = array<i32>} : memref<8x128xf32, #tpu.memory_space<vmem>>, vector<1x128xf32>,
    %c0_274 = arith.constant 0 : index
    %c0_275 = arith.constant 0 : index
    %468 = vector.load %arg4[%c0_274, %c0_275] : memref<128x32xf32, #tpu.memory_space<vmem>>, vector<128x32xf32>
    %cst_276 = arith.constant dense<0.000000e+00> : vector<1x32xf32>
    %469 = tpu.matmul %466, %468, %cst_276 {dimension_numbers = #tpu.dot_dimension_numbers<[1], [0], [0], [1], [0, 0, 1, 1], [], []>} : vector<1x128xf32>, vector<128x32xf32>, vector<1x32xf32> -> vector<1x32xf32>
    %c0_277 = arith.constant 0 : index
    %c0_278 = arith.constant 0 : index
    %470 = vector.load %arg8[%c0_277, %c0_278] : memref<32x32xf32, #tpu.memory_space<vmem>>, vector<32x32xf32>
    %cst_279 = arith.constant dense<0.000000e+00> : vector<1x32xf32>
    %471 = tpu.matmul %448, %470, %cst_279 {dimension_numbers = #tpu.dot_dimension_numbers<[1], [0], [0], [1], [0, 0, 1, 1], [], []>} : vector<1x32xf32>, vector<32x32xf32>, vector<1x32xf32> -> vector<1x32xf32>
    %c0_280 = arith.constant 0 : index
    %c0_281 = arith.constant 0 : index
    %472 = vector.load %arg9[%c0_280, %c0_281] : memref<32x32xf32, #tpu.memory_space<vmem>>, vector<32x32xf32>
    %cst_282 = arith.constant dense<0.000000e+00> : vector<1x32xf32>
    %473 = tpu.matmul %469, %472, %cst_282 {dimension_numbers = #tpu.dot_dimension_numbers<[1], [0], [0], [1], [0, 0, 1, 1], [], []>} : vector<1x32xf32>, vector<32x32xf32>, vector<1x32xf32> -> vector<1x32xf32>
    %474 = arith.addf %471, %473 : vector<1x32xf32>
    %c0_283 = arith.constant 0 : index
    %c0_284 = arith.constant 0 : index
    %475 = vector.load %arg10[%c0_283, %c0_284] : memref<1x32xf32, #tpu.memory_space<vmem>>, vector<1x32xf32>
    %476 = arith.addf %474, %475 : vector<1x32xf32>
    %cst_285 = arith.constant 0.000000e+00 : f32
    %477 = vector.broadcast %cst_285 : f32 to vector<1x32xf32>
    %478 = arith.maximumf %476, %477 : vector<1x32xf32>
    %c0_286 = arith.constant 0 : index
    %c0_287 = arith.constant 0 : index
    %479 = vector.load %arg11[%c0_286, %c0_287] : memref<32x96xf32, #tpu.memory_space<vmem>>, vector<32x96xf32>
    %cst_288 = arith.constant dense<0.000000e+00> : vector<1x96xf32>
    %480 = tpu.matmul %478, %479, %cst_288 {dimension_numbers = #tpu.dot_dimension_numbers<[1], [0], [0], [1], [0, 0, 1, 1], [], []>} : vector<1x32xf32>, vector<32x96xf32>, vector<1x96xf32> -> vector<1x96xf32>
    %c0_289 = arith.constant 0 : index
    %c0_290 = arith.constant 0 : index
    %481 = vector.load %arg12[%c0_289, %c0_290] : memref<1x96xf32, #tpu.memory_space<vmem>>, vector<1x96xf32>
    %482 = arith.addf %480, %481 : vector<1x96xf32>
    %c0_291 = arith.constant 0 : index
    %c0_292 = arith.constant 0 : index
    %483 = vector.load %arg13[%c0_291, %c0_292] : memref<32x96xf32, #tpu.memory_space<vmem>>, vector<32x96xf32>
    %cst_293 = arith.constant dense<0.000000e+00> : vector<1x96xf32>
    %484 = tpu.matmul %449, %483, %cst_293 {dimension_numbers = #tpu.dot_dimension_numbers<[1], [0], [0], [1], [0, 0, 1, 1], [], []>} : vector<1x32xf32>, vector<32x96xf32>, vector<1x96xf32> -> vector<1x96xf32>
    %c0_294 = arith.constant 0 : index
    %c0_295 = arith.constant 0 : index
    %485 = vector.load %arg14[%c0_294, %c0_295] : memref<1x96xf32, #tpu.memory_space<vmem>>, vector<1x96xf32>
    %486 = arith.addf %484, %485 : vector<1x96xf32>
    %487 = vector.extract_strided_slice %482 {offsets = [0, 0], sizes = [1, 32], strides = [1, 1]} : vector<1x96xf32> to vector<1x32xf32>
    %488 = vector.extract_strided_slice %486 {offsets = [0, 0], sizes = [1, 32], strides = [1, 1]} : vector<1x96xf32> to vector<1x32xf32>
    %489 = arith.addf %487, %488 : vector<1x32xf32>
    %490 = arith.negf %489 : vector<1x32xf32>
    %491 = math.exp %490 : vector<1x32xf32>
    %cst_296 = arith.constant 1.000000e+00 : f32
    %492 = vector.broadcast %cst_296 : f32 to vector<1x32xf32>
    %493 = arith.addf %492, %491 : vector<1x32xf32>
    %494 = arith.divf %492, %493 : vector<1x32xf32>
    %495 = vector.extract_strided_slice %482 {offsets = [0, 32], sizes = [1, 32], strides = [1, 1]} : vector<1x96xf32> to vector<1x32xf32>
    %496 = vector.extract_strided_slice %486 {offsets = [0, 32], sizes = [1, 32], strides = [1, 1]} : vector<1x96xf32> to vector<1x32xf32>
    %497 = arith.addf %495, %496 : vector<1x32xf32>
    %498 = arith.negf %497 : vector<1x32xf32>
    %499 = math.exp %498 : vector<1x32xf32>
    %cst_297 = arith.constant 1.000000e+00 : f32
    %500 = vector.broadcast %cst_297 : f32 to vector<1x32xf32>
    %501 = arith.addf %500, %499 : vector<1x32xf32>
    %502 = arith.divf %500, %501 : vector<1x32xf32>
    %503 = vector.extract_strided_slice %482 {offsets = [0, 64], sizes = [1, 32], strides = [1, 1]} : vector<1x96xf32> to vector<1x32xf32>
    %504 = vector.extract_strided_slice %486 {offsets = [0, 64], sizes = [1, 32], strides = [1, 1]} : vector<1x96xf32> to vector<1x32xf32>
    %505 = arith.mulf %494, %504 : vector<1x32xf32>
    %506 = arith.addf %503, %505 : vector<1x32xf32>
    %507 = math.tanh %506 : vector<1x32xf32>
    %cst_298 = arith.constant 1.000000e+00 : f32
    %508 = vector.broadcast %cst_298 : f32 to vector<1x32xf32>
    %509 = arith.subf %508, %502 : vector<1x32xf32>
    %510 = arith.mulf %509, %507 : vector<1x32xf32>
    %511 = arith.mulf %502, %449 : vector<1x32xf32>
    %512 = arith.addf %510, %511 : vector<1x32xf32>
    %c6_i32_299 = arith.constant 6 : i32
    %513 = arith.cmpi slt, %444, %c6_i32_299 : i32
    %514 = arith.select %513, %512, %449 : vector<1x32xf32>
    %c0_300 = arith.constant 0 : index
    %c0_301 = arith.constant 0 : index
    %515 = vector.load %arg18[%c0_300, %c0_301] : memref<1x32xf32, #tpu.memory_space<vmem>>, vector<1x32xf32>
    tpu.vector_store %arg18[%c0_300, %c0_301], %514 {strides = array<i32>} : memref<1x32xf32, #tpu.memory_space<vmem>>, vector<1x32xf32>,
    %c0_302 = arith.constant 0 : index
    %c0_303 = arith.constant 0 : index
    %516 = vector.load %arg15[%c0_302, %c0_303] : memref<32x128xf32, #tpu.memory_space<vmem>>, vector<32x128xf32>
    %cst_304 = arith.constant dense<0.000000e+00> : vector<1x128xf32>
    %517 = tpu.matmul %512, %516, %cst_304 {dimension_numbers = #tpu.dot_dimension_numbers<[1], [0], [0], [1], [0, 0, 1, 1], [], []>} : vector<1x32xf32>, vector<32x128xf32>, vector<1x128xf32> -> vector<1x128xf32>
    %c0_305 = arith.constant 0 : index
    %c0_306 = arith.constant 0 : index
    %518 = vector.load %arg16[%c0_305, %c0_306] : memref<1x128xf32, #tpu.memory_space<vmem>>, vector<1x128xf32>
    %519 = arith.addf %517, %518 : vector<1x128xf32>
    %cst_307 = arith.constant dense<0xFF800000> : vector<1xf32>
    %520 = vector.multi_reduction <maximumf>, %519, %cst_307 [1] : vector<1x128xf32> to vector<1xf32>
    %521 = vector.shape_cast %520 : vector<1xf32> to vector<1x1xf32>
    %522 = vector.broadcast %521 : vector<1x1xf32> to vector<1x128xf32>
    %523 = arith.subf %519, %522 : vector<1x128xf32>
    %524 = math.exp %523 : vector<1x128xf32>
    %cst_308 = arith.constant dense<0.000000e+00> : vector<1xf32>
    %525 = vector.multi_reduction <add>, %524, %cst_308 [1] : vector<1x128xf32> to vector<1xf32>
    %526 = vector.shape_cast %525 : vector<1xf32> to vector<1x1xf32>
    %527 = math.log %526 : vector<1x1xf32>
    %528 = vector.broadcast %527 : vector<1x1xf32> to vector<1x128xf32>
    %529 = arith.subf %523, %528 : vector<1x128xf32>
    %c5_309 = arith.constant 5 : index
    %c0_310 = arith.constant 0 : index
    %530 = vector.load %arg17[%c5_309, %c0_310] : memref<8x128xf32, #tpu.memory_space<vmem>>, vector<1x128xf32>
    tpu.vector_store %arg17[%c5_309, %c0_310], %529 {strides = array<i32>} : memref<8x128xf32, #tpu.memory_space<vmem>>, vector<1x128xf32>,
    %c8_i32_311 = arith.constant 8 : i32
    %531 = arith.muli %arg0, %c8_i32_311 : i32
    %c6_i32_312 = arith.constant 6 : i32
    %532 = arith.addi %531, %c6_i32_312 : i32
    %533 = arith.index_cast %532 : i32 to index
    %534 = memref.load %arg1[%533] : memref<8xi32, #tpu.memory_space<smem>>
    %535 = arith.index_cast %534 : i32 to index
    %c0_313 = arith.constant 0 : index
    %536 = vector.load %arg2[%535, %c0_313] : memref<48x32xf32, #tpu.memory_space<vmem>>, vector<1x32xf32>
    %c0_314 = arith.constant 0 : index
    %c0_315 = arith.constant 0 : index
    %537 = vector.load %arg18[%c0_314, %c0_315] : memref<1x32xf32, #tpu.memory_space<vmem>>, vector<1x32xf32>
    %c0_316 = arith.constant 0 : index
    %c0_317 = arith.constant 0 : index
    %538 = vector.load %arg5[%c0_316, %c0_317] : memref<32x128xf32, #tpu.memory_space<vmem>>, vector<32x128xf32>
    %cst_318 = arith.constant dense<0.000000e+00> : vector<1x128xf32>
    %539 = tpu.matmul %536, %538, %cst_318 {dimension_numbers = #tpu.dot_dimension_numbers<[1], [0], [0], [1], [0, 0, 1, 1], [], []>} : vector<1x32xf32>, vector<32x128xf32>, vector<1x128xf32> -> vector<1x128xf32>
    %c0_319 = arith.constant 0 : index
    %c0_320 = arith.constant 0 : index
    %540 = vector.load %arg6[%c0_319, %c0_320] : memref<32x128xf32, #tpu.memory_space<vmem>>, vector<32x128xf32>
    %cst_321 = arith.constant dense<0.000000e+00> : vector<1x128xf32>
    %541 = tpu.matmul %537, %540, %cst_321 {dimension_numbers = #tpu.dot_dimension_numbers<[1], [0], [0], [1], [0, 0, 1, 1], [], []>} : vector<1x32xf32>, vector<32x128xf32>, vector<1x128xf32> -> vector<1x128xf32>
    %542 = arith.addf %539, %541 : vector<1x128xf32>
    %c0_322 = arith.constant 0 : index
    %c0_323 = arith.constant 0 : index
    %543 = vector.load %arg7[%c0_322, %c0_323] : memref<1x128xf32, #tpu.memory_space<vmem>>, vector<1x128xf32>
    %544 = arith.addf %542, %543 : vector<1x128xf32>
    %cst_324 = arith.constant dense<0xFF800000> : vector<1xf32>
    %545 = vector.multi_reduction <maximumf>, %544, %cst_324 [1] : vector<1x128xf32> to vector<1xf32>
    %546 = vector.shape_cast %545 : vector<1xf32> to vector<1x1xf32>
    %547 = vector.broadcast %546 : vector<1x1xf32> to vector<1x128xf32>
    %548 = arith.subf %544, %547 : vector<1x128xf32>
    %549 = math.exp %548 : vector<1x128xf32>
    %cst_325 = arith.constant dense<0.000000e+00> : vector<1xf32>
    %550 = vector.multi_reduction <add>, %549, %cst_325 [1] : vector<1x128xf32> to vector<1xf32>
    %551 = vector.shape_cast %550 : vector<1xf32> to vector<1x1xf32>
    %552 = tpu.reciprocal %551 {approx = true} : vector<1x1xf32> -> vector<1x1xf32>
    %553 = vector.broadcast %552 : vector<1x1xf32> to vector<1x128xf32>
    %554 = arith.mulf %549, %553 : vector<1x128xf32>
    %c6 = arith.constant 6 : index
    %c0_326 = arith.constant 0 : index
    %555 = vector.load %arg19[%c6, %c0_326] : memref<8x128xf32, #tpu.memory_space<vmem>>, vector<1x128xf32>
    tpu.vector_store %arg19[%c6, %c0_326], %554 {strides = array<i32>} : memref<8x128xf32, #tpu.memory_space<vmem>>, vector<1x128xf32>,
    %c0_327 = arith.constant 0 : index
    %c0_328 = arith.constant 0 : index
    %556 = vector.load %arg4[%c0_327, %c0_328] : memref<128x32xf32, #tpu.memory_space<vmem>>, vector<128x32xf32>
    %cst_329 = arith.constant dense<0.000000e+00> : vector<1x32xf32>
    %557 = tpu.matmul %554, %556, %cst_329 {dimension_numbers = #tpu.dot_dimension_numbers<[1], [0], [0], [1], [0, 0, 1, 1], [], []>} : vector<1x128xf32>, vector<128x32xf32>, vector<1x32xf32> -> vector<1x32xf32>
    %c0_330 = arith.constant 0 : index
    %c0_331 = arith.constant 0 : index
    %558 = vector.load %arg8[%c0_330, %c0_331] : memref<32x32xf32, #tpu.memory_space<vmem>>, vector<32x32xf32>
    %cst_332 = arith.constant dense<0.000000e+00> : vector<1x32xf32>
    %559 = tpu.matmul %536, %558, %cst_332 {dimension_numbers = #tpu.dot_dimension_numbers<[1], [0], [0], [1], [0, 0, 1, 1], [], []>} : vector<1x32xf32>, vector<32x32xf32>, vector<1x32xf32> -> vector<1x32xf32>
    %c0_333 = arith.constant 0 : index
    %c0_334 = arith.constant 0 : index
    %560 = vector.load %arg9[%c0_333, %c0_334] : memref<32x32xf32, #tpu.memory_space<vmem>>, vector<32x32xf32>
    %cst_335 = arith.constant dense<0.000000e+00> : vector<1x32xf32>
    %561 = tpu.matmul %557, %560, %cst_335 {dimension_numbers = #tpu.dot_dimension_numbers<[1], [0], [0], [1], [0, 0, 1, 1], [], []>} : vector<1x32xf32>, vector<32x32xf32>, vector<1x32xf32> -> vector<1x32xf32>
    %562 = arith.addf %559, %561 : vector<1x32xf32>
    %c0_336 = arith.constant 0 : index
    %c0_337 = arith.constant 0 : index
    %563 = vector.load %arg10[%c0_336, %c0_337] : memref<1x32xf32, #tpu.memory_space<vmem>>, vector<1x32xf32>
    %564 = arith.addf %562, %563 : vector<1x32xf32>
    %cst_338 = arith.constant 0.000000e+00 : f32
    %565 = vector.broadcast %cst_338 : f32 to vector<1x32xf32>
    %566 = arith.maximumf %564, %565 : vector<1x32xf32>
    %c0_339 = arith.constant 0 : index
    %c0_340 = arith.constant 0 : index
    %567 = vector.load %arg11[%c0_339, %c0_340] : memref<32x96xf32, #tpu.memory_space<vmem>>, vector<32x96xf32>
    %cst_341 = arith.constant dense<0.000000e+00> : vector<1x96xf32>
    %568 = tpu.matmul %566, %567, %cst_341 {dimension_numbers = #tpu.dot_dimension_numbers<[1], [0], [0], [1], [0, 0, 1, 1], [], []>} : vector<1x32xf32>, vector<32x96xf32>, vector<1x96xf32> -> vector<1x96xf32>
    %c0_342 = arith.constant 0 : index
    %c0_343 = arith.constant 0 : index
    %569 = vector.load %arg12[%c0_342, %c0_343] : memref<1x96xf32, #tpu.memory_space<vmem>>, vector<1x96xf32>
    %570 = arith.addf %568, %569 : vector<1x96xf32>
    %c0_344 = arith.constant 0 : index
    %c0_345 = arith.constant 0 : index
    %571 = vector.load %arg13[%c0_344, %c0_345] : memref<32x96xf32, #tpu.memory_space<vmem>>, vector<32x96xf32>
    %cst_346 = arith.constant dense<0.000000e+00> : vector<1x96xf32>
    %572 = tpu.matmul %537, %571, %cst_346 {dimension_numbers = #tpu.dot_dimension_numbers<[1], [0], [0], [1], [0, 0, 1, 1], [], []>} : vector<1x32xf32>, vector<32x96xf32>, vector<1x96xf32> -> vector<1x96xf32>
    %c0_347 = arith.constant 0 : index
    %c0_348 = arith.constant 0 : index
    %573 = vector.load %arg14[%c0_347, %c0_348] : memref<1x96xf32, #tpu.memory_space<vmem>>, vector<1x96xf32>
    %574 = arith.addf %572, %573 : vector<1x96xf32>
    %575 = vector.extract_strided_slice %570 {offsets = [0, 0], sizes = [1, 32], strides = [1, 1]} : vector<1x96xf32> to vector<1x32xf32>
    %576 = vector.extract_strided_slice %574 {offsets = [0, 0], sizes = [1, 32], strides = [1, 1]} : vector<1x96xf32> to vector<1x32xf32>
    %577 = arith.addf %575, %576 : vector<1x32xf32>
    %578 = arith.negf %577 : vector<1x32xf32>
    %579 = math.exp %578 : vector<1x32xf32>
    %cst_349 = arith.constant 1.000000e+00 : f32
    %580 = vector.broadcast %cst_349 : f32 to vector<1x32xf32>
    %581 = arith.addf %580, %579 : vector<1x32xf32>
    %582 = arith.divf %580, %581 : vector<1x32xf32>
    %583 = vector.extract_strided_slice %570 {offsets = [0, 32], sizes = [1, 32], strides = [1, 1]} : vector<1x96xf32> to vector<1x32xf32>
    %584 = vector.extract_strided_slice %574 {offsets = [0, 32], sizes = [1, 32], strides = [1, 1]} : vector<1x96xf32> to vector<1x32xf32>
    %585 = arith.addf %583, %584 : vector<1x32xf32>
    %586 = arith.negf %585 : vector<1x32xf32>
    %587 = math.exp %586 : vector<1x32xf32>
    %cst_350 = arith.constant 1.000000e+00 : f32
    %588 = vector.broadcast %cst_350 : f32 to vector<1x32xf32>
    %589 = arith.addf %588, %587 : vector<1x32xf32>
    %590 = arith.divf %588, %589 : vector<1x32xf32>
    %591 = vector.extract_strided_slice %570 {offsets = [0, 64], sizes = [1, 32], strides = [1, 1]} : vector<1x96xf32> to vector<1x32xf32>
    %592 = vector.extract_strided_slice %574 {offsets = [0, 64], sizes = [1, 32], strides = [1, 1]} : vector<1x96xf32> to vector<1x32xf32>
    %593 = arith.mulf %582, %592 : vector<1x32xf32>
    %594 = arith.addf %591, %593 : vector<1x32xf32>
    %595 = math.tanh %594 : vector<1x32xf32>
    %cst_351 = arith.constant 1.000000e+00 : f32
    %596 = vector.broadcast %cst_351 : f32 to vector<1x32xf32>
    %597 = arith.subf %596, %590 : vector<1x32xf32>
    %598 = arith.mulf %597, %595 : vector<1x32xf32>
    %599 = arith.mulf %590, %537 : vector<1x32xf32>
    %600 = arith.addf %598, %599 : vector<1x32xf32>
    %c6_i32_352 = arith.constant 6 : i32
    %601 = arith.cmpi slt, %532, %c6_i32_352 : i32
    %602 = arith.select %601, %600, %537 : vector<1x32xf32>
    %c0_353 = arith.constant 0 : index
    %c0_354 = arith.constant 0 : index
    %603 = vector.load %arg18[%c0_353, %c0_354] : memref<1x32xf32, #tpu.memory_space<vmem>>, vector<1x32xf32>
    tpu.vector_store %arg18[%c0_353, %c0_354], %602 {strides = array<i32>} : memref<1x32xf32, #tpu.memory_space<vmem>>, vector<1x32xf32>,
    %c0_355 = arith.constant 0 : index
    %c0_356 = arith.constant 0 : index
    %604 = vector.load %arg15[%c0_355, %c0_356] : memref<32x128xf32, #tpu.memory_space<vmem>>, vector<32x128xf32>
    %cst_357 = arith.constant dense<0.000000e+00> : vector<1x128xf32>
    %605 = tpu.matmul %600, %604, %cst_357 {dimension_numbers = #tpu.dot_dimension_numbers<[1], [0], [0], [1], [0, 0, 1, 1], [], []>} : vector<1x32xf32>, vector<32x128xf32>, vector<1x128xf32> -> vector<1x128xf32>
    %c0_358 = arith.constant 0 : index
    %c0_359 = arith.constant 0 : index
    %606 = vector.load %arg16[%c0_358, %c0_359] : memref<1x128xf32, #tpu.memory_space<vmem>>, vector<1x128xf32>
    %607 = arith.addf %605, %606 : vector<1x128xf32>
    %cst_360 = arith.constant dense<0xFF800000> : vector<1xf32>
    %608 = vector.multi_reduction <maximumf>, %607, %cst_360 [1] : vector<1x128xf32> to vector<1xf32>
    %609 = vector.shape_cast %608 : vector<1xf32> to vector<1x1xf32>
    %610 = vector.broadcast %609 : vector<1x1xf32> to vector<1x128xf32>
    %611 = arith.subf %607, %610 : vector<1x128xf32>
    %612 = math.exp %611 : vector<1x128xf32>
    %cst_361 = arith.constant dense<0.000000e+00> : vector<1xf32>
    %613 = vector.multi_reduction <add>, %612, %cst_361 [1] : vector<1x128xf32> to vector<1xf32>
    %614 = vector.shape_cast %613 : vector<1xf32> to vector<1x1xf32>
    %615 = math.log %614 : vector<1x1xf32>
    %616 = vector.broadcast %615 : vector<1x1xf32> to vector<1x128xf32>
    %617 = arith.subf %611, %616 : vector<1x128xf32>
    %c6_362 = arith.constant 6 : index
    %c0_363 = arith.constant 0 : index
    %618 = vector.load %arg17[%c6_362, %c0_363] : memref<8x128xf32, #tpu.memory_space<vmem>>, vector<1x128xf32>
    tpu.vector_store %arg17[%c6_362, %c0_363], %617 {strides = array<i32>} : memref<8x128xf32, #tpu.memory_space<vmem>>, vector<1x128xf32>,
    %c8_i32_364 = arith.constant 8 : i32
    %619 = arith.muli %arg0, %c8_i32_364 : i32
    %c7_i32 = arith.constant 7 : i32
    %620 = arith.addi %619, %c7_i32 : i32
    %621 = arith.index_cast %620 : i32 to index
    %622 = memref.load %arg1[%621] : memref<8xi32, #tpu.memory_space<smem>>
    %623 = arith.index_cast %622 : i32 to index
    %c0_365 = arith.constant 0 : index
    %624 = vector.load %arg2[%623, %c0_365] : memref<48x32xf32, #tpu.memory_space<vmem>>, vector<1x32xf32>
    %c0_366 = arith.constant 0 : index
    %c0_367 = arith.constant 0 : index
    %625 = vector.load %arg18[%c0_366, %c0_367] : memref<1x32xf32, #tpu.memory_space<vmem>>, vector<1x32xf32>
    %c0_368 = arith.constant 0 : index
    %c0_369 = arith.constant 0 : index
    %626 = vector.load %arg5[%c0_368, %c0_369] : memref<32x128xf32, #tpu.memory_space<vmem>>, vector<32x128xf32>
    %cst_370 = arith.constant dense<0.000000e+00> : vector<1x128xf32>
    %627 = tpu.matmul %624, %626, %cst_370 {dimension_numbers = #tpu.dot_dimension_numbers<[1], [0], [0], [1], [0, 0, 1, 1], [], []>} : vector<1x32xf32>, vector<32x128xf32>, vector<1x128xf32> -> vector<1x128xf32>
    %c0_371 = arith.constant 0 : index
    %c0_372 = arith.constant 0 : index
    %628 = vector.load %arg6[%c0_371, %c0_372] : memref<32x128xf32, #tpu.memory_space<vmem>>, vector<32x128xf32>
    %cst_373 = arith.constant dense<0.000000e+00> : vector<1x128xf32>
    %629 = tpu.matmul %625, %628, %cst_373 {dimension_numbers = #tpu.dot_dimension_numbers<[1], [0], [0], [1], [0, 0, 1, 1], [], []>} : vector<1x32xf32>, vector<32x128xf32>, vector<1x128xf32> -> vector<1x128xf32>
    %630 = arith.addf %627, %629 : vector<1x128xf32>
    %c0_374 = arith.constant 0 : index
    %c0_375 = arith.constant 0 : index
    %631 = vector.load %arg7[%c0_374, %c0_375] : memref<1x128xf32, #tpu.memory_space<vmem>>, vector<1x128xf32>
    %632 = arith.addf %630, %631 : vector<1x128xf32>
    %cst_376 = arith.constant dense<0xFF800000> : vector<1xf32>
    %633 = vector.multi_reduction <maximumf>, %632, %cst_376 [1] : vector<1x128xf32> to vector<1xf32>
    %634 = vector.shape_cast %633 : vector<1xf32> to vector<1x1xf32>
    %635 = vector.broadcast %634 : vector<1x1xf32> to vector<1x128xf32>
    %636 = arith.subf %632, %635 : vector<1x128xf32>
    %637 = math.exp %636 : vector<1x128xf32>
    %cst_377 = arith.constant dense<0.000000e+00> : vector<1xf32>
    %638 = vector.multi_reduction <add>, %637, %cst_377 [1] : vector<1x128xf32> to vector<1xf32>
    %639 = vector.shape_cast %638 : vector<1xf32> to vector<1x1xf32>
    %640 = tpu.reciprocal %639 {approx = true} : vector<1x1xf32> -> vector<1x1xf32>
    %641 = vector.broadcast %640 : vector<1x1xf32> to vector<1x128xf32>
    %642 = arith.mulf %637, %641 : vector<1x128xf32>
    %c7 = arith.constant 7 : index
    %c0_378 = arith.constant 0 : index
    %643 = vector.load %arg19[%c7, %c0_378] : memref<8x128xf32, #tpu.memory_space<vmem>>, vector<1x128xf32>
    tpu.vector_store %arg19[%c7, %c0_378], %642 {strides = array<i32>} : memref<8x128xf32, #tpu.memory_space<vmem>>, vector<1x128xf32>,
    %c0_379 = arith.constant 0 : index
    %c0_380 = arith.constant 0 : index
    %644 = vector.load %arg4[%c0_379, %c0_380] : memref<128x32xf32, #tpu.memory_space<vmem>>, vector<128x32xf32>
    %cst_381 = arith.constant dense<0.000000e+00> : vector<1x32xf32>
    %645 = tpu.matmul %642, %644, %cst_381 {dimension_numbers = #tpu.dot_dimension_numbers<[1], [0], [0], [1], [0, 0, 1, 1], [], []>} : vector<1x128xf32>, vector<128x32xf32>, vector<1x32xf32> -> vector<1x32xf32>
    %c0_382 = arith.constant 0 : index
    %c0_383 = arith.constant 0 : index
    %646 = vector.load %arg8[%c0_382, %c0_383] : memref<32x32xf32, #tpu.memory_space<vmem>>, vector<32x32xf32>
    %cst_384 = arith.constant dense<0.000000e+00> : vector<1x32xf32>
    %647 = tpu.matmul %624, %646, %cst_384 {dimension_numbers = #tpu.dot_dimension_numbers<[1], [0], [0], [1], [0, 0, 1, 1], [], []>} : vector<1x32xf32>, vector<32x32xf32>, vector<1x32xf32> -> vector<1x32xf32>
    %c0_385 = arith.constant 0 : index
    %c0_386 = arith.constant 0 : index
    %648 = vector.load %arg9[%c0_385, %c0_386] : memref<32x32xf32, #tpu.memory_space<vmem>>, vector<32x32xf32>
    %cst_387 = arith.constant dense<0.000000e+00> : vector<1x32xf32>
    %649 = tpu.matmul %645, %648, %cst_387 {dimension_numbers = #tpu.dot_dimension_numbers<[1], [0], [0], [1], [0, 0, 1, 1], [], []>} : vector<1x32xf32>, vector<32x32xf32>, vector<1x32xf32> -> vector<1x32xf32>
    %650 = arith.addf %647, %649 : vector<1x32xf32>
    %c0_388 = arith.constant 0 : index
    %c0_389 = arith.constant 0 : index
    %651 = vector.load %arg10[%c0_388, %c0_389] : memref<1x32xf32, #tpu.memory_space<vmem>>, vector<1x32xf32>
    %652 = arith.addf %650, %651 : vector<1x32xf32>
    %cst_390 = arith.constant 0.000000e+00 : f32
    %653 = vector.broadcast %cst_390 : f32 to vector<1x32xf32>
    %654 = arith.maximumf %652, %653 : vector<1x32xf32>
    %c0_391 = arith.constant 0 : index
    %c0_392 = arith.constant 0 : index
    %655 = vector.load %arg11[%c0_391, %c0_392] : memref<32x96xf32, #tpu.memory_space<vmem>>, vector<32x96xf32>
    %cst_393 = arith.constant dense<0.000000e+00> : vector<1x96xf32>
    %656 = tpu.matmul %654, %655, %cst_393 {dimension_numbers = #tpu.dot_dimension_numbers<[1], [0], [0], [1], [0, 0, 1, 1], [], []>} : vector<1x32xf32>, vector<32x96xf32>, vector<1x96xf32> -> vector<1x96xf32>
    %c0_394 = arith.constant 0 : index
    %c0_395 = arith.constant 0 : index
    %657 = vector.load %arg12[%c0_394, %c0_395] : memref<1x96xf32, #tpu.memory_space<vmem>>, vector<1x96xf32>
    %658 = arith.addf %656, %657 : vector<1x96xf32>
    %c0_396 = arith.constant 0 : index
    %c0_397 = arith.constant 0 : index
    %659 = vector.load %arg13[%c0_396, %c0_397] : memref<32x96xf32, #tpu.memory_space<vmem>>, vector<32x96xf32>
    %cst_398 = arith.constant dense<0.000000e+00> : vector<1x96xf32>
    %660 = tpu.matmul %625, %659, %cst_398 {dimension_numbers = #tpu.dot_dimension_numbers<[1], [0], [0], [1], [0, 0, 1, 1], [], []>} : vector<1x32xf32>, vector<32x96xf32>, vector<1x96xf32> -> vector<1x96xf32>
    %c0_399 = arith.constant 0 : index
    %c0_400 = arith.constant 0 : index
    %661 = vector.load %arg14[%c0_399, %c0_400] : memref<1x96xf32, #tpu.memory_space<vmem>>, vector<1x96xf32>
    %662 = arith.addf %660, %661 : vector<1x96xf32>
    %663 = vector.extract_strided_slice %658 {offsets = [0, 0], sizes = [1, 32], strides = [1, 1]} : vector<1x96xf32> to vector<1x32xf32>
    %664 = vector.extract_strided_slice %662 {offsets = [0, 0], sizes = [1, 32], strides = [1, 1]} : vector<1x96xf32> to vector<1x32xf32>
    %665 = arith.addf %663, %664 : vector<1x32xf32>
    %666 = arith.negf %665 : vector<1x32xf32>
    %667 = math.exp %666 : vector<1x32xf32>
    %cst_401 = arith.constant 1.000000e+00 : f32
    %668 = vector.broadcast %cst_401 : f32 to vector<1x32xf32>
    %669 = arith.addf %668, %667 : vector<1x32xf32>
    %670 = arith.divf %668, %669 : vector<1x32xf32>
    %671 = vector.extract_strided_slice %658 {offsets = [0, 32], sizes = [1, 32], strides = [1, 1]} : vector<1x96xf32> to vector<1x32xf32>
    %672 = vector.extract_strided_slice %662 {offsets = [0, 32], sizes = [1, 32], strides = [1, 1]} : vector<1x96xf32> to vector<1x32xf32>
    %673 = arith.addf %671, %672 : vector<1x32xf32>
    %674 = arith.negf %673 : vector<1x32xf32>
    %675 = math.exp %674 : vector<1x32xf32>
    %cst_402 = arith.constant 1.000000e+00 : f32
    %676 = vector.broadcast %cst_402 : f32 to vector<1x32xf32>
    %677 = arith.addf %676, %675 : vector<1x32xf32>
    %678 = arith.divf %676, %677 : vector<1x32xf32>
    %679 = vector.extract_strided_slice %658 {offsets = [0, 64], sizes = [1, 32], strides = [1, 1]} : vector<1x96xf32> to vector<1x32xf32>
    %680 = vector.extract_strided_slice %662 {offsets = [0, 64], sizes = [1, 32], strides = [1, 1]} : vector<1x96xf32> to vector<1x32xf32>
    %681 = arith.mulf %670, %680 : vector<1x32xf32>
    %682 = arith.addf %679, %681 : vector<1x32xf32>
    %683 = math.tanh %682 : vector<1x32xf32>
    %cst_403 = arith.constant 1.000000e+00 : f32
    %684 = vector.broadcast %cst_403 : f32 to vector<1x32xf32>
    %685 = arith.subf %684, %678 : vector<1x32xf32>
    %686 = arith.mulf %685, %683 : vector<1x32xf32>
    %687 = arith.mulf %678, %625 : vector<1x32xf32>
    %688 = arith.addf %686, %687 : vector<1x32xf32>
    %c6_i32_404 = arith.constant 6 : i32
    %689 = arith.cmpi slt, %620, %c6_i32_404 : i32
    %690 = arith.select %689, %688, %625 : vector<1x32xf32>
    %c0_405 = arith.constant 0 : index
    %c0_406 = arith.constant 0 : index
    %691 = vector.load %arg18[%c0_405, %c0_406] : memref<1x32xf32, #tpu.memory_space<vmem>>, vector<1x32xf32>
    tpu.vector_store %arg18[%c0_405, %c0_406], %690 {strides = array<i32>} : memref<1x32xf32, #tpu.memory_space<vmem>>, vector<1x32xf32>,
    %c0_407 = arith.constant 0 : index
    %c0_408 = arith.constant 0 : index
    %692 = vector.load %arg15[%c0_407, %c0_408] : memref<32x128xf32, #tpu.memory_space<vmem>>, vector<32x128xf32>
    %cst_409 = arith.constant dense<0.000000e+00> : vector<1x128xf32>
    %693 = tpu.matmul %688, %692, %cst_409 {dimension_numbers = #tpu.dot_dimension_numbers<[1], [0], [0], [1], [0, 0, 1, 1], [], []>} : vector<1x32xf32>, vector<32x128xf32>, vector<1x128xf32> -> vector<1x128xf32>
    %c0_410 = arith.constant 0 : index
    %c0_411 = arith.constant 0 : index
    %694 = vector.load %arg16[%c0_410, %c0_411] : memref<1x128xf32, #tpu.memory_space<vmem>>, vector<1x128xf32>
    %695 = arith.addf %693, %694 : vector<1x128xf32>
    %cst_412 = arith.constant dense<0xFF800000> : vector<1xf32>
    %696 = vector.multi_reduction <maximumf>, %695, %cst_412 [1] : vector<1x128xf32> to vector<1xf32>
    %697 = vector.shape_cast %696 : vector<1xf32> to vector<1x1xf32>
    %698 = vector.broadcast %697 : vector<1x1xf32> to vector<1x128xf32>
    %699 = arith.subf %695, %698 : vector<1x128xf32>
    %700 = math.exp %699 : vector<1x128xf32>
    %cst_413 = arith.constant dense<0.000000e+00> : vector<1xf32>
    %701 = vector.multi_reduction <add>, %700, %cst_413 [1] : vector<1x128xf32> to vector<1xf32>
    %702 = vector.shape_cast %701 : vector<1xf32> to vector<1x1xf32>
    %703 = math.log %702 : vector<1x1xf32>
    %704 = vector.broadcast %703 : vector<1x1xf32> to vector<1x128xf32>
    %705 = arith.subf %699, %704 : vector<1x128xf32>
    %c7_414 = arith.constant 7 : index
    %c0_415 = arith.constant 0 : index
    %706 = vector.load %arg17[%c7_414, %c0_415] : memref<8x128xf32, #tpu.memory_space<vmem>>, vector<1x128xf32>
    tpu.vector_store %arg17[%c7_414, %c0_415], %705 {strides = array<i32>} : memref<8x128xf32, #tpu.memory_space<vmem>>, vector<1x128xf32>,
    return
  }
  func.func @transform_0(%arg0: i32, %arg1: memref<8xi32, #tpu.memory_space<smem>>) -> (i32, i32) {
    %c0_i32 = arith.constant 0 : i32
    %c0_i32_0 = arith.constant 0 : i32
    %c0_i32_1 = arith.constant 0 : i32
    return %c0_i32, %c0_i32_0 : i32, i32
  }
  func.func @transform_1(%arg0: i32, %arg1: memref<8xi32, #tpu.memory_space<smem>>) -> (i32, i32) {
    %c0_i32 = arith.constant 0 : i32
    %c0_i32_0 = arith.constant 0 : i32
    %c0_i32_1 = arith.constant 0 : i32
    return %c0_i32, %c0_i32_0 : i32, i32
  }
  func.func @transform_2(%arg0: i32, %arg1: memref<8xi32, #tpu.memory_space<smem>>) -> (i32, i32) {
    %c0_i32 = arith.constant 0 : i32
    %c0_i32_0 = arith.constant 0 : i32
    %c0_i32_1 = arith.constant 0 : i32
    return %c0_i32, %c0_i32_0 : i32, i32
  }
  func.func @transform_3(%arg0: i32, %arg1: memref<8xi32, #tpu.memory_space<smem>>) -> (i32, i32) {
    %c0_i32 = arith.constant 0 : i32
    %c0_i32_0 = arith.constant 0 : i32
    %c0_i32_1 = arith.constant 0 : i32
    return %c0_i32, %c0_i32_0 : i32, i32
  }
  func.func @transform_4(%arg0: i32, %arg1: memref<8xi32, #tpu.memory_space<smem>>) -> (i32, i32) {
    %c0_i32 = arith.constant 0 : i32
    %c0_i32_0 = arith.constant 0 : i32
    %c0_i32_1 = arith.constant 0 : i32
    return %c0_i32, %c0_i32_0 : i32, i32
  }
  func.func @transform_5(%arg0: i32, %arg1: memref<8xi32, #tpu.memory_space<smem>>) -> (i32, i32) {
    %c0_i32 = arith.constant 0 : i32
    %c0_i32_0 = arith.constant 0 : i32
    %c0_i32_1 = arith.constant 0 : i32
    return %c0_i32, %c0_i32_0 : i32, i32
  }
  func.func @transform_6(%arg0: i32, %arg1: memref<8xi32, #tpu.memory_space<smem>>) -> (i32, i32) {
    %c0_i32 = arith.constant 0 : i32
    %c0_i32_0 = arith.constant 0 : i32
    %c0_i32_1 = arith.constant 0 : i32
    return %c0_i32, %c0_i32_0 : i32, i32
  }
  func.func @transform_7(%arg0: i32, %arg1: memref<8xi32, #tpu.memory_space<smem>>) -> (i32, i32) {
    %c0_i32 = arith.constant 0 : i32
    %c0_i32_0 = arith.constant 0 : i32
    %c0_i32_1 = arith.constant 0 : i32
    return %c0_i32, %c0_i32_0 : i32, i32
  }
  func.func @transform_8(%arg0: i32, %arg1: memref<8xi32, #tpu.memory_space<smem>>) -> (i32, i32) {
    %c0_i32 = arith.constant 0 : i32
    %c0_i32_0 = arith.constant 0 : i32
    %c0_i32_1 = arith.constant 0 : i32
    return %c0_i32, %c0_i32_0 : i32, i32
  }
  func.func @transform_9(%arg0: i32, %arg1: memref<8xi32, #tpu.memory_space<smem>>) -> (i32, i32) {
    %c0_i32 = arith.constant 0 : i32
    %c0_i32_0 = arith.constant 0 : i32
    %c0_i32_1 = arith.constant 0 : i32
    return %c0_i32, %c0_i32_0 : i32, i32
  }
  func.func @transform_10(%arg0: i32, %arg1: memref<8xi32, #tpu.memory_space<smem>>) -> (i32, i32) {
    %c0_i32 = arith.constant 0 : i32
    %c0_i32_0 = arith.constant 0 : i32
    %c0_i32_1 = arith.constant 0 : i32
    return %c0_i32, %c0_i32_0 : i32, i32
  }
  func.func @transform_11(%arg0: i32, %arg1: memref<8xi32, #tpu.memory_space<smem>>) -> (i32, i32) {
    %c0_i32 = arith.constant 0 : i32
    %c0_i32_0 = arith.constant 0 : i32
    %c0_i32_1 = arith.constant 0 : i32
    return %c0_i32, %c0_i32_0 : i32, i32
  }
  func.func @transform_12(%arg0: i32, %arg1: memref<8xi32, #tpu.memory_space<smem>>) -> (i32, i32) {
    %c0_i32 = arith.constant 0 : i32
    %c0_i32_0 = arith.constant 0 : i32
    %c0_i32_1 = arith.constant 0 : i32
    return %c0_i32, %c0_i32_0 : i32, i32
  }
  func.func @transform_13(%arg0: i32, %arg1: memref<8xi32, #tpu.memory_space<smem>>) -> (i32, i32) {
    %c0_i32 = arith.constant 0 : i32
    %c0_i32_0 = arith.constant 0 : i32
    %c0_i32_1 = arith.constant 0 : i32
    return %c0_i32, %c0_i32_0 : i32, i32
  }
  func.func @transform_14(%arg0: i32, %arg1: memref<8xi32, #tpu.memory_space<smem>>) -> (i32, i32) {
    %c0_i32 = arith.constant 0 : i32
    %c0_i32_0 = arith.constant 0 : i32
    %c0_i32_1 = arith.constant 0 : i32
    return %c0_i32, %c0_i32_0 : i32, i32
  }
  func.func @transform_15(%arg0: i32, %arg1: memref<8xi32, #tpu.memory_space<smem>>) -> (i32, i32) {
    %c0_i32 = arith.constant 0 : i32
    %c0_i32_0 = arith.constant 0 : i32
    return %arg0, %c0_i32 : i32, i32
  }
  func.func @transform_16(%arg0: i32, %arg1: memref<8xi32, #tpu.memory_space<smem>>) -> (i32, i32) {
    %c0_i32 = arith.constant 0 : i32
    %c0_i32_0 = arith.constant 0 : i32
    %c0_i32_1 = arith.constant 0 : i32
    return %c0_i32, %c0_i32_0 : i32, i32
  }
  func.func @transform_17(%arg0: i32, %arg1: memref<8xi32, #tpu.memory_space<smem>>) -> (i32, i32) {
    %c0_i32 = arith.constant 0 : i32
    %c0_i32_0 = arith.constant 0 : i32
    return %arg0, %c0_i32 : i32, i32
  }
}

</mosaic_0001>

<llo_original>
// kernel: tpu_custom_call.1
$region0: #{tpu_custom_call.1}
  #allocation0 [shape = 'u32[]', space=smem, size = 0x4, offset = 0x4, fixed_abs, tag = 'smem constant byte address 0x4 - core index']
  #allocation1 [shape = 'u32[144,128]{1,0:T(1,128)}', space=vmem, size = 0x12000, scoped, tag = 'internal scratch']
  #allocation2 [shape = 's32[1]{0}', space=sflag, size = 0x4, scoped, tag = 'scoped memory for tpu_custom_call.1']
  #allocation3 [shape = 'u8[512]{0}', space=smem, size = 0x200, scoped, tag = 'prefetched SMEM operand 0']
  %s0 = inlined_call_operand.vmem [shape: s32[8], index: 0, kind: input, shape index: {}]
  %s1 = inlined_call_operand.vmem [shape: f32[48,32], index: 1, kind: input, shape index: {}]
  %s2 = inlined_call_operand.vmem [shape: f32[1,32], index: 2, kind: input, shape index: {}]
  %s3 = inlined_call_operand.vmem [shape: f32[128,32], index: 3, kind: input, shape index: {}]
  %s4 = inlined_call_operand.vmem [shape: f32[32,128], index: 4, kind: input, shape index: {}]
  %s5 = inlined_call_operand.vmem [shape: f32[32,128], index: 5, kind: input, shape index: {}]
  %s6 = inlined_call_operand.vmem [shape: f32[1,128], index: 6, kind: input, shape index: {}]
  %s7 = inlined_call_operand.vmem [shape: f32[32,32], index: 7, kind: input, shape index: {}]
  %s8 = inlined_call_operand.vmem [shape: f32[32,32], index: 8, kind: input, shape index: {}]
  %s9 = inlined_call_operand.vmem [shape: f32[1,32], index: 9, kind: input, shape index: {}]
  %s10 = inlined_call_operand.vmem [shape: f32[32,96], index: 10, kind: input, shape index: {}]
  %s11 = inlined_call_operand.vmem [shape: f32[1,96], index: 11, kind: input, shape index: {}]
  %s12 = inlined_call_operand.vmem [shape: f32[32,96], index: 12, kind: input, shape index: {}]
  %s13 = inlined_call_operand.vmem [shape: f32[1,96], index: 13, kind: input, shape index: {}]
  %s14 = inlined_call_operand.vmem [shape: f32[32,128], index: 14, kind: input, shape index: {}]
  %s15 = inlined_call_operand.vmem [shape: f32[1,128], index: 15, kind: input, shape index: {}]
  %s16 = inlined_call_operand.hbm [shape: f32[8,128], index: 16, kind: output, shape index: {0}]
  %s17 = inlined_call_operand.hbm [shape: f32[1,32], index: 17, kind: output, shape index: {1}]
  %s18 = inlined_call_operand.hbm [shape: f32[8,128], index: 18, kind: output, shape index: {2}]
  %19 = xla_tuple %s16, %s17, %s18
  %s20 = sld [smem:[#allocation0]]
  $region90: #{tpu_custom_call.1} parent=0
    _
  %s22 = ssub.s32 1, %s20
  %s23 = scalar_select 0, %s22, %s20
  %s24 = sshll.u32 %s0, 4
  %s25 = int_to_ptr.vmem [resolvable:$true] %s24
  %27 = dma.vmem_to_smem %s25, 16, [#allocation3], [#allocation2]
  %28 = dma.done [#allocation2], 16
  %29 = sfence
  $region1: #{tpu_custom_call.1} parent=0
    #allocation4 [shape = 'u8[4096]{0}', space=vmem, size = 0x1000, scoped, tag = 'output window, operand 0, single buffered']
    #allocation5 [shape = 's32[1]{0}', space=sflag, size = 0x4, scoped, tag = 'scoped memory for tpu_custom_call.1']
    #allocation6 [shape = 'u8[512]{0}', space=vmem, size = 0x400, scoped, tag = 'output window, operand 1, single buffered']
    #allocation7 [shape = 's32[1]{0}', space=sflag, size = 0x4, scoped, tag = 'scoped memory for tpu_custom_call.1']
    #allocation8 [shape = 'u8[4096]{0}', space=vmem, size = 0x1000, scoped, tag = 'output window, operand 2, single buffered']
    %30 = vsyncpa [#allocation5], 0
    %31 = vsyncpa [#allocation7], 0
    // Predicated region
    $region2: #{tpu_custom_call.1} parent=1 // pred_check
      _
    $region3: #{tpu_custom_call.1} parent=1 // pred_check_branch
      %33 = sbr.rel (0) target = $region5
    $region4: #{tpu_custom_call.1} parent=1 // pred_region
      _
    $region5: #{tpu_custom_call.1} parent=1 // pred_fallthru
      _
    // Predicated region
    $region6: #{tpu_custom_call.1} parent=1 // pred_check
      _
    $region7: #{tpu_custom_call.1} parent=1 // pred_check_branch
      %35 = sbr.rel (0) target = $region9
    $region8: #{tpu_custom_call.1} parent=1 // pred_region
      _
    $region9: #{tpu_custom_call.1} parent=1 // pred_fallthru
      _
    // Predicated region
    $region10: #{tpu_custom_call.1} parent=1 // pred_check
      _
    $region11: #{tpu_custom_call.1} parent=1 // pred_check_branch
      %37 = sbr.rel (0) target = $region13
    $region12: #{tpu_custom_call.1} parent=1 // pred_region
      _
    $region13: #{tpu_custom_call.1} parent=1 // pred_fallthru
      _
    // Predicated region
    $region14: #{tpu_custom_call.1} parent=1 // pred_check
      _
    $region15: #{tpu_custom_call.1} parent=1 // pred_check_branch
      %39 = sbr.rel (0) target = $region17
    $region16: #{tpu_custom_call.1} parent=1 // pred_region
      _
    $region17: #{tpu_custom_call.1} parent=1 // pred_fallthru
      _
    // Predicated region
    $region18: #{tpu_custom_call.1} parent=1 // pred_check
      _
    $region19: #{tpu_custom_call.1} parent=1 // pred_check_branch
      %41 = sbr.rel (0) target = $region21
    $region20: #{tpu_custom_call.1} parent=1 // pred_region
      _
    $region21: #{tpu_custom_call.1} parent=1 // pred_fallthru
      _
    // Predicated region
    $region22: #{tpu_custom_call.1} parent=1 // pred_check
      _
    $region23: #{tpu_custom_call.1} parent=1 // pred_check_branch
      %43 = sbr.rel (0) target = $region25
    $region24: #{tpu_custom_call.1} parent=1 // pred_region
      _
    $region25: #{tpu_custom_call.1} parent=1 // pred_fallthru
      _
    // Predicated region
    $region26: #{tpu_custom_call.1} parent=1 // pred_check
      _
    $region27: #{tpu_custom_call.1} parent=1 // pred_check_branch
      %45 = sbr.rel (0) target = $region29
    $region28: #{tpu_custom_call.1} parent=1 // pred_region
      _
    $region29: #{tpu_custom_call.1} parent=1 // pred_fallthru
      _
    // Predicated region
    $region30: #{tpu_custom_call.1} parent=1 // pred_check
      _
    $region31: #{tpu_custom_call.1} parent=1 // pred_check_branch
      %47 = sbr.rel (0) target = $region33
    $region32: #{tpu_custom_call.1} parent=1 // pred_region
      _
    $region33: #{tpu_custom_call.1} parent=1 // pred_fallthru
      _
    // Predicated region
    $region34: #{tpu_custom_call.1} parent=1 // pred_check
      _
    $region35: #{tpu_custom_call.1} parent=1 // pred_check_branch
      %49 = sbr.rel (0) target = $region37
    $region36: #{tpu_custom_call.1} parent=1 // pred_region
      _
    $region37: #{tpu_custom_call.1} parent=1 // pred_fallthru
      _
    // Predicated region
    $region38: #{tpu_custom_call.1} parent=1 // pred_check
      _
    $region39: #{tpu_custom_call.1} parent=1 // pred_check_branch
      %51 = sbr.rel (0) target = $region41
    $region40: #{tpu_custom_call.1} parent=1 // pred_region
      _
    $region41: #{tpu_custom_call.1} parent=1 // pred_fallthru
      _
    // Predicated region
    $region42: #{tpu_custom_call.1} parent=1 // pred_check
      _
    $region43: #{tpu_custom_call.1} parent=1 // pred_check_branch
      %53 = sbr.rel (0) target = $region45
    $region44: #{tpu_custom_call.1} parent=1 // pred_region
      _
    $region45: #{tpu_custom_call.1} parent=1 // pred_fallthru
      _
    // Predicated region
    $region46: #{tpu_custom_call.1} parent=1 // pred_check
      _
    $region47: #{tpu_custom_call.1} parent=1 // pred_check_branch
      %55 = sbr.rel (0) target = $region49
    $region48: #{tpu_custom_call.1} parent=1 // pred_region
      _
    $region49: #{tpu_custom_call.1} parent=1 // pred_fallthru
      _
    // Predicated region
    $region50: #{tpu_custom_call.1} parent=1 // pred_check
      _
    $region51: #{tpu_custom_call.1} parent=1 // pred_check_branch
      %57 = sbr.rel (0) target = $region53
    $region52: #{tpu_custom_call.1} parent=1 // pred_region
      _
    $region53: #{tpu_custom_call.1} parent=1 // pred_fallthru
      _
    // Predicated region
    $region54: #{tpu_custom_call.1} parent=1 // pred_check
      _
    $region55: #{tpu_custom_call.1} parent=1 // pred_check_branch
      %59 = sbr.rel (0) target = $region57
    $region56: #{tpu_custom_call.1} parent=1 // pred_region
      _
    $region57: #{tpu_custom_call.1} parent=1 // pred_fallthru
      _
    // Predicated region
    $region58: #{tpu_custom_call.1} parent=1 // pred_check
      _
    $region59: #{tpu_custom_call.1} parent=1 // pred_check_branch
      %61 = sbr.rel (0) target = $region61
    $region60: #{tpu_custom_call.1} parent=1 // pred_region
      _
    $region61: #{tpu_custom_call.1} parent=1 // pred_fallthru
      _
    %p62 = scmp.eq.s32.totalorder 0, 0
    // Predicated region
    $region62: #{tpu_custom_call.1} parent=1 // pred_check
      %p63 = pneg %p62
    $region63: #{tpu_custom_call.1} parent=1 // pred_check_branch
      %65 = sbr.rel (%p63) target = $region65
    $region64: #{tpu_custom_call.1} parent=1 // pred_region
      %v66 = vld [vmem:[%s2] sm:$0x1]
      %vm67 = vcmask 253952
      %68 = vst.msk [vmem:[#allocation6] sm:$0x1] %vm67, %v66
    $region65: #{tpu_custom_call.1} parent=1 // pred_fallthru
      _
    %s69 = smul.u32 0, 8
    %s70 = sld [smem:[#allocation3 + %s69]]
    %s71 = scalar_lea.vmem %s1, %s70
    %v72 = vld [vmem:[%s71] sm:$0x1]
    %v73 = vld [vmem:[#allocation6] sm:$0x1]
    %v74 = vld [vmem:[%s4] sm:$0xff]
    %v75 = vld [vmem:[%s4 + $0x8] sm:$0xff]
    %v76 = vld [vmem:[%s4 + $0x10] sm:$0xff]
    %v77 = vld [vmem:[%s4 + $0x18] sm:$0xff]
    %v78 = vld [vmem:[%s5] sm:$0xff]
    %v79 = vld [vmem:[%s5 + $0x8] sm:$0xff]
    %v80 = vld [vmem:[%s5 + $0x10] sm:$0xff]
    %v81 = vld [vmem:[%s5 + $0x18] sm:$0xff]
    %vm82 = vcmask 261120
    %v84 = vsel %vm82, %v73, 0
    %86 = vmatprep.subr.mxu0 0.0
    %87 = vmatpush1.msra.mxu0 %v78
    %88 = vmatprep.subr.mxu0 0.0
    %89 = vmatpush1.msra.mxu0 %v79
    %90 = vmatprep.subr.mxu0 0.0
    %91 = vmatpush1.msra.mxu0 %v80
    %92 = vmatprep.subr.mxu0 0.0
    %93 = vmatpush1.msra.mxu0 %v81
    %94 = vmatprep.subr.mxu0 0.0
    %95 = vmatpush1.msra.mxu0 0.0
    %96 = vmatprep.subr.mxu0 0.0
    %97 = vmatpush1.msra.mxu0 0.0
    %98 = vmatprep.subr.mxu0 0.0
    %99 = vmatpush1.msra.mxu0 0.0
    %100 = vmatprep.subr.mxu0 0.0
    %101 = vmatpush1.msra.mxu0 0.0
    %102 = vmatprep.subr.mxu0 0.0
    %103 = vmatpush1.msra.mxu0 0.0
    %104 = vmatprep.subr.mxu0 0.0
    %105 = vmatpush1.msra.mxu0 0.0
    %106 = vmatprep.subr.mxu0 0.0
    %107 = vmatpush1.msra.mxu0 0.0
    %108 = vmatprep.subr.mxu0 0.0
    %109 = vmatpush1.msra.mxu0 0.0
    %110 = vmatprep.subr.mxu0 0.0
    %111 = vmatpush1.msra.mxu0 0.0
    %112 = vmatprep.subr.mxu0 0.0
    %113 = vmatpush1.msra.mxu0 0.0
    %114 = vmatprep.subr.mxu0 0.0
    %115 = vmatpush1.msra.mxu0 0.0
    %116 = vmatprep.subr.mxu0 0.0
    %117 = vmatpush1.msra.mxu0 0.0
    %118 = vmatprep.subr.mxu0 0.0
    %119 = vmatpush1.msra.mxu0 0.0
    %120 = vmatprep.subr.mxu0 0.0
    %121 = vmatpush1.msra.mxu0 0.0
    %122 = vmatprep.subr.mxu0 0.0
    %123 = vmatpush1.msra.mxu0 0.0
    %124 = vmatprep.subr.mxu0 0.0
    %125 = vmatpush1.msra.mxu0 0.0
    %126 = vmatprep.subr.mxu0 0.0
    %127 = vmatpush1.msra.mxu0 0.0
    %128 = vmatprep.subr.mxu0 0.0
    %129 = vmatpush1.msra.mxu0 0.0
    %130 = vmatprep.subr.mxu0 0.0
    %131 = vmatpush1.msra.mxu0 0.0
    %132 = vmatprep.subr.mxu0 0.0
    %133 = vmatpush1.msra.mxu0 0.0
    %134 = vmatprep.subr.mxu0 0.0
    %135 = vmatpush1.msra.mxu0 0.0
    %136 = vmatprep.subr.mxu0 0.0
    %137 = vmatpush1.msra.mxu0 0.0
    %138 = vmatprep.subr.mxu0 0.0
    %139 = vmatpush1.msra.mxu0 0.0
    %140 = vmatprep.subr.mxu0 0.0
    %141 = vmatpush1.msra.mxu0 0.0
    %142 = vmatprep.subr.mxu0 0.0
    %143 = vmatpush1.msra.mxu0 0.0
    %144 = vmatprep.subr.mxu0 0.0
    %145 = vmatpush1.msra.mxu0 0.0
    %146 = vmatprep.subr.mxu0 0.0
    %147 = vmatpush1.msra.mxu0 0.0
    %148 = vmatprep.subr.mxu0 0.0
    %149 = vmatpush1.msra.mxu0 0.0
    %150 = vmatprep.mubr.f32.mxu0 0.0
    %151 = vmatmul.mubr.f32.gmra.mrb[0].mxu0 %v84
    %v152 = vpop.f32.mrb[0].mxu0
    %v153 = vadd.f32 0.0, %v152
    %v154 = vpop.f32.mrb[0].mxu0
    %155 = vdwg.mxu0
    %v157 = vsel %vm82, %v72, 0
    %159 = vmatprep.subr.mxu0 0.0
    %160 = vmatpush1.msra.mxu0 %v74
    %161 = vmatprep.subr.mxu0 0.0
    %162 = vmatpush1.msra.mxu0 %v75
    %163 = vmatprep.subr.mxu0 0.0
    %164 = vmatpush1.msra.mxu0 %v76
    %165 = vmatprep.subr.mxu0 0.0
    %166 = vmatpush1.msra.mxu0 %v77
    %167 = vmatprep.subr.mxu0 0.0
    %168 = vmatpush1.msra.mxu0 0.0
    %169 = vmatprep.subr.mxu0 0.0
    %170 = vmatpush1.msra.mxu0 0.0
    %171 = vmatprep.subr.mxu0 0.0
    %172 = vmatpush1.msra.mxu0 0.0
    %173 = vmatprep.subr.mxu0 0.0
    %174 = vmatpush1.msra.mxu0 0.0
    %175 = vmatprep.subr.mxu0 0.0
    %176 = vmatpush1.msra.mxu0 0.0
    %177 = vmatprep.subr.mxu0 0.0
    %178 = vmatpush1.msra.mxu0 0.0
    %179 = vmatprep.subr.mxu0 0.0
    %180 = vmatpush1.msra.mxu0 0.0
    %181 = vmatprep.subr.mxu0 0.0
    %182 = vmatpush1.msra.mxu0 0.0
    %183 = vmatprep.subr.mxu0 0.0
    %184 = vmatpush1.msra.mxu0 0.0
    %185 = vmatprep.subr.mxu0 0.0
    %186 = vmatpush1.msra.mxu0 0.0
    %187 = vmatprep.subr.mxu0 0.0
    %188 = vmatpush1.msra.mxu0 0.0
    %189 = vmatprep.subr.mxu0 0.0
    %190 = vmatpush1.msra.mxu0 0.0
    %191 = vmatprep.subr.mxu0 0.0
    %192 = vmatpush1.msra.mxu0 0.0
    %193 = vmatprep.subr.mxu0 0.0
    %194 = vmatpush1.msra.mxu0 0.0
    %195 = vmatprep.subr.mxu0 0.0
    %196 = vmatpush1.msra.mxu0 0.0
    %197 = vmatprep.subr.mxu0 0.0
    %198 = vmatpush1.msra.mxu0 0.0
    %199 = vmatprep.subr.mxu0 0.0
    %200 = vmatpush1.msra.mxu0 0.0
    %201 = vmatprep.subr.mxu0 0.0
    %202 = vmatpush1.msra.mxu0 0.0
    %203 = vmatprep.subr.mxu0 0.0
    %204 = vmatpush1.msra.mxu0 0.0
    %205 = vmatprep.subr.mxu0 0.0
    %206 = vmatpush1.msra.mxu0 0.0
    %207 = vmatprep.subr.mxu0 0.0
    %208 = vmatpush1.msra.mxu0 0.0
    %209 = vmatprep.subr.mxu0 0.0
    %210 = vmatpush1.msra.mxu0 0.0
    %211 = vmatprep.subr.mxu0 0.0
    %212 = vmatpush1.msra.mxu0 0.0
    %213 = vmatprep.subr.mxu0 0.0
    %214 = vmatpush1.msra.mxu0 0.0
    %215 = vmatprep.subr.mxu0 0.0
    %216 = vmatpush1.msra.mxu0 0.0
    %217 = vmatprep.subr.mxu0 0.0
    %218 = vmatpush1.msra.mxu0 0.0
    %219 = vmatprep.subr.mxu0 0.0
    %220 = vmatpush1.msra.mxu0 0.0
    %221 = vmatprep.subr.mxu0 0.0
    %222 = vmatpush1.msra.mxu0 0.0
    %223 = vmatprep.mubr.f32.mxu0 0.0
    %224 = vmatmul.mubr.f32.gmra.mrb[0].mxu0 %v157
    %v225 = vpop.f32.mrb[0].mxu0
    %v226 = vadd.f32 %v153, %v225
    %v227 = vpop.f32.mrb[0].mxu0
    %228 = vdwg.mxu0
    %v229 = vld [vmem:[%s6] sm:$0x1]
    %v230 = vadd.f32 %v226, %v229
    %vm231 = vcmask 1040384
    %v232 = vsel %vm231, %v230, -inf
    %233 = vmax.xlane.f32.xlu0 %v232
    %v234 = vpop.xlane.xlu0 %233
    %v235 = vsub.f32 %v230, %v234
    %v236 = vmul.f32 %v235, 1.442695
    %v237 = vpow.pop %v236
    %v238 = vsel %vm231, %v237, 0.0
    %239 = vadd.xlane.f32.xlu0 %v238
    %v240 = vpop.xlane.xlu0 %239
    %v241 = vrcp.pop %v240
    %v242 = vmul.f32 %v237, %v241
    %243 = vst [vmem:[#allocation8] sm:$0x1] %v242
    %v244 = vld [vmem:[%s3] sm:$0xff]
    %v245 = vld [vmem:[%s3 + $0x8] sm:$0xff]
    %v246 = vld [vmem:[%s3 + $0x10] sm:$0xff]
    %v247 = vld [vmem:[%s3 + $0x18] sm:$0xff]
    %v248 = vld [vmem:[%s3 + $0x20] sm:$0xff]
    %v249 = vld [vmem:[%s3 + $0x28] sm:$0xff]
    %v250 = vld [vmem:[%s3 + $0x30] sm:$0xff]
    %v251 = vld [vmem:[%s3 + $0x38] sm:$0xff]
    %v252 = vld [vmem:[%s3 + $0x40] sm:$0xff]
    %v253 = vld [vmem:[%s3 + $0x48] sm:$0xff]
    %v254 = vld [vmem:[%s3 + $0x50] sm:$0xff]
    %v255 = vld [vmem:[%s3 + $0x58] sm:$0xff]
    %v256 = vld [vmem:[%s3 + $0x60] sm:$0xff]
    %v257 = vld [vmem:[%s3 + $0x68] sm:$0xff]
    %v258 = vld [vmem:[%s3 + $0x70] sm:$0xff]
    %v259 = vld [vmem:[%s3 + $0x78] sm:$0xff]
    %260 = vmatprep.subr.mxu0 0.0
    %261 = vmatpush1.msra.mxu0 %v244
    %262 = vmatprep.subr.mxu0 0.0
    %263 = vmatpush1.msra.mxu0 %v245
    %264 = vmatprep.subr.mxu0 0.0
    %265 = vmatpush1.msra.mxu0 %v246
    %266 = vmatprep.subr.mxu0 0.0
    %267 = vmatpush1.msra.mxu0 %v247
    %268 = vmatprep.subr.mxu0 0.0
    %269 = vmatpush1.msra.mxu0 %v248
    %270 = vmatprep.subr.mxu0 0.0
    %271 = vmatpush1.msra.mxu0 %v249
    %272 = vmatprep.subr.mxu0 0.0
    %273 = vmatpush1.msra.mxu0 %v250
    %274 = vmatprep.subr.mxu0 0.0
    %275 = vmatpush1.msra.mxu0 %v251
    %276 = vmatprep.subr.mxu0 0.0
    %277 = vmatpush1.msra.mxu0 %v252
    %278 = vmatprep.subr.mxu0 0.0
    %279 = vmatpush1.msra.mxu0 %v253
    %280 = vmatprep.subr.mxu0 0.0
    %281 = vmatpush1.msra.mxu0 %v254
    %282 = vmatprep.subr.mxu0 0.0
    %283 = vmatpush1.msra.mxu0 %v255
    %284 = vmatprep.subr.mxu0 0.0
    %285 = vmatpush1.msra.mxu0 %v256
    %286 = vmatprep.subr.mxu0 0.0
    %287 = vmatpush1.msra.mxu0 %v257
    %288 = vmatprep.subr.mxu0 0.0
    %289 = vmatpush1.msra.mxu0 %v258
    %290 = vmatprep.subr.mxu0 0.0
    %291 = vmatpush1.msra.mxu0 %v259
    %292 = vmatprep.subr.mxu0 0.0
    %293 = vmatpush1.msra.mxu0 0.0
    %294 = vmatprep.subr.mxu0 0.0
    %295 = vmatpush1.msra.mxu0 0.0
    %296 = vmatprep.subr.mxu0 0.0
    %297 = vmatpush1.msra.mxu0 0.0
    %298 = vmatprep.subr.mxu0 0.0
    %299 = vmatpush1.msra.mxu0 0.0
    %300 = vmatprep.subr.mxu0 0.0
    %301 = vmatpush1.msra.mxu0 0.0
    %302 = vmatprep.subr.mxu0 0.0
    %303 = vmatpush1.msra.mxu0 0.0
    %304 = vmatprep.subr.mxu0 0.0
    %305 = vmatpush1.msra.mxu0 0.0
    %306 = vmatprep.subr.mxu0 0.0
    %307 = vmatpush1.msra.mxu0 0.0
    %308 = vmatprep.subr.mxu0 0.0
    %309 = vmatpush1.msra.mxu0 0.0
    %310 = vmatprep.subr.mxu0 0.0
    %311 = vmatpush1.msra.mxu0 0.0
    %312 = vmatprep.subr.mxu0 0.0
    %313 = vmatpush1.msra.mxu0 0.0
    %314 = vmatprep.subr.mxu0 0.0
    %315 = vmatpush1.msra.mxu0 0.0
    %316 = vmatprep.subr.mxu0 0.0
    %317 = vmatpush1.msra.mxu0 0.0
    %318 = vmatprep.subr.mxu0 0.0
    %319 = vmatpush1.msra.mxu0 0.0
    %320 = vmatprep.subr.mxu0 0.0
    %321 = vmatpush1.msra.mxu0 0.0
    %322 = vmatprep.subr.mxu0 0.0
    %323 = vmatpush1.msra.mxu0 0.0
    %324 = vmatprep.mubr.f32.mxu0 0.0
    %325 = vmatmul.mubr.f32.gmra.mrb[0].mxu0 %v242
    %v326 = vpop.f32.mrb[0].mxu0
    %v327 = vadd.f32 0.0, %v326
    %v328 = vpop.f32.mrb[0].mxu0
    %329 = vdwg.mxu0
    %v330 = vld [vmem:[%s7] sm:$0xff]
    %v331 = vld [vmem:[%s7 + $0x8] sm:$0xff]
    %v332 = vld [vmem:[%s7 + $0x10] sm:$0xff]
    %v333 = vld [vmem:[%s7 + $0x18] sm:$0xff]
    %v334 = vld [vmem:[%s8] sm:$0xff]
    %v335 = vld [vmem:[%s8 + $0x8] sm:$0xff]
    %v336 = vld [vmem:[%s8 + $0x10] sm:$0xff]
    %v337 = vld [vmem:[%s8 + $0x18] sm:$0xff]
    %v339 = vsel %vm82, %v327, 0
    %341 = vmatprep.subr.mxu0 0.0
    %342 = vmatpush1.msra.mxu0 %v334
    %343 = vmatprep.subr.mxu0 0.0
    %344 = vmatpush1.msra.mxu0 %v335
    %345 = vmatprep.subr.mxu0 0.0
    %346 = vmatpush1.msra.mxu0 %v336
    %347 = vmatprep.subr.mxu0 0.0
    %348 = vmatpush1.msra.mxu0 %v337
    %349 = vmatprep.subr.mxu0 0.0
    %350 = vmatpush1.msra.mxu0 0.0
    %351 = vmatprep.subr.mxu0 0.0
    %352 = vmatpush1.msra.mxu0 0.0
    %353 = vmatprep.subr.mxu0 0.0
    %354 = vmatpush1.msra.mxu0 0.0
    %355 = vmatprep.subr.mxu0 0.0
    %356 = vmatpush1.msra.mxu0 0.0
    %357 = vmatprep.subr.mxu0 0.0
    %358 = vmatpush1.msra.mxu0 0.0
    %359 = vmatprep.subr.mxu0 0.0
    %360 = vmatpush1.msra.mxu0 0.0
    %361 = vmatprep.subr.mxu0 0.0
    %362 = vmatpush1.msra.mxu0 0.0
    %363 = vmatprep.subr.mxu0 0.0
    %364 = vmatpush1.msra.mxu0 0.0
    %365 = vmatprep.subr.mxu0 0.0
    %366 = vmatpush1.msra.mxu0 0.0
    %367 = vmatprep.subr.mxu0 0.0
    %368 = vmatpush1.msra.mxu0 0.0
    %369 = vmatprep.subr.mxu0 0.0
    %370 = vmatpush1.msra.mxu0 0.0
    %371 = vmatprep.subr.mxu0 0.0
    %372 = vmatpush1.msra.mxu0 0.0
    %373 = vmatprep.subr.mxu0 0.0
    %374 = vmatpush1.msra.mxu0 0.0
    %375 = vmatprep.subr.mxu0 0.0
    %376 = vmatpush1.msra.mxu0 0.0
    %377 = vmatprep.subr.mxu0 0.0
    %378 = vmatpush1.msra.mxu0 0.0
    %379 = vmatprep.subr.mxu0 0.0
    %380 = vmatpush1.msra.mxu0 0.0
    %381 = vmatprep.subr.mxu0 0.0
    %382 = vmatpush1.msra.mxu0 0.0
    %383 = vmatprep.subr.mxu0 0.0
    %384 = vmatpush1.msra.mxu0 0.0
    %385 = vmatprep.subr.mxu0 0.0
    %386 = vmatpush1.msra.mxu0 0.0
    %387 = vmatprep.subr.mxu0 0.0
    %388 = vmatpush1.msra.mxu0 0.0
    %389 = vmatprep.subr.mxu0 0.0
    %390 = vmatpush1.msra.mxu0 0.0
    %391 = vmatprep.subr.mxu0 0.0
    %392 = vmatpush1.msra.mxu0 0.0
    %393 = vmatprep.subr.mxu0 0.0
    %394 = vmatpush1.msra.mxu0 0.0
    %395 = vmatprep.subr.mxu0 0.0
    %396 = vmatpush1.msra.mxu0 0.0
    %397 = vmatprep.subr.mxu0 0.0
    %398 = vmatpush1.msra.mxu0 0.0
    %399 = vmatprep.subr.mxu0 0.0
    %400 = vmatpush1.msra.mxu0 0.0
    %401 = vmatprep.subr.mxu0 0.0
    %402 = vmatpush1.msra.mxu0 0.0
    %403 = vmatprep.subr.mxu0 0.0
    %404 = vmatpush1.msra.mxu0 0.0
    %405 = vmatprep.mubr.f32.mxu0 0.0
    %406 = vmatmul.mubr.f32.gmra.mrb[0].mxu0 %v339
    %v407 = vpop.f32.mrb[0].mxu0
    %v408 = vadd.f32 0.0, %v407
    %v409 = vpop.f32.mrb[0].mxu0
    %410 = vdwg.mxu0
    %411 = vmatprep.subr.mxu0 0.0
    %412 = vmatpush1.msra.mxu0 %v330
    %413 = vmatprep.subr.mxu0 0.0
    %414 = vmatpush1.msra.mxu0 %v331
    %415 = vmatprep.subr.mxu0 0.0
    %416 = vmatpush1.msra.mxu0 %v332
    %417 = vmatprep.subr.mxu0 0.0
    %418 = vmatpush1.msra.mxu0 %v333
    %419 = vmatprep.subr.mxu0 0.0
    %420 = vmatpush1.msra.mxu0 0.0
    %421 = vmatprep.subr.mxu0 0.0
    %422 = vmatpush1.msra.mxu0 0.0
    %423 = vmatprep.subr.mxu0 0.0
    %424 = vmatpush1.msra.mxu0 0.0
    %425 = vmatprep.subr.mxu0 0.0
    %426 = vmatpush1.msra.mxu0 0.0
    %427 = vmatprep.subr.mxu0 0.0
    %428 = vmatpush1.msra.mxu0 0.0
    %429 = vmatprep.subr.mxu0 0.0
    %430 = vmatpush1.msra.mxu0 0.0
    %431 = vmatprep.subr.mxu0 0.0
    %432 = vmatpush1.msra.mxu0 0.0
    %433 = vmatprep.subr.mxu0 0.0
    %434 = vmatpush1.msra.mxu0 0.0
    %435 = vmatprep.subr.mxu0 0.0
    %436 = vmatpush1.msra.mxu0 0.0
    %437 = vmatprep.subr.mxu0 0.0
    %438 = vmatpush1.msra.mxu0 0.0
    %439 = vmatprep.subr.mxu0 0.0
    %440 = vmatpush1.msra.mxu0 0.0
    %441 = vmatprep.subr.mxu0 0.0
    %442 = vmatpush1.msra.mxu0 0.0
    %443 = vmatprep.subr.mxu0 0.0
    %444 = vmatpush1.msra.mxu0 0.0
    %445 = vmatprep.subr.mxu0 0.0
    %446 = vmatpush1.msra.mxu0 0.0
    %447 = vmatprep.subr.mxu0 0.0
    %448 = vmatpush1.msra.mxu0 0.0
    %449 = vmatprep.subr.mxu0 0.0
    %450 = vmatpush1.msra.mxu0 0.0
    %451 = vmatprep.subr.mxu0 0.0
    %452 = vmatpush1.msra.mxu0 0.0
    %453 = vmatprep.subr.mxu0 0.0
    %454 = vmatpush1.msra.mxu0 0.0
    %455 = vmatprep.subr.mxu0 0.0
    %456 = vmatpush1.msra.mxu0 0.0
    %457 = vmatprep.subr.mxu0 0.0
    %458 = vmatpush1.msra.mxu0 0.0
    %459 = vmatprep.subr.mxu0 0.0
    %460 = vmatpush1.msra.mxu0 0.0
    %461 = vmatprep.subr.mxu0 0.0
    %462 = vmatpush1.msra.mxu0 0.0
    %463 = vmatprep.subr.mxu0 0.0
    %464 = vmatpush1.msra.mxu0 0.0
    %465 = vmatprep.subr.mxu0 0.0
    %466 = vmatpush1.msra.mxu0 0.0
    %467 = vmatprep.subr.mxu0 0.0
    %468 = vmatpush1.msra.mxu0 0.0
    %469 = vmatprep.subr.mxu0 0.0
    %470 = vmatpush1.msra.mxu0 0.0
    %471 = vmatprep.subr.mxu0 0.0
    %472 = vmatpush1.msra.mxu0 0.0
    %473 = vmatprep.subr.mxu0 0.0
    %474 = vmatpush1.msra.mxu0 0.0
    %475 = vmatprep.mubr.f32.mxu0 0.0
    %476 = vmatmul.mubr.f32.gmra.mrb[0].mxu0 %v157
    %v477 = vpop.f32.mrb[0].mxu0
    %v478 = vadd.f32 %v408, %v477
    %v479 = vpop.f32.mrb[0].mxu0
    %480 = vdwg.mxu0
    %v481 = vld [vmem:[%s9] sm:$0x1]
    %v482 = vadd.f32 %v478, %v481
    %v483 = vmax.f32 %v482, 0.0
    %v484 = vld [vmem:[%s10] sm:$0xff]
    %v485 = vld [vmem:[%s10 + $0x8] sm:$0xff]
    %v486 = vld [vmem:[%s10 + $0x10] sm:$0xff]
    %v487 = vld [vmem:[%s10 + $0x18] sm:$0xff]
    %v488 = vld [vmem:[%s11] sm:$0x1]
    %v490 = vsel %vm82, %v483, 0
    %492 = vmatprep.subr.mxu0 0.0
    %493 = vmatpush1.msra.mxu0 %v484
    %494 = vmatprep.subr.mxu0 0.0
    %495 = vmatpush1.msra.mxu0 %v485
    %496 = vmatprep.subr.mxu0 0.0
    %497 = vmatpush1.msra.mxu0 %v486
    %498 = vmatprep.subr.mxu0 0.0
    %499 = vmatpush1.msra.mxu0 %v487
    %500 = vmatprep.subr.mxu0 0.0
    %501 = vmatpush1.msra.mxu0 0.0
    %502 = vmatprep.subr.mxu0 0.0
    %503 = vmatpush1.msra.mxu0 0.0
    %504 = vmatprep.subr.mxu0 0.0
    %505 = vmatpush1.msra.mxu0 0.0
    %506 = vmatprep.subr.mxu0 0.0
    %507 = vmatpush1.msra.mxu0 0.0
    %508 = vmatprep.subr.mxu0 0.0
    %509 = vmatpush1.msra.mxu0 0.0
    %510 = vmatprep.subr.mxu0 0.0
    %511 = vmatpush1.msra.mxu0 0.0
    %512 = vmatprep.subr.mxu0 0.0
    %513 = vmatpush1.msra.mxu0 0.0
    %514 = vmatprep.subr.mxu0 0.0
    %515 = vmatpush1.msra.mxu0 0.0
    %516 = vmatprep.subr.mxu0 0.0
    %517 = vmatpush1.msra.mxu0 0.0
    %518 = vmatprep.subr.mxu0 0.0
    %519 = vmatpush1.msra.mxu0 0.0
    %520 = vmatprep.subr.mxu0 0.0
    %521 = vmatpush1.msra.mxu0 0.0
    %522 = vmatprep.subr.mxu0 0.0
    %523 = vmatpush1.msra.mxu0 0.0
    %524 = vmatprep.subr.mxu0 0.0
    %525 = vmatpush1.msra.mxu0 0.0
    %526 = vmatprep.subr.mxu0 0.0
    %527 = vmatpush1.msra.mxu0 0.0
    %528 = vmatprep.subr.mxu0 0.0
    %529 = vmatpush1.msra.mxu0 0.0
    %530 = vmatprep.subr.mxu0 0.0
    %531 = vmatpush1.msra.mxu0 0.0
    %532 = vmatprep.subr.mxu0 0.0
    %533 = vmatpush1.msra.mxu0 0.0
    %534 = vmatprep.subr.mxu0 0.0
    %535 = vmatpush1.msra.mxu0 0.0
    %536 = vmatprep.subr.mxu0 0.0
    %537 = vmatpush1.msra.mxu0 0.0
    %538 = vmatprep.subr.mxu0 0.0
    %539 = vmatpush1.msra.mxu0 0.0
    %540 = vmatprep.subr.mxu0 0.0
    %541 = vmatpush1.msra.mxu0 0.0
    %542 = vmatprep.subr.mxu0 0.0
    %543 = vmatpush1.msra.mxu0 0.0
    %544 = vmatprep.subr.mxu0 0.0
    %545 = vmatpush1.msra.mxu0 0.0
    %546 = vmatprep.subr.mxu0 0.0
    %547 = vmatpush1.msra.mxu0 0.0
    %548 = vmatprep.subr.mxu0 0.0
    %549 = vmatpush1.msra.mxu0 0.0
    %550 = vmatprep.subr.mxu0 0.0
    %551 = vmatpush1.msra.mxu0 0.0
    %552 = vmatprep.subr.mxu0 0.0
    %553 = vmatpush1.msra.mxu0 0.0
    %554 = vmatprep.subr.mxu0 0.0
    %555 = vmatpush1.msra.mxu0 0.0
    %556 = vmatprep.mubr.f32.mxu0 0.0
    %557 = vmatmul.mubr.f32.gmra.mrb[0].mxu0 %v490
    %v558 = vpop.f32.mrb[0].mxu0
    %v559 = vadd.f32 %v488, %v558
    %v560 = vpop.f32.mrb[0].mxu0
    %561 = vdwg.mxu0
    %v562 = vld [vmem:[%s12] sm:$0xff]
    %v563 = vld [vmem:[%s12 + $0x8] sm:$0xff]
    %v564 = vld [vmem:[%s12 + $0x10] sm:$0xff]
    %v565 = vld [vmem:[%s12 + $0x18] sm:$0xff]
    %v566 = vld [vmem:[%s13] sm:$0x1]
    %567 = vmatprep.subr.mxu0 0.0
    %568 = vmatpush1.msra.mxu0 %v562
    %569 = vmatprep.subr.mxu0 0.0
    %570 = vmatpush1.msra.mxu0 %v563
    %571 = vmatprep.subr.mxu0 0.0
    %572 = vmatpush1.msra.mxu0 %v564
    %573 = vmatprep.subr.mxu0 0.0
    %574 = vmatpush1.msra.mxu0 %v565
    %575 = vmatprep.subr.mxu0 0.0
    %576 = vmatpush1.msra.mxu0 0.0
    %577 = vmatprep.subr.mxu0 0.0
    %578 = vmatpush1.msra.mxu0 0.0
    %579 = vmatprep.subr.mxu0 0.0
    %580 = vmatpush1.msra.mxu0 0.0
    %581 = vmatprep.subr.mxu0 0.0
    %582 = vmatpush1.msra.mxu0 0.0
    %583 = vmatprep.subr.mxu0 0.0
    %584 = vmatpush1.msra.mxu0 0.0
    %585 = vmatprep.subr.mxu0 0.0
    %586 = vmatpush1.msra.mxu0 0.0
    %587 = vmatprep.subr.mxu0 0.0
    %588 = vmatpush1.msra.mxu0 0.0
    %589 = vmatprep.subr.mxu0 0.0
    %590 = vmatpush1.msra.mxu0 0.0
    %591 = vmatprep.subr.mxu0 0.0
    %592 = vmatpush1.msra.mxu0 0.0
    %593 = vmatprep.subr.mxu0 0.0
    %594 = vmatpush1.msra.mxu0 0.0
    %595 = vmatprep.subr.mxu0 0.0
    %596 = vmatpush1.msra.mxu0 0.0
    %597 = vmatprep.subr.mxu0 0.0
    %598 = vmatpush1.msra.mxu0 0.0
    %599 = vmatprep.subr.mxu0 0.0
    %600 = vmatpush1.msra.mxu0 0.0
    %601 = vmatprep.subr.mxu0 0.0
    %602 = vmatpush1.msra.mxu0 0.0
    %603 = vmatprep.subr.mxu0 0.0
    %604 = vmatpush1.msra.mxu0 0.0
    %605 = vmatprep.subr.mxu0 0.0
    %606 = vmatpush1.msra.mxu0 0.0
    %607 = vmatprep.subr.mxu0 0.0
    %608 = vmatpush1.msra.mxu0 0.0
    %609 = vmatprep.subr.mxu0 0.0
    %610 = vmatpush1.msra.mxu0 0.0
    %611 = vmatprep.subr.mxu0 0.0
    %612 = vmatpush1.msra.mxu0 0.0
    %613 = vmatprep.subr.mxu0 0.0
    %614 = vmatpush1.msra.mxu0 0.0
    %615 = vmatprep.subr.mxu0 0.0
    %616 = vmatpush1.msra.mxu0 0.0
    %617 = vmatprep.subr.mxu0 0.0
    %618 = vmatpush1.msra.mxu0 0.0
    %619 = vmatprep.subr.mxu0 0.0
    %620 = vmatpush1.msra.mxu0 0.0
    %621 = vmatprep.subr.mxu0 0.0
    %622 = vmatpush1.msra.mxu0 0.0
    %623 = vmatprep.subr.mxu0 0.0
    %624 = vmatpush1.msra.mxu0 0.0
    %625 = vmatprep.subr.mxu0 0.0
    %626 = vmatpush1.msra.mxu0 0.0
    %627 = vmatprep.subr.mxu0 0.0
    %628 = vmatpush1.msra.mxu0 0.0
    %629 = vmatprep.subr.mxu0 0.0
    %630 = vmatpush1.msra.mxu0 0.0
    %631 = vmatprep.mubr.f32.mxu0 0.0
    %632 = vmatmul.mubr.f32.gmra.mrb[0].mxu0 %v84
    %v633 = vpop.f32.mrb[0].mxu0
    %v634 = vadd.f32 %v566, %v633
    %v635 = vpop.f32.mrb[0].mxu0
    %636 = vdwg.mxu0
    %v637 = vadd.f32 %v559, %v634
    %v638 = vxor.u32 %v637, 2147483648
    %v639 = vmul.f32 %v638, 1.442695
    %v640 = vpow.pop %v639
    %v641 = vadd.f32 %v640, 1.0
    %v642 = vrcp.pop %v641
    %v643 = vmul.f32 1.0, %v642
    %645 = vrot.lane.b32.xlu0 %v634, 64
    %v646 = vpop.permute.xlu0 %645
    %v648 = vmul.f32 %v643, %v646
    %650 = vrot.lane.b32.xlu0 %v648, 64
    %v651 = vpop.permute.xlu0 %650
    %v653 = vadd.f32 %v559, %v651
    %v654 = vtanh.pop %v653
    %v655 = vsub.f32 1.0, %v643
    %657 = vrot.lane.b32.xlu0 %v654, 96
    %v658 = vpop.permute.xlu0 %657
    %v660 = vmul.f32 %v655, %v658
    %v661 = vlaneseq
    %v662 = vshrl.u32 %v661, 7
    %v663 = vsub.s32 0, %v662
    %v664 = vrot.slane %v73, %v663
    %665 = vrot.lane.b32.xlu0 %v664, 32
    %v666 = vpop.permute.xlu0 %665
    %v668 = vmul.f32 %v643, %v666
    %v669 = vadd.f32 %v660, %v668
    %p670 = scmp.lt.s32.totalorder %s69, 6
    %s671 = scalar_select %p670, 1, 0
    %v672 = vstv %s671
    %vm673 = vcmp.eq.s32.totalorder %v672, 1
    %v674 = vsel %vm673, %v669, %v666
    %676 = vrot.lane.b32.xlu0 %v674, 96
    %v677 = vpop.permute.xlu0 %676
    %vm679 = vcmask 253952
    %680 = vst.msk [vmem:[#allocation6] sm:$0x1] %vm679, %v677
    %v681 = vld [vmem:[%s14] sm:$0xff]
    %v682 = vld [vmem:[%s14 + $0x8] sm:$0xff]
    %v683 = vld [vmem:[%s14 + $0x10] sm:$0xff]
    %v684 = vld [vmem:[%s14 + $0x18] sm:$0xff]
    %v685 = vld [vmem:[%s15] sm:$0x1]
    %687 = vrot.lane.b32.xlu0 %v669, 96
    %v688 = vpop.permute.xlu0 %687
    %v689 = vsel %vm82, %v688, 0
    %691 = vmatprep.subr.mxu0 0.0
    %692 = vmatpush1.msra.mxu0 %v681
    %693 = vmatprep.subr.mxu0 0.0
    %694 = vmatpush1.msra.mxu0 %v682
    %695 = vmatprep.subr.mxu0 0.0
    %696 = vmatpush1.msra.mxu0 %v683
    %697 = vmatprep.subr.mxu0 0.0
    %698 = vmatpush1.msra.mxu0 %v684
    %699 = vmatprep.subr.mxu0 0.0
    %700 = vmatpush1.msra.mxu0 0.0
    %701 = vmatprep.subr.mxu0 0.0
    %702 = vmatpush1.msra.mxu0 0.0
    %703 = vmatprep.subr.mxu0 0.0
    %704 = vmatpush1.msra.mxu0 0.0
    %705 = vmatprep.subr.mxu0 0.0
    %706 = vmatpush1.msra.mxu0 0.0
    %707 = vmatprep.subr.mxu0 0.0
    %708 = vmatpush1.msra.mxu0 0.0
    %709 = vmatprep.subr.mxu0 0.0
    %710 = vmatpush1.msra.mxu0 0.0
    %711 = vmatprep.subr.mxu0 0.0
    %712 = vmatpush1.msra.mxu0 0.0
    %713 = vmatprep.subr.mxu0 0.0
    %714 = vmatpush1.msra.mxu0 0.0
    %715 = vmatprep.subr.mxu0 0.0
    %716 = vmatpush1.msra.mxu0 0.0
    %717 = vmatprep.subr.mxu0 0.0
    %718 = vmatpush1.msra.mxu0 0.0
    %719 = vmatprep.subr.mxu0 0.0
    %720 = vmatpush1.msra.mxu0 0.0
    %721 = vmatprep.subr.mxu0 0.0
    %722 = vmatpush1.msra.mxu0 0.0
    %723 = vmatprep.subr.mxu0 0.0
    %724 = vmatpush1.msra.mxu0 0.0
    %725 = vmatprep.subr.mxu0 0.0
    %726 = vmatpush1.msra.mxu0 0.0
    %727 = vmatprep.subr.mxu0 0.0
    %728 = vmatpush1.msra.mxu0 0.0
    %729 = vmatprep.subr.mxu0 0.0
    %730 = vmatpush1.msra.mxu0 0.0
    %731 = vmatprep.subr.mxu0 0.0
    %732 = vmatpush1.msra.mxu0 0.0
    %733 = vmatprep.subr.mxu0 0.0
    %734 = vmatpush1.msra.mxu0 0.0
    %735 = vmatprep.subr.mxu0 0.0
    %736 = vmatpush1.msra.mxu0 0.0
    %737 = vmatprep.subr.mxu0 0.0
    %738 = vmatpush1.msra.mxu0 0.0
    %739 = vmatprep.subr.mxu0 0.0
    %740 = vmatpush1.msra.mxu0 0.0
    %741 = vmatprep.subr.mxu0 0.0
    %742 = vmatpush1.msra.mxu0 0.0
    %743 = vmatprep.subr.mxu0 0.0
    %744 = vmatpush1.msra.mxu0 0.0
    %745 = vmatprep.subr.mxu0 0.0
    %746 = vmatpush1.msra.mxu0 0.0
    %747 = vmatprep.subr.mxu0 0.0
    %748 = vmatpush1.msra.mxu0 0.0
    %749 = vmatprep.subr.mxu0 0.0
    %750 = vmatpush1.msra.mxu0 0.0
    %751 = vmatprep.subr.mxu0 0.0
    %752 = vmatpush1.msra.mxu0 0.0
    %753 = vmatprep.subr.mxu0 0.0
    %754 = vmatpush1.msra.mxu0 0.0
    %755 = vmatprep.mubr.f32.mxu0 0.0
    %756 = vmatmul.mubr.f32.gmra.mrb[0].mxu0 %v689
    %v757 = vpop.f32.mrb[0].mxu0
    %v758 = vadd.f32 %v685, %v757
    %v759 = vpop.f32.mrb[0].mxu0
    %760 = vdwg.mxu0
    %v761 = vsel %vm231, %v758, -inf
    %762 = vmax.xlane.f32.xlu0 %v761
    %v763 = vpop.xlane.xlu0 %762
    %v764 = vsub.f32 %v758, %v763
    %v765 = vmul.f32 %v764, 1.442695
    %v766 = vpow.pop %v765
    %v767 = vsel %vm231, %v766, 0.0
    %768 = vadd.xlane.f32.xlu0 %v767
    %v769 = vpop.xlane.xlu0 %768
    %v770 = vlog2.pop %v769
    %v771 = vmul.f32 %v770, 0.6931472
    %v772 = vsub.f32 %v764, %v771
    %773 = vst [vmem:[#allocation4] sm:$0x1] %v772
    %s774 = sadd.s32 %s69, 1
    %s775 = sld [smem:[#allocation3 + %s774]]
    %s776 = scalar_lea.vmem %s1, %s775
    %v777 = vld [vmem:[%s776] sm:$0x1]
    %v778 = vld [vmem:[#allocation6] sm:$0x1]
    %v779 = vld [vmem:[%s4] sm:$0xff]
    %v780 = vld [vmem:[%s4 + $0x8] sm:$0xff]
    %v781 = vld [vmem:[%s4 + $0x10] sm:$0xff]
    %v782 = vld [vmem:[%s4 + $0x18] sm:$0xff]
    %v783 = vld [vmem:[%s5] sm:$0xff]
    %v784 = vld [vmem:[%s5 + $0x8] sm:$0xff]
    %v785 = vld [vmem:[%s5 + $0x10] sm:$0xff]
    %v786 = vld [vmem:[%s5 + $0x18] sm:$0xff]
    %v788 = vsel %vm82, %v778, 0
    %790 = vmatprep.subr.mxu0 0.0
    %791 = vmatpush1.msra.mxu0 %v783
    %792 = vmatprep.subr.mxu0 0.0
    %793 = vmatpush1.msra.mxu0 %v784
    %794 = vmatprep.subr.mxu0 0.0
    %795 = vmatpush1.msra.mxu0 %v785
    %796 = vmatprep.subr.mxu0 0.0
    %797 = vmatpush1.msra.mxu0 %v786
    %798 = vmatprep.subr.mxu0 0.0
    %799 = vmatpush1.msra.mxu0 0.0
    %800 = vmatprep.subr.mxu0 0.0
    %801 = vmatpush1.msra.mxu0 0.0
    %802 = vmatprep.subr.mxu0 0.0
    %803 = vmatpush1.msra.mxu0 0.0
    %804 = vmatprep.subr.mxu0 0.0
    %805 = vmatpush1.msra.mxu0 0.0
    %806 = vmatprep.subr.mxu0 0.0
    %807 = vmatpush1.msra.mxu0 0.0
    %808 = vmatprep.subr.mxu0 0.0
    %809 = vmatpush1.msra.mxu0 0.0
    %810 = vmatprep.subr.mxu0 0.0
    %811 = vmatpush1.msra.mxu0 0.0
    %812 = vmatprep.subr.mxu0 0.0
    %813 = vmatpush1.msra.mxu0 0.0
    %814 = vmatprep.subr.mxu0 0.0
    %815 = vmatpush1.msra.mxu0 0.0
    %816 = vmatprep.subr.mxu0 0.0
    %817 = vmatpush1.msra.mxu0 0.0
    %818 = vmatprep.subr.mxu0 0.0
    %819 = vmatpush1.msra.mxu0 0.0
    %820 = vmatprep.subr.mxu0 0.0
    %821 = vmatpush1.msra.mxu0 0.0
    %822 = vmatprep.subr.mxu0 0.0
    %823 = vmatpush1.msra.mxu0 0.0
    %824 = vmatprep.subr.mxu0 0.0
    %825 = vmatpush1.msra.mxu0 0.0
    %826 = vmatprep.subr.mxu0 0.0
    %827 = vmatpush1.msra.mxu0 0.0
    %828 = vmatprep.subr.mxu0 0.0
    %829 = vmatpush1.msra.mxu0 0.0
    %830 = vmatprep.subr.mxu0 0.0
    %831 = vmatpush1.msra.mxu0 0.0
    %832 = vmatprep.subr.mxu0 0.0
    %833 = vmatpush1.msra.mxu0 0.0
    %834 = vmatprep.subr.mxu0 0.0
    %835 = vmatpush1.msra.mxu0 0.0
    %836 = vmatprep.subr.mxu0 0.0
    %837 = vmatpush1.msra.mxu0 0.0
    %838 = vmatprep.subr.mxu0 0.0
    %839 = vmatpush1.msra.mxu0 0.0
    %840 = vmatprep.subr.mxu0 0.0
    %841 = vmatpush1.msra.mxu0 0.0
    %842 = vmatprep.subr.mxu0 0.0
    %843 = vmatpush1.msra.mxu0 0.0
    %844 = vmatprep.subr.mxu0 0.0
    %845 = vmatpush1.msra.mxu0 0.0
    %846 = vmatprep.subr.mxu0 0.0
    %847 = vmatpush1.msra.mxu0 0.0
    %848 = vmatprep.subr.mxu0 0.0
    %849 = vmatpush1.msra.mxu0 0.0
    %850 = vmatprep.subr.mxu0 0.0
    %851 = vmatpush1.msra.mxu0 0.0
    %852 = vmatprep.subr.mxu0 0.0
    %853 = vmatpush1.msra.mxu0 0.0
    %854 = vmatprep.mubr.f32.mxu0 0.0
    %855 = vmatmul.mubr.f32.gmra.mrb[0].mxu0 %v788
    %v856 = vpop.f32.mrb[0].mxu0
    %v857 = vadd.f32 0.0, %v856
    %v858 = vpop.f32.mrb[0].mxu0
    %859 = vdwg.mxu0
    %v861 = vsel %vm82, %v777, 0
    %863 = vmatprep.subr.mxu0 0.0
    %864 = vmatpush1.msra.mxu0 %v779
    %865 = vmatprep.subr.mxu0 0.0
    %866 = vmatpush1.msra.mxu0 %v780
    %867 = vmatprep.subr.mxu0 0.0
    %868 = vmatpush1.msra.mxu0 %v781
    %869 = vmatprep.subr.mxu0 0.0
    %870 = vmatpush1.msra.mxu0 %v782
    %871 = vmatprep.subr.mxu0 0.0
    %872 = vmatpush1.msra.mxu0 0.0
    %873 = vmatprep.subr.mxu0 0.0
    %874 = vmatpush1.msra.mxu0 0.0
    %875 = vmatprep.subr.mxu0 0.0
    %876 = vmatpush1.msra.mxu0 0.0
    %877 = vmatprep.subr.mxu0 0.0
    %878 = vmatpush1.msra.mxu0 0.0
    %879 = vmatprep.subr.mxu0 0.0
    %880 = vmatpush1.msra.mxu0 0.0
    %881 = vmatprep.subr.mxu0 0.0
    %882 = vmatpush1.msra.mxu0 0.0
    %883 = vmatprep.subr.mxu0 0.0
    %884 = vmatpush1.msra.mxu0 0.0
    %885 = vmatprep.subr.mxu0 0.0
    %886 = vmatpush1.msra.mxu0 0.0
    %887 = vmatprep.subr.mxu0 0.0
    %888 = vmatpush1.msra.mxu0 0.0
    %889 = vmatprep.subr.mxu0 0.0
    %890 = vmatpush1.msra.mxu0 0.0
    %891 = vmatprep.subr.mxu0 0.0
    %892 = vmatpush1.msra.mxu0 0.0
    %893 = vmatprep.subr.mxu0 0.0
    %894 = vmatpush1.msra.mxu0 0.0
    %895 = vmatprep.subr.mxu0 0.0
    %896 = vmatpush1.msra.mxu0 0.0
    %897 = vmatprep.subr.mxu0 0.0
    %898 = vmatpush1.msra.mxu0 0.0
    %899 = vmatprep.subr.mxu0 0.0
    %900 = vmatpush1.msra.mxu0 0.0
    %901 = vmatprep.subr.mxu0 0.0
    %902 = vmatpush1.msra.mxu0 0.0
    %903 = vmatprep.subr.mxu0 0.0
    %904 = vmatpush1.msra.mxu0 0.0
    %905 = vmatprep.subr.mxu0 0.0
    %906 = vmatpush1.msra.mxu0 0.0
    %907 = vmatprep.subr.mxu0 0.0
    %908 = vmatpush1.msra.mxu0 0.0
    %909 = vmatprep.subr.mxu0 0.0
    %910 = vmatpush1.msra.mxu0 0.0
    %911 = vmatprep.subr.mxu0 0.0
    %912 = vmatpush1.msra.mxu0 0.0
    %913 = vmatprep.subr.mxu0 0.0
    %914 = vmatpush1.msra.mxu0 0.0
    %915 = vmatprep.subr.mxu0 0.0
    %916 = vmatpush1.msra.mxu0 0.0
    %917 = vmatprep.subr.mxu0 0.0
    %918 = vmatpush1.msra.mxu0 0.0
    %919 = vmatprep.subr.mxu0 0.0
    %920 = vmatpush1.msra.mxu0 0.0
    %921 = vmatprep.subr.mxu0 0.0
    %922 = vmatpush1.msra.mxu0 0.0
    %923 = vmatprep.subr.mxu0 0.0
    %924 = vmatpush1.msra.mxu0 0.0
    %925 = vmatprep.subr.mxu0 0.0
    %926 = vmatpush1.msra.mxu0 0.0
    %927 = vmatprep.mubr.f32.mxu0 0.0
    %928 = vmatmul.mubr.f32.gmra.mrb[0].mxu0 %v861
    %v929 = vpop.f32.mrb[0].mxu0
    %v930 = vadd.f32 %v857, %v929
    %v931 = vpop.f32.mrb[0].mxu0
    %932 = vdwg.mxu0
    %v933 = vld [vmem:[%s6] sm:$0x1]
    %v934 = vadd.f32 %v930, %v933
    %v935 = vsel %vm231, %v934, -inf
    %936 = vmax.xlane.f32.xlu0 %v935
    %v937 = vpop.xlane.xlu0 %936
    %v938 = vsub.f32 %v934, %v937
    %v939 = vmul.f32 %v938, 1.442695
    %v940 = vpow.pop %v939
    %v941 = vsel %vm231, %v940, 0.0
    %942 = vadd.xlane.f32.xlu0 %v941
    %v943 = vpop.xlane.xlu0 %942
    %v944 = vrcp.pop %v943
    %v945 = vmul.f32 %v940, %v944
    %946 = vst [vmem:[#allocation8 + $0x1] sm:$0x1] %v945
    %v947 = vld [vmem:[%s3] sm:$0xff]
    %v948 = vld [vmem:[%s3 + $0x8] sm:$0xff]
    %v949 = vld [vmem:[%s3 + $0x10] sm:$0xff]
    %v950 = vld [vmem:[%s3 + $0x18] sm:$0xff]
    %v951 = vld [vmem:[%s3 + $0x20] sm:$0xff]
    %v952 = vld [vmem:[%s3 + $0x28] sm:$0xff]
    %v953 = vld [vmem:[%s3 + $0x30] sm:$0xff]
    %v954 = vld [vmem:[%s3 + $0x38] sm:$0xff]
    %v955 = vld [vmem:[%s3 + $0x40] sm:$0xff]
    %v956 = vld [vmem:[%s3 + $0x48] sm:$0xff]
    %v957 = vld [vmem:[%s3 + $0x50] sm:$0xff]
    %v958 = vld [vmem:[%s3 + $0x58] sm:$0xff]
    %v959 = vld [vmem:[%s3 + $0x60] sm:$0xff]
    %v960 = vld [vmem:[%s3 + $0x68] sm:$0xff]
    %v961 = vld [vmem:[%s3 + $0x70] sm:$0xff]
    %v962 = vld [vmem:[%s3 + $0x78] sm:$0xff]
    %963 = vmatprep.subr.mxu0 0.0
    %964 = vmatpush1.msra.mxu0 %v947
    %965 = vmatprep.subr.mxu0 0.0
    %966 = vmatpush1.msra.mxu0 %v948
    %967 = vmatprep.subr.mxu0 0.0
    %968 = vmatpush1.msra.mxu0 %v949
    %969 = vmatprep.subr.mxu0 0.0
    %970 = vmatpush1.msra.mxu0 %v950
    %971 = vmatprep.subr.mxu0 0.0
    %972 = vmatpush1.msra.mxu0 %v951
    %973 = vmatprep.subr.mxu0 0.0
    %974 = vmatpush1.msra.mxu0 %v952
    %975 = vmatprep.subr.mxu0 0.0
    %976 = vmatpush1.msra.mxu0 %v953
    %977 = vmatprep.subr.mxu0 0.0
    %978 = vmatpush1.msra.mxu0 %v954
    %979 = vmatprep.subr.mxu0 0.0
    %980 = vmatpush1.msra.mxu0 %v955
    %981 = vmatprep.subr.mxu0 0.0
    %982 = vmatpush1.msra.mxu0 %v956
    %983 = vmatprep.subr.mxu0 0.0
    %984 = vmatpush1.msra.mxu0 %v957
    %985 = vmatprep.subr.mxu0 0.0
    %986 = vmatpush1.msra.mxu0 %v958
    %987 = vmatprep.subr.mxu0 0.0
    %988 = vmatpush1.msra.mxu0 %v959
    %989 = vmatprep.subr.mxu0 0.0
    %990 = vmatpush1.msra.mxu0 %v960
    %991 = vmatprep.subr.mxu0 0.0
    %992 = vmatpush1.msra.mxu0 %v961
    %993 = vmatprep.subr.mxu0 0.0
    %994 = vmatpush1.msra.mxu0 %v962
    %995 = vmatprep.subr.mxu0 0.0
    %996 = vmatpush1.msra.mxu0 0.0
    %997 = vmatprep.subr.mxu0 0.0
    %998 = vmatpush1.msra.mxu0 0.0
    %999 = vmatprep.subr.mxu0 0.0
    %1000 = vmatpush1.msra.mxu0 0.0
    %1001 = vmatprep.subr.mxu0 0.0
    %1002 = vmatpush1.msra.mxu0 0.0
    %1003 = vmatprep.subr.mxu0 0.0
    %1004 = vmatpush1.msra.mxu0 0.0
    %1005 = vmatprep.subr.mxu0 0.0
    %1006 = vmatpush1.msra.mxu0 0.0
    %1007 = vmatprep.subr.mxu0 0.0
    %1008 = vmatpush1.msra.mxu0 0.0
    %1009 = vmatprep.subr.mxu0 0.0
    %1010 = vmatpush1.msra.mxu0 0.0
    %1011 = vmatprep.subr.mxu0 0.0
    %1012 = vmatpush1.msra.mxu0 0.0
    %1013 = vmatprep.subr.mxu0 0.0
    %1014 = vmatpush1.msra.mxu0 0.0
    %1015 = vmatprep.subr.mxu0 0.0
    %1016 = vmatpush1.msra.mxu0 0.0
    %1017 = vmatprep.subr.mxu0 0.0
    %1018 = vmatpush1.msra.mxu0 0.0
    %1019 = vmatprep.subr.mxu0 0.0
    %1020 = vmatpush1.msra.mxu0 0.0
    %1021 = vmatprep.subr.mxu0 0.0
    %1022 = vmatpush1.msra.mxu0 0.0
    %1023 = vmatprep.subr.mxu0 0.0
    %1024 = vmatpush1.msra.mxu0 0.0
    %1025 = vmatprep.subr.mxu0 0.0
    %1026 = vmatpush1.msra.mxu0 0.0
    %1027 = vmatprep.mubr.f32.mxu0 0.0
    %1028 = vmatmul.mubr.f32.gmra.mrb[0].mxu0 %v945
    %v1029 = vpop.f32.mrb[0].mxu0
    %v1030 = vadd.f32 0.0, %v1029
    %v1031 = vpop.f32.mrb[0].mxu0
    %1032 = vdwg.mxu0
    %v1033 = vld [vmem:[%s7] sm:$0xff]
    %v1034 = vld [vmem:[%s7 + $0x8] sm:$0xff]
    %v1035 = vld [vmem:[%s7 + $0x10] sm:$0xff]
    %v1036 = vld [vmem:[%s7 + $0x18] sm:$0xff]
    %v1037 = vld [vmem:[%s8] sm:$0xff]
    %v1038 = vld [vmem:[%s8 + $0x8] sm:$0xff]
    %v1039 = vld [vmem:[%s8 + $0x10] sm:$0xff]
    %v1040 = vld [vmem:[%s8 + $0x18] sm:$0xff]
    %v1042 = vsel %vm82, %v1030, 0
    %1044 = vmatprep.subr.mxu0 0.0
    %1045 = vmatpush1.msra.mxu0 %v1037
    %1046 = vmatprep.subr.mxu0 0.0
    %1047 = vmatpush1.msra.mxu0 %v1038
    %1048 = vmatprep.subr.mxu0 0.0
    %1049 = vmatpush1.msra.mxu0 %v1039
    %1050 = vmatprep.subr.mxu0 0.0
    %1051 = vmatpush1.msra.mxu0 %v1040
    %1052 = vmatprep.subr.mxu0 0.0
    %1053 = vmatpush1.msra.mxu0 0.0
    %1054 = vmatprep.subr.mxu0 0.0
    %1055 = vmatpush1.msra.mxu0 0.0
    %1056 = vmatprep.subr.mxu0 0.0
    %1057 = vmatpush1.msra.mxu0 0.0
    %1058 = vmatprep.subr.mxu0 0.0
    %1059 = vmatpush1.msra.mxu0 0.0
    %1060 = vmatprep.subr.mxu0 0.0
    %1061 = vmatpush1.msra.mxu0 0.0
    %1062 = vmatprep.subr.mxu0 0.0
    %1063 = vmatpush1.msra.mxu0 0.0
    %1064 = vmatprep.subr.mxu0 0.0
    %1065 = vmatpush1.msra.mxu0 0.0
    %1066 = vmatprep.subr.mxu0 0.0
    %1067 = vmatpush1.msra.mxu0 0.0
    %1068 = vmatprep.subr.mxu0 0.0
    %1069 = vmatpush1.msra.mxu0 0.0
    %1070 = vmatprep.subr.mxu0 0.0
    %1071 = vmatpush1.msra.mxu0 0.0
    %1072 = vmatprep.subr.mxu0 0.0
    %1073 = vmatpush1.msra.mxu0 0.0
    %1074 = vmatprep.subr.mxu0 0.0
    %1075 = vmatpush1.msra.mxu0 0.0
    %1076 = vmatprep.subr.mxu0 0.0
    %1077 = vmatpush1.msra.mxu0 0.0
    %1078 = vmatprep.subr.mxu0 0.0
    %1079 = vmatpush1.msra.mxu0 0.0
    %1080 = vmatprep.subr.mxu0 0.0
    %1081 = vmatpush1.msra.mxu0 0.0
    %1082 = vmatprep.subr.mxu0 0.0
    %1083 = vmatpush1.msra.mxu0 0.0
    %1084 = vmatprep.subr.mxu0 0.0
    %1085 = vmatpush1.msra.mxu0 0.0
    %1086 = vmatprep.subr.mxu0 0.0
    %1087 = vmatpush1.msra.mxu0 0.0
    %1088 = vmatprep.subr.mxu0 0.0
    %1089 = vmatpush1.msra.mxu0 0.0
    %1090 = vmatprep.subr.mxu0 0.0
    %1091 = vmatpush1.msra.mxu0 0.0
    %1092 = vmatprep.subr.mxu0 0.0
    %1093 = vmatpush1.msra.mxu0 0.0
    %1094 = vmatprep.subr.mxu0 0.0
    %1095 = vmatpush1.msra.mxu0 0.0
    %1096 = vmatprep.subr.mxu0 0.0
    %1097 = vmatpush1.msra.mxu0 0.0
    %1098 = vmatprep.subr.mxu0 0.0
    %1099 = vmatpush1.msra.mxu0 0.0
    %1100 = vmatprep.subr.mxu0 0.0
    %1101 = vmatpush1.msra.mxu0 0.0
    %1102 = vmatprep.subr.mxu0 0.0
    %1103 = vmatpush1.msra.mxu0 0.0
    %1104 = vmatprep.subr.mxu0 0.0
    %1105 = vmatpush1.msra.mxu0 0.0
    %1106 = vmatprep.subr.mxu0 0.0
    %1107 = vmatpush1.msra.mxu0 0.0
    %1108 = vmatprep.mubr.f32.mxu0 0.0
    %1109 = vmatmul.mubr.f32.gmra.mrb[0].mxu0 %v1042
    %v1110 = vpop.f32.mrb[0].mxu0
    %v1111 = vadd.f32 0.0, %v1110
    %v1112 = vpop.f32.mrb[0].mxu0
    %1113 = vdwg.mxu0
    %1114 = vmatprep.subr.mxu0 0.0
    %1115 = vmatpush1.msra.mxu0 %v1033
    %1116 = vmatprep.subr.mxu0 0.0
    %1117 = vmatpush1.msra.mxu0 %v1034
    %1118 = vmatprep.subr.mxu0 0.0
    %1119 = vmatpush1.msra.mxu0 %v1035
    %1120 = vmatprep.subr.mxu0 0.0
    %1121 = vmatpush1.msra.mxu0 %v1036
    %1122 = vmatprep.subr.mxu0 0.0
    %1123 = vmatpush1.msra.mxu0 0.0
    %1124 = vmatprep.subr.mxu0 0.0
    %1125 = vmatpush1.msra.mxu0 0.0
    %1126 = vmatprep.subr.mxu0 0.0
    %1127 = vmatpush1.msra.mxu0 0.0
    %1128 = vmatprep.subr.mxu0 0.0
    %1129 = vmatpush1.msra.mxu0 0.0
    %1130 = vmatprep.subr.mxu0 0.0
    %1131 = vmatpush1.msra.mxu0 0.0
    %1132 = vmatprep.subr.mxu0 0.0
    %1133 = vmatpush1.msra.mxu0 0.0
    %1134 = vmatprep.subr.mxu0 0.0
    %1135 = vmatpush1.msra.mxu0 0.0
    %1136 = vmatprep.subr.mxu0 0.0
    %1137 = vmatpush1.msra.mxu0 0.0
    %1138 = vmatprep.subr.mxu0 0.0
    %1139 = vmatpush1.msra.mxu0 0.0
    %1140 = vmatprep.subr.mxu0 0.0
    %1141 = vmatpush1.msra.mxu0 0.0
    %1142 = vmatprep.subr.mxu0 0.0
    %1143 = vmatpush1.msra.mxu0 0.0
    %1144 = vmatprep.subr.mxu0 0.0
    %1145 = vmatpush1.msra.mxu0 0.0
    %1146 = vmatprep.subr.mxu0 0.0
    %1147 = vmatpush1.msra.mxu0 0.0
    %1148 = vmatprep.subr.mxu0 0.0
    %1149 = vmatpush1.msra.mxu0 0.0
    %1150 = vmatprep.subr.mxu0 0.0
    %1151 = vmatpush1.msra.mxu0 0.0
    %1152 = vmatprep.subr.mxu0 0.0
    %1153 = vmatpush1.msra.mxu0 0.0
    %1154 = vmatprep.subr.mxu0 0.0
    %1155 = vmatpush1.msra.mxu0 0.0
    %1156 = vmatprep.subr.mxu0 0.0
    %1157 = vmatpush1.msra.mxu0 0.0
    %1158 = vmatprep.subr.mxu0 0.0
    %1159 = vmatpush1.msra.mxu0 0.0
    %1160 = vmatprep.subr.mxu0 0.0
    %1161 = vmatpush1.msra.mxu0 0.0
    %1162 = vmatprep.subr.mxu0 0.0
    %1163 = vmatpush1.msra.mxu0 0.0
    %1164 = vmatprep.subr.mxu0 0.0
    %1165 = vmatpush1.msra.mxu0 0.0
    %1166 = vmatprep.subr.mxu0 0.0
    %1167 = vmatpush1.msra.mxu0 0.0
    %1168 = vmatprep.subr.mxu0 0.0
    %1169 = vmatpush1.msra.mxu0 0.0
    %1170 = vmatprep.subr.mxu0 0.0
    %1171 = vmatpush1.msra.mxu0 0.0
    %1172 = vmatprep.subr.mxu0 0.0
    %1173 = vmatpush1.msra.mxu0 0.0
    %1174 = vmatprep.subr.mxu0 0.0
    %1175 = vmatpush1.msra.mxu0 0.0
    %1176 = vmatprep.subr.mxu0 0.0
    %1177 = vmatpush1.msra.mxu0 0.0
    %1178 = vmatprep.mubr.f32.mxu0 0.0
    %1179 = vmatmul.mubr.f32.gmra.mrb[0].mxu0 %v861
    %v1180 = vpop.f32.mrb[0].mxu0
    %v1181 = vadd.f32 %v1111, %v1180
    %v1182 = vpop.f32.mrb[0].mxu0
    %1183 = vdwg.mxu0
    %v1184 = vld [vmem:[%s9] sm:$0x1]
    %v1185 = vadd.f32 %v1181, %v1184
    %v1186 = vmax.f32 %v1185, 0.0
    %v1187 = vld [vmem:[%s10] sm:$0xff]
    %v1188 = vld [vmem:[%s10 + $0x8] sm:$0xff]
    %v1189 = vld [vmem:[%s10 + $0x10] sm:$0xff]
    %v1190 = vld [vmem:[%s10 + $0x18] sm:$0xff]
    %v1191 = vld [vmem:[%s11] sm:$0x1]
    %v1193 = vsel %vm82, %v1186, 0
    %1195 = vmatprep.subr.mxu0 0.0
    %1196 = vmatpush1.msra.mxu0 %v1187
    %1197 = vmatprep.subr.mxu0 0.0
    %1198 = vmatpush1.msra.mxu0 %v1188
    %1199 = vmatprep.subr.mxu0 0.0
    %1200 = vmatpush1.msra.mxu0 %v1189
    %1201 = vmatprep.subr.mxu0 0.0
    %1202 = vmatpush1.msra.mxu0 %v1190
    %1203 = vmatprep.subr.mxu0 0.0
    %1204 = vmatpush1.msra.mxu0 0.0
    %1205 = vmatprep.subr.mxu0 0.0
    %1206 = vmatpush1.msra.mxu0 0.0
    %1207 = vmatprep.subr.mxu0 0.0
    %1208 = vmatpush1.msra.mxu0 0.0
    %1209 = vmatprep.subr.mxu0 0.0
    %1210 = vmatpush1.msra.mxu0 0.0
    %1211 = vmatprep.subr.mxu0 0.0
    %1212 = vmatpush1.msra.mxu0 0.0
    %1213 = vmatprep.subr.mxu0 0.0
    %1214 = vmatpush1.msra.mxu0 0.0
    %1215 = vmatprep.subr.mxu0 0.0
    %1216 = vmatpush1.msra.mxu0 0.0
    %1217 = vmatprep.subr.mxu0 0.0
    %1218 = vmatpush1.msra.mxu0 0.0
    %1219 = vmatprep.subr.mxu0 0.0
    %1220 = vmatpush1.msra.mxu0 0.0
    %1221 = vmatprep.subr.mxu0 0.0
    %1222 = vmatpush1.msra.mxu0 0.0
    %1223 = vmatprep.subr.mxu0 0.0
    %1224 = vmatpush1.msra.mxu0 0.0
    %1225 = vmatprep.subr.mxu0 0.0
    %1226 = vmatpush1.msra.mxu0 0.0
    %1227 = vmatprep.subr.mxu0 0.0
    %1228 = vmatpush1.msra.mxu0 0.0
    %1229 = vmatprep.subr.mxu0 0.0
    %1230 = vmatpush1.msra.mxu0 0.0
    %1231 = vmatprep.subr.mxu0 0.0
    %1232 = vmatpush1.msra.mxu0 0.0
    %1233 = vmatprep.subr.mxu0 0.0
    %1234 = vmatpush1.msra.mxu0 0.0
    %1235 = vmatprep.subr.mxu0 0.0
    %1236 = vmatpush1.msra.mxu0 0.0
    %1237 = vmatprep.subr.mxu0 0.0
    %1238 = vmatpush1.msra.mxu0 0.0
    %1239 = vmatprep.subr.mxu0 0.0
    %1240 = vmatpush1.msra.mxu0 0.0
    %1241 = vmatprep.subr.mxu0 0.0
    %1242 = vmatpush1.msra.mxu0 0.0
    %1243 = vmatprep.subr.mxu0 0.0
    %1244 = vmatpush1.msra.mxu0 0.0
    %1245 = vmatprep.subr.mxu0 0.0
    %1246 = vmatpush1.msra.mxu0 0.0
    %1247 = vmatprep.subr.mxu0 0.0
    %1248 = vmatpush1.msra.mxu0 0.0
    %1249 = vmatprep.subr.mxu0 0.0
    %1250 = vmatpush1.msra.mxu0 0.0
    %1251 = vmatprep.subr.mxu0 0.0
    %1252 = vmatpush1.msra.mxu0 0.0
    %1253 = vmatprep.subr.mxu0 0.0
    %1254 = vmatpush1.msra.mxu0 0.0
    %1255 = vmatprep.subr.mxu0 0.0
    %1256 = vmatpush1.msra.mxu0 0.0
    %1257 = vmatprep.subr.mxu0 0.0
    %1258 = vmatpush1.msra.mxu0 0.0
    %1259 = vmatprep.mubr.f32.mxu0 0.0
    %1260 = vmatmul.mubr.f32.gmra.mrb[0].mxu0 %v1193
    %v1261 = vpop.f32.mrb[0].mxu0
    %v1262 = vadd.f32 %v1191, %v1261
    %v1263 = vpop.f32.mrb[0].mxu0
    %1264 = vdwg.mxu0
    %v1265 = vld [vmem:[%s12] sm:$0xff]
    %v1266 = vld [vmem:[%s12 + $0x8] sm:$0xff]
    %v1267 = vld [vmem:[%s12 + $0x10] sm:$0xff]
    %v1268 = vld [vmem:[%s12 + $0x18] sm:$0xff]
    %v1269 = vld [vmem:[%s13] sm:$0x1]
    %1270 = vmatprep.subr.mxu0 0.0
    %1271 = vmatpush1.msra.mxu0 %v1265
    %1272 = vmatprep.subr.mxu0 0.0
    %1273 = vmatpush1.msra.mxu0 %v1266
    %1274 = vmatprep.subr.mxu0 0.0
    %1275 = vmatpush1.msra.mxu0 %v1267
    %1276 = vmatprep.subr.mxu0 0.0
    %1277 = vmatpush1.msra.mxu0 %v1268
    %1278 = vmatprep.subr.mxu0 0.0
    %1279 = vmatpush1.msra.mxu0 0.0
    %1280 = vmatprep.subr.mxu0 0.0
    %1281 = vmatpush1.msra.mxu0 0.0
    %1282 = vmatprep.subr.mxu0 0.0
    %1283 = vmatpush1.msra.mxu0 0.0
    %1284 = vmatprep.subr.mxu0 0.0
    %1285 = vmatpush1.msra.mxu0 0.0
    %1286 = vmatprep.subr.mxu0 0.0
    %1287 = vmatpush1.msra.mxu0 0.0
    %1288 = vmatprep.subr.mxu0 0.0
    %1289 = vmatpush1.msra.mxu0 0.0
    %1290 = vmatprep.subr.mxu0 0.0
    %1291 = vmatpush1.msra.mxu0 0.0
    %1292 = vmatprep.subr.mxu0 0.0
    %1293 = vmatpush1.msra.mxu0 0.0
    %1294 = vmatprep.subr.mxu0 0.0
    %1295 = vmatpush1.msra.mxu0 0.0
    %1296 = vmatprep.subr.mxu0 0.0
    %1297 = vmatpush1.msra.mxu0 0.0
    %1298 = vmatprep.subr.mxu0 0.0
    %1299 = vmatpush1.msra.mxu0 0.0
    %1300 = vmatprep.subr.mxu0 0.0
    %1301 = vmatpush1.msra.mxu0 0.0
    %1302 = vmatprep.subr.mxu0 0.0
    %1303 = vmatpush1.msra.mxu0 0.0
    %1304 = vmatprep.subr.mxu0 0.0
    %1305 = vmatpush1.msra.mxu0 0.0
    %1306 = vmatprep.subr.mxu0 0.0
    %1307 = vmatpush1.msra.mxu0 0.0
    %1308 = vmatprep.subr.mxu0 0.0
    %1309 = vmatpush1.msra.mxu0 0.0
    %1310 = vmatprep.subr.mxu0 0.0
    %1311 = vmatpush1.msra.mxu0 0.0
    %1312 = vmatprep.subr.mxu0 0.0
    %1313 = vmatpush1.msra.mxu0 0.0
    %1314 = vmatprep.subr.mxu0 0.0
    %1315 = vmatpush1.msra.mxu0 0.0
    %1316 = vmatprep.subr.mxu0 0.0
    %1317 = vmatpush1.msra.mxu0 0.0
    %1318 = vmatprep.subr.mxu0 0.0
    %1319 = vmatpush1.msra.mxu0 0.0
    %1320 = vmatprep.subr.mxu0 0.0
    %1321 = vmatpush1.msra.mxu0 0.0
    %1322 = vmatprep.subr.mxu0 0.0
    %1323 = vmatpush1.msra.mxu0 0.0
    %1324 = vmatprep.subr.mxu0 0.0
    %1325 = vmatpush1.msra.mxu0 0.0
    %1326 = vmatprep.subr.mxu0 0.0
    %1327 = vmatpush1.msra.mxu0 0.0
    %1328 = vmatprep.subr.mxu0 0.0
    %1329 = vmatpush1.msra.mxu0 0.0
    %1330 = vmatprep.subr.mxu0 0.0
    %1331 = vmatpush1.msra.mxu0 0.0
    %1332 = vmatprep.subr.mxu0 0.0
    %1333 = vmatpush1.msra.mxu0 0.0
    %1334 = vmatprep.mubr.f32.mxu0 0.0
    %1335 = vmatmul.mubr.f32.gmra.mrb[0].mxu0 %v788
    %v1336 = vpop.f32.mrb[0].mxu0
    %v1337 = vadd.f32 %v1269, %v1336
    %v1338 = vpop.f32.mrb[0].mxu0
    %1339 = vdwg.mxu0
    %v1340 = vadd.f32 %v1262, %v1337
    %v1341 = vxor.u32 %v1340, 2147483648
    %v1342 = vmul.f32 %v1341, 1.442695
    %v1343 = vpow.pop %v1342
    %v1344 = vadd.f32 %v1343, 1.0
    %v1345 = vrcp.pop %v1344
    %v1346 = vmul.f32 1.0, %v1345
    %1348 = vrot.lane.b32.xlu0 %v1337, 64
    %v1349 = vpop.permute.xlu0 %1348
    %v1351 = vmul.f32 %v1346, %v1349
    %1353 = vrot.lane.b32.xlu0 %v1351, 64
    %v1354 = vpop.permute.xlu0 %1353
    %v1356 = vadd.f32 %v1262, %v1354
    %v1357 = vtanh.pop %v1356
    %v1358 = vsub.f32 1.0, %v1346
    %1360 = vrot.lane.b32.xlu0 %v1357, 96
    %v1361 = vpop.permute.xlu0 %1360
    %v1363 = vmul.f32 %v1358, %v1361
    %v1364 = vlaneseq
    %v1365 = vshrl.u32 %v1364, 7
    %v1366 = vsub.s32 0, %v1365
    %v1367 = vrot.slane %v778, %v1366
    %1368 = vrot.lane.b32.xlu0 %v1367, 32
    %v1369 = vpop.permute.xlu0 %1368
    %v1371 = vmul.f32 %v1346, %v1369
    %v1372 = vadd.f32 %v1363, %v1371
    %p1373 = scmp.lt.s32.totalorder %s774, 6
    %s1374 = scalar_select %p1373, 1, 0
    %v1375 = vstv %s1374
    %vm1376 = vcmp.eq.s32.totalorder %v1375, 1
    %v1377 = vsel %vm1376, %v1372, %v1369
    %1379 = vrot.lane.b32.xlu0 %v1377, 96
    %v1380 = vpop.permute.xlu0 %1379
    %1382 = vst.msk [vmem:[#allocation6] sm:$0x1] %vm679, %v1380
    %v1383 = vld [vmem:[%s14] sm:$0xff]
    %v1384 = vld [vmem:[%s14 + $0x8] sm:$0xff]
    %v1385 = vld [vmem:[%s14 + $0x10] sm:$0xff]
    %v1386 = vld [vmem:[%s14 + $0x18] sm:$0xff]
    %v1387 = vld [vmem:[%s15] sm:$0x1]
    %1389 = vrot.lane.b32.xlu0 %v1372, 96
    %v1390 = vpop.permute.xlu0 %1389
    %v1391 = vsel %vm82, %v1390, 0
    %1393 = vmatprep.subr.mxu0 0.0
    %1394 = vmatpush1.msra.mxu0 %v1383
    %1395 = vmatprep.subr.mxu0 0.0
    %1396 = vmatpush1.msra.mxu0 %v1384
    %1397 = vmatprep.subr.mxu0 0.0
    %1398 = vmatpush1.msra.mxu0 %v1385
    %1399 = vmatprep.subr.mxu0 0.0
    %1400 = vmatpush1.msra.mxu0 %v1386
    %1401 = vmatprep.subr.mxu0 0.0
    %1402 = vmatpush1.msra.mxu0 0.0
    %1403 = vmatprep.subr.mxu0 0.0
    %1404 = vmatpush1.msra.mxu0 0.0
    %1405 = vmatprep.subr.mxu0 0.0
    %1406 = vmatpush1.msra.mxu0 0.0
    %1407 = vmatprep.subr.mxu0 0.0
    %1408 = vmatpush1.msra.mxu0 0.0
    %1409 = vmatprep.subr.mxu0 0.0
    %1410 = vmatpush1.msra.mxu0 0.0
    %1411 = vmatprep.subr.mxu0 0.0
    %1412 = vmatpush1.msra.mxu0 0.0
    %1413 = vmatprep.subr.mxu0 0.0
    %1414 = vmatpush1.msra.mxu0 0.0
    %1415 = vmatprep.subr.mxu0 0.0
    %1416 = vmatpush1.msra.mxu0 0.0
    %1417 = vmatprep.subr.mxu0 0.0
    %1418 = vmatpush1.msra.mxu0 0.0
    %1419 = vmatprep.subr.mxu0 0.0
    %1420 = vmatpush1.msra.mxu0 0.0
    %1421 = vmatprep.subr.mxu0 0.0
    %1422 = vmatpush1.msra.mxu0 0.0
    %1423 = vmatprep.subr.mxu0 0.0
    %1424 = vmatpush1.msra.mxu0 0.0
    %1425 = vmatprep.subr.mxu0 0.0
    %1426 = vmatpush1.msra.mxu0 0.0
    %1427 = vmatprep.subr.mxu0 0.0
    %1428 = vmatpush1.msra.mxu0 0.0
    %1429 = vmatprep.subr.mxu0 0.0
    %1430 = vmatpush1.msra.mxu0 0.0
    %1431 = vmatprep.subr.mxu0 0.0
    %1432 = vmatpush1.msra.mxu0 0.0
    %1433 = vmatprep.subr.mxu0 0.0
    %1434 = vmatpush1.msra.mxu0 0.0
    %1435 = vmatprep.subr.mxu0 0.0
    %1436 = vmatpush1.msra.mxu0 0.0
    %1437 = vmatprep.subr.mxu0 0.0
    %1438 = vmatpush1.msra.mxu0 0.0
    %1439 = vmatprep.subr.mxu0 0.0
    %1440 = vmatpush1.msra.mxu0 0.0
    %1441 = vmatprep.subr.mxu0 0.0
    %1442 = vmatpush1.msra.mxu0 0.0
    %1443 = vmatprep.subr.mxu0 0.0
    %1444 = vmatpush1.msra.mxu0 0.0
    %1445 = vmatprep.subr.mxu0 0.0
    %1446 = vmatpush1.msra.mxu0 0.0
    %1447 = vmatprep.subr.mxu0 0.0
    %1448 = vmatpush1.msra.mxu0 0.0
    %1449 = vmatprep.subr.mxu0 0.0
    %1450 = vmatpush1.msra.mxu0 0.0
    %1451 = vmatprep.subr.mxu0 0.0
    %1452 = vmatpush1.msra.mxu0 0.0
    %1453 = vmatprep.subr.mxu0 0.0
    %1454 = vmatpush1.msra.mxu0 0.0
    %1455 = vmatprep.subr.mxu0 0.0
    %1456 = vmatpush1.msra.mxu0 0.0
    %1457 = vmatprep.mubr.f32.mxu0 0.0
    %1458 = vmatmul.mubr.f32.gmra.mrb[0].mxu0 %v1391
    %v1459 = vpop.f32.mrb[0].mxu0
    %v1460 = vadd.f32 %v1387, %v1459
    %v1461 = vpop.f32.mrb[0].mxu0
    %1462 = vdwg.mxu0
    %v1463 = vsel %vm231, %v1460, -inf
    %1464 = vmax.xlane.f32.xlu0 %v1463
    %v1465 = vpop.xlane.xlu0 %1464
    %v1466 = vsub.f32 %v1460, %v1465
    %v1467 = vmul.f32 %v1466, 1.442695
    %v1468 = vpow.pop %v1467
    %v1469 = vsel %vm231, %v1468, 0.0
    %1470 = vadd.xlane.f32.xlu0 %v1469
    %v1471 = vpop.xlane.xlu0 %1470
    %v1472 = vlog2.pop %v1471
    %v1473 = vmul.f32 %v1472, 0.6931472
    %v1474 = vsub.f32 %v1466, %v1473
    %1475 = vst [vmem:[#allocation4 + $0x1] sm:$0x1] %v1474
    %s1476 = sadd.s32 %s69, 2
    %s1477 = sld [smem:[#allocation3 + %s1476]]
    %s1478 = scalar_lea.vmem %s1, %s1477
    %v1479 = vld [vmem:[%s1478] sm:$0x1]
    %v1480 = vld [vmem:[#allocation6] sm:$0x1]
    %v1481 = vld [vmem:[%s4] sm:$0xff]
    %v1482 = vld [vmem:[%s4 + $0x8] sm:$0xff]
    %v1483 = vld [vmem:[%s4 + $0x10] sm:$0xff]
    %v1484 = vld [vmem:[%s4 + $0x18] sm:$0xff]
    %v1485 = vld [vmem:[%s5] sm:$0xff]
    %v1486 = vld [vmem:[%s5 + $0x8] sm:$0xff]
    %v1487 = vld [vmem:[%s5 + $0x10] sm:$0xff]
    %v1488 = vld [vmem:[%s5 + $0x18] sm:$0xff]
    %v1490 = vsel %vm82, %v1480, 0
    %1492 = vmatprep.subr.mxu0 0.0
    %1493 = vmatpush1.msra.mxu0 %v1485
    %1494 = vmatprep.subr.mxu0 0.0
    %1495 = vmatpush1.msra.mxu0 %v1486
    %1496 = vmatprep.subr.mxu0 0.0
    %1497 = vmatpush1.msra.mxu0 %v1487
    %1498 = vmatprep.subr.mxu0 0.0
    %1499 = vmatpush1.msra.mxu0 %v1488
    %1500 = vmatprep.subr.mxu0 0.0
    %1501 = vmatpush1.msra.mxu0 0.0
    %1502 = vmatprep.subr.mxu0 0.0
    %1503 = vmatpush1.msra.mxu0 0.0
    %1504 = vmatprep.subr.mxu0 0.0
    %1505 = vmatpush1.msra.mxu0 0.0
    %1506 = vmatprep.subr.mxu0 0.0
    %1507 = vmatpush1.msra.mxu0 0.0
    %1508 = vmatprep.subr.mxu0 0.0
    %1509 = vmatpush1.msra.mxu0 0.0
    %1510 = vmatprep.subr.mxu0 0.0
    %1511 = vmatpush1.msra.mxu0 0.0
    %1512 = vmatprep.subr.mxu0 0.0
    %1513 = vmatpush1.msra.mxu0 0.0
    %1514 = vmatprep.subr.mxu0 0.0
    %1515 = vmatpush1.msra.mxu0 0.0
    %1516 = vmatprep.subr.mxu0 0.0
    %1517 = vmatpush1.msra.mxu0 0.0
    %1518 = vmatprep.subr.mxu0 0.0
    %1519 = vmatpush1.msra.mxu0 0.0
    %1520 = vmatprep.subr.mxu0 0.0
    %1521 = vmatpush1.msra.mxu0 0.0
    %1522 = vmatprep.subr.mxu0 0.0
    %1523 = vmatpush1.msra.mxu0 0.0
    %1524 = vmatprep.subr.mxu0 0.0
    %1525 = vmatpush1.msra.mxu0 0.0
    %1526 = vmatprep.subr.mxu0 0.0
    %1527 = vmatpush1.msra.mxu0 0.0
    %1528 = vmatprep.subr.mxu0 0.0
    %1529 = vmatpush1.msra.mxu0 0.0
    %1530 = vmatprep.subr.mxu0 0.0
    %1531 = vmatpush1.msra.mxu0 0.0
    %1532 = vmatprep.subr.mxu0 0.0
    %1533 = vmatpush1.msra.mxu0 0.0
    %1534 = vmatprep.subr.mxu0 0.0
    %1535 = vmatpush1.msra.mxu0 0.0
    %1536 = vmatprep.subr.mxu0 0.0
    %1537 = vmatpush1.msra.mxu0 0.0
    %1538 = vmatprep.subr.mxu0 0.0
    %1539 = vmatpush1.msra.mxu0 0.0
    %1540 = vmatprep.subr.mxu0 0.0
    %1541 = vmatpush1.msra.mxu0 0.0
    %1542 = vmatprep.subr.mxu0 0.0
    %1543 = vmatpush1.msra.mxu0 0.0
    %1544 = vmatprep.subr.mxu0 0.0
    %1545 = vmatpush1.msra.mxu0 0.0
    %1546 = vmatprep.subr.mxu0 0.0
    %1547 = vmatpush1.msra.mxu0 0.0
    %1548 = vmatprep.subr.mxu0 0.0
    %1549 = vmatpush1.msra.mxu0 0.0
    %1550 = vmatprep.subr.mxu0 0.0
    %1551 = vmatpush1.msra.mxu0 0.0
    %1552 = vmatprep.subr.mxu0 0.0
    %1553 = vmatpush1.msra.mxu0 0.0
    %1554 = vmatprep.subr.mxu0 0.0
    %1555 = vmatpush1.msra.mxu0 0.0
    %1556 = vmatprep.mubr.f32.mxu0 0.0
    %1557 = vmatmul.mubr.f32.gmra.mrb[0].mxu0 %v1490
    %v1558 = vpop.f32.mrb[0].mxu0
    %v1559 = vadd.f32 0.0, %v1558
    %v1560 = vpop.f32.mrb[0].mxu0
    %1561 = vdwg.mxu0
    %v1563 = vsel %vm82, %v1479, 0
    %1565 = vmatprep.subr.mxu0 0.0
    %1566 = vmatpush1.msra.mxu0 %v1481
    %1567 = vmatprep.subr.mxu0 0.0
    %1568 = vmatpush1.msra.mxu0 %v1482
    %1569 = vmatprep.subr.mxu0 0.0
    %1570 = vmatpush1.msra.mxu0 %v1483
    %1571 = vmatprep.subr.mxu0 0.0
    %1572 = vmatpush1.msra.mxu0 %v1484
    %1573 = vmatprep.subr.mxu0 0.0
    %1574 = vmatpush1.msra.mxu0 0.0
    %1575 = vmatprep.subr.mxu0 0.0
    %1576 = vmatpush1.msra.mxu0 0.0
    %1577 = vmatprep.subr.mxu0 0.0
    %1578 = vmatpush1.msra.mxu0 0.0
    %1579 = vmatprep.subr.mxu0 0.0
    %1580 = vmatpush1.msra.mxu0 0.0
    %1581 = vmatprep.subr.mxu0 0.0
    %1582 = vmatpush1.msra.mxu0 0.0
    %1583 = vmatprep.subr.mxu0 0.0
    %1584 = vmatpush1.msra.mxu0 0.0
    %1585 = vmatprep.subr.mxu0 0.0
    %1586 = vmatpush1.msra.mxu0 0.0
    %1587 = vmatprep.subr.mxu0 0.0
    %1588 = vmatpush1.msra.mxu0 0.0
    %1589 = vmatprep.subr.mxu0 0.0
    %1590 = vmatpush1.msra.mxu0 0.0
    %1591 = vmatprep.subr.mxu0 0.0
    %1592 = vmatpush1.msra.mxu0 0.0
    %1593 = vmatprep.subr.mxu0 0.0
    %1594 = vmatpush1.msra.mxu0 0.0
    %1595 = vmatprep.subr.mxu0 0.0
    %1596 = vmatpush1.msra.mxu0 0.0
    %1597 = vmatprep.subr.mxu0 0.0
    %1598 = vmatpush1.msra.mxu0 0.0
    %1599 = vmatprep.subr.mxu0 0.0
    %1600 = vmatpush1.msra.mxu0 0.0
    %1601 = vmatprep.subr.mxu0 0.0
    %1602 = vmatpush1.msra.mxu0 0.0
    %1603 = vmatprep.subr.mxu0 0.0
    %1604 = vmatpush1.msra.mxu0 0.0
    %1605 = vmatprep.subr.mxu0 0.0
    %1606 = vmatpush1.msra.mxu0 0.0
    %1607 = vmatprep.subr.mxu0 0.0
    %1608 = vmatpush1.msra.mxu0 0.0
    %1609 = vmatprep.subr.mxu0 0.0
    %1610 = vmatpush1.msra.mxu0 0.0
    %1611 = vmatprep.subr.mxu0 0.0
    %1612 = vmatpush1.msra.mxu0 0.0
    %1613 = vmatprep.subr.mxu0 0.0
    %1614 = vmatpush1.msra.mxu0 0.0
    %1615 = vmatprep.subr.mxu0 0.0
    %1616 = vmatpush1.msra.mxu0 0.0
    %1617 = vmatprep.subr.mxu0 0.0
    %1618 = vmatpush1.msra.mxu0 0.0
    %1619 = vmatprep.subr.mxu0 0.0
    %1620 = vmatpush1.msra.mxu0 0.0
    %1621 = vmatprep.subr.mxu0 0.0
    %1622 = vmatpush1.msra.mxu0 0.0
    %1623 = vmatprep.subr.mxu0 0.0
    %1624 = vmatpush1.msra.mxu0 0.0
    %1625 = vmatprep.subr.mxu0 0.0
    %1626 = vmatpush1.msra.mxu0 0.0
    %1627 = vmatprep.subr.mxu0 0.0
    %1628 = vmatpush1.msra.mxu0 0.0
    %1629 = vmatprep.mubr.f32.mxu0 0.0
    %1630 = vmatmul.mubr.f32.gmra.mrb[0].mxu0 %v1563
    %v1631 = vpop.f32.mrb[0].mxu0
    %v1632 = vadd.f32 %v1559, %v1631
    %v1633 = vpop.f32.mrb[0].mxu0
    %1634 = vdwg.mxu0
    %v1635 = vld [vmem:[%s6] sm:$0x1]
    %v1636 = vadd.f32 %v1632, %v1635
    %v1637 = vsel %vm231, %v1636, -inf
    %1638 = vmax.xlane.f32.xlu0 %v1637
    %v1639 = vpop.xlane.xlu0 %1638
    %v1640 = vsub.f32 %v1636, %v1639
    %v1641 = vmul.f32 %v1640, 1.442695
    %v1642 = vpow.pop %v1641
    %v1643 = vsel %vm231, %v1642, 0.0
    %1644 = vadd.xlane.f32.xlu0 %v1643
    %v1645 = vpop.xlane.xlu0 %1644
    %v1646 = vrcp.pop %v1645
    %v1647 = vmul.f32 %v1642, %v1646
    %1648 = vst [vmem:[#allocation8 + $0x2] sm:$0x1] %v1647
    %v1649 = vld [vmem:[%s3] sm:$0xff]
    %v1650 = vld [vmem:[%s3 + $0x8] sm:$0xff]
    %v1651 = vld [vmem:[%s3 + $0x10] sm:$0xff]
    %v1652 = vld [vmem:[%s3 + $0x18] sm:$0xff]
    %v1653 = vld [vmem:[%s3 + $0x20] sm:$0xff]
    %v1654 = vld [vmem:[%s3 + $0x28] sm:$0xff]
    %v1655 = vld [vmem:[%s3 + $0x30] sm:$0xff]
    %v1656 = vld [vmem:[%s3 + $0x38] sm:$0xff]
    %v1657 = vld [vmem:[%s3 + $0x40] sm:$0xff]
    %v1658 = vld [vmem:[%s3 + $0x48] sm:$0xff]
    %v1659 = vld [vmem:[%s3 + $0x50] sm:$0xff]
    %v1660 = vld [vmem:[%s3 + $0x58] sm:$0xff]
    %v1661 = vld [vmem:[%s3 + $0x60] sm:$0xff]
    %v1662 = vld [vmem:[%s3 + $0x68] sm:$0xff]
    %v1663 = vld [vmem:[%s3 + $0x70] sm:$0xff]
    %v1664 = vld [vmem:[%s3 + $0x78] sm:$0xff]
    %1665 = vmatprep.subr.mxu0 0.0
    %1666 = vmatpush1.msra.mxu0 %v1649
    %1667 = vmatprep.subr.mxu0 0.0
    %1668 = vmatpush1.msra.mxu0 %v1650
    %1669 = vmatprep.subr.mxu0 0.0
    %1670 = vmatpush1.msra.mxu0 %v1651
    %1671 = vmatprep.subr.mxu0 0.0
    %1672 = vmatpush1.msra.mxu0 %v1652
    %1673 = vmatprep.subr.mxu0 0.0
    %1674 = vmatpush1.msra.mxu0 %v1653
    %1675 = vmatprep.subr.mxu0 0.0
    %1676 = vmatpush1.msra.mxu0 %v1654
    %1677 = vmatprep.subr.mxu0 0.0
    %1678 = vmatpush1.msra.mxu0 %v1655
    %1679 = vmatprep.subr.mxu0 0.0
    %1680 = vmatpush1.msra.mxu0 %v1656
    %1681 = vmatprep.subr.mxu0 0.0
    %1682 = vmatpush1.msra.mxu0 %v1657
    %1683 = vmatprep.subr.mxu0 0.0
    %1684 = vmatpush1.msra.mxu0 %v1658
    %1685 = vmatprep.subr.mxu0 0.0
    %1686 = vmatpush1.msra.mxu0 %v1659
    %1687 = vmatprep.subr.mxu0 0.0
    %1688 = vmatpush1.msra.mxu0 %v1660
    %1689 = vmatprep.subr.mxu0 0.0
    %1690 = vmatpush1.msra.mxu0 %v1661
    %1691 = vmatprep.subr.mxu0 0.0
    %1692 = vmatpush1.msra.mxu0 %v1662
    %1693 = vmatprep.subr.mxu0 0.0
    %1694 = vmatpush1.msra.mxu0 %v1663
    %1695 = vmatprep.subr.mxu0 0.0
    %1696 = vmatpush1.msra.mxu0 %v1664
    %1697 = vmatprep.subr.mxu0 0.0
    %1698 = vmatpush1.msra.mxu0 0.0
    %1699 = vmatprep.subr.mxu0 0.0
    %1700 = vmatpush1.msra.mxu0 0.0
    %1701 = vmatprep.subr.mxu0 0.0
    %1702 = vmatpush1.msra.mxu0 0.0
    %1703 = vmatprep.subr.mxu0 0.0
    %1704 = vmatpush1.msra.mxu0 0.0
    %1705 = vmatprep.subr.mxu0 0.0
    %1706 = vmatpush1.msra.mxu0 0.0
    %1707 = vmatprep.subr.mxu0 0.0
    %1708 = vmatpush1.msra.mxu0 0.0
    %1709 = vmatprep.subr.mxu0 0.0
    %1710 = vmatpush1.msra.mxu0 0.0
    %1711 = vmatprep.subr.mxu0 0.0
    %1712 = vmatpush1.msra.mxu0 0.0
    %1713 = vmatprep.subr.mxu0 0.0
    %1714 = vmatpush1.msra.mxu0 0.0
    %1715 = vmatprep.subr.mxu0 0.0
    %1716 = vmatpush1.msra.mxu0 0.0
    %1717 = vmatprep.subr.mxu0 0.0
    %1718 = vmatpush1.msra.mxu0 0.0
    %1719 = vmatprep.subr.mxu0 0.0
    %1720 = vmatpush1.msra.mxu0 0.0
    %1721 = vmatprep.subr.mxu0 0.0
    %1722 = vmatpush1.msra.mxu0 0.0
    %1723 = vmatprep.subr.mxu0 0.0
    %1724 = vmatpush1.msra.mxu0 0.0
    %1725 = vmatprep.subr.mxu0 0.0
    %1726 = vmatpush1.msra.mxu0 0.0
    %1727 = vmatprep.subr.mxu0 0.0
    %1728 = vmatpush1.msra.mxu0 0.0
    %1729 = vmatprep.mubr.f32.mxu0 0.0
    %1730 = vmatmul.mubr.f32.gmra.mrb[0].mxu0 %v1647
    %v1731 = vpop.f32.mrb[0].mxu0
    %v1732 = vadd.f32 0.0, %v1731
    %v1733 = vpop.f32.mrb[0].mxu0
    %1734 = vdwg.mxu0
    %v1735 = vld [vmem:[%s7] sm:$0xff]
    %v1736 = vld [vmem:[%s7 + $0x8] sm:$0xff]
    %v1737 = vld [vmem:[%s7 + $0x10] sm:$0xff]
    %v1738 = vld [vmem:[%s7 + $0x18] sm:$0xff]
    %v1739 = vld [vmem:[%s8] sm:$0xff]
    %v1740 = vld [vmem:[%s8 + $0x8] sm:$0xff]
    %v1741 = vld [vmem:[%s8 + $0x10] sm:$0xff]
    %v1742 = vld [vmem:[%s8 + $0x18] sm:$0xff]
    %v1744 = vsel %vm82, %v1732, 0
    %1746 = vmatprep.subr.mxu0 0.0
    %1747 = vmatpush1.msra.mxu0 %v1739
    %1748 = vmatprep.subr.mxu0 0.0
    %1749 = vmatpush1.msra.mxu0 %v1740
    %1750 = vmatprep.subr.mxu0 0.0
    %1751 = vmatpush1.msra.mxu0 %v1741
    %1752 = vmatprep.subr.mxu0 0.0
    %1753 = vmatpush1.msra.mxu0 %v1742
    %1754 = vmatprep.subr.mxu0 0.0
    %1755 = vmatpush1.msra.mxu0 0.0
    %1756 = vmatprep.subr.mxu0 0.0
    %1757 = vmatpush1.msra.mxu0 0.0
    %1758 = vmatprep.subr.mxu0 0.0
    %1759 = vmatpush1.msra.mxu0 0.0
    %1760 = vmatprep.subr.mxu0 0.0
    %1761 = vmatpush1.msra.mxu0 0.0
    %1762 = vmatprep.subr.mxu0 0.0
    %1763 = vmatpush1.msra.mxu0 0.0
    %1764 = vmatprep.subr.mxu0 0.0
    %1765 = vmatpush1.msra.mxu0 0.0
    %1766 = vmatprep.subr.mxu0 0.0
    %1767 = vmatpush1.msra.mxu0 0.0
    %1768 = vmatprep.subr.mxu0 0.0
    %1769 = vmatpush1.msra.mxu0 0.0
    %1770 = vmatprep.subr.mxu0 0.0
    %1771 = vmatpush1.msra.mxu0 0.0
    %1772 = vmatprep.subr.mxu0 0.0
    %1773 = vmatpush1.msra.mxu0 0.0
    %1774 = vmatprep.subr.mxu0 0.0
    %1775 = vmatpush1.msra.mxu0 0.0
    %1776 = vmatprep.subr.mxu0 0.0
    %1777 = vmatpush1.msra.mxu0 0.0
    %1778 = vmatprep.subr.mxu0 0.0
    %1779 = vmatpush1.msra.mxu0 0.0
    %1780 = vmatprep.subr.mxu0 0.0
    %1781 = vmatpush1.msra.mxu0 0.0
    %1782 = vmatprep.subr.mxu0 0.0
    %1783 = vmatpush1.msra.mxu0 0.0
    %1784 = vmatprep.subr.mxu0 0.0
    %1785 = vmatpush1.msra.mxu0 0.0
    %1786 = vmatprep.subr.mxu0 0.0
    %1787 = vmatpush1.msra.mxu0 0.0
    %1788 = vmatprep.subr.mxu0 0.0
    %1789 = vmatpush1.msra.mxu0 0.0
    %1790 = vmatprep.subr.mxu0 0.0
    %1791 = vmatpush1.msra.mxu0 0.0
    %1792 = vmatprep.subr.mxu0 0.0
    %1793 = vmatpush1.msra.mxu0 0.0
    %1794 = vmatprep.subr.mxu0 0.0
    %1795 = vmatpush1.msra.mxu0 0.0
    %1796 = vmatprep.subr.mxu0 0.0
    %1797 = vmatpush1.msra.mxu0 0.0
    %1798 = vmatprep.subr.mxu0 0.0
    %1799 = vmatpush1.msra.mxu0 0.0
    %1800 = vmatprep.subr.mxu0 0.0
    %1801 = vmatpush1.msra.mxu0 0.0
    %1802 = vmatprep.subr.mxu0 0.0
    %1803 = vmatpush1.msra.mxu0 0.0
    %1804 = vmatprep.subr.mxu0 0.0
    %1805 = vmatpush1.msra.mxu0 0.0
    %1806 = vmatprep.subr.mxu0 0.0
    %1807 = vmatpush1.msra.mxu0 0.0
    %1808 = vmatprep.subr.mxu0 0.0
    %1809 = vmatpush1.msra.mxu0 0.0
    %1810 = vmatprep.mubr.f32.mxu0 0.0
    %1811 = vmatmul.mubr.f32.gmra.mrb[0].mxu0 %v1744
    %v1812 = vpop.f32.mrb[0].mxu0
    %v1813 = vadd.f32 0.0, %v1812
    %v1814 = vpop.f32.mrb[0].mxu0
    %1815 = vdwg.mxu0
    %1816 = vmatprep.subr.mxu0 0.0
    %1817 = vmatpush1.msra.mxu0 %v1735
    %1818 = vmatprep.subr.mxu0 0.0
    %1819 = vmatpush1.msra.mxu0 %v1736
    %1820 = vmatprep.subr.mxu0 0.0
    %1821 = vmatpush1.msra.mxu0 %v1737
    %1822 = vmatprep.subr.mxu0 0.0
    %1823 = vmatpush1.msra.mxu0 %v1738
    %1824 = vmatprep.subr.mxu0 0.0
    %1825 = vmatpush1.msra.mxu0 0.0
    %1826 = vmatprep.subr.mxu0 0.0
    %1827 = vmatpush1.msra.mxu0 0.0
    %1828 = vmatprep.subr.mxu0 0.0
    %1829 = vmatpush1.msra.mxu0 0.0
    %1830 = vmatprep.subr.mxu0 0.0
    %1831 = vmatpush1.msra.mxu0 0.0
    %1832 = vmatprep.subr.mxu0 0.0
    %1833 = vmatpush1.msra.mxu0 0.0
    %1834 = vmatprep.subr.mxu0 0.0
    %1835 = vmatpush1.msra.mxu0 0.0
    %1836 = vmatprep.subr.mxu0 0.0
    %1837 = vmatpush1.msra.mxu0 0.0
    %1838 = vmatprep.subr.mxu0 0.0
    %1839 = vmatpush1.msra.mxu0 0.0
    %1840 = vmatprep.subr.mxu0 0.0
    %1841 = vmatpush1.msra.mxu0 0.0
    %1842 = vmatprep.subr.mxu0 0.0
    %1843 = vmatpush1.msra.mxu0 0.0
    %1844 = vmatprep.subr.mxu0 0.0
    %1845 = vmatpush1.msra.mxu0 0.0
    %1846 = vmatprep.subr.mxu0 0.0
    %1847 = vmatpush1.msra.mxu0 0.0
    %1848 = vmatprep.subr.mxu0 0.0
    %1849 = vmatpush1.msra.mxu0 0.0
    %1850 = vmatprep.subr.mxu0 0.0
    %1851 = vmatpush1.msra.mxu0 0.0
    %1852 = vmatprep.subr.mxu0 0.0
    %1853 = vmatpush1.msra.mxu0 0.0
    %1854 = vmatprep.subr.mxu0 0.0
    %1855 = vmatpush1.msra.mxu0 0.0
    %1856 = vmatprep.subr.mxu0 0.0
    %1857 = vmatpush1.msra.mxu0 0.0
    %1858 = vmatprep.subr.mxu0 0.0
    %1859 = vmatpush1.msra.mxu0 0.0
    %1860 = vmatprep.subr.mxu0 0.0
    %1861 = vmatpush1.msra.mxu0 0.0
    %1862 = vmatprep.subr.mxu0 0.0
    %1863 = vmatpush1.msra.mxu0 0.0
    %1864 = vmatprep.subr.mxu0 0.0
    %1865 = vmatpush1.msra.mxu0 0.0
    %1866 = vmatprep.subr.mxu0 0.0
    %1867 = vmatpush1.msra.mxu0 0.0
    %1868 = vmatprep.subr.mxu0 0.0
    %1869 = vmatpush1.msra.mxu0 0.0
    %1870 = vmatprep.subr.mxu0 0.0
    %1871 = vmatpush1.msra.mxu0 0.0
    %1872 = vmatprep.subr.mxu0 0.0
    %1873 = vmatpush1.msra.mxu0 0.0
    %1874 = vmatprep.subr.mxu0 0.0
    %1875 = vmatpush1.msra.mxu0 0.0
    %1876 = vmatprep.subr.mxu0 0.0
    %1877 = vmatpush1.msra.mxu0 0.0
    %1878 = vmatprep.subr.mxu0 0.0
    %1879 = vmatpush1.msra.mxu0 0.0
    %1880 = vmatprep.mubr.f32.mxu0 0.0
    %1881 = vmatmul.mubr.f32.gmra.mrb[0].mxu0 %v1563
    %v1882 = vpop.f32.mrb[0].mxu0
    %v1883 = vadd.f32 %v1813, %v1882
    %v1884 = vpop.f32.mrb[0].mxu0
    %1885 = vdwg.mxu0
    %v1886 = vld [vmem:[%s9] sm:$0x1]
    %v1887 = vadd.f32 %v1883, %v1886
    %v1888 = vmax.f32 %v1887, 0.0
    %v1889 = vld [vmem:[%s10] sm:$0xff]
    %v1890 = vld [vmem:[%s10 + $0x8] sm:$0xff]
    %v1891 = vld [vmem:[%s10 + $0x10] sm:$0xff]
    %v1892 = vld [vmem:[%s10 + $0x18] sm:$0xff]
    %v1893 = vld [vmem:[%s11] sm:$0x1]
    %v1895 = vsel %vm82, %v1888, 0
    %1897 = vmatprep.subr.mxu0 0.0
    %1898 = vmatpush1.msra.mxu0 %v1889
    %1899 = vmatprep.subr.mxu0 0.0
    %1900 = vmatpush1.msra.mxu0 %v1890
    %1901 = vmatprep.subr.mxu0 0.0
    %1902 = vmatpush1.msra.mxu0 %v1891
    %1903 = vmatprep.subr.mxu0 0.0
    %1904 = vmatpush1.msra.mxu0 %v1892
    %1905 = vmatprep.subr.mxu0 0.0
    %1906 = vmatpush1.msra.mxu0 0.0
    %1907 = vmatprep.subr.mxu0 0.0
    %1908 = vmatpush1.msra.mxu0 0.0
    %1909 = vmatprep.subr.mxu0 0.0
    %1910 = vmatpush1.msra.mxu0 0.0
    %1911 = vmatprep.subr.mxu0 0.0
    %1912 = vmatpush1.msra.mxu0 0.0
    %1913 = vmatprep.subr.mxu0 0.0
    %1914 = vmatpush1.msra.mxu0 0.0
    %1915 = vmatprep.subr.mxu0 0.0
    %1916 = vmatpush1.msra.mxu0 0.0
    %1917 = vmatprep.subr.mxu0 0.0
    %1918 = vmatpush1.msra.mxu0 0.0
    %1919 = vmatprep.subr.mxu0 0.0
    %1920 = vmatpush1.msra.mxu0 0.0
    %1921 = vmatprep.subr.mxu0 0.0
    %1922 = vmatpush1.msra.mxu0 0.0
    %1923 = vmatprep.subr.mxu0 0.0
    %1924 = vmatpush1.msra.mxu0 0.0
    %1925 = vmatprep.subr.mxu0 0.0
    %1926 = vmatpush1.msra.mxu0 0.0
    %1927 = vmatprep.subr.mxu0 0.0
    %1928 = vmatpush1.msra.mxu0 0.0
    %1929 = vmatprep.subr.mxu0 0.0
    %1930 = vmatpush1.msra.mxu0 0.0
    %1931 = vmatprep.subr.mxu0 0.0
    %1932 = vmatpush1.msra.mxu0 0.0
    %1933 = vmatprep.subr.mxu0 0.0
    %1934 = vmatpush1.msra.mxu0 0.0
    %1935 = vmatprep.subr.mxu0 0.0
    %1936 = vmatpush1.msra.mxu0 0.0
    %1937 = vmatprep.subr.mxu0 0.0
    %1938 = vmatpush1.msra.mxu0 0.0
    %1939 = vmatprep.subr.mxu0 0.0
    %1940 = vmatpush1.msra.mxu0 0.0
    %1941 = vmatprep.subr.mxu0 0.0
    %1942 = vmatpush1.msra.mxu0 0.0
    %1943 = vmatprep.subr.mxu0 0.0
    %1944 = vmatpush1.msra.mxu0 0.0
    %1945 = vmatprep.subr.mxu0 0.0
    %1946 = vmatpush1.msra.mxu0 0.0
    %1947 = vmatprep.subr.mxu0 0.0
    %1948 = vmatpush1.msra.mxu0 0.0
    %1949 = vmatprep.subr.mxu0 0.0
    %1950 = vmatpush1.msra.mxu0 0.0
    %1951 = vmatprep.subr.mxu0 0.0
    %1952 = vmatpush1.msra.mxu0 0.0
    %1953 = vmatprep.subr.mxu0 0.0
    %1954 = vmatpush1.msra.mxu0 0.0
    %1955 = vmatprep.subr.mxu0 0.0
    %1956 = vmatpush1.msra.mxu0 0.0
    %1957 = vmatprep.subr.mxu0 0.0
    %1958 = vmatpush1.msra.mxu0 0.0
    %1959 = vmatprep.subr.mxu0 0.0
    %1960 = vmatpush1.msra.mxu0 0.0
    %1961 = vmatprep.mubr.f32.mxu0 0.0
    %1962 = vmatmul.mubr.f32.gmra.mrb[0].mxu0 %v1895
    %v1963 = vpop.f32.mrb[0].mxu0
    %v1964 = vadd.f32 %v1893, %v1963
    %v1965 = vpop.f32.mrb[0].mxu0
    %1966 = vdwg.mxu0
    %v1967 = vld [vmem:[%s12] sm:$0xff]
    %v1968 = vld [vmem:[%s12 + $0x8] sm:$0xff]
    %v1969 = vld [vmem:[%s12 + $0x10] sm:$0xff]
    %v1970 = vld [vmem:[%s12 + $0x18] sm:$0xff]
    %v1971 = vld [vmem:[%s13] sm:$0x1]
    %1972 = vmatprep.subr.mxu0 0.0
    %1973 = vmatpush1.msra.mxu0 %v1967
    %1974 = vmatprep.subr.mxu0 0.0
    %1975 = vmatpush1.msra.mxu0 %v1968
    %1976 = vmatprep.subr.mxu0 0.0
    %1977 = vmatpush1.msra.mxu0 %v1969
    %1978 = vmatprep.subr.mxu0 0.0
    %1979 = vmatpush1.msra.mxu0 %v1970
    %1980 = vmatprep.subr.mxu0 0.0
    %1981 = vmatpush1.msra.mxu0 0.0
    %1982 = vmatprep.subr.mxu0 0.0
    %1983 = vmatpush1.msra.mxu0 0.0
    %1984 = vmatprep.subr.mxu0 0.0
    %1985 = vmatpush1.msra.mxu0 0.0
    %1986 = vmatprep.subr.mxu0 0.0
    %1987 = vmatpush1.msra.mxu0 0.0
    %1988 = vmatprep.subr.mxu0 0.0
    %1989 = vmatpush1.msra.mxu0 0.0
    %1990 = vmatprep.subr.mxu0 0.0
    %1991 = vmatpush1.msra.mxu0 0.0
    %1992 = vmatprep.subr.mxu0 0.0
    %1993 = vmatpush1.msra.mxu0 0.0
    %1994 = vmatprep.subr.mxu0 0.0
    %1995 = vmatpush1.msra.mxu0 0.0
    %1996 = vmatprep.subr.mxu0 0.0
    %1997 = vmatpush1.msra.mxu0 0.0
    %1998 = vmatprep.subr.mxu0 0.0
    %1999 = vmatpush1.msra.mxu0 0.0
    %2000 = vmatprep.subr.mxu0 0.0
    %2001 = vmatpush1.msra.mxu0 0.0
    %2002 = vmatprep.subr.mxu0 0.0
    %2003 = vmatpush1.msra.mxu0 0.0
    %2004 = vmatprep.subr.mxu0 0.0
    %2005 = vmatpush1.msra.mxu0 0.0
    %2006 = vmatprep.subr.mxu0 0.0
    %2007 = vmatpush1.msra.mxu0 0.0
    %2008 = vmatprep.subr.mxu0 0.0
    %2009 = vmatpush1.msra.mxu0 0.0
    %2010 = vmatprep.subr.mxu0 0.0
    %2011 = vmatpush1.msra.mxu0 0.0
    %2012 = vmatprep.subr.mxu0 0.0
    %2013 = vmatpush1.msra.mxu0 0.0
    %2014 = vmatprep.subr.mxu0 0.0
    %2015 = vmatpush1.msra.mxu0 0.0
    %2016 = vmatprep.subr.mxu0 0.0
    %2017 = vmatpush1.msra.mxu0 0.0
    %2018 = vmatprep.subr.mxu0 0.0
    %2019 = vmatpush1.msra.mxu0 0.0
    %2020 = vmatprep.subr.mxu0 0.0
    %2021 = vmatpush1.msra.mxu0 0.0
    %2022 = vmatprep.subr.mxu0 0.0
    %2023 = vmatpush1.msra.mxu0 0.0
    %2024 = vmatprep.subr.mxu0 0.0
    %2025 = vmatpush1.msra.mxu0 0.0
    %2026 = vmatprep.subr.mxu0 0.0
    %2027 = vmatpush1.msra.mxu0 0.0
    %2028 = vmatprep.subr.mxu0 0.0
    %2029 = vmatpush1.msra.mxu0 0.0
    %2030 = vmatprep.subr.mxu0 0.0
    %2031 = vmatpush1.msra.mxu0 0.0
    %2032 = vmatprep.subr.mxu0 0.0
    %2033 = vmatpush1.msra.mxu0 0.0
    %2034 = vmatprep.subr.mxu0 0.0
    %2035 = vmatpush1.msra.mxu0 0.0
    %2036 = vmatprep.mubr.f32.mxu0 0.0
    %2037 = vmatmul.mubr.f32.gmra.mrb[0].mxu0 %v1490
    %v2038 = vpop.f32.mrb[0].mxu0
    %v2039 = vadd.f32 %v1971, %v2038
    %v2040 = vpop.f32.mrb[0].mxu0
    %2041 = vdwg.mxu0
    %v2042 = vadd.f32 %v1964, %v2039
    %v2043 = vxor.u32 %v2042, 2147483648
    %v2044 = vmul.f32 %v2043, 1.442695
    %v2045 = vpow.pop %v2044
    %v2046 = vadd.f32 %v2045, 1.0
    %v2047 = vrcp.pop %v2046
    %v2048 = vmul.f32 1.0, %v2047
    %2050 = vrot.lane.b32.xlu0 %v2039, 64
    %v2051 = vpop.permute.xlu0 %2050
    %v2053 = vmul.f32 %v2048, %v2051
    %2055 = vrot.lane.b32.xlu0 %v2053, 64
    %v2056 = vpop.permute.xlu0 %2055
    %v2058 = vadd.f32 %v1964, %v2056
    %v2059 = vtanh.pop %v2058
    %v2060 = vsub.f32 1.0, %v2048
    %2062 = vrot.lane.b32.xlu0 %v2059, 96
    %v2063 = vpop.permute.xlu0 %2062
    %v2065 = vmul.f32 %v2060, %v2063
    %v2066 = vlaneseq
    %v2067 = vshrl.u32 %v2066, 7
    %v2068 = vsub.s32 0, %v2067
    %v2069 = vrot.slane %v1480, %v2068
    %2070 = vrot.lane.b32.xlu0 %v2069, 32
    %v2071 = vpop.permute.xlu0 %2070
    %v2073 = vmul.f32 %v2048, %v2071
    %v2074 = vadd.f32 %v2065, %v2073
    %p2075 = scmp.lt.s32.totalorder %s1476, 6
    %s2076 = scalar_select %p2075, 1, 0
    %v2077 = vstv %s2076
    %vm2078 = vcmp.eq.s32.totalorder %v2077, 1
    %v2079 = vsel %vm2078, %v2074, %v2071
    %2081 = vrot.lane.b32.xlu0 %v2079, 96
    %v2082 = vpop.permute.xlu0 %2081
    %2084 = vst.msk [vmem:[#allocation6] sm:$0x1] %vm679, %v2082
    %v2085 = vld [vmem:[%s14] sm:$0xff]
    %v2086 = vld [vmem:[%s14 + $0x8] sm:$0xff]
    %v2087 = vld [vmem:[%s14 + $0x10] sm:$0xff]
    %v2088 = vld [vmem:[%s14 + $0x18] sm:$0xff]
    %v2089 = vld [vmem:[%s15] sm:$0x1]
    %2091 = vrot.lane.b32.xlu0 %v2074, 96
    %v2092 = vpop.permute.xlu0 %2091
    %v2093 = vsel %vm82, %v2092, 0
    %2095 = vmatprep.subr.mxu0 0.0
    %2096 = vmatpush1.msra.mxu0 %v2085
    %2097 = vmatprep.subr.mxu0 0.0
    %2098 = vmatpush1.msra.mxu0 %v2086
    %2099 = vmatprep.subr.mxu0 0.0
    %2100 = vmatpush1.msra.mxu0 %v2087
    %2101 = vmatprep.subr.mxu0 0.0
    %2102 = vmatpush1.msra.mxu0 %v2088
    %2103 = vmatprep.subr.mxu0 0.0
    %2104 = vmatpush1.msra.mxu0 0.0
    %2105 = vmatprep.subr.mxu0 0.0
    %2106 = vmatpush1.msra.mxu0 0.0
    %2107 = vmatprep.subr.mxu0 0.0
    %2108 = vmatpush1.msra.mxu0 0.0
    %2109 = vmatprep.subr.mxu0 0.0
    %2110 = vmatpush1.msra.mxu0 0.0
    %2111 = vmatprep.subr.mxu0 0.0
    %2112 = vmatpush1.msra.mxu0 0.0
    %2113 = vmatprep.subr.mxu0 0.0
    %2114 = vmatpush1.msra.mxu0 0.0
    %2115 = vmatprep.subr.mxu0 0.0
    %2116 = vmatpush1.msra.mxu0 0.0
    %2117 = vmatprep.subr.mxu0 0.0
    %2118 = vmatpush1.msra.mxu0 0.0
    %2119 = vmatprep.subr.mxu0 0.0
    %2120 = vmatpush1.msra.mxu0 0.0
    %2121 = vmatprep.subr.mxu0 0.0
    %2122 = vmatpush1.msra.mxu0 0.0
    %2123 = vmatprep.subr.mxu0 0.0
    %2124 = vmatpush1.msra.mxu0 0.0
    %2125 = vmatprep.subr.mxu0 0.0
    %2126 = vmatpush1.msra.mxu0 0.0
    %2127 = vmatprep.subr.mxu0 0.0
    %2128 = vmatpush1.msra.mxu0 0.0
    %2129 = vmatprep.subr.mxu0 0.0
    %2130 = vmatpush1.msra.mxu0 0.0
    %2131 = vmatprep.subr.mxu0 0.0
    %2132 = vmatpush1.msra.mxu0 0.0
    %2133 = vmatprep.subr.mxu0 0.0
    %2134 = vmatpush1.msra.mxu0 0.0
    %2135 = vmatprep.subr.mxu0 0.0
    %2136 = vmatpush1.msra.mxu0 0.0
    %2137 = vmatprep.subr.mxu0 0.0
    %2138 = vmatpush1.msra.mxu0 0.0
    %2139 = vmatprep.subr.mxu0 0.0
    %2140 = vmatpush1.msra.mxu0 0.0
    %2141 = vmatprep.subr.mxu0 0.0
    %2142 = vmatpush1.msra.mxu0 0.0
    %2143 = vmatprep.subr.mxu0 0.0
    %2144 = vmatpush1.msra.mxu0 0.0
    %2145 = vmatprep.subr.mxu0 0.0
    %2146 = vmatpush1.msra.mxu0 0.0
    %2147 = vmatprep.subr.mxu0 0.0
    %2148 = vmatpush1.msra.mxu0 0.0
    %2149 = vmatprep.subr.mxu0 0.0
    %2150 = vmatpush1.msra.mxu0 0.0
    %2151 = vmatprep.subr.mxu0 0.0
    %2152 = vmatpush1.msra.mxu0 0.0
    %2153 = vmatprep.subr.mxu0 0.0
    %2154 = vmatpush1.msra.mxu0 0.0
    %2155 = vmatprep.subr.mxu0 0.0
    %2156 = vmatpush1.msra.mxu0 0.0
    %2157 = vmatprep.subr.mxu0 0.0
    %2158 = vmatpush1.msra.mxu0 0.0
    %2159 = vmatprep.mubr.f32.mxu0 0.0
    %2160 = vmatmul.mubr.f32.gmra.mrb[0].mxu0 %v2093
    %v2161 = vpop.f32.mrb[0].mxu0
    %v2162 = vadd.f32 %v2089, %v2161
    %v2163 = vpop.f32.mrb[0].mxu0
    %2164 = vdwg.mxu0
    %v2165 = vsel %vm231, %v2162, -inf
    %2166 = vmax.xlane.f32.xlu0 %v2165
    %v2167 = vpop.xlane.xlu0 %2166
    %v2168 = vsub.f32 %v2162, %v2167
    %v2169 = vmul.f32 %v2168, 1.442695
    %v2170 = vpow.pop %v2169
    %v2171 = vsel %vm231, %v2170, 0.0
    %2172 = vadd.xlane.f32.xlu0 %v2171
    %v2173 = vpop.xlane.xlu0 %2172
    %v2174 = vlog2.pop %v2173
    %v2175 = vmul.f32 %v2174, 0.6931472
    %v2176 = vsub.f32 %v2168, %v2175
    %2177 = vst [vmem:[#allocation4 + $0x2] sm:$0x1] %v2176
    %s2178 = sadd.s32 %s69, 3
    %s2179 = sld [smem:[#allocation3 + %s2178]]
    %s2180 = scalar_lea.vmem %s1, %s2179
    %v2181 = vld [vmem:[%s2180] sm:$0x1]
    %v2182 = vld [vmem:[#allocation6] sm:$0x1]
    %v2183 = vld [vmem:[%s4] sm:$0xff]
    %v2184 = vld [vmem:[%s4 + $0x8] sm:$0xff]
    %v2185 = vld [vmem:[%s4 + $0x10] sm:$0xff]
    %v2186 = vld [vmem:[%s4 + $0x18] sm:$0xff]
    %v2187 = vld [vmem:[%s5] sm:$0xff]
    %v2188 = vld [vmem:[%s5 + $0x8] sm:$0xff]
    %v2189 = vld [vmem:[%s5 + $0x10] sm:$0xff]
    %v2190 = vld [vmem:[%s5 + $0x18] sm:$0xff]
    %v2192 = vsel %vm82, %v2182, 0
    %2194 = vmatprep.subr.mxu0 0.0
    %2195 = vmatpush1.msra.mxu0 %v2187
    %2196 = vmatprep.subr.mxu0 0.0
    %2197 = vmatpush1.msra.mxu0 %v2188
    %2198 = vmatprep.subr.mxu0 0.0
    %2199 = vmatpush1.msra.mxu0 %v2189
    %2200 = vmatprep.subr.mxu0 0.0
    %2201 = vmatpush1.msra.mxu0 %v2190
    %2202 = vmatprep.subr.mxu0 0.0
    %2203 = vmatpush1.msra.mxu0 0.0
    %2204 = vmatprep.subr.mxu0 0.0
    %2205 = vmatpush1.msra.mxu0 0.0
    %2206 = vmatprep.subr.mxu0 0.0
    %2207 = vmatpush1.msra.mxu0 0.0
    %2208 = vmatprep.subr.mxu0 0.0
    %2209 = vmatpush1.msra.mxu0 0.0
    %2210 = vmatprep.subr.mxu0 0.0
    %2211 = vmatpush1.msra.mxu0 0.0
    %2212 = vmatprep.subr.mxu0 0.0
    %2213 = vmatpush1.msra.mxu0 0.0
    %2214 = vmatprep.subr.mxu0 0.0
    %2215 = vmatpush1.msra.mxu0 0.0
    %2216 = vmatprep.subr.mxu0 0.0
    %2217 = vmatpush1.msra.mxu0 0.0
    %2218 = vmatprep.subr.mxu0 0.0
    %2219 = vmatpush1.msra.mxu0 0.0
    %2220 = vmatprep.subr.mxu0 0.0
    %2221 = vmatpush1.msra.mxu0 0.0
    %2222 = vmatprep.subr.mxu0 0.0
    %2223 = vmatpush1.msra.mxu0 0.0
    %2224 = vmatprep.subr.mxu0 0.0
    %2225 = vmatpush1.msra.mxu0 0.0
    %2226 = vmatprep.subr.mxu0 0.0
    %2227 = vmatpush1.msra.mxu0 0.0
    %2228 = vmatprep.subr.mxu0 0.0
    %2229 = vmatpush1.msra.mxu0 0.0
    %2230 = vmatprep.subr.mxu0 0.0
    %2231 = vmatpush1.msra.mxu0 0.0
    %2232 = vmatprep.subr.mxu0 0.0
    %2233 = vmatpush1.msra.mxu0 0.0
    %2234 = vmatprep.subr.mxu0 0.0
    %2235 = vmatpush1.msra.mxu0 0.0
    %2236 = vmatprep.subr.mxu0 0.0
    %2237 = vmatpush1.msra.mxu0 0.0
    %2238 = vmatprep.subr.mxu0 0.0
    %2239 = vmatpush1.msra.mxu0 0.0
    %2240 = vmatprep.subr.mxu0 0.0
    %2241 = vmatpush1.msra.mxu0 0.0
    %2242 = vmatprep.subr.mxu0 0.0
    %2243 = vmatpush1.msra.mxu0 0.0
    %2244 = vmatprep.subr.mxu0 0.0
    %2245 = vmatpush1.msra.mxu0 0.0
    %2246 = vmatprep.subr.mxu0 0.0
    %2247 = vmatpush1.msra.mxu0 0.0
    %2248 = vmatprep.subr.mxu0 0.0
    %2249 = vmatpush1.msra.mxu0 0.0
    %2250 = vmatprep.subr.mxu0 0.0
    %2251 = vmatpush1.msra.mxu0 0.0
    %2252 = vmatprep.subr.mxu0 0.0
    %2253 = vmatpush1.msra.mxu0 0.0
    %2254 = vmatprep.subr.mxu0 0.0
    %2255 = vmatpush1.msra.mxu0 0.0
    %2256 = vmatprep.subr.mxu0 0.0
    %2257 = vmatpush1.msra.mxu0 0.0
    %2258 = vmatprep.mubr.f32.mxu0 0.0
    %2259 = vmatmul.mubr.f32.gmra.mrb[0].mxu0 %v2192
    %v2260 = vpop.f32.mrb[0].mxu0
    %v2261 = vadd.f32 0.0, %v2260
    %v2262 = vpop.f32.mrb[0].mxu0
    %2263 = vdwg.mxu0
    %v2265 = vsel %vm82, %v2181, 0
    %2267 = vmatprep.subr.mxu0 0.0
    %2268 = vmatpush1.msra.mxu0 %v2183
    %2269 = vmatprep.subr.mxu0 0.0
    %2270 = vmatpush1.msra.mxu0 %v2184
    %2271 = vmatprep.subr.mxu0 0.0
    %2272 = vmatpush1.msra.mxu0 %v2185
    %2273 = vmatprep.subr.mxu0 0.0
    %2274 = vmatpush1.msra.mxu0 %v2186
    %2275 = vmatprep.subr.mxu0 0.0
    %2276 = vmatpush1.msra.mxu0 0.0
    %2277 = vmatprep.subr.mxu0 0.0
    %2278 = vmatpush1.msra.mxu0 0.0
    %2279 = vmatprep.subr.mxu0 0.0
    %2280 = vmatpush1.msra.mxu0 0.0
    %2281 = vmatprep.subr.mxu0 0.0
    %2282 = vmatpush1.msra.mxu0 0.0
    %2283 = vmatprep.subr.mxu0 0.0
    %2284 = vmatpush1.msra.mxu0 0.0
    %2285 = vmatprep.subr.mxu0 0.0
    %2286 = vmatpush1.msra.mxu0 0.0
    %2287 = vmatprep.subr.mxu0 0.0
    %2288 = vmatpush1.msra.mxu0 0.0
    %2289 = vmatprep.subr.mxu0 0.0
    %2290 = vmatpush1.msra.mxu0 0.0
    %2291 = vmatprep.subr.mxu0 0.0
    %2292 = vmatpush1.msra.mxu0 0.0
    %2293 = vmatprep.subr.mxu0 0.0
    %2294 = vmatpush1.msra.mxu0 0.0
    %2295 = vmatprep.subr.mxu0 0.0
    %2296 = vmatpush1.msra.mxu0 0.0
    %2297 = vmatprep.subr.mxu0 0.0
    %2298 = vmatpush1.msra.mxu0 0.0
    %2299 = vmatprep.subr.mxu0 0.0
    %2300 = vmatpush1.msra.mxu0 0.0
    %2301 = vmatprep.subr.mxu0 0.0
    %2302 = vmatpush1.msra.mxu0 0.0
    %2303 = vmatprep.subr.mxu0 0.0
    %2304 = vmatpush1.msra.mxu0 0.0
    %2305 = vmatprep.subr.mxu0 0.0
    %2306 = vmatpush1.msra.mxu0 0.0
    %2307 = vmatprep.subr.mxu0 0.0
    %2308 = vmatpush1.msra.mxu0 0.0
    %2309 = vmatprep.subr.mxu0 0.0
    %2310 = vmatpush1.msra.mxu0 0.0
    %2311 = vmatprep.subr.mxu0 0.0
    %2312 = vmatpush1.msra.mxu0 0.0
    %2313 = vmatprep.subr.mxu0 0.0
    %2314 = vmatpush1.msra.mxu0 0.0
    %2315 = vmatprep.subr.mxu0 0.0
    %2316 = vmatpush1.msra.mxu0 0.0
    %2317 = vmatprep.subr.mxu0 0.0
    %2318 = vmatpush1.msra.mxu0 0.0
    %2319 = vmatprep.subr.mxu0 0.0
    %2320 = vmatpush1.msra.mxu0 0.0
    %2321 = vmatprep.subr.mxu0 0.0
    %2322 = vmatpush1.msra.mxu0 0.0
    %2323 = vmatprep.subr.mxu0 0.0
    %2324 = vmatpush1.msra.mxu0 0.0
    %2325 = vmatprep.subr.mxu0 0.0
    %2326 = vmatpush1.msra.mxu0 0.0
    %2327 = vmatprep.subr.mxu0 0.0
    %2328 = vmatpush1.msra.mxu0 0.0
    %2329 = vmatprep.subr.mxu0 0.0
    %2330 = vmatpush1.msra.mxu0 0.0
    %2331 = vmatprep.mubr.f32.mxu0 0.0
    %2332 = vmatmul.mubr.f32.gmra.mrb[0].mxu0 %v2265
    %v2333 = vpop.f32.mrb[0].mxu0
    %v2334 = vadd.f32 %v2261, %v2333
    %v2335 = vpop.f32.mrb[0].mxu0
    %2336 = vdwg.mxu0
    %v2337 = vld [vmem:[%s6] sm:$0x1]
    %v2338 = vadd.f32 %v2334, %v2337
    %v2339 = vsel %vm231, %v2338, -inf
    %2340 = vmax.xlane.f32.xlu0 %v2339
    %v2341 = vpop.xlane.xlu0 %2340
    %v2342 = vsub.f32 %v2338, %v2341
    %v2343 = vmul.f32 %v2342, 1.442695
    %v2344 = vpow.pop %v2343
    %v2345 = vsel %vm231, %v2344, 0.0
    %2346 = vadd.xlane.f32.xlu0 %v2345
    %v2347 = vpop.xlane.xlu0 %2346
    %v2348 = vrcp.pop %v2347
    %v2349 = vmul.f32 %v2344, %v2348
    %2350 = vst [vmem:[#allocation8 + $0x3] sm:$0x1] %v2349
    %v2351 = vld [vmem:[%s3] sm:$0xff]
    %v2352 = vld [vmem:[%s3 + $0x8] sm:$0xff]
    %v2353 = vld [vmem:[%s3 + $0x10] sm:$0xff]
    %v2354 = vld [vmem:[%s3 + $0x18] sm:$0xff]
    %v2355 = vld [vmem:[%s3 + $0x20] sm:$0xff]
    %v2356 = vld [vmem:[%s3 + $0x28] sm:$0xff]
    %v2357 = vld [vmem:[%s3 + $0x30] sm:$0xff]
    %v2358 = vld [vmem:[%s3 + $0x38] sm:$0xff]
    %v2359 = vld [vmem:[%s3 + $0x40] sm:$0xff]
    %v2360 = vld [vmem:[%s3 + $0x48] sm:$0xff]
    %v2361 = vld [vmem:[%s3 + $0x50] sm:$0xff]
    %v2362 = vld [vmem:[%s3 + $0x58] sm:$0xff]
    %v2363 = vld [vmem:[%s3 + $0x60] sm:$0xff]
    %v2364 = vld [vmem:[%s3 + $0x68] sm:$0xff]
    %v2365 = vld [vmem:[%s3 + $0x70] sm:$0xff]
    %v2366 = vld [vmem:[%s3 + $0x78] sm:$0xff]
    %2367 = vmatprep.subr.mxu0 0.0
    %2368 = vmatpush1.msra.mxu0 %v2351
    %2369 = vmatprep.subr.mxu0 0.0
    %2370 = vmatpush1.msra.mxu0 %v2352
    %2371 = vmatprep.subr.mxu0 0.0
    %2372 = vmatpush1.msra.mxu0 %v2353
    %2373 = vmatprep.subr.mxu0 0.0
    %2374 = vmatpush1.msra.mxu0 %v2354
    %2375 = vmatprep.subr.mxu0 0.0
    %2376 = vmatpush1.msra.mxu0 %v2355
    %2377 = vmatprep.subr.mxu0 0.0
    %2378 = vmatpush1.msra.mxu0 %v2356
    %2379 = vmatprep.subr.mxu0 0.0
    %2380 = vmatpush1.msra.mxu0 %v2357
    %2381 = vmatprep.subr.mxu0 0.0
    %2382 = vmatpush1.msra.mxu0 %v2358
    %2383 = vmatprep.subr.mxu0 0.0
    %2384 = vmatpush1.msra.mxu0 %v2359
    %2385 = vmatprep.subr.mxu0 0.0
    %2386 = vmatpush1.msra.mxu0 %v2360
    %2387 = vmatprep.subr.mxu0 0.0
    %2388 = vmatpush1.msra.mxu0 %v2361
    %2389 = vmatprep.subr.mxu0 0.0
    %2390 = vmatpush1.msra.mxu0 %v2362
    %2391 = vmatprep.subr.mxu0 0.0
    %2392 = vmatpush1.msra.mxu0 %v2363
    %2393 = vmatprep.subr.mxu0 0.0
    %2394 = vmatpush1.msra.mxu0 %v2364
    %2395 = vmatprep.subr.mxu0 0.0
    %2396 = vmatpush1.msra.mxu0 %v2365
    %2397 = vmatprep.subr.mxu0 0.0
    %2398 = vmatpush1.msra.mxu0 %v2366
    %2399 = vmatprep.subr.mxu0 0.0
    %2400 = vmatpush1.msra.mxu0 0.0
    %2401 = vmatprep.subr.mxu0 0.0
    %2402 = vmatpush1.msra.mxu0 0.0
    %2403 = vmatprep.subr.mxu0 0.0
    %2404 = vmatpush1.msra.mxu0 0.0
    %2405 = vmatprep.subr.mxu0 0.0
    %2406 = vmatpush1.msra.mxu0 0.0
    %2407 = vmatprep.subr.mxu0 0.0
    %2408 = vmatpush1.msra.mxu0 0.0
    %2409 = vmatprep.subr.mxu0 0.0
    %2410 = vmatpush1.msra.mxu0 0.0
    %2411 = vmatprep.subr.mxu0 0.0
    %2412 = vmatpush1.msra.mxu0 0.0
    %2413 = vmatprep.subr.mxu0 0.0
    %2414 = vmatpush1.msra.mxu0 0.0
    %2415 = vmatprep.subr.mxu0 0.0
    %2416 = vmatpush1.msra.mxu0 0.0
    %2417 = vmatprep.subr.mxu0 0.0
    %2418 = vmatpush1.msra.mxu0 0.0
    %2419 = vmatprep.subr.mxu0 0.0
    %2420 = vmatpush1.msra.mxu0 0.0
    %2421 = vmatprep.subr.mxu0 0.0
    %2422 = vmatpush1.msra.mxu0 0.0
    %2423 = vmatprep.subr.mxu0 0.0
    %2424 = vmatpush1.msra.mxu0 0.0
    %2425 = vmatprep.subr.mxu0 0.0
    %2426 = vmatpush1.msra.mxu0 0.0
    %2427 = vmatprep.subr.mxu0 0.0
    %2428 = vmatpush1.msra.mxu0 0.0
    %2429 = vmatprep.subr.mxu0 0.0
    %2430 = vmatpush1.msra.mxu0 0.0
    %2431 = vmatprep.mubr.f32.mxu0 0.0
    %2432 = vmatmul.mubr.f32.gmra.mrb[0].mxu0 %v2349
    %v2433 = vpop.f32.mrb[0].mxu0
    %v2434 = vadd.f32 0.0, %v2433
    %v2435 = vpop.f32.mrb[0].mxu0
    %2436 = vdwg.mxu0
    %v2437 = vld [vmem:[%s7] sm:$0xff]
    %v2438 = vld [vmem:[%s7 + $0x8] sm:$0xff]
    %v2439 = vld [vmem:[%s7 + $0x10] sm:$0xff]
    %v2440 = vld [vmem:[%s7 + $0x18] sm:$0xff]
    %v2441 = vld [vmem:[%s8] sm:$0xff]
    %v2442 = vld [vmem:[%s8 + $0x8] sm:$0xff]
    %v2443 = vld [vmem:[%s8 + $0x10] sm:$0xff]
    %v2444 = vld [vmem:[%s8 + $0x18] sm:$0xff]
    %v2446 = vsel %vm82, %v2434, 0
    %2448 = vmatprep.subr.mxu0 0.0
    %2449 = vmatpush1.msra.mxu0 %v2441
    %2450 = vmatprep.subr.mxu0 0.0
    %2451 = vmatpush1.msra.mxu0 %v2442
    %2452 = vmatprep.subr.mxu0 0.0
    %2453 = vmatpush1.msra.mxu0 %v2443
    %2454 = vmatprep.subr.mxu0 0.0
    %2455 = vmatpush1.msra.mxu0 %v2444
    %2456 = vmatprep.subr.mxu0 0.0
    %2457 = vmatpush1.msra.mxu0 0.0
    %2458 = vmatprep.subr.mxu0 0.0
    %2459 = vmatpush1.msra.mxu0 0.0
    %2460 = vmatprep.subr.mxu0 0.0
    %2461 = vmatpush1.msra.mxu0 0.0
    %2462 = vmatprep.subr.mxu0 0.0
    %2463 = vmatpush1.msra.mxu0 0.0
    %2464 = vmatprep.subr.mxu0 0.0
    %2465 = vmatpush1.msra.mxu0 0.0
    %2466 = vmatprep.subr.mxu0 0.0
    %2467 = vmatpush1.msra.mxu0 0.0
    %2468 = vmatprep.subr.mxu0 0.0
    %2469 = vmatpush1.msra.mxu0 0.0
    %2470 = vmatprep.subr.mxu0 0.0
    %2471 = vmatpush1.msra.mxu0 0.0
    %2472 = vmatprep.subr.mxu0 0.0
    %2473 = vmatpush1.msra.mxu0 0.0
    %2474 = vmatprep.subr.mxu0 0.0
    %2475 = vmatpush1.msra.mxu0 0.0
    %2476 = vmatprep.subr.mxu0 0.0
    %2477 = vmatpush1.msra.mxu0 0.0
    %2478 = vmatprep.subr.mxu0 0.0
    %2479 = vmatpush1.msra.mxu0 0.0
    %2480 = vmatprep.subr.mxu0 0.0
    %2481 = vmatpush1.msra.mxu0 0.0
    %2482 = vmatprep.subr.mxu0 0.0
    %2483 = vmatpush1.msra.mxu0 0.0
    %2484 = vmatprep.subr.mxu0 0.0
    %2485 = vmatpush1.msra.mxu0 0.0
    %2486 = vmatprep.subr.mxu0 0.0
    %2487 = vmatpush1.msra.mxu0 0.0
    %2488 = vmatprep.subr.mxu0 0.0
    %2489 = vmatpush1.msra.mxu0 0.0
    %2490 = vmatprep.subr.mxu0 0.0
    %2491 = vmatpush1.msra.mxu0 0.0
    %2492 = vmatprep.subr.mxu0 0.0
    %2493 = vmatpush1.msra.mxu0 0.0
    %2494 = vmatprep.subr.mxu0 0.0
    %2495 = vmatpush1.msra.mxu0 0.0
    %2496 = vmatprep.subr.mxu0 0.0
    %2497 = vmatpush1.msra.mxu0 0.0
    %2498 = vmatprep.subr.mxu0 0.0
    %2499 = vmatpush1.msra.mxu0 0.0
    %2500 = vmatprep.subr.mxu0 0.0
    %2501 = vmatpush1.msra.mxu0 0.0
    %2502 = vmatprep.subr.mxu0 0.0
    %2503 = vmatpush1.msra.mxu0 0.0
    %2504 = vmatprep.subr.mxu0 0.0
    %2505 = vmatpush1.msra.mxu0 0.0
    %2506 = vmatprep.subr.mxu0 0.0
    %2507 = vmatpush1.msra.mxu0 0.0
    %2508 = vmatprep.subr.mxu0 0.0
    %2509 = vmatpush1.msra.mxu0 0.0
    %2510 = vmatprep.subr.mxu0 0.0
    %2511 = vmatpush1.msra.mxu0 0.0
    %2512 = vmatprep.mubr.f32.mxu0 0.0
    %2513 = vmatmul.mubr.f32.gmra.mrb[0].mxu0 %v2446
    %v2514 = vpop.f32.mrb[0].mxu0
    %v2515 = vadd.f32 0.0, %v2514
    %v2516 = vpop.f32.mrb[0].mxu0
    %2517 = vdwg.mxu0
    %2518 = vmatprep.subr.mxu0 0.0
    %2519 = vmatpush1.msra.mxu0 %v2437
    %2520 = vmatprep.subr.mxu0 0.0
    %2521 = vmatpush1.msra.mxu0 %v2438
    %2522 = vmatprep.subr.mxu0 0.0
    %2523 = vmatpush1.msra.mxu0 %v2439
    %2524 = vmatprep.subr.mxu0 0.0
    %2525 = vmatpush1.msra.mxu0 %v2440
    %2526 = vmatprep.subr.mxu0 0.0
    %2527 = vmatpush1.msra.mxu0 0.0
    %2528 = vmatprep.subr.mxu0 0.0
    %2529 = vmatpush1.msra.mxu0 0.0
    %2530 = vmatprep.subr.mxu0 0.0
    %2531 = vmatpush1.msra.mxu0 0.0
    %2532 = vmatprep.subr.mxu0 0.0
    %2533 = vmatpush1.msra.mxu0 0.0
    %2534 = vmatprep.subr.mxu0 0.0
    %2535 = vmatpush1.msra.mxu0 0.0
    %2536 = vmatprep.subr.mxu0 0.0
    %2537 = vmatpush1.msra.mxu0 0.0
    %2538 = vmatprep.subr.mxu0 0.0
    %2539 = vmatpush1.msra.mxu0 0.0
    %2540 = vmatprep.subr.mxu0 0.0
    %2541 = vmatpush1.msra.mxu0 0.0
    %2542 = vmatprep.subr.mxu0 0.0
    %2543 = vmatpush1.msra.mxu0 0.0
    %2544 = vmatprep.subr.mxu0 0.0
    %2545 = vmatpush1.msra.mxu0 0.0
    %2546 = vmatprep.subr.mxu0 0.0
    %2547 = vmatpush1.msra.mxu0 0.0
    %2548 = vmatprep.subr.mxu0 0.0
    %2549 = vmatpush1.msra.mxu0 0.0
    %2550 = vmatprep.subr.mxu0 0.0
    %2551 = vmatpush1.msra.mxu0 0.0
    %2552 = vmatprep.subr.mxu0 0.0
    %2553 = vmatpush1.msra.mxu0 0.0
    %2554 = vmatprep.subr.mxu0 0.0
    %2555 = vmatpush1.msra.mxu0 0.0
    %2556 = vmatprep.subr.mxu0 0.0
    %2557 = vmatpush1.msra.mxu0 0.0
    %2558 = vmatprep.subr.mxu0 0.0
    %2559 = vmatpush1.msra.mxu0 0.0
    %2560 = vmatprep.subr.mxu0 0.0
    %2561 = vmatpush1.msra.mxu0 0.0
    %2562 = vmatprep.subr.mxu0 0.0
    %2563 = vmatpush1.msra.mxu0 0.0
    %2564 = vmatprep.subr.mxu0 0.0
    %2565 = vmatpush1.msra.mxu0 0.0
    %2566 = vmatprep.subr.mxu0 0.0
    %2567 = vmatpush1.msra.mxu0 0.0
    %2568 = vmatprep.subr.mxu0 0.0
    %2569 = vmatpush1.msra.mxu0 0.0
    %2570 = vmatprep.subr.mxu0 0.0
    %2571 = vmatpush1.msra.mxu0 0.0
    %2572 = vmatprep.subr.mxu0 0.0
    %2573 = vmatpush1.msra.mxu0 0.0
    %2574 = vmatprep.subr.mxu0 0.0
    %2575 = vmatpush1.msra.mxu0 0.0
    %2576 = vmatprep.subr.mxu0 0.0
    %2577 = vmatpush1.msra.mxu0 0.0
    %2578 = vmatprep.subr.mxu0 0.0
    %2579 = vmatpush1.msra.mxu0 0.0
    %2580 = vmatprep.subr.mxu0 0.0
    %2581 = vmatpush1.msra.mxu0 0.0
    %2582 = vmatprep.mubr.f32.mxu0 0.0
    %2583 = vmatmul.mubr.f32.gmra.mrb[0].mxu0 %v2265
    %v2584 = vpop.f32.mrb[0].mxu0
    %v2585 = vadd.f32 %v2515, %v2584
    %v2586 = vpop.f32.mrb[0].mxu0
    %2587 = vdwg.mxu0
    %v2588 = vld [vmem:[%s9] sm:$0x1]
    %v2589 = vadd.f32 %v2585, %v2588
    %v2590 = vmax.f32 %v2589, 0.0
    %v2591 = vld [vmem:[%s10] sm:$0xff]
    %v2592 = vld [vmem:[%s10 + $0x8] sm:$0xff]
    %v2593 = vld [vmem:[%s10 + $0x10] sm:$0xff]
    %v2594 = vld [vmem:[%s10 + $0x18] sm:$0xff]
    %v2595 = vld [vmem:[%s11] sm:$0x1]
    %v2597 = vsel %vm82, %v2590, 0
    %2599 = vmatprep.subr.mxu0 0.0
    %2600 = vmatpush1.msra.mxu0 %v2591
    %2601 = vmatprep.subr.mxu0 0.0
    %2602 = vmatpush1.msra.mxu0 %v2592
    %2603 = vmatprep.subr.mxu0 0.0
    %2604 = vmatpush1.msra.mxu0 %v2593
    %2605 = vmatprep.subr.mxu0 0.0
    %2606 = vmatpush1.msra.mxu0 %v2594
    %2607 = vmatprep.subr.mxu0 0.0
    %2608 = vmatpush1.msra.mxu0 0.0
    %2609 = vmatprep.subr.mxu0 0.0
    %2610 = vmatpush1.msra.mxu0 0.0
    %2611 = vmatprep.subr.mxu0 0.0
    %2612 = vmatpush1.msra.mxu0 0.0
    %2613 = vmatprep.subr.mxu0 0.0
    %2614 = vmatpush1.msra.mxu0 0.0
    %2615 = vmatprep.subr.mxu0 0.0
    %2616 = vmatpush1.msra.mxu0 0.0
    %2617 = vmatprep.subr.mxu0 0.0
    %2618 = vmatpush1.msra.mxu0 0.0
    %2619 = vmatprep.subr.mxu0 0.0
    %2620 = vmatpush1.msra.mxu0 0.0
    %2621 = vmatprep.subr.mxu0 0.0
    %2622 = vmatpush1.msra.mxu0 0.0
    %2623 = vmatprep.subr.mxu0 0.0
    %2624 = vmatpush1.msra.mxu0 0.0
    %2625 = vmatprep.subr.mxu0 0.0
    %2626 = vmatpush1.msra.mxu0 0.0
    %2627 = vmatprep.subr.mxu0 0.0
    %2628 = vmatpush1.msra.mxu0 0.0
    %2629 = vmatprep.subr.mxu0 0.0
    %2630 = vmatpush1.msra.mxu0 0.0
    %2631 = vmatprep.subr.mxu0 0.0
    %2632 = vmatpush1.msra.mxu0 0.0
    %2633 = vmatprep.subr.mxu0 0.0
    %2634 = vmatpush1.msra.mxu0 0.0
    %2635 = vmatprep.subr.mxu0 0.0
    %2636 = vmatpush1.msra.mxu0 0.0
    %2637 = vmatprep.subr.mxu0 0.0
    %2638 = vmatpush1.msra.mxu0 0.0
    %2639 = vmatprep.subr.mxu0 0.0
    %2640 = vmatpush1.msra.mxu0 0.0
    %2641 = vmatprep.subr.mxu0 0.0
    %2642 = vmatpush1.msra.mxu0 0.0
    %2643 = vmatprep.subr.mxu0 0.0
    %2644 = vmatpush1.msra.mxu0 0.0
    %2645 = vmatprep.subr.mxu0 0.0
    %2646 = vmatpush1.msra.mxu0 0.0
    %2647 = vmatprep.subr.mxu0 0.0
    %2648 = vmatpush1.msra.mxu0 0.0
    %2649 = vmatprep.subr.mxu0 0.0
    %2650 = vmatpush1.msra.mxu0 0.0
    %2651 = vmatprep.subr.mxu0 0.0
    %2652 = vmatpush1.msra.mxu0 0.0
    %2653 = vmatprep.subr.mxu0 0.0
    %2654 = vmatpush1.msra.mxu0 0.0
    %2655 = vmatprep.subr.mxu0 0.0
    %2656 = vmatpush1.msra.mxu0 0.0
    %2657 = vmatprep.subr.mxu0 0.0
    %2658 = vmatpush1.msra.mxu0 0.0
    %2659 = vmatprep.subr.mxu0 0.0
    %2660 = vmatpush1.msra.mxu0 0.0
    %2661 = vmatprep.subr.mxu0 0.0
    %2662 = vmatpush1.msra.mxu0 0.0
    %2663 = vmatprep.mubr.f32.mxu0 0.0
    %2664 = vmatmul.mubr.f32.gmra.mrb[0].mxu0 %v2597
    %v2665 = vpop.f32.mrb[0].mxu0
    %v2666 = vadd.f32 %v2595, %v2665
    %v2667 = vpop.f32.mrb[0].mxu0
    %2668 = vdwg.mxu0
    %v2669 = vld [vmem:[%s12] sm:$0xff]
    %v2670 = vld [vmem:[%s12 + $0x8] sm:$0xff]
    %v2671 = vld [vmem:[%s12 + $0x10] sm:$0xff]
    %v2672 = vld [vmem:[%s12 + $0x18] sm:$0xff]
    %v2673 = vld [vmem:[%s13] sm:$0x1]
    %2674 = vmatprep.subr.mxu0 0.0
    %2675 = vmatpush1.msra.mxu0 %v2669
    %2676 = vmatprep.subr.mxu0 0.0
    %2677 = vmatpush1.msra.mxu0 %v2670
    %2678 = vmatprep.subr.mxu0 0.0
    %2679 = vmatpush1.msra.mxu0 %v2671
    %2680 = vmatprep.subr.mxu0 0.0
    %2681 = vmatpush1.msra.mxu0 %v2672
    %2682 = vmatprep.subr.mxu0 0.0
    %2683 = vmatpush1.msra.mxu0 0.0
    %2684 = vmatprep.subr.mxu0 0.0
    %2685 = vmatpush1.msra.mxu0 0.0
    %2686 = vmatprep.subr.mxu0 0.0
    %2687 = vmatpush1.msra.mxu0 0.0
    %2688 = vmatprep.subr.mxu0 0.0
    %2689 = vmatpush1.msra.mxu0 0.0
    %2690 = vmatprep.subr.mxu0 0.0
    %2691 = vmatpush1.msra.mxu0 0.0
    %2692 = vmatprep.subr.mxu0 0.0
    %2693 = vmatpush1.msra.mxu0 0.0
    %2694 = vmatprep.subr.mxu0 0.0
    %2695 = vmatpush1.msra.mxu0 0.0
    %2696 = vmatprep.subr.mxu0 0.0
    %2697 = vmatpush1.msra.mxu0 0.0
    %2698 = vmatprep.subr.mxu0 0.0
    %2699 = vmatpush1.msra.mxu0 0.0
    %2700 = vmatprep.subr.mxu0 0.0
    %2701 = vmatpush1.msra.mxu0 0.0
    %2702 = vmatprep.subr.mxu0 0.0
    %2703 = vmatpush1.msra.mxu0 0.0
    %2704 = vmatprep.subr.mxu0 0.0
    %2705 = vmatpush1.msra.mxu0 0.0
    %2706 = vmatprep.subr.mxu0 0.0
    %2707 = vmatpush1.msra.mxu0 0.0
    %2708 = vmatprep.subr.mxu0 0.0
    %2709 = vmatpush1.msra.mxu0 0.0
    %2710 = vmatprep.subr.mxu0 0.0
    %2711 = vmatpush1.msra.mxu0 0.0
    %2712 = vmatprep.subr.mxu0 0.0
    %2713 = vmatpush1.msra.mxu0 0.0
    %2714 = vmatprep.subr.mxu0 0.0
    %2715 = vmatpush1.msra.mxu0 0.0
    %2716 = vmatprep.subr.mxu0 0.0
    %2717 = vmatpush1.msra.mxu0 0.0
    %2718 = vmatprep.subr.mxu0 0.0
    %2719 = vmatpush1.msra.mxu0 0.0
    %2720 = vmatprep.subr.mxu0 0.0
    %2721 = vmatpush1.msra.mxu0 0.0
    %2722 = vmatprep.subr.mxu0 0.0
    %2723 = vmatpush1.msra.mxu0 0.0
    %2724 = vmatprep.subr.mxu0 0.0
    %2725 = vmatpush1.msra.mxu0 0.0
    %2726 = vmatprep.subr.mxu0 0.0
    %2727 = vmatpush1.msra.mxu0 0.0
    %2728 = vmatprep.subr.mxu0 0.0
    %2729 = vmatpush1.msra.mxu0 0.0
    %2730 = vmatprep.subr.mxu0 0.0
    %2731 = vmatpush1.msra.mxu0 0.0
    %2732 = vmatprep.subr.mxu0 0.0
    %2733 = vmatpush1.msra.mxu0 0.0
    %2734 = vmatprep.subr.mxu0 0.0
    %2735 = vmatpush1.msra.mxu0 0.0
    %2736 = vmatprep.subr.mxu0 0.0
    %2737 = vmatpush1.msra.mxu0 0.0
    %2738 = vmatprep.mubr.f32.mxu0 0.0
    %2739 = vmatmul.mubr.f32.gmra.mrb[0].mxu0 %v2192
    %v2740 = vpop.f32.mrb[0].mxu0
    %v2741 = vadd.f32 %v2673, %v2740
    %v2742 = vpop.f32.mrb[0].mxu0
    %2743 = vdwg.mxu0
    %v2744 = vadd.f32 %v2666, %v2741
    %v2745 = vxor.u32 %v2744, 2147483648
    %v2746 = vmul.f32 %v2745, 1.442695
    %v2747 = vpow.pop %v2746
    %v2748 = vadd.f32 %v2747, 1.0
    %v2749 = vrcp.pop %v2748
    %v2750 = vmul.f32 1.0, %v2749
    %2752 = vrot.lane.b32.xlu0 %v2741, 64
    %v2753 = vpop.permute.xlu0 %2752
    %v2755 = vmul.f32 %v2750, %v2753
    %2757 = vrot.lane.b32.xlu0 %v2755, 64
    %v2758 = vpop.permute.xlu0 %2757
    %v2760 = vadd.f32 %v2666, %v2758
    %v2761 = vtanh.pop %v2760
    %v2762 = vsub.f32 1.0, %v2750
    %2764 = vrot.lane.b32.xlu0 %v2761, 96
    %v2765 = vpop.permute.xlu0 %2764
    %v2767 = vmul.f32 %v2762, %v2765
    %v2768 = vlaneseq
    %v2769 = vshrl.u32 %v2768, 7
    %v2770 = vsub.s32 0, %v2769
    %v2771 = vrot.slane %v2182, %v2770
    %2772 = vrot.lane.b32.xlu0 %v2771, 32
    %v2773 = vpop.permute.xlu0 %2772
    %v2775 = vmul.f32 %v2750, %v2773
    %v2776 = vadd.f32 %v2767, %v2775
    %p2777 = scmp.lt.s32.totalorder %s2178, 6
    %s2778 = scalar_select %p2777, 1, 0
    %v2779 = vstv %s2778
    %vm2780 = vcmp.eq.s32.totalorder %v2779, 1
    %v2781 = vsel %vm2780, %v2776, %v2773
    %2783 = vrot.lane.b32.xlu0 %v2781, 96
    %v2784 = vpop.permute.xlu0 %2783
    %2786 = vst.msk [vmem:[#allocation6] sm:$0x1] %vm679, %v2784
    %v2787 = vld [vmem:[%s14] sm:$0xff]
    %v2788 = vld [vmem:[%s14 + $0x8] sm:$0xff]
    %v2789 = vld [vmem:[%s14 + $0x10] sm:$0xff]
    %v2790 = vld [vmem:[%s14 + $0x18] sm:$0xff]
    %v2791 = vld [vmem:[%s15] sm:$0x1]
    %2793 = vrot.lane.b32.xlu0 %v2776, 96
    %v2794 = vpop.permute.xlu0 %2793
    %v2795 = vsel %vm82, %v2794, 0
    %2797 = vmatprep.subr.mxu0 0.0
    %2798 = vmatpush1.msra.mxu0 %v2787
    %2799 = vmatprep.subr.mxu0 0.0
    %2800 = vmatpush1.msra.mxu0 %v2788
    %2801 = vmatprep.subr.mxu0 0.0
    %2802 = vmatpush1.msra.mxu0 %v2789
    %2803 = vmatprep.subr.mxu0 0.0
    %2804 = vmatpush1.msra.mxu0 %v2790
    %2805 = vmatprep.subr.mxu0 0.0
    %2806 = vmatpush1.msra.mxu0 0.0
    %2807 = vmatprep.subr.mxu0 0.0
    %2808 = vmatpush1.msra.mxu0 0.0
    %2809 = vmatprep.subr.mxu0 0.0
    %2810 = vmatpush1.msra.mxu0 0.0
    %2811 = vmatprep.subr.mxu0 0.0
    %2812 = vmatpush1.msra.mxu0 0.0
    %2813 = vmatprep.subr.mxu0 0.0
    %2814 = vmatpush1.msra.mxu0 0.0
    %2815 = vmatprep.subr.mxu0 0.0
    %2816 = vmatpush1.msra.mxu0 0.0
    %2817 = vmatprep.subr.mxu0 0.0
    %2818 = vmatpush1.msra.mxu0 0.0
    %2819 = vmatprep.subr.mxu0 0.0
    %2820 = vmatpush1.msra.mxu0 0.0
    %2821 = vmatprep.subr.mxu0 0.0
    %2822 = vmatpush1.msra.mxu0 0.0
    %2823 = vmatprep.subr.mxu0 0.0
    %2824 = vmatpush1.msra.mxu0 0.0
    %2825 = vmatprep.subr.mxu0 0.0
    %2826 = vmatpush1.msra.mxu0 0.0
    %2827 = vmatprep.subr.mxu0 0.0
    %2828 = vmatpush1.msra.mxu0 0.0
    %2829 = vmatprep.subr.mxu0 0.0
    %2830 = vmatpush1.msra.mxu0 0.0
    %2831 = vmatprep.subr.mxu0 0.0
    %2832 = vmatpush1.msra.mxu0 0.0
    %2833 = vmatprep.subr.mxu0 0.0
    %2834 = vmatpush1.msra.mxu0 0.0
    %2835 = vmatprep.subr.mxu0 0.0
    %2836 = vmatpush1.msra.mxu0 0.0
    %2837 = vmatprep.subr.mxu0 0.0
    %2838 = vmatpush1.msra.mxu0 0.0
    %2839 = vmatprep.subr.mxu0 0.0
    %2840 = vmatpush1.msra.mxu0 0.0
    %2841 = vmatprep.subr.mxu0 0.0
    %2842 = vmatpush1.msra.mxu0 0.0
    %2843 = vmatprep.subr.mxu0 0.0
    %2844 = vmatpush1.msra.mxu0 0.0
    %2845 = vmatprep.subr.mxu0 0.0
    %2846 = vmatpush1.msra.mxu0 0.0
    %2847 = vmatprep.subr.mxu0 0.0
    %2848 = vmatpush1.msra.mxu0 0.0
    %2849 = vmatprep.subr.mxu0 0.0
    %2850 = vmatpush1.msra.mxu0 0.0
    %2851 = vmatprep.subr.mxu0 0.0
    %2852 = vmatpush1.msra.mxu0 0.0
    %2853 = vmatprep.subr.mxu0 0.0
    %2854 = vmatpush1.msra.mxu0 0.0
    %2855 = vmatprep.subr.mxu0 0.0
    %2856 = vmatpush1.msra.mxu0 0.0
    %2857 = vmatprep.subr.mxu0 0.0
    %2858 = vmatpush1.msra.mxu0 0.0
    %2859 = vmatprep.subr.mxu0 0.0
    %2860 = vmatpush1.msra.mxu0 0.0
    %2861 = vmatprep.mubr.f32.mxu0 0.0
    %2862 = vmatmul.mubr.f32.gmra.mrb[0].mxu0 %v2795
    %v2863 = vpop.f32.mrb[0].mxu0
    %v2864 = vadd.f32 %v2791, %v2863
    %v2865 = vpop.f32.mrb[0].mxu0
    %2866 = vdwg.mxu0
    %v2867 = vsel %vm231, %v2864, -inf
    %2868 = vmax.xlane.f32.xlu0 %v2867
    %v2869 = vpop.xlane.xlu0 %2868
    %v2870 = vsub.f32 %v2864, %v2869
    %v2871 = vmul.f32 %v2870, 1.442695
    %v2872 = vpow.pop %v2871
    %v2873 = vsel %vm231, %v2872, 0.0
    %2874 = vadd.xlane.f32.xlu0 %v2873
    %v2875 = vpop.xlane.xlu0 %2874
    %v2876 = vlog2.pop %v2875
    %v2877 = vmul.f32 %v2876, 0.6931472
    %v2878 = vsub.f32 %v2870, %v2877
    %2879 = vst [vmem:[#allocation4 + $0x3] sm:$0x1] %v2878
    %s2880 = sadd.s32 %s69, 4
    %s2881 = sld [smem:[#allocation3 + %s2880]]
    %s2882 = scalar_lea.vmem %s1, %s2881
    %v2883 = vld [vmem:[%s2882] sm:$0x1]
    %v2884 = vld [vmem:[#allocation6] sm:$0x1]
    %v2885 = vld [vmem:[%s4] sm:$0xff]
    %v2886 = vld [vmem:[%s4 + $0x8] sm:$0xff]
    %v2887 = vld [vmem:[%s4 + $0x10] sm:$0xff]
    %v2888 = vld [vmem:[%s4 + $0x18] sm:$0xff]
    %v2889 = vld [vmem:[%s5] sm:$0xff]
    %v2890 = vld [vmem:[%s5 + $0x8] sm:$0xff]
    %v2891 = vld [vmem:[%s5 + $0x10] sm:$0xff]
    %v2892 = vld [vmem:[%s5 + $0x18] sm:$0xff]
    %v2894 = vsel %vm82, %v2884, 0
    %2896 = vmatprep.subr.mxu0 0.0
    %2897 = vmatpush1.msra.mxu0 %v2889
    %2898 = vmatprep.subr.mxu0 0.0
    %2899 = vmatpush1.msra.mxu0 %v2890
    %2900 = vmatprep.subr.mxu0 0.0
    %2901 = vmatpush1.msra.mxu0 %v2891
    %2902 = vmatprep.subr.mxu0 0.0
    %2903 = vmatpush1.msra.mxu0 %v2892
    %2904 = vmatprep.subr.mxu0 0.0
    %2905 = vmatpush1.msra.mxu0 0.0
    %2906 = vmatprep.subr.mxu0 0.0
    %2907 = vmatpush1.msra.mxu0 0.0
    %2908 = vmatprep.subr.mxu0 0.0
    %2909 = vmatpush1.msra.mxu0 0.0
    %2910 = vmatprep.subr.mxu0 0.0
    %2911 = vmatpush1.msra.mxu0 0.0
    %2912 = vmatprep.subr.mxu0 0.0
    %2913 = vmatpush1.msra.mxu0 0.0
    %2914 = vmatprep.subr.mxu0 0.0
    %2915 = vmatpush1.msra.mxu0 0.0
    %2916 = vmatprep.subr.mxu0 0.0
    %2917 = vmatpush1.msra.mxu0 0.0
    %2918 = vmatprep.subr.mxu0 0.0
    %2919 = vmatpush1.msra.mxu0 0.0
    %2920 = vmatprep.subr.mxu0 0.0
    %2921 = vmatpush1.msra.mxu0 0.0
    %2922 = vmatprep.subr.mxu0 0.0
    %2923 = vmatpush1.msra.mxu0 0.0
    %2924 = vmatprep.subr.mxu0 0.0
    %2925 = vmatpush1.msra.mxu0 0.0
    %2926 = vmatprep.subr.mxu0 0.0
    %2927 = vmatpush1.msra.mxu0 0.0
    %2928 = vmatprep.subr.mxu0 0.0
    %2929 = vmatpush1.msra.mxu0 0.0
    %2930 = vmatprep.subr.mxu0 0.0
    %2931 = vmatpush1.msra.mxu0 0.0
    %2932 = vmatprep.subr.mxu0 0.0
    %2933 = vmatpush1.msra.mxu0 0.0
    %2934 = vmatprep.subr.mxu0 0.0
    %2935 = vmatpush1.msra.mxu0 0.0
    %2936 = vmatprep.subr.mxu0 0.0
    %2937 = vmatpush1.msra.mxu0 0.0
    %2938 = vmatprep.subr.mxu0 0.0
    %2939 = vmatpush1.msra.mxu0 0.0
    %2940 = vmatprep.subr.mxu0 0.0
    %2941 = vmatpush1.msra.mxu0 0.0
    %2942 = vmatprep.subr.mxu0 0.0
    %2943 = vmatpush1.msra.mxu0 0.0
    %2944 = vmatprep.subr.mxu0 0.0
    %2945 = vmatpush1.msra.mxu0 0.0
    %2946 = vmatprep.subr.mxu0 0.0
    %2947 = vmatpush1.msra.mxu0 0.0
    %2948 = vmatprep.subr.mxu0 0.0
    %2949 = vmatpush1.msra.mxu0 0.0
    %2950 = vmatprep.subr.mxu0 0.0
    %2951 = vmatpush1.msra.mxu0 0.0
    %2952 = vmatprep.subr.mxu0 0.0
    %2953 = vmatpush1.msra.mxu0 0.0
    %2954 = vmatprep.subr.mxu0 0.0
    %2955 = vmatpush1.msra.mxu0 0.0
    %2956 = vmatprep.subr.mxu0 0.0
    %2957 = vmatpush1.msra.mxu0 0.0
    %2958 = vmatprep.subr.mxu0 0.0
    %2959 = vmatpush1.msra.mxu0 0.0
    %2960 = vmatprep.mubr.f32.mxu0 0.0
    %2961 = vmatmul.mubr.f32.gmra.mrb[0].mxu0 %v2894
    %v2962 = vpop.f32.mrb[0].mxu0
    %v2963 = vadd.f32 0.0, %v2962
    %v2964 = vpop.f32.mrb[0].mxu0
    %2965 = vdwg.mxu0
    %v2967 = vsel %vm82, %v2883, 0
    %2969 = vmatprep.subr.mxu0 0.0
    %2970 = vmatpush1.msra.mxu0 %v2885
    %2971 = vmatprep.subr.mxu0 0.0
    %2972 = vmatpush1.msra.mxu0 %v2886
    %2973 = vmatprep.subr.mxu0 0.0
    %2974 = vmatpush1.msra.mxu0 %v2887
    %2975 = vmatprep.subr.mxu0 0.0
    %2976 = vmatpush1.msra.mxu0 %v2888
    %2977 = vmatprep.subr.mxu0 0.0
    %2978 = vmatpush1.msra.mxu0 0.0
    %2979 = vmatprep.subr.mxu0 0.0
    %2980 = vmatpush1.msra.mxu0 0.0
    %2981 = vmatprep.subr.mxu0 0.0
    %2982 = vmatpush1.msra.mxu0 0.0
    %2983 = vmatprep.subr.mxu0 0.0
    %2984 = vmatpush1.msra.mxu0 0.0
    %2985 = vmatprep.subr.mxu0 0.0
    %2986 = vmatpush1.msra.mxu0 0.0
    %2987 = vmatprep.subr.mxu0 0.0
    %2988 = vmatpush1.msra.mxu0 0.0
    %2989 = vmatprep.subr.mxu0 0.0
    %2990 = vmatpush1.msra.mxu0 0.0
    %2991 = vmatprep.subr.mxu0 0.0
    %2992 = vmatpush1.msra.mxu0 0.0
    %2993 = vmatprep.subr.mxu0 0.0
    %2994 = vmatpush1.msra.mxu0 0.0
    %2995 = vmatprep.subr.mxu0 0.0
    %2996 = vmatpush1.msra.mxu0 0.0
    %2997 = vmatprep.subr.mxu0 0.0
    %2998 = vmatpush1.msra.mxu0 0.0
    %2999 = vmatprep.subr.mxu0 0.0
    %3000 = vmatpush1.msra.mxu0 0.0
    %3001 = vmatprep.subr.mxu0 0.0
    %3002 = vmatpush1.msra.mxu0 0.0
    %3003 = vmatprep.subr.mxu0 0.0
    %3004 = vmatpush1.msra.mxu0 0.0
    %3005 = vmatprep.subr.mxu0 0.0
    %3006 = vmatpush1.msra.mxu0 0.0
    %3007 = vmatprep.subr.mxu0 0.0
    %3008 = vmatpush1.msra.mxu0 0.0
    %3009 = vmatprep.subr.mxu0 0.0
    %3010 = vmatpush1.msra.mxu0 0.0
    %3011 = vmatprep.subr.mxu0 0.0
    %3012 = vmatpush1.msra.mxu0 0.0
    %3013 = vmatprep.subr.mxu0 0.0
    %3014 = vmatpush1.msra.mxu0 0.0
    %3015 = vmatprep.subr.mxu0 0.0
    %3016 = vmatpush1.msra.mxu0 0.0
    %3017 = vmatprep.subr.mxu0 0.0
    %3018 = vmatpush1.msra.mxu0 0.0
    %3019 = vmatprep.subr.mxu0 0.0
    %3020 = vmatpush1.msra.mxu0 0.0
    %3021 = vmatprep.subr.mxu0 0.0
    %3022 = vmatpush1.msra.mxu0 0.0
    %3023 = vmatprep.subr.mxu0 0.0
    %3024 = vmatpush1.msra.mxu0 0.0
    %3025 = vmatprep.subr.mxu0 0.0
    %3026 = vmatpush1.msra.mxu0 0.0
    %3027 = vmatprep.subr.mxu0 0.0
    %3028 = vmatpush1.msra.mxu0 0.0
    %3029 = vmatprep.subr.mxu0 0.0
    %3030 = vmatpush1.msra.mxu0 0.0
    %3031 = vmatprep.subr.mxu0 0.0
    %3032 = vmatpush1.msra.mxu0 0.0
    %3033 = vmatprep.mubr.f32.mxu0 0.0
    %3034 = vmatmul.mubr.f32.gmra.mrb[0].mxu0 %v2967
    %v3035 = vpop.f32.mrb[0].mxu0
    %v3036 = vadd.f32 %v2963, %v3035
    %v3037 = vpop.f32.mrb[0].mxu0
    %3038 = vdwg.mxu0
    %v3039 = vld [vmem:[%s6] sm:$0x1]
    %v3040 = vadd.f32 %v3036, %v3039
    %v3041 = vsel %vm231, %v3040, -inf
    %3042 = vmax.xlane.f32.xlu0 %v3041
    %v3043 = vpop.xlane.xlu0 %3042
    %v3044 = vsub.f32 %v3040, %v3043
    %v3045 = vmul.f32 %v3044, 1.442695
    %v3046 = vpow.pop %v3045
    %v3047 = vsel %vm231, %v3046, 0.0
    %3048 = vadd.xlane.f32.xlu0 %v3047
    %v3049 = vpop.xlane.xlu0 %3048
    %v3050 = vrcp.pop %v3049
    %v3051 = vmul.f32 %v3046, %v3050
    %3052 = vst [vmem:[#allocation8 + $0x4] sm:$0x1] %v3051
    %v3053 = vld [vmem:[%s3] sm:$0xff]
    %v3054 = vld [vmem:[%s3 + $0x8] sm:$0xff]
    %v3055 = vld [vmem:[%s3 + $0x10] sm:$0xff]
    %v3056 = vld [vmem:[%s3 + $0x18] sm:$0xff]
    %v3057 = vld [vmem:[%s3 + $0x20] sm:$0xff]
    %v3058 = vld [vmem:[%s3 + $0x28] sm:$0xff]
    %v3059 = vld [vmem:[%s3 + $0x30] sm:$0xff]
    %v3060 = vld [vmem:[%s3 + $0x38] sm:$0xff]
    %v3061 = vld [vmem:[%s3 + $0x40] sm:$0xff]
    %v3062 = vld [vmem:[%s3 + $0x48] sm:$0xff]
    %v3063 = vld [vmem:[%s3 + $0x50] sm:$0xff]
    %v3064 = vld [vmem:[%s3 + $0x58] sm:$0xff]
    %v3065 = vld [vmem:[%s3 + $0x60] sm:$0xff]
    %v3066 = vld [vmem:[%s3 + $0x68] sm:$0xff]
    %v3067 = vld [vmem:[%s3 + $0x70] sm:$0xff]
    %v3068 = vld [vmem:[%s3 + $0x78] sm:$0xff]
    %3069 = vmatprep.subr.mxu0 0.0
    %3070 = vmatpush1.msra.mxu0 %v3053
    %3071 = vmatprep.subr.mxu0 0.0
    %3072 = vmatpush1.msra.mxu0 %v3054
    %3073 = vmatprep.subr.mxu0 0.0
    %3074 = vmatpush1.msra.mxu0 %v3055
    %3075 = vmatprep.subr.mxu0 0.0
    %3076 = vmatpush1.msra.mxu0 %v3056
    %3077 = vmatprep.subr.mxu0 0.0
    %3078 = vmatpush1.msra.mxu0 %v3057
    %3079 = vmatprep.subr.mxu0 0.0
    %3080 = vmatpush1.msra.mxu0 %v3058
    %3081 = vmatprep.subr.mxu0 0.0
    %3082 = vmatpush1.msra.mxu0 %v3059
    %3083 = vmatprep.subr.mxu0 0.0
    %3084 = vmatpush1.msra.mxu0 %v3060
    %3085 = vmatprep.subr.mxu0 0.0
    %3086 = vmatpush1.msra.mxu0 %v3061
    %3087 = vmatprep.subr.mxu0 0.0
    %3088 = vmatpush1.msra.mxu0 %v3062
    %3089 = vmatprep.subr.mxu0 0.0
    %3090 = vmatpush1.msra.mxu0 %v3063
    %3091 = vmatprep.subr.mxu0 0.0
    %3092 = vmatpush1.msra.mxu0 %v3064
    %3093 = vmatprep.subr.mxu0 0.0
    %3094 = vmatpush1.msra.mxu0 %v3065
    %3095 = vmatprep.subr.mxu0 0.0
    %3096 = vmatpush1.msra.mxu0 %v3066
    %3097 = vmatprep.subr.mxu0 0.0
    %3098 = vmatpush1.msra.mxu0 %v3067
    %3099 = vmatprep.subr.mxu0 0.0
    %3100 = vmatpush1.msra.mxu0 %v3068
    %3101 = vmatprep.subr.mxu0 0.0
    %3102 = vmatpush1.msra.mxu0 0.0
    %3103 = vmatprep.subr.mxu0 0.0
    %3104 = vmatpush1.msra.mxu0 0.0
    %3105 = vmatprep.subr.mxu0 0.0
    %3106 = vmatpush1.msra.mxu0 0.0
    %3107 = vmatprep.subr.mxu0 0.0
    %3108 = vmatpush1.msra.mxu0 0.0
    %3109 = vmatprep.subr.mxu0 0.0
    %3110 = vmatpush1.msra.mxu0 0.0
    %3111 = vmatprep.subr.mxu0 0.0
    %3112 = vmatpush1.msra.mxu0 0.0
    %3113 = vmatprep.subr.mxu0 0.0
    %3114 = vmatpush1.msra.mxu0 0.0
    %3115 = vmatprep.subr.mxu0 0.0
    %3116 = vmatpush1.msra.mxu0 0.0
    %3117 = vmatprep.subr.mxu0 0.0
    %3118 = vmatpush1.msra.mxu0 0.0
    %3119 = vmatprep.subr.mxu0 0.0
    %3120 = vmatpush1.msra.mxu0 0.0
    %3121 = vmatprep.subr.mxu0 0.0
    %3122 = vmatpush1.msra.mxu0 0.0
    %3123 = vmatprep.subr.mxu0 0.0
    %3124 = vmatpush1.msra.mxu0 0.0
    %3125 = vmatprep.subr.mxu0 0.0
    %3126 = vmatpush1.msra.mxu0 0.0
    %3127 = vmatprep.subr.mxu0 0.0
    %3128 = vmatpush1.msra.mxu0 0.0
    %3129 = vmatprep.subr.mxu0 0.0
    %3130 = vmatpush1.msra.mxu0 0.0
    %3131 = vmatprep.subr.mxu0 0.0
    %3132 = vmatpush1.msra.mxu0 0.0
    %3133 = vmatprep.mubr.f32.mxu0 0.0
    %3134 = vmatmul.mubr.f32.gmra.mrb[0].mxu0 %v3051
    %v3135 = vpop.f32.mrb[0].mxu0
    %v3136 = vadd.f32 0.0, %v3135
    %v3137 = vpop.f32.mrb[0].mxu0
    %3138 = vdwg.mxu0
    %v3139 = vld [vmem:[%s7] sm:$0xff]
    %v3140 = vld [vmem:[%s7 + $0x8] sm:$0xff]
    %v3141 = vld [vmem:[%s7 + $0x10] sm:$0xff]
    %v3142 = vld [vmem:[%s7 + $0x18] sm:$0xff]
    %v3143 = vld [vmem:[%s8] sm:$0xff]
    %v3144 = vld [vmem:[%s8 + $0x8] sm:$0xff]
    %v3145 = vld [vmem:[%s8 + $0x10] sm:$0xff]
    %v3146 = vld [vmem:[%s8 + $0x18] sm:$0xff]
    %v3148 = vsel %vm82, %v3136, 0
    %3150 = vmatprep.subr.mxu0 0.0
    %3151 = vmatpush1.msra.mxu0 %v3143
    %3152 = vmatprep.subr.mxu0 0.0
    %3153 = vmatpush1.msra.mxu0 %v3144
    %3154 = vmatprep.subr.mxu0 0.0
    %3155 = vmatpush1.msra.mxu0 %v3145
    %3156 = vmatprep.subr.mxu0 0.0
    %3157 = vmatpush1.msra.mxu0 %v3146
    %3158 = vmatprep.subr.mxu0 0.0
    %3159 = vmatpush1.msra.mxu0 0.0
    %3160 = vmatprep.subr.mxu0 0.0
    %3161 = vmatpush1.msra.mxu0 0.0
    %3162 = vmatprep.subr.mxu0 0.0
    %3163 = vmatpush1.msra.mxu0 0.0
    %3164 = vmatprep.subr.mxu0 0.0
    %3165 = vmatpush1.msra.mxu0 0.0
    %3166 = vmatprep.subr.mxu0 0.0
    %3167 = vmatpush1.msra.mxu0 0.0
    %3168 = vmatprep.subr.mxu0 0.0
    %3169 = vmatpush1.msra.mxu0 0.0
    %3170 = vmatprep.subr.mxu0 0.0
    %3171 = vmatpush1.msra.mxu0 0.0
    %3172 = vmatprep.subr.mxu0 0.0
    %3173 = vmatpush1.msra.mxu0 0.0
    %3174 = vmatprep.subr.mxu0 0.0
    %3175 = vmatpush1.msra.mxu0 0.0
    %3176 = vmatprep.subr.mxu0 0.0
    %3177 = vmatpush1.msra.mxu0 0.0
    %3178 = vmatprep.subr.mxu0 0.0
    %3179 = vmatpush1.msra.mxu0 0.0
    %3180 = vmatprep.subr.mxu0 0.0
    %3181 = vmatpush1.msra.mxu0 0.0
    %3182 = vmatprep.subr.mxu0 0.0
    %3183 = vmatpush1.msra.mxu0 0.0
    %3184 = vmatprep.subr.mxu0 0.0
    %3185 = vmatpush1.msra.mxu0 0.0
    %3186 = vmatprep.subr.mxu0 0.0
    %3187 = vmatpush1.msra.mxu0 0.0
    %3188 = vmatprep.subr.mxu0 0.0
    %3189 = vmatpush1.msra.mxu0 0.0
    %3190 = vmatprep.subr.mxu0 0.0
    %3191 = vmatpush1.msra.mxu0 0.0
    %3192 = vmatprep.subr.mxu0 0.0
    %3193 = vmatpush1.msra.mxu0 0.0
    %3194 = vmatprep.subr.mxu0 0.0
    %3195 = vmatpush1.msra.mxu0 0.0
    %3196 = vmatprep.subr.mxu0 0.0
    %3197 = vmatpush1.msra.mxu0 0.0
    %3198 = vmatprep.subr.mxu0 0.0
    %3199 = vmatpush1.msra.mxu0 0.0
    %3200 = vmatprep.subr.mxu0 0.0
    %3201 = vmatpush1.msra.mxu0 0.0
    %3202 = vmatprep.subr.mxu0 0.0
    %3203 = vmatpush1.msra.mxu0 0.0
    %3204 = vmatprep.subr.mxu0 0.0
    %3205 = vmatpush1.msra.mxu0 0.0
    %3206 = vmatprep.subr.mxu0 0.0
    %3207 = vmatpush1.msra.mxu0 0.0
    %3208 = vmatprep.subr.mxu0 0.0
    %3209 = vmatpush1.msra.mxu0 0.0
    %3210 = vmatprep.subr.mxu0 0.0
    %3211 = vmatpush1.msra.mxu0 0.0
    %3212 = vmatprep.subr.mxu0 0.0
    %3213 = vmatpush1.msra.mxu0 0.0
    %3214 = vmatprep.mubr.f32.mxu0 0.0
    %3215 = vmatmul.mubr.f32.gmra.mrb[0].mxu0 %v3148
    %v3216 = vpop.f32.mrb[0].mxu0
    %v3217 = vadd.f32 0.0, %v3216
    %v3218 = vpop.f32.mrb[0].mxu0
    %3219 = vdwg.mxu0
    %3220 = vmatprep.subr.mxu0 0.0
    %3221 = vmatpush1.msra.mxu0 %v3139
    %3222 = vmatprep.subr.mxu0 0.0
    %3223 = vmatpush1.msra.mxu0 %v3140
    %3224 = vmatprep.subr.mxu0 0.0
    %3225 = vmatpush1.msra.mxu0 %v3141
    %3226 = vmatprep.subr.mxu0 0.0
    %3227 = vmatpush1.msra.mxu0 %v3142
    %3228 = vmatprep.subr.mxu0 0.0
    %3229 = vmatpush1.msra.mxu0 0.0
    %3230 = vmatprep.subr.mxu0 0.0
    %3231 = vmatpush1.msra.mxu0 0.0
    %3232 = vmatprep.subr.mxu0 0.0
    %3233 = vmatpush1.msra.mxu0 0.0
    %3234 = vmatprep.subr.mxu0 0.0
    %3235 = vmatpush1.msra.mxu0 0.0
    %3236 = vmatprep.subr.mxu0 0.0
    %3237 = vmatpush1.msra.mxu0 0.0
    %3238 = vmatprep.subr.mxu0 0.0
    %3239 = vmatpush1.msra.mxu0 0.0
    %3240 = vmatprep.subr.mxu0 0.0
    %3241 = vmatpush1.msra.mxu0 0.0
    %3242 = vmatprep.subr.mxu0 0.0
    %3243 = vmatpush1.msra.mxu0 0.0
    %3244 = vmatprep.subr.mxu0 0.0
    %3245 = vmatpush1.msra.mxu0 0.0
    %3246 = vmatprep.subr.mxu0 0.0
    %3247 = vmatpush1.msra.mxu0 0.0
    %3248 = vmatprep.subr.mxu0 0.0
    %3249 = vmatpush1.msra.mxu0 0.0
    %3250 = vmatprep.subr.mxu0 0.0
    %3251 = vmatpush1.msra.mxu0 0.0
    %3252 = vmatprep.subr.mxu0 0.0
    %3253 = vmatpush1.msra.mxu0 0.0
    %3254 = vmatprep.subr.mxu0 0.0
    %3255 = vmatpush1.msra.mxu0 0.0
    %3256 = vmatprep.subr.mxu0 0.0
    %3257 = vmatpush1.msra.mxu0 0.0
    %3258 = vmatprep.subr.mxu0 0.0
    %3259 = vmatpush1.msra.mxu0 0.0
    %3260 = vmatprep.subr.mxu0 0.0
    %3261 = vmatpush1.msra.mxu0 0.0
    %3262 = vmatprep.subr.mxu0 0.0
    %3263 = vmatpush1.msra.mxu0 0.0
    %3264 = vmatprep.subr.mxu0 0.0
    %3265 = vmatpush1.msra.mxu0 0.0
    %3266 = vmatprep.subr.mxu0 0.0
    %3267 = vmatpush1.msra.mxu0 0.0
    %3268 = vmatprep.subr.mxu0 0.0
    %3269 = vmatpush1.msra.mxu0 0.0
    %3270 = vmatprep.subr.mxu0 0.0
    %3271 = vmatpush1.msra.mxu0 0.0
    %3272 = vmatprep.subr.mxu0 0.0
    %3273 = vmatpush1.msra.mxu0 0.0
    %3274 = vmatprep.subr.mxu0 0.0
    %3275 = vmatpush1.msra.mxu0 0.0
    %3276 = vmatprep.subr.mxu0 0.0
    %3277 = vmatpush1.msra.mxu0 0.0
    %3278 = vmatprep.subr.mxu0 0.0
    %3279 = vmatpush1.msra.mxu0 0.0
    %3280 = vmatprep.subr.mxu0 0.0
    %3281 = vmatpush1.msra.mxu0 0.0
    %3282 = vmatprep.subr.mxu0 0.0
    %3283 = vmatpush1.msra.mxu0 0.0
    %3284 = vmatprep.mubr.f32.mxu0 0.0
    %3285 = vmatmul.mubr.f32.gmra.mrb[0].mxu0 %v2967
    %v3286 = vpop.f32.mrb[0].mxu0
    %v3287 = vadd.f32 %v3217, %v3286
    %v3288 = vpop.f32.mrb[0].mxu0
    %3289 = vdwg.mxu0
    %v3290 = vld [vmem:[%s9] sm:$0x1]
    %v3291 = vadd.f32 %v3287, %v3290
    %v3292 = vmax.f32 %v3291, 0.0
    %v3293 = vld [vmem:[%s10] sm:$0xff]
    %v3294 = vld [vmem:[%s10 + $0x8] sm:$0xff]
    %v3295 = vld [vmem:[%s10 + $0x10] sm:$0xff]
    %v3296 = vld [vmem:[%s10 + $0x18] sm:$0xff]
    %v3297 = vld [vmem:[%s11] sm:$0x1]
    %v3299 = vsel %vm82, %v3292, 0
    %3301 = vmatprep.subr.mxu0 0.0
    %3302 = vmatpush1.msra.mxu0 %v3293
    %3303 = vmatprep.subr.mxu0 0.0
    %3304 = vmatpush1.msra.mxu0 %v3294
    %3305 = vmatprep.subr.mxu0 0.0
    %3306 = vmatpush1.msra.mxu0 %v3295
    %3307 = vmatprep.subr.mxu0 0.0
    %3308 = vmatpush1.msra.mxu0 %v3296
    %3309 = vmatprep.subr.mxu0 0.0
    %3310 = vmatpush1.msra.mxu0 0.0
    %3311 = vmatprep.subr.mxu0 0.0
    %3312 = vmatpush1.msra.mxu0 0.0
    %3313 = vmatprep.subr.mxu0 0.0
    %3314 = vmatpush1.msra.mxu0 0.0
    %3315 = vmatprep.subr.mxu0 0.0
    %3316 = vmatpush1.msra.mxu0 0.0
    %3317 = vmatprep.subr.mxu0 0.0
    %3318 = vmatpush1.msra.mxu0 0.0
    %3319 = vmatprep.subr.mxu0 0.0
    %3320 = vmatpush1.msra.mxu0 0.0
    %3321 = vmatprep.subr.mxu0 0.0
    %3322 = vmatpush1.msra.mxu0 0.0
    %3323 = vmatprep.subr.mxu0 0.0
    %3324 = vmatpush1.msra.mxu0 0.0
    %3325 = vmatprep.subr.mxu0 0.0
    %3326 = vmatpush1.msra.mxu0 0.0
    %3327 = vmatprep.subr.mxu0 0.0
    %3328 = vmatpush1.msra.mxu0 0.0
    %3329 = vmatprep.subr.mxu0 0.0
    %3330 = vmatpush1.msra.mxu0 0.0
    %3331 = vmatprep.subr.mxu0 0.0
    %3332 = vmatpush1.msra.mxu0 0.0
    %3333 = vmatprep.subr.mxu0 0.0
    %3334 = vmatpush1.msra.mxu0 0.0
    %3335 = vmatprep.subr.mxu0 0.0
    %3336 = vmatpush1.msra.mxu0 0.0
    %3337 = vmatprep.subr.mxu0 0.0
    %3338 = vmatpush1.msra.mxu0 0.0
    %3339 = vmatprep.subr.mxu0 0.0
    %3340 = vmatpush1.msra.mxu0 0.0
    %3341 = vmatprep.subr.mxu0 0.0
    %3342 = vmatpush1.msra.mxu0 0.0
    %3343 = vmatprep.subr.mxu0 0.0
    %3344 = vmatpush1.msra.mxu0 0.0
    %3345 = vmatprep.subr.mxu0 0.0
    %3346 = vmatpush1.msra.mxu0 0.0
    %3347 = vmatprep.subr.mxu0 0.0
    %3348 = vmatpush1.msra.mxu0 0.0
    %3349 = vmatprep.subr.mxu0 0.0
    %3350 = vmatpush1.msra.mxu0 0.0
    %3351 = vmatprep.subr.mxu0 0.0
    %3352 = vmatpush1.msra.mxu0 0.0
    %3353 = vmatprep.subr.mxu0 0.0
    %3354 = vmatpush1.msra.mxu0 0.0
    %3355 = vmatprep.subr.mxu0 0.0
    %3356 = vmatpush1.msra.mxu0 0.0
    %3357 = vmatprep.subr.mxu0 0.0
    %3358 = vmatpush1.msra.mxu0 0.0
    %3359 = vmatprep.subr.mxu0 0.0
    %3360 = vmatpush1.msra.mxu0 0.0
    %3361 = vmatprep.subr.mxu0 0.0
    %3362 = vmatpush1.msra.mxu0 0.0
    %3363 = vmatprep.subr.mxu0 0.0
    %3364 = vmatpush1.msra.mxu0 0.0
    %3365 = vmatprep.mubr.f32.mxu0 0.0
    %3366 = vmatmul.mubr.f32.gmra.mrb[0].mxu0 %v3299
    %v3367 = vpop.f32.mrb[0].mxu0
    %v3368 = vadd.f32 %v3297, %v3367
    %v3369 = vpop.f32.mrb[0].mxu0
    %3370 = vdwg.mxu0
    %v3371 = vld [vmem:[%s12] sm:$0xff]
    %v3372 = vld [vmem:[%s12 + $0x8] sm:$0xff]
    %v3373 = vld [vmem:[%s12 + $0x10] sm:$0xff]
    %v3374 = vld [vmem:[%s12 + $0x18] sm:$0xff]
    %v3375 = vld [vmem:[%s13] sm:$0x1]
    %3376 = vmatprep.subr.mxu0 0.0
    %3377 = vmatpush1.msra.mxu0 %v3371
    %3378 = vmatprep.subr.mxu0 0.0
    %3379 = vmatpush1.msra.mxu0 %v3372
    %3380 = vmatprep.subr.mxu0 0.0
    %3381 = vmatpush1.msra.mxu0 %v3373
    %3382 = vmatprep.subr.mxu0 0.0
    %3383 = vmatpush1.msra.mxu0 %v3374
    %3384 = vmatprep.subr.mxu0 0.0
    %3385 = vmatpush1.msra.mxu0 0.0
    %3386 = vmatprep.subr.mxu0 0.0
    %3387 = vmatpush1.msra.mxu0 0.0
    %3388 = vmatprep.subr.mxu0 0.0
    %3389 = vmatpush1.msra.mxu0 0.0
    %3390 = vmatprep.subr.mxu0 0.0
    %3391 = vmatpush1.msra.mxu0 0.0
    %3392 = vmatprep.subr.mxu0 0.0
    %3393 = vmatpush1.msra.mxu0 0.0
    %3394 = vmatprep.subr.mxu0 0.0
    %3395 = vmatpush1.msra.mxu0 0.0
    %3396 = vmatprep.subr.mxu0 0.0
    %3397 = vmatpush1.msra.mxu0 0.0
    %3398 = vmatprep.subr.mxu0 0.0
    %3399 = vmatpush1.msra.mxu0 0.0
    %3400 = vmatprep.subr.mxu0 0.0
    %3401 = vmatpush1.msra.mxu0 0.0
    %3402 = vmatprep.subr.mxu0 0.0
    %3403 = vmatpush1.msra.mxu0 0.0
    %3404 = vmatprep.subr.mxu0 0.0
    %3405 = vmatpush1.msra.mxu0 0.0
    %3406 = vmatprep.subr.mxu0 0.0
    %3407 = vmatpush1.msra.mxu0 0.0
    %3408 = vmatprep.subr.mxu0 0.0
    %3409 = vmatpush1.msra.mxu0 0.0
    %3410 = vmatprep.subr.mxu0 0.0
    %3411 = vmatpush1.msra.mxu0 0.0
    %3412 = vmatprep.subr.mxu0 0.0
    %3413 = vmatpush1.msra.mxu0 0.0
    %3414 = vmatprep.subr.mxu0 0.0
    %3415 = vmatpush1.msra.mxu0 0.0
    %3416 = vmatprep.subr.mxu0 0.0
    %3417 = vmatpush1.msra.mxu0 0.0
    %3418 = vmatprep.subr.mxu0 0.0
    %3419 = vmatpush1.msra.mxu0 0.0
    %3420 = vmatprep.subr.mxu0 0.0
    %3421 = vmatpush1.msra.mxu0 0.0
    %3422 = vmatprep.subr.mxu0 0.0
    %3423 = vmatpush1.msra.mxu0 0.0
    %3424 = vmatprep.subr.mxu0 0.0
    %3425 = vmatpush1.msra.mxu0 0.0
    %3426 = vmatprep.subr.mxu0 0.0
    %3427 = vmatpush1.msra.mxu0 0.0
    %3428 = vmatprep.subr.mxu0 0.0
    %3429 = vmatpush1.msra.mxu0 0.0
    %3430 = vmatprep.subr.mxu0 0.0
    %3431 = vmatpush1.msra.mxu0 0.0
    %3432 = vmatprep.subr.mxu0 0.0
    %3433 = vmatpush1.msra.mxu0 0.0
    %3434 = vmatprep.subr.mxu0 0.0
    %3435 = vmatpush1.msra.mxu0 0.0
    %3436 = vmatprep.subr.mxu0 0.0
    %3437 = vmatpush1.msra.mxu0 0.0
    %3438 = vmatprep.subr.mxu0 0.0
    %3439 = vmatpush1.msra.mxu0 0.0
    %3440 = vmatprep.mubr.f32.mxu0 0.0
    %3441 = vmatmul.mubr.f32.gmra.mrb[0].mxu0 %v2894
    %v3442 = vpop.f32.mrb[0].mxu0
    %v3443 = vadd.f32 %v3375, %v3442
    %v3444 = vpop.f32.mrb[0].mxu0
    %3445 = vdwg.mxu0
    %v3446 = vadd.f32 %v3368, %v3443
    %v3447 = vxor.u32 %v3446, 2147483648
    %v3448 = vmul.f32 %v3447, 1.442695
    %v3449 = vpow.pop %v3448
    %v3450 = vadd.f32 %v3449, 1.0
    %v3451 = vrcp.pop %v3450
    %v3452 = vmul.f32 1.0, %v3451
    %3454 = vrot.lane.b32.xlu0 %v3443, 64
    %v3455 = vpop.permute.xlu0 %3454
    %v3457 = vmul.f32 %v3452, %v3455
    %3459 = vrot.lane.b32.xlu0 %v3457, 64
    %v3460 = vpop.permute.xlu0 %3459
    %v3462 = vadd.f32 %v3368, %v3460
    %v3463 = vtanh.pop %v3462
    %v3464 = vsub.f32 1.0, %v3452
    %3466 = vrot.lane.b32.xlu0 %v3463, 96
    %v3467 = vpop.permute.xlu0 %3466
    %v3469 = vmul.f32 %v3464, %v3467
    %v3470 = vlaneseq
    %v3471 = vshrl.u32 %v3470, 7
    %v3472 = vsub.s32 0, %v3471
    %v3473 = vrot.slane %v2884, %v3472
    %3474 = vrot.lane.b32.xlu0 %v3473, 32
    %v3475 = vpop.permute.xlu0 %3474
    %v3477 = vmul.f32 %v3452, %v3475
    %v3478 = vadd.f32 %v3469, %v3477
    %p3479 = scmp.lt.s32.totalorder %s2880, 6
    %s3480 = scalar_select %p3479, 1, 0
    %v3481 = vstv %s3480
    %vm3482 = vcmp.eq.s32.totalorder %v3481, 1
    %v3483 = vsel %vm3482, %v3478, %v3475
    %3485 = vrot.lane.b32.xlu0 %v3483, 96
    %v3486 = vpop.permute.xlu0 %3485
    %3488 = vst.msk [vmem:[#allocation6] sm:$0x1] %vm679, %v3486
    %v3489 = vld [vmem:[%s14] sm:$0xff]
    %v3490 = vld [vmem:[%s14 + $0x8] sm:$0xff]
    %v3491 = vld [vmem:[%s14 + $0x10] sm:$0xff]
    %v3492 = vld [vmem:[%s14 + $0x18] sm:$0xff]
    %v3493 = vld [vmem:[%s15] sm:$0x1]
    %3495 = vrot.lane.b32.xlu0 %v3478, 96
    %v3496 = vpop.permute.xlu0 %3495
    %v3497 = vsel %vm82, %v3496, 0
    %3499 = vmatprep.subr.mxu0 0.0
    %3500 = vmatpush1.msra.mxu0 %v3489
    %3501 = vmatprep.subr.mxu0 0.0
    %3502 = vmatpush1.msra.mxu0 %v3490
    %3503 = vmatprep.subr.mxu0 0.0
    %3504 = vmatpush1.msra.mxu0 %v3491
    %3505 = vmatprep.subr.mxu0 0.0
    %3506 = vmatpush1.msra.mxu0 %v3492
    %3507 = vmatprep.subr.mxu0 0.0
    %3508 = vmatpush1.msra.mxu0 0.0
    %3509 = vmatprep.subr.mxu0 0.0
    %3510 = vmatpush1.msra.mxu0 0.0
    %3511 = vmatprep.subr.mxu0 0.0
    %3512 = vmatpush1.msra.mxu0 0.0
    %3513 = vmatprep.subr.mxu0 0.0
    %3514 = vmatpush1.msra.mxu0 0.0
    %3515 = vmatprep.subr.mxu0 0.0
    %3516 = vmatpush1.msra.mxu0 0.0
    %3517 = vmatprep.subr.mxu0 0.0
    %3518 = vmatpush1.msra.mxu0 0.0
    %3519 = vmatprep.subr.mxu0 0.0
    %3520 = vmatpush1.msra.mxu0 0.0
    %3521 = vmatprep.subr.mxu0 0.0
    %3522 = vmatpush1.msra.mxu0 0.0
    %3523 = vmatprep.subr.mxu0 0.0
    %3524 = vmatpush1.msra.mxu0 0.0
    %3525 = vmatprep.subr.mxu0 0.0
    %3526 = vmatpush1.msra.mxu0 0.0
    %3527 = vmatprep.subr.mxu0 0.0
    %3528 = vmatpush1.msra.mxu0 0.0
    %3529 = vmatprep.subr.mxu0 0.0
    %3530 = vmatpush1.msra.mxu0 0.0
    %3531 = vmatprep.subr.mxu0 0.0
    %3532 = vmatpush1.msra.mxu0 0.0
    %3533 = vmatprep.subr.mxu0 0.0
    %3534 = vmatpush1.msra.mxu0 0.0
    %3535 = vmatprep.subr.mxu0 0.0
    %3536 = vmatpush1.msra.mxu0 0.0
    %3537 = vmatprep.subr.mxu0 0.0
    %3538 = vmatpush1.msra.mxu0 0.0
    %3539 = vmatprep.subr.mxu0 0.0
    %3540 = vmatpush1.msra.mxu0 0.0
    %3541 = vmatprep.subr.mxu0 0.0
    %3542 = vmatpush1.msra.mxu0 0.0
    %3543 = vmatprep.subr.mxu0 0.0
    %3544 = vmatpush1.msra.mxu0 0.0
    %3545 = vmatprep.subr.mxu0 0.0
    %3546 = vmatpush1.msra.mxu0 0.0
    %3547 = vmatprep.subr.mxu0 0.0
    %3548 = vmatpush1.msra.mxu0 0.0
    %3549 = vmatprep.subr.mxu0 0.0
    %3550 = vmatpush1.msra.mxu0 0.0
    %3551 = vmatprep.subr.mxu0 0.0
    %3552 = vmatpush1.msra.mxu0 0.0
    %3553 = vmatprep.subr.mxu0 0.0
    %3554 = vmatpush1.msra.mxu0 0.0
    %3555 = vmatprep.subr.mxu0 0.0
    %3556 = vmatpush1.msra.mxu0 0.0
    %3557 = vmatprep.subr.mxu0 0.0
    %3558 = vmatpush1.msra.mxu0 0.0
    %3559 = vmatprep.subr.mxu0 0.0
    %3560 = vmatpush1.msra.mxu0 0.0
    %3561 = vmatprep.subr.mxu0 0.0
    %3562 = vmatpush1.msra.mxu0 0.0
    %3563 = vmatprep.mubr.f32.mxu0 0.0
    %3564 = vmatmul.mubr.f32.gmra.mrb[0].mxu0 %v3497
    %v3565 = vpop.f32.mrb[0].mxu0
    %v3566 = vadd.f32 %v3493, %v3565
    %v3567 = vpop.f32.mrb[0].mxu0
    %3568 = vdwg.mxu0
    %v3569 = vsel %vm231, %v3566, -inf
    %3570 = vmax.xlane.f32.xlu0 %v3569
    %v3571 = vpop.xlane.xlu0 %3570
    %v3572 = vsub.f32 %v3566, %v3571
    %v3573 = vmul.f32 %v3572, 1.442695
    %v3574 = vpow.pop %v3573
    %v3575 = vsel %vm231, %v3574, 0.0
    %3576 = vadd.xlane.f32.xlu0 %v3575
    %v3577 = vpop.xlane.xlu0 %3576
    %v3578 = vlog2.pop %v3577
    %v3579 = vmul.f32 %v3578, 0.6931472
    %v3580 = vsub.f32 %v3572, %v3579
    %3581 = vst [vmem:[#allocation4 + $0x4] sm:$0x1] %v3580
    %s3582 = sadd.s32 %s69, 5
    %s3583 = sld [smem:[#allocation3 + %s3582]]
    %s3584 = scalar_lea.vmem %s1, %s3583
    %v3585 = vld [vmem:[%s3584] sm:$0x1]
    %v3586 = vld [vmem:[#allocation6] sm:$0x1]
    %v3587 = vld [vmem:[%s4] sm:$0xff]
    %v3588 = vld [vmem:[%s4 + $0x8] sm:$0xff]
    %v3589 = vld [vmem:[%s4 + $0x10] sm:$0xff]
    %v3590 = vld [vmem:[%s4 + $0x18] sm:$0xff]
    %v3591 = vld [vmem:[%s5] sm:$0xff]
    %v3592 = vld [vmem:[%s5 + $0x8] sm:$0xff]
    %v3593 = vld [vmem:[%s5 + $0x10] sm:$0xff]
    %v3594 = vld [vmem:[%s5 + $0x18] sm:$0xff]
    %v3596 = vsel %vm82, %v3586, 0
    %3598 = vmatprep.subr.mxu0 0.0
    %3599 = vmatpush1.msra.mxu0 %v3591
    %3600 = vmatprep.subr.mxu0 0.0
    %3601 = vmatpush1.msra.mxu0 %v3592
    %3602 = vmatprep.subr.mxu0 0.0
    %3603 = vmatpush1.msra.mxu0 %v3593
    %3604 = vmatprep.subr.mxu0 0.0
    %3605 = vmatpush1.msra.mxu0 %v3594
    %3606 = vmatprep.subr.mxu0 0.0
    %3607 = vmatpush1.msra.mxu0 0.0
    %3608 = vmatprep.subr.mxu0 0.0
    %3609 = vmatpush1.msra.mxu0 0.0
    %3610 = vmatprep.subr.mxu0 0.0
    %3611 = vmatpush1.msra.mxu0 0.0
    %3612 = vmatprep.subr.mxu0 0.0
    %3613 = vmatpush1.msra.mxu0 0.0
    %3614 = vmatprep.subr.mxu0 0.0
    %3615 = vmatpush1.msra.mxu0 0.0
    %3616 = vmatprep.subr.mxu0 0.0
    %3617 = vmatpush1.msra.mxu0 0.0
    %3618 = vmatprep.subr.mxu0 0.0
    %3619 = vmatpush1.msra.mxu0 0.0
    %3620 = vmatprep.subr.mxu0 0.0
    %3621 = vmatpush1.msra.mxu0 0.0
    %3622 = vmatprep.subr.mxu0 0.0
    %3623 = vmatpush1.msra.mxu0 0.0
    %3624 = vmatprep.subr.mxu0 0.0
    %3625 = vmatpush1.msra.mxu0 0.0
    %3626 = vmatprep.subr.mxu0 0.0
    %3627 = vmatpush1.msra.mxu0 0.0
    %3628 = vmatprep.subr.mxu0 0.0
    %3629 = vmatpush1.msra.mxu0 0.0
    %3630 = vmatprep.subr.mxu0 0.0
    %3631 = vmatpush1.msra.mxu0 0.0
    %3632 = vmatprep.subr.mxu0 0.0
    %3633 = vmatpush1.msra.mxu0 0.0
    %3634 = vmatprep.subr.mxu0 0.0
    %3635 = vmatpush1.msra.mxu0 0.0
    %3636 = vmatprep.subr.mxu0 0.0
    %3637 = vmatpush1.msra.mxu0 0.0
    %3638 = vmatprep.subr.mxu0 0.0
    %3639 = vmatpush1.msra.mxu0 0.0
    %3640 = vmatprep.subr.mxu0 0.0
    %3641 = vmatpush1.msra.mxu0 0.0
    %3642 = vmatprep.subr.mxu0 0.0
    %3643 = vmatpush1.msra.mxu0 0.0
    %3644 = vmatprep.subr.mxu0 0.0
    %3645 = vmatpush1.msra.mxu0 0.0
    %3646 = vmatprep.subr.mxu0 0.0
    %3647 = vmatpush1.msra.mxu0 0.0
    %3648 = vmatprep.subr.mxu0 0.0
    %3649 = vmatpush1.msra.mxu0 0.0
    %3650 = vmatprep.subr.mxu0 0.0
    %3651 = vmatpush1.msra.mxu0 0.0
    %3652 = vmatprep.subr.mxu0 0.0
    %3653 = vmatpush1.msra.mxu0 0.0
    %3654 = vmatprep.subr.mxu0 0.0
    %3655 = vmatpush1.msra.mxu0 0.0
    %3656 = vmatprep.subr.mxu0 0.0
    %3657 = vmatpush1.msra.mxu0 0.0
    %3658 = vmatprep.subr.mxu0 0.0
    %3659 = vmatpush1.msra.mxu0 0.0
    %3660 = vmatprep.subr.mxu0 0.0
    %3661 = vmatpush1.msra.mxu0 0.0
    %3662 = vmatprep.mubr.f32.mxu0 0.0
    %3663 = vmatmul.mubr.f32.gmra.mrb[0].mxu0 %v3596
    %v3664 = vpop.f32.mrb[0].mxu0
    %v3665 = vadd.f32 0.0, %v3664
    %v3666 = vpop.f32.mrb[0].mxu0
    %3667 = vdwg.mxu0
    %v3669 = vsel %vm82, %v3585, 0
    %3671 = vmatprep.subr.mxu0 0.0
    %3672 = vmatpush1.msra.mxu0 %v3587
    %3673 = vmatprep.subr.mxu0 0.0
    %3674 = vmatpush1.msra.mxu0 %v3588
    %3675 = vmatprep.subr.mxu0 0.0
    %3676 = vmatpush1.msra.mxu0 %v3589
    %3677 = vmatprep.subr.mxu0 0.0
    %3678 = vmatpush1.msra.mxu0 %v3590
    %3679 = vmatprep.subr.mxu0 0.0
    %3680 = vmatpush1.msra.mxu0 0.0
    %3681 = vmatprep.subr.mxu0 0.0
    %3682 = vmatpush1.msra.mxu0 0.0
    %3683 = vmatprep.subr.mxu0 0.0
    %3684 = vmatpush1.msra.mxu0 0.0
    %3685 = vmatprep.subr.mxu0 0.0
    %3686 = vmatpush1.msra.mxu0 0.0
    %3687 = vmatprep.subr.mxu0 0.0
    %3688 = vmatpush1.msra.mxu0 0.0
    %3689 = vmatprep.subr.mxu0 0.0
    %3690 = vmatpush1.msra.mxu0 0.0
    %3691 = vmatprep.subr.mxu0 0.0
    %3692 = vmatpush1.msra.mxu0 0.0
    %3693 = vmatprep.subr.mxu0 0.0
    %3694 = vmatpush1.msra.mxu0 0.0
    %3695 = vmatprep.subr.mxu0 0.0
    %3696 = vmatpush1.msra.mxu0 0.0
    %3697 = vmatprep.subr.mxu0 0.0
    %3698 = vmatpush1.msra.mxu0 0.0
    %3699 = vmatprep.subr.mxu0 0.0
    %3700 = vmatpush1.msra.mxu0 0.0
    %3701 = vmatprep.subr.mxu0 0.0
    %3702 = vmatpush1.msra.mxu0 0.0
    %3703 = vmatprep.subr.mxu0 0.0
    %3704 = vmatpush1.msra.mxu0 0.0
    %3705 = vmatprep.subr.mxu0 0.0
    %3706 = vmatpush1.msra.mxu0 0.0
    %3707 = vmatprep.subr.mxu0 0.0
    %3708 = vmatpush1.msra.mxu0 0.0
    %3709 = vmatprep.subr.mxu0 0.0
    %3710 = vmatpush1.msra.mxu0 0.0
    %3711 = vmatprep.subr.mxu0 0.0
    %3712 = vmatpush1.msra.mxu0 0.0
    %3713 = vmatprep.subr.mxu0 0.0
    %3714 = vmatpush1.msra.mxu0 0.0
    %3715 = vmatprep.subr.mxu0 0.0
    %3716 = vmatpush1.msra.mxu0 0.0
    %3717 = vmatprep.subr.mxu0 0.0
    %3718 = vmatpush1.msra.mxu0 0.0
    %3719 = vmatprep.subr.mxu0 0.0
    %3720 = vmatpush1.msra.mxu0 0.0
    %3721 = vmatprep.subr.mxu0 0.0
    %3722 = vmatpush1.msra.mxu0 0.0
    %3723 = vmatprep.subr.mxu0 0.0
    %3724 = vmatpush1.msra.mxu0 0.0
    %3725 = vmatprep.subr.mxu0 0.0
    %3726 = vmatpush1.msra.mxu0 0.0
    %3727 = vmatprep.subr.mxu0 0.0
    %3728 = vmatpush1.msra.mxu0 0.0
    %3729 = vmatprep.subr.mxu0 0.0
    %3730 = vmatpush1.msra.mxu0 0.0
    %3731 = vmatprep.subr.mxu0 0.0
    %3732 = vmatpush1.msra.mxu0 0.0
    %3733 = vmatprep.subr.mxu0 0.0
    %3734 = vmatpush1.msra.mxu0 0.0
    %3735 = vmatprep.mubr.f32.mxu0 0.0
    %3736 = vmatmul.mubr.f32.gmra.mrb[0].mxu0 %v3669
    %v3737 = vpop.f32.mrb[0].mxu0
    %v3738 = vadd.f32 %v3665, %v3737
    %v3739 = vpop.f32.mrb[0].mxu0
    %3740 = vdwg.mxu0
    %v3741 = vld [vmem:[%s6] sm:$0x1]
    %v3742 = vadd.f32 %v3738, %v3741
    %v3743 = vsel %vm231, %v3742, -inf
    %3744 = vmax.xlane.f32.xlu0 %v3743
    %v3745 = vpop.xlane.xlu0 %3744
    %v3746 = vsub.f32 %v3742, %v3745
    %v3747 = vmul.f32 %v3746, 1.442695
    %v3748 = vpow.pop %v3747
    %v3749 = vsel %vm231, %v3748, 0.0
    %3750 = vadd.xlane.f32.xlu0 %v3749
    %v3751 = vpop.xlane.xlu0 %3750
    %v3752 = vrcp.pop %v3751
    %v3753 = vmul.f32 %v3748, %v3752
    %3754 = vst [vmem:[#allocation8 + $0x5] sm:$0x1] %v3753
    %v3755 = vld [vmem:[%s3] sm:$0xff]
    %v3756 = vld [vmem:[%s3 + $0x8] sm:$0xff]
    %v3757 = vld [vmem:[%s3 + $0x10] sm:$0xff]
    %v3758 = vld [vmem:[%s3 + $0x18] sm:$0xff]
    %v3759 = vld [vmem:[%s3 + $0x20] sm:$0xff]
    %v3760 = vld [vmem:[%s3 + $0x28] sm:$0xff]
    %v3761 = vld [vmem:[%s3 + $0x30] sm:$0xff]
    %v3762 = vld [vmem:[%s3 + $0x38] sm:$0xff]
    %v3763 = vld [vmem:[%s3 + $0x40] sm:$0xff]
    %v3764 = vld [vmem:[%s3 + $0x48] sm:$0xff]
    %v3765 = vld [vmem:[%s3 + $0x50] sm:$0xff]
    %v3766 = vld [vmem:[%s3 + $0x58] sm:$0xff]
    %v3767 = vld [vmem:[%s3 + $0x60] sm:$0xff]
    %v3768 = vld [vmem:[%s3 + $0x68] sm:$0xff]
    %v3769 = vld [vmem:[%s3 + $0x70] sm:$0xff]
    %v3770 = vld [vmem:[%s3 + $0x78] sm:$0xff]
    %3771 = vmatprep.subr.mxu0 0.0
    %3772 = vmatpush1.msra.mxu0 %v3755
    %3773 = vmatprep.subr.mxu0 0.0
    %3774 = vmatpush1.msra.mxu0 %v3756
    %3775 = vmatprep.subr.mxu0 0.0
    %3776 = vmatpush1.msra.mxu0 %v3757
    %3777 = vmatprep.subr.mxu0 0.0
    %3778 = vmatpush1.msra.mxu0 %v3758
    %3779 = vmatprep.subr.mxu0 0.0
    %3780 = vmatpush1.msra.mxu0 %v3759
    %3781 = vmatprep.subr.mxu0 0.0
    %3782 = vmatpush1.msra.mxu0 %v3760
    %3783 = vmatprep.subr.mxu0 0.0
    %3784 = vmatpush1.msra.mxu0 %v3761
    %3785 = vmatprep.subr.mxu0 0.0
    %3786 = vmatpush1.msra.mxu0 %v3762
    %3787 = vmatprep.subr.mxu0 0.0
    %3788 = vmatpush1.msra.mxu0 %v3763
    %3789 = vmatprep.subr.mxu0 0.0
    %3790 = vmatpush1.msra.mxu0 %v3764
    %3791 = vmatprep.subr.mxu0 0.0
    %3792 = vmatpush1.msra.mxu0 %v3765
    %3793 = vmatprep.subr.mxu0 0.0
    %3794 = vmatpush1.msra.mxu0 %v3766
    %3795 = vmatprep.subr.mxu0 0.0
    %3796 = vmatpush1.msra.mxu0 %v3767
    %3797 = vmatprep.subr.mxu0 0.0
    %3798 = vmatpush1.msra.mxu0 %v3768
    %3799 = vmatprep.subr.mxu0 0.0
    %3800 = vmatpush1.msra.mxu0 %v3769
    %3801 = vmatprep.subr.mxu0 0.0
    %3802 = vmatpush1.msra.mxu0 %v3770
    %3803 = vmatprep.subr.mxu0 0.0
    %3804 = vmatpush1.msra.mxu0 0.0
    %3805 = vmatprep.subr.mxu0 0.0
    %3806 = vmatpush1.msra.mxu0 0.0
    %3807 = vmatprep.subr.mxu0 0.0
    %3808 = vmatpush1.msra.mxu0 0.0
    %3809 = vmatprep.subr.mxu0 0.0
    %3810 = vmatpush1.msra.mxu0 0.0
    %3811 = vmatprep.subr.mxu0 0.0
    %3812 = vmatpush1.msra.mxu0 0.0
    %3813 = vmatprep.subr.mxu0 0.0
    %3814 = vmatpush1.msra.mxu0 0.0
    %3815 = vmatprep.subr.mxu0 0.0
    %3816 = vmatpush1.msra.mxu0 0.0
    %3817 = vmatprep.subr.mxu0 0.0
    %3818 = vmatpush1.msra.mxu0 0.0
    %3819 = vmatprep.subr.mxu0 0.0
    %3820 = vmatpush1.msra.mxu0 0.0
    %3821 = vmatprep.subr.mxu0 0.0
    %3822 = vmatpush1.msra.mxu0 0.0
    %3823 = vmatprep.subr.mxu0 0.0
    %3824 = vmatpush1.msra.mxu0 0.0
    %3825 = vmatprep.subr.mxu0 0.0
    %3826 = vmatpush1.msra.mxu0 0.0
    %3827 = vmatprep.subr.mxu0 0.0
    %3828 = vmatpush1.msra.mxu0 0.0
    %3829 = vmatprep.subr.mxu0 0.0
    %3830 = vmatpush1.msra.mxu0 0.0
    %3831 = vmatprep.subr.mxu0 0.0
    %3832 = vmatpush1.msra.mxu0 0.0
    %3833 = vmatprep.subr.mxu0 0.0
    %3834 = vmatpush1.msra.mxu0 0.0
    %3835 = vmatprep.mubr.f32.mxu0 0.0
    %3836 = vmatmul.mubr.f32.gmra.mrb[0].mxu0 %v3753
    %v3837 = vpop.f32.mrb[0].mxu0
    %v3838 = vadd.f32 0.0, %v3837
    %v3839 = vpop.f32.mrb[0].mxu0
    %3840 = vdwg.mxu0
    %v3841 = vld [vmem:[%s7] sm:$0xff]
    %v3842 = vld [vmem:[%s7 + $0x8] sm:$0xff]
    %v3843 = vld [vmem:[%s7 + $0x10] sm:$0xff]
    %v3844 = vld [vmem:[%s7 + $0x18] sm:$0xff]
    %v3845 = vld [vmem:[%s8] sm:$0xff]
    %v3846 = vld [vmem:[%s8 + $0x8] sm:$0xff]
    %v3847 = vld [vmem:[%s8 + $0x10] sm:$0xff]
    %v3848 = vld [vmem:[%s8 + $0x18] sm:$0xff]
    %v3850 = vsel %vm82, %v3838, 0
    %3852 = vmatprep.subr.mxu0 0.0
    %3853 = vmatpush1.msra.mxu0 %v3845
    %3854 = vmatprep.subr.mxu0 0.0
    %3855 = vmatpush1.msra.mxu0 %v3846
    %3856 = vmatprep.subr.mxu0 0.0
    %3857 = vmatpush1.msra.mxu0 %v3847
    %3858 = vmatprep.subr.mxu0 0.0
    %3859 = vmatpush1.msra.mxu0 %v3848
    %3860 = vmatprep.subr.mxu0 0.0
    %3861 = vmatpush1.msra.mxu0 0.0
    %3862 = vmatprep.subr.mxu0 0.0
    %3863 = vmatpush1.msra.mxu0 0.0
    %3864 = vmatprep.subr.mxu0 0.0
    %3865 = vmatpush1.msra.mxu0 0.0
    %3866 = vmatprep.subr.mxu0 0.0
    %3867 = vmatpush1.msra.mxu0 0.0
    %3868 = vmatprep.subr.mxu0 0.0
    %3869 = vmatpush1.msra.mxu0 0.0
    %3870 = vmatprep.subr.mxu0 0.0
    %3871 = vmatpush1.msra.mxu0 0.0
    %3872 = vmatprep.subr.mxu0 0.0
    %3873 = vmatpush1.msra.mxu0 0.0
    %3874 = vmatprep.subr.mxu0 0.0
    %3875 = vmatpush1.msra.mxu0 0.0
    %3876 = vmatprep.subr.mxu0 0.0
    %3877 = vmatpush1.msra.mxu0 0.0
    %3878 = vmatprep.subr.mxu0 0.0
    %3879 = vmatpush1.msra.mxu0 0.0
    %3880 = vmatprep.subr.mxu0 0.0
    %3881 = vmatpush1.msra.mxu0 0.0
    %3882 = vmatprep.subr.mxu0 0.0
    %3883 = vmatpush1.msra.mxu0 0.0
    %3884 = vmatprep.subr.mxu0 0.0
    %3885 = vmatpush1.msra.mxu0 0.0
    %3886 = vmatprep.subr.mxu0 0.0
    %3887 = vmatpush1.msra.mxu0 0.0
    %3888 = vmatprep.subr.mxu0 0.0
    %3889 = vmatpush1.msra.mxu0 0.0
    %3890 = vmatprep.subr.mxu0 0.0
    %3891 = vmatpush1.msra.mxu0 0.0
    %3892 = vmatprep.subr.mxu0 0.0
    %3893 = vmatpush1.msra.mxu0 0.0
    %3894 = vmatprep.subr.mxu0 0.0
    %3895 = vmatpush1.msra.mxu0 0.0
    %3896 = vmatprep.subr.mxu0 0.0
    %3897 = vmatpush1.msra.mxu0 0.0
    %3898 = vmatprep.subr.mxu0 0.0
    %3899 = vmatpush1.msra.mxu0 0.0
    %3900 = vmatprep.subr.mxu0 0.0
    %3901 = vmatpush1.msra.mxu0 0.0
    %3902 = vmatprep.subr.mxu0 0.0
    %3903 = vmatpush1.msra.mxu0 0.0
    %3904 = vmatprep.subr.mxu0 0.0
    %3905 = vmatpush1.msra.mxu0 0.0
    %3906 = vmatprep.subr.mxu0 0.0
    %3907 = vmatpush1.msra.mxu0 0.0
    %3908 = vmatprep.subr.mxu0 0.0
    %3909 = vmatpush1.msra.mxu0 0.0
    %3910 = vmatprep.subr.mxu0 0.0
    %3911 = vmatpush1.msra.mxu0 0.0
    %3912 = vmatprep.subr.mxu0 0.0
    %3913 = vmatpush1.msra.mxu0 0.0
    %3914 = vmatprep.subr.mxu0 0.0
    %3915 = vmatpush1.msra.mxu0 0.0
    %3916 = vmatprep.mubr.f32.mxu0 0.0
    %3917 = vmatmul.mubr.f32.gmra.mrb[0].mxu0 %v3850
    %v3918 = vpop.f32.mrb[0].mxu0
    %v3919 = vadd.f32 0.0, %v3918
    %v3920 = vpop.f32.mrb[0].mxu0
    %3921 = vdwg.mxu0
    %3922 = vmatprep.subr.mxu0 0.0
    %3923 = vmatpush1.msra.mxu0 %v3841
    %3924 = vmatprep.subr.mxu0 0.0
    %3925 = vmatpush1.msra.mxu0 %v3842
    %3926 = vmatprep.subr.mxu0 0.0
    %3927 = vmatpush1.msra.mxu0 %v3843
    %3928 = vmatprep.subr.mxu0 0.0
    %3929 = vmatpush1.msra.mxu0 %v3844
    %3930 = vmatprep.subr.mxu0 0.0
    %3931 = vmatpush1.msra.mxu0 0.0
    %3932 = vmatprep.subr.mxu0 0.0
    %3933 = vmatpush1.msra.mxu0 0.0
    %3934 = vmatprep.subr.mxu0 0.0
    %3935 = vmatpush1.msra.mxu0 0.0
    %3936 = vmatprep.subr.mxu0 0.0
    %3937 = vmatpush1.msra.mxu0 0.0
    %3938 = vmatprep.subr.mxu0 0.0
    %3939 = vmatpush1.msra.mxu0 0.0
    %3940 = vmatprep.subr.mxu0 0.0
    %3941 = vmatpush1.msra.mxu0 0.0
    %3942 = vmatprep.subr.mxu0 0.0
    %3943 = vmatpush1.msra.mxu0 0.0
    %3944 = vmatprep.subr.mxu0 0.0
    %3945 = vmatpush1.msra.mxu0 0.0
    %3946 = vmatprep.subr.mxu0 0.0
    %3947 = vmatpush1.msra.mxu0 0.0
    %3948 = vmatprep.subr.mxu0 0.0
    %3949 = vmatpush1.msra.mxu0 0.0
    %3950 = vmatprep.subr.mxu0 0.0
    %3951 = vmatpush1.msra.mxu0 0.0
    %3952 = vmatprep.subr.mxu0 0.0
    %3953 = vmatpush1.msra.mxu0 0.0
    %3954 = vmatprep.subr.mxu0 0.0
    %3955 = vmatpush1.msra.mxu0 0.0
    %3956 = vmatprep.subr.mxu0 0.0
    %3957 = vmatpush1.msra.mxu0 0.0
    %3958 = vmatprep.subr.mxu0 0.0
    %3959 = vmatpush1.msra.mxu0 0.0
    %3960 = vmatprep.subr.mxu0 0.0
    %3961 = vmatpush1.msra.mxu0 0.0
    %3962 = vmatprep.subr.mxu0 0.0
    %3963 = vmatpush1.msra.mxu0 0.0
    %3964 = vmatprep.subr.mxu0 0.0
    %3965 = vmatpush1.msra.mxu0 0.0
    %3966 = vmatprep.subr.mxu0 0.0
    %3967 = vmatpush1.msra.mxu0 0.0
    %3968 = vmatprep.subr.mxu0 0.0
    %3969 = vmatpush1.msra.mxu0 0.0
    %3970 = vmatprep.subr.mxu0 0.0
    %3971 = vmatpush1.msra.mxu0 0.0
    %3972 = vmatprep.subr.mxu0 0.0
    %3973 = vmatpush1.msra.mxu0 0.0
    %3974 = vmatprep.subr.mxu0 0.0
    %3975 = vmatpush1.msra.mxu0 0.0
    %3976 = vmatprep.subr.mxu0 0.0
    %3977 = vmatpush1.msra.mxu0 0.0
    %3978 = vmatprep.subr.mxu0 0.0
    %3979 = vmatpush1.msra.mxu0 0.0
    %3980 = vmatprep.subr.mxu0 0.0
    %3981 = vmatpush1.msra.mxu0 0.0
    %3982 = vmatprep.subr.mxu0 0.0
    %3983 = vmatpush1.msra.mxu0 0.0
    %3984 = vmatprep.subr.mxu0 0.0
    %3985 = vmatpush1.msra.mxu0 0.0
    %3986 = vmatprep.mubr.f32.mxu0 0.0
    %3987 = vmatmul.mubr.f32.gmra.mrb[0].mxu0 %v3669
    %v3988 = vpop.f32.mrb[0].mxu0
    %v3989 = vadd.f32 %v3919, %v3988
    %v3990 = vpop.f32.mrb[0].mxu0
    %3991 = vdwg.mxu0
    %v3992 = vld [vmem:[%s9] sm:$0x1]
    %v3993 = vadd.f32 %v3989, %v3992
    %v3994 = vmax.f32 %v3993, 0.0
    %v3995 = vld [vmem:[%s10] sm:$0xff]
    %v3996 = vld [vmem:[%s10 + $0x8] sm:$0xff]
    %v3997 = vld [vmem:[%s10 + $0x10] sm:$0xff]
    %v3998 = vld [vmem:[%s10 + $0x18] sm:$0xff]
    %v3999 = vld [vmem:[%s11] sm:$0x1]
    %v4001 = vsel %vm82, %v3994, 0
    %4003 = vmatprep.subr.mxu0 0.0
    %4004 = vmatpush1.msra.mxu0 %v3995
    %4005 = vmatprep.subr.mxu0 0.0
    %4006 = vmatpush1.msra.mxu0 %v3996
    %4007 = vmatprep.subr.mxu0 0.0
    %4008 = vmatpush1.msra.mxu0 %v3997
    %4009 = vmatprep.subr.mxu0 0.0
    %4010 = vmatpush1.msra.mxu0 %v3998
    %4011 = vmatprep.subr.mxu0 0.0
    %4012 = vmatpush1.msra.mxu0 0.0
    %4013 = vmatprep.subr.mxu0 0.0
    %4014 = vmatpush1.msra.mxu0 0.0
    %4015 = vmatprep.subr.mxu0 0.0
    %4016 = vmatpush1.msra.mxu0 0.0
    %4017 = vmatprep.subr.mxu0 0.0
    %4018 = vmatpush1.msra.mxu0 0.0
    %4019 = vmatprep.subr.mxu0 0.0
    %4020 = vmatpush1.msra.mxu0 0.0
    %4021 = vmatprep.subr.mxu0 0.0
    %4022 = vmatpush1.msra.mxu0 0.0
    %4023 = vmatprep.subr.mxu0 0.0
    %4024 = vmatpush1.msra.mxu0 0.0
    %4025 = vmatprep.subr.mxu0 0.0
    %4026 = vmatpush1.msra.mxu0 0.0
    %4027 = vmatprep.subr.mxu0 0.0
    %4028 = vmatpush1.msra.mxu0 0.0
    %4029 = vmatprep.subr.mxu0 0.0
    %4030 = vmatpush1.msra.mxu0 0.0
    %4031 = vmatprep.subr.mxu0 0.0
    %4032 = vmatpush1.msra.mxu0 0.0
    %4033 = vmatprep.subr.mxu0 0.0
    %4034 = vmatpush1.msra.mxu0 0.0
    %4035 = vmatprep.subr.mxu0 0.0
    %4036 = vmatpush1.msra.mxu0 0.0
    %4037 = vmatprep.subr.mxu0 0.0
    %4038 = vmatpush1.msra.mxu0 0.0
    %4039 = vmatprep.subr.mxu0 0.0
    %4040 = vmatpush1.msra.mxu0 0.0
    %4041 = vmatprep.subr.mxu0 0.0
    %4042 = vmatpush1.msra.mxu0 0.0
    %4043 = vmatprep.subr.mxu0 0.0
    %4044 = vmatpush1.msra.mxu0 0.0
    %4045 = vmatprep.subr.mxu0 0.0
    %4046 = vmatpush1.msra.mxu0 0.0
    %4047 = vmatprep.subr.mxu0 0.0
    %4048 = vmatpush1.msra.mxu0 0.0
    %4049 = vmatprep.subr.mxu0 0.0
    %4050 = vmatpush1.msra.mxu0 0.0
    %4051 = vmatprep.subr.mxu0 0.0
    %4052 = vmatpush1.msra.mxu0 0.0
    %4053 = vmatprep.subr.mxu0 0.0
    %4054 = vmatpush1.msra.mxu0 0.0
    %4055 = vmatprep.subr.mxu0 0.0
    %4056 = vmatpush1.msra.mxu0 0.0
    %4057 = vmatprep.subr.mxu0 0.0
    %4058 = vmatpush1.msra.mxu0 0.0
    %4059 = vmatprep.subr.mxu0 0.0
    %4060 = vmatpush1.msra.mxu0 0.0
    %4061 = vmatprep.subr.mxu0 0.0
    %4062 = vmatpush1.msra.mxu0 0.0
    %4063 = vmatprep.subr.mxu0 0.0
    %4064 = vmatpush1.msra.mxu0 0.0
    %4065 = vmatprep.subr.mxu0 0.0
    %4066 = vmatpush1.msra.mxu0 0.0
    %4067 = vmatprep.mubr.f32.mxu0 0.0
    %4068 = vmatmul.mubr.f32.gmra.mrb[0].mxu0 %v4001
    %v4069 = vpop.f32.mrb[0].mxu0
    %v4070 = vadd.f32 %v3999, %v4069
    %v4071 = vpop.f32.mrb[0].mxu0
    %4072 = vdwg.mxu0
    %v4073 = vld [vmem:[%s12] sm:$0xff]
    %v4074 = vld [vmem:[%s12 + $0x8] sm:$0xff]
    %v4075 = vld [vmem:[%s12 + $0x10] sm:$0xff]
    %v4076 = vld [vmem:[%s12 + $0x18] sm:$0xff]
    %v4077 = vld [vmem:[%s13] sm:$0x1]
    %4078 = vmatprep.subr.mxu0 0.0
    %4079 = vmatpush1.msra.mxu0 %v4073
    %4080 = vmatprep.subr.mxu0 0.0
    %4081 = vmatpush1.msra.mxu0 %v4074
    %4082 = vmatprep.subr.mxu0 0.0
    %4083 = vmatpush1.msra.mxu0 %v4075
    %4084 = vmatprep.subr.mxu0 0.0
    %4085 = vmatpush1.msra.mxu0 %v4076
    %4086 = vmatprep.subr.mxu0 0.0
    %4087 = vmatpush1.msra.mxu0 0.0
    %4088 = vmatprep.subr.mxu0 0.0
    %4089 = vmatpush1.msra.mxu0 0.0
    %4090 = vmatprep.subr.mxu0 0.0
    %4091 = vmatpush1.msra.mxu0 0.0
    %4092 = vmatprep.subr.mxu0 0.0
    %4093 = vmatpush1.msra.mxu0 0.0
    %4094 = vmatprep.subr.mxu0 0.0
    %4095 = vmatpush1.msra.mxu0 0.0
    %4096 = vmatprep.subr.mxu0 0.0
    %4097 = vmatpush1.msra.mxu0 0.0
    %4098 = vmatprep.subr.mxu0 0.0
    %4099 = vmatpush1.msra.mxu0 0.0
    %4100 = vmatprep.subr.mxu0 0.0
    %4101 = vmatpush1.msra.mxu0 0.0
    %4102 = vmatprep.subr.mxu0 0.0
    %4103 = vmatpush1.msra.mxu0 0.0
    %4104 = vmatprep.subr.mxu0 0.0
    %4105 = vmatpush1.msra.mxu0 0.0
    %4106 = vmatprep.subr.mxu0 0.0
    %4107 = vmatpush1.msra.mxu0 0.0
    %4108 = vmatprep.subr.mxu0 0.0
    %4109 = vmatpush1.msra.mxu0 0.0
    %4110 = vmatprep.subr.mxu0 0.0
    %4111 = vmatpush1.msra.mxu0 0.0
    %4112 = vmatprep.subr.mxu0 0.0
    %4113 = vmatpush1.msra.mxu0 0.0
    %4114 = vmatprep.subr.mxu0 0.0
    %4115 = vmatpush1.msra.mxu0 0.0
    %4116 = vmatprep.subr.mxu0 0.0
    %4117 = vmatpush1.msra.mxu0 0.0
    %4118 = vmatprep.subr.mxu0 0.0
    %4119 = vmatpush1.msra.mxu0 0.0
    %4120 = vmatprep.subr.mxu0 0.0
    %4121 = vmatpush1.msra.mxu0 0.0
    %4122 = vmatprep.subr.mxu0 0.0
    %4123 = vmatpush1.msra.mxu0 0.0
    %4124 = vmatprep.subr.mxu0 0.0
    %4125 = vmatpush1.msra.mxu0 0.0
    %4126 = vmatprep.subr.mxu0 0.0
    %4127 = vmatpush1.msra.mxu0 0.0
    %4128 = vmatprep.subr.mxu0 0.0
    %4129 = vmatpush1.msra.mxu0 0.0
    %4130 = vmatprep.subr.mxu0 0.0
    %4131 = vmatpush1.msra.mxu0 0.0
    %4132 = vmatprep.subr.mxu0 0.0
    %4133 = vmatpush1.msra.mxu0 0.0
    %4134 = vmatprep.subr.mxu0 0.0
    %4135 = vmatpush1.msra.mxu0 0.0
    %4136 = vmatprep.subr.mxu0 0.0
    %4137 = vmatpush1.msra.mxu0 0.0
    %4138 = vmatprep.subr.mxu0 0.0
    %4139 = vmatpush1.msra.mxu0 0.0
    %4140 = vmatprep.subr.mxu0 0.0
    %4141 = vmatpush1.msra.mxu0 0.0
    %4142 = vmatprep.mubr.f32.mxu0 0.0
    %4143 = vmatmul.mubr.f32.gmra.mrb[0].mxu0 %v3596
    %v4144 = vpop.f32.mrb[0].mxu0
    %v4145 = vadd.f32 %v4077, %v4144
    %v4146 = vpop.f32.mrb[0].mxu0
    %4147 = vdwg.mxu0
    %v4148 = vadd.f32 %v4070, %v4145
    %v4149 = vxor.u32 %v4148, 2147483648
    %v4150 = vmul.f32 %v4149, 1.442695
    %v4151 = vpow.pop %v4150
    %v4152 = vadd.f32 %v4151, 1.0
    %v4153 = vrcp.pop %v4152
    %v4154 = vmul.f32 1.0, %v4153
    %4156 = vrot.lane.b32.xlu0 %v4145, 64
    %v4157 = vpop.permute.xlu0 %4156
    %v4159 = vmul.f32 %v4154, %v4157
    %4161 = vrot.lane.b32.xlu0 %v4159, 64
    %v4162 = vpop.permute.xlu0 %4161
    %v4164 = vadd.f32 %v4070, %v4162
    %v4165 = vtanh.pop %v4164
    %v4166 = vsub.f32 1.0, %v4154
    %4168 = vrot.lane.b32.xlu0 %v4165, 96
    %v4169 = vpop.permute.xlu0 %4168
    %v4171 = vmul.f32 %v4166, %v4169
    %v4172 = vlaneseq
    %v4173 = vshrl.u32 %v4172, 7
    %v4174 = vsub.s32 0, %v4173
    %v4175 = vrot.slane %v3586, %v4174
    %4176 = vrot.lane.b32.xlu0 %v4175, 32
    %v4177 = vpop.permute.xlu0 %4176
    %v4179 = vmul.f32 %v4154, %v4177
    %v4180 = vadd.f32 %v4171, %v4179
    %p4181 = scmp.lt.s32.totalorder %s3582, 6
    %s4182 = scalar_select %p4181, 1, 0
    %v4183 = vstv %s4182
    %vm4184 = vcmp.eq.s32.totalorder %v4183, 1
    %v4185 = vsel %vm4184, %v4180, %v4177
    %4187 = vrot.lane.b32.xlu0 %v4185, 96
    %v4188 = vpop.permute.xlu0 %4187
    %4190 = vst.msk [vmem:[#allocation6] sm:$0x1] %vm679, %v4188
    %v4191 = vld [vmem:[%s14] sm:$0xff]
    %v4192 = vld [vmem:[%s14 + $0x8] sm:$0xff]
    %v4193 = vld [vmem:[%s14 + $0x10] sm:$0xff]
    %v4194 = vld [vmem:[%s14 + $0x18] sm:$0xff]
    %v4195 = vld [vmem:[%s15] sm:$0x1]
    %4197 = vrot.lane.b32.xlu0 %v4180, 96
    %v4198 = vpop.permute.xlu0 %4197
    %v4199 = vsel %vm82, %v4198, 0
    %4201 = vmatprep.subr.mxu0 0.0
    %4202 = vmatpush1.msra.mxu0 %v4191
    %4203 = vmatprep.subr.mxu0 0.0
    %4204 = vmatpush1.msra.mxu0 %v4192
    %4205 = vmatprep.subr.mxu0 0.0
    %4206 = vmatpush1.msra.mxu0 %v4193
    %4207 = vmatprep.subr.mxu0 0.0
    %4208 = vmatpush1.msra.mxu0 %v4194
    %4209 = vmatprep.subr.mxu0 0.0
    %4210 = vmatpush1.msra.mxu0 0.0
    %4211 = vmatprep.subr.mxu0 0.0
    %4212 = vmatpush1.msra.mxu0 0.0
    %4213 = vmatprep.subr.mxu0 0.0
    %4214 = vmatpush1.msra.mxu0 0.0
    %4215 = vmatprep.subr.mxu0 0.0
    %4216 = vmatpush1.msra.mxu0 0.0
    %4217 = vmatprep.subr.mxu0 0.0
    %4218 = vmatpush1.msra.mxu0 0.0
    %4219 = vmatprep.subr.mxu0 0.0
    %4220 = vmatpush1.msra.mxu0 0.0
    %4221 = vmatprep.subr.mxu0 0.0
    %4222 = vmatpush1.msra.mxu0 0.0
    %4223 = vmatprep.subr.mxu0 0.0
    %4224 = vmatpush1.msra.mxu0 0.0
    %4225 = vmatprep.subr.mxu0 0.0
    %4226 = vmatpush1.msra.mxu0 0.0
    %4227 = vmatprep.subr.mxu0 0.0
    %4228 = vmatpush1.msra.mxu0 0.0
    %4229 = vmatprep.subr.mxu0 0.0
    %4230 = vmatpush1.msra.mxu0 0.0
    %4231 = vmatprep.subr.mxu0 0.0
    %4232 = vmatpush1.msra.mxu0 0.0
    %4233 = vmatprep.subr.mxu0 0.0
    %4234 = vmatpush1.msra.mxu0 0.0
    %4235 = vmatprep.subr.mxu0 0.0
    %4236 = vmatpush1.msra.mxu0 0.0
    %4237 = vmatprep.subr.mxu0 0.0
    %4238 = vmatpush1.msra.mxu0 0.0
    %4239 = vmatprep.subr.mxu0 0.0
    %4240 = vmatpush1.msra.mxu0 0.0
    %4241 = vmatprep.subr.mxu0 0.0
    %4242 = vmatpush1.msra.mxu0 0.0
    %4243 = vmatprep.subr.mxu0 0.0
    %4244 = vmatpush1.msra.mxu0 0.0
    %4245 = vmatprep.subr.mxu0 0.0
    %4246 = vmatpush1.msra.mxu0 0.0
    %4247 = vmatprep.subr.mxu0 0.0
    %4248 = vmatpush1.msra.mxu0 0.0
    %4249 = vmatprep.subr.mxu0 0.0
    %4250 = vmatpush1.msra.mxu0 0.0
    %4251 = vmatprep.subr.mxu0 0.0
    %4252 = vmatpush1.msra.mxu0 0.0
    %4253 = vmatprep.subr.mxu0 0.0
    %4254 = vmatpush1.msra.mxu0 0.0
    %4255 = vmatprep.subr.mxu0 0.0
    %4256 = vmatpush1.msra.mxu0 0.0
    %4257 = vmatprep.subr.mxu0 0.0
    %4258 = vmatpush1.msra.mxu0 0.0
    %4259 = vmatprep.subr.mxu0 0.0
    %4260 = vmatpush1.msra.mxu0 0.0
    %4261 = vmatprep.subr.mxu0 0.0
    %4262 = vmatpush1.msra.mxu0 0.0
    %4263 = vmatprep.subr.mxu0 0.0
    %4264 = vmatpush1.msra.mxu0 0.0
    %4265 = vmatprep.mubr.f32.mxu0 0.0
    %4266 = vmatmul.mubr.f32.gmra.mrb[0].mxu0 %v4199
    %v4267 = vpop.f32.mrb[0].mxu0
    %v4268 = vadd.f32 %v4195, %v4267
    %v4269 = vpop.f32.mrb[0].mxu0
    %4270 = vdwg.mxu0
    %v4271 = vsel %vm231, %v4268, -inf
    %4272 = vmax.xlane.f32.xlu0 %v4271
    %v4273 = vpop.xlane.xlu0 %4272
    %v4274 = vsub.f32 %v4268, %v4273
    %v4275 = vmul.f32 %v4274, 1.442695
    %v4276 = vpow.pop %v4275
    %v4277 = vsel %vm231, %v4276, 0.0
    %4278 = vadd.xlane.f32.xlu0 %v4277
    %v4279 = vpop.xlane.xlu0 %4278
    %v4280 = vlog2.pop %v4279
    %v4281 = vmul.f32 %v4280, 0.6931472
    %v4282 = vsub.f32 %v4274, %v4281
    %4283 = vst [vmem:[#allocation4 + $0x5] sm:$0x1] %v4282
    %s4284 = sadd.s32 %s69, 6
    %s4285 = sld [smem:[#allocation3 + %s4284]]
    %s4286 = scalar_lea.vmem %s1, %s4285
    %v4287 = vld [vmem:[%s4286] sm:$0x1]
    %v4288 = vld [vmem:[#allocation6] sm:$0x1]
    %v4289 = vld [vmem:[%s4] sm:$0xff]
    %v4290 = vld [vmem:[%s4 + $0x8] sm:$0xff]
    %v4291 = vld [vmem:[%s4 + $0x10] sm:$0xff]
    %v4292 = vld [vmem:[%s4 + $0x18] sm:$0xff]
    %v4293 = vld [vmem:[%s5] sm:$0xff]
    %v4294 = vld [vmem:[%s5 + $0x8] sm:$0xff]
    %v4295 = vld [vmem:[%s5 + $0x10] sm:$0xff]
    %v4296 = vld [vmem:[%s5 + $0x18] sm:$0xff]
    %v4298 = vsel %vm82, %v4288, 0
    %4300 = vmatprep.subr.mxu0 0.0
    %4301 = vmatpush1.msra.mxu0 %v4293
    %4302 = vmatprep.subr.mxu0 0.0
    %4303 = vmatpush1.msra.mxu0 %v4294
    %4304 = vmatprep.subr.mxu0 0.0
    %4305 = vmatpush1.msra.mxu0 %v4295
    %4306 = vmatprep.subr.mxu0 0.0
    %4307 = vmatpush1.msra.mxu0 %v4296
    %4308 = vmatprep.subr.mxu0 0.0
    %4309 = vmatpush1.msra.mxu0 0.0
    %4310 = vmatprep.subr.mxu0 0.0
    %4311 = vmatpush1.msra.mxu0 0.0
    %4312 = vmatprep.subr.mxu0 0.0
    %4313 = vmatpush1.msra.mxu0 0.0
    %4314 = vmatprep.subr.mxu0 0.0
    %4315 = vmatpush1.msra.mxu0 0.0
    %4316 = vmatprep.subr.mxu0 0.0
    %4317 = vmatpush1.msra.mxu0 0.0
    %4318 = vmatprep.subr.mxu0 0.0
    %4319 = vmatpush1.msra.mxu0 0.0
    %4320 = vmatprep.subr.mxu0 0.0
    %4321 = vmatpush1.msra.mxu0 0.0
    %4322 = vmatprep.subr.mxu0 0.0
    %4323 = vmatpush1.msra.mxu0 0.0
    %4324 = vmatprep.subr.mxu0 0.0
    %4325 = vmatpush1.msra.mxu0 0.0
    %4326 = vmatprep.subr.mxu0 0.0
    %4327 = vmatpush1.msra.mxu0 0.0
    %4328 = vmatprep.subr.mxu0 0.0
    %4329 = vmatpush1.msra.mxu0 0.0
    %4330 = vmatprep.subr.mxu0 0.0
    %4331 = vmatpush1.msra.mxu0 0.0
    %4332 = vmatprep.subr.mxu0 0.0
    %4333 = vmatpush1.msra.mxu0 0.0
    %4334 = vmatprep.subr.mxu0 0.0
    %4335 = vmatpush1.msra.mxu0 0.0
    %4336 = vmatprep.subr.mxu0 0.0
    %4337 = vmatpush1.msra.mxu0 0.0
    %4338 = vmatprep.subr.mxu0 0.0
    %4339 = vmatpush1.msra.mxu0 0.0
    %4340 = vmatprep.subr.mxu0 0.0
    %4341 = vmatpush1.msra.mxu0 0.0
    %4342 = vmatprep.subr.mxu0 0.0
    %4343 = vmatpush1.msra.mxu0 0.0
    %4344 = vmatprep.subr.mxu0 0.0
    %4345 = vmatpush1.msra.mxu0 0.0
    %4346 = vmatprep.subr.mxu0 0.0
    %4347 = vmatpush1.msra.mxu0 0.0
    %4348 = vmatprep.subr.mxu0 0.0
    %4349 = vmatpush1.msra.mxu0 0.0
    %4350 = vmatprep.subr.mxu0 0.0
    %4351 = vmatpush1.msra.mxu0 0.0
    %4352 = vmatprep.subr.mxu0 0.0
    %4353 = vmatpush1.msra.mxu0 0.0
    %4354 = vmatprep.subr.mxu0 0.0
    %4355 = vmatpush1.msra.mxu0 0.0
    %4356 = vmatprep.subr.mxu0 0.0
    %4357 = vmatpush1.msra.mxu0 0.0
    %4358 = vmatprep.subr.mxu0 0.0
    %4359 = vmatpush1.msra.mxu0 0.0
    %4360 = vmatprep.subr.mxu0 0.0
    %4361 = vmatpush1.msra.mxu0 0.0
    %4362 = vmatprep.subr.mxu0 0.0
    %4363 = vmatpush1.msra.mxu0 0.0
    %4364 = vmatprep.mubr.f32.mxu0 0.0
    %4365 = vmatmul.mubr.f32.gmra.mrb[0].mxu0 %v4298
    %v4366 = vpop.f32.mrb[0].mxu0
    %v4367 = vadd.f32 0.0, %v4366
    %v4368 = vpop.f32.mrb[0].mxu0
    %4369 = vdwg.mxu0
    %v4371 = vsel %vm82, %v4287, 0
    %4373 = vmatprep.subr.mxu0 0.0
    %4374 = vmatpush1.msra.mxu0 %v4289
    %4375 = vmatprep.subr.mxu0 0.0
    %4376 = vmatpush1.msra.mxu0 %v4290
    %4377 = vmatprep.subr.mxu0 0.0
    %4378 = vmatpush1.msra.mxu0 %v4291
    %4379 = vmatprep.subr.mxu0 0.0
    %4380 = vmatpush1.msra.mxu0 %v4292
    %4381 = vmatprep.subr.mxu0 0.0
    %4382 = vmatpush1.msra.mxu0 0.0
    %4383 = vmatprep.subr.mxu0 0.0
    %4384 = vmatpush1.msra.mxu0 0.0
    %4385 = vmatprep.subr.mxu0 0.0
    %4386 = vmatpush1.msra.mxu0 0.0
    %4387 = vmatprep.subr.mxu0 0.0
    %4388 = vmatpush1.msra.mxu0 0.0
    %4389 = vmatprep.subr.mxu0 0.0
    %4390 = vmatpush1.msra.mxu0 0.0
    %4391 = vmatprep.subr.mxu0 0.0
    %4392 = vmatpush1.msra.mxu0 0.0
    %4393 = vmatprep.subr.mxu0 0.0
    %4394 = vmatpush1.msra.mxu0 0.0
    %4395 = vmatprep.subr.mxu0 0.0
    %4396 = vmatpush1.msra.mxu0 0.0
    %4397 = vmatprep.subr.mxu0 0.0
    %4398 = vmatpush1.msra.mxu0 0.0
    %4399 = vmatprep.subr.mxu0 0.0
    %4400 = vmatpush1.msra.mxu0 0.0
    %4401 = vmatprep.subr.mxu0 0.0
    %4402 = vmatpush1.msra.mxu0 0.0
    %4403 = vmatprep.subr.mxu0 0.0
    %4404 = vmatpush1.msra.mxu0 0.0
    %4405 = vmatprep.subr.mxu0 0.0
    %4406 = vmatpush1.msra.mxu0 0.0
    %4407 = vmatprep.subr.mxu0 0.0
    %4408 = vmatpush1.msra.mxu0 0.0
    %4409 = vmatprep.subr.mxu0 0.0
    %4410 = vmatpush1.msra.mxu0 0.0
    %4411 = vmatprep.subr.mxu0 0.0
    %4412 = vmatpush1.msra.mxu0 0.0
    %4413 = vmatprep.subr.mxu0 0.0
    %4414 = vmatpush1.msra.mxu0 0.0
    %4415 = vmatprep.subr.mxu0 0.0
    %4416 = vmatpush1.msra.mxu0 0.0
    %4417 = vmatprep.subr.mxu0 0.0
    %4418 = vmatpush1.msra.mxu0 0.0
    %4419 = vmatprep.subr.mxu0 0.0
    %4420 = vmatpush1.msra.mxu0 0.0
    %4421 = vmatprep.subr.mxu0 0.0
    %4422 = vmatpush1.msra.mxu0 0.0
    %4423 = vmatprep.subr.mxu0 0.0
    %4424 = vmatpush1.msra.mxu0 0.0
    %4425 = vmatprep.subr.mxu0 0.0
    %4426 = vmatpush1.msra.mxu0 0.0
    %4427 = vmatprep.subr.mxu0 0.0
    %4428 = vmatpush1.msra.mxu0 0.0
    %4429 = vmatprep.subr.mxu0 0.0
    %4430 = vmatpush1.msra.mxu0 0.0
    %4431 = vmatprep.subr.mxu0 0.0
    %4432 = vmatpush1.msra.mxu0 0.0
    %4433 = vmatprep.subr.mxu0 0.0
    %4434 = vmatpush1.msra.mxu0 0.0
    %4435 = vmatprep.subr.mxu0 0.0
    %4436 = vmatpush1.msra.mxu0 0.0
    %4437 = vmatprep.mubr.f32.mxu0 0.0
    %4438 = vmatmul.mubr.f32.gmra.mrb[0].mxu0 %v4371
    %v4439 = vpop.f32.mrb[0].mxu0
    %v4440 = vadd.f32 %v4367, %v4439
    %v4441 = vpop.f32.mrb[0].mxu0
    %4442 = vdwg.mxu0
    %v4443 = vld [vmem:[%s6] sm:$0x1]
    %v4444 = vadd.f32 %v4440, %v4443
    %v4445 = vsel %vm231, %v4444, -inf
    %4446 = vmax.xlane.f32.xlu0 %v4445
    %v4447 = vpop.xlane.xlu0 %4446
    %v4448 = vsub.f32 %v4444, %v4447
    %v4449 = vmul.f32 %v4448, 1.442695
    %v4450 = vpow.pop %v4449
    %v4451 = vsel %vm231, %v4450, 0.0
    %4452 = vadd.xlane.f32.xlu0 %v4451
    %v4453 = vpop.xlane.xlu0 %4452
    %v4454 = vrcp.pop %v4453
    %v4455 = vmul.f32 %v4450, %v4454
    %4456 = vst [vmem:[#allocation8 + $0x6] sm:$0x1] %v4455
    %v4457 = vld [vmem:[%s3] sm:$0xff]
    %v4458 = vld [vmem:[%s3 + $0x8] sm:$0xff]
    %v4459 = vld [vmem:[%s3 + $0x10] sm:$0xff]
    %v4460 = vld [vmem:[%s3 + $0x18] sm:$0xff]
    %v4461 = vld [vmem:[%s3 + $0x20] sm:$0xff]
    %v4462 = vld [vmem:[%s3 + $0x28] sm:$0xff]
    %v4463 = vld [vmem:[%s3 + $0x30] sm:$0xff]
    %v4464 = vld [vmem:[%s3 + $0x38] sm:$0xff]
    %v4465 = vld [vmem:[%s3 + $0x40] sm:$0xff]
    %v4466 = vld [vmem:[%s3 + $0x48] sm:$0xff]
    %v4467 = vld [vmem:[%s3 + $0x50] sm:$0xff]
    %v4468 = vld [vmem:[%s3 + $0x58] sm:$0xff]
    %v4469 = vld [vmem:[%s3 + $0x60] sm:$0xff]
    %v4470 = vld [vmem:[%s3 + $0x68] sm:$0xff]
    %v4471 = vld [vmem:[%s3 + $0x70] sm:$0xff]
    %v4472 = vld [vmem:[%s3 + $0x78] sm:$0xff]
    %4473 = vmatprep.subr.mxu0 0.0
    %4474 = vmatpush1.msra.mxu0 %v4457
    %4475 = vmatprep.subr.mxu0 0.0
    %4476 = vmatpush1.msra.mxu0 %v4458
    %4477 = vmatprep.subr.mxu0 0.0
    %4478 = vmatpush1.msra.mxu0 %v4459
    %4479 = vmatprep.subr.mxu0 0.0
    %4480 = vmatpush1.msra.mxu0 %v4460
    %4481 = vmatprep.subr.mxu0 0.0
    %4482 = vmatpush1.msra.mxu0 %v4461
    %4483 = vmatprep.subr.mxu0 0.0
    %4484 = vmatpush1.msra.mxu0 %v4462
    %4485 = vmatprep.subr.mxu0 0.0
    %4486 = vmatpush1.msra.mxu0 %v4463
    %4487 = vmatprep.subr.mxu0 0.0
    %4488 = vmatpush1.msra.mxu0 %v4464
    %4489 = vmatprep.subr.mxu0 0.0
    %4490 = vmatpush1.msra.mxu0 %v4465
    %4491 = vmatprep.subr.mxu0 0.0
    %4492 = vmatpush1.msra.mxu0 %v4466
    %4493 = vmatprep.subr.mxu0 0.0
    %4494 = vmatpush1.msra.mxu0 %v4467
    %4495 = vmatprep.subr.mxu0 0.0
    %4496 = vmatpush1.msra.mxu0 %v4468
    %4497 = vmatprep.subr.mxu0 0.0
    %4498 = vmatpush1.msra.mxu0 %v4469
    %4499 = vmatprep.subr.mxu0 0.0
    %4500 = vmatpush1.msra.mxu0 %v4470
    %4501 = vmatprep.subr.mxu0 0.0
    %4502 = vmatpush1.msra.mxu0 %v4471
    %4503 = vmatprep.subr.mxu0 0.0
    %4504 = vmatpush1.msra.mxu0 %v4472
    %4505 = vmatprep.subr.mxu0 0.0
    %4506 = vmatpush1.msra.mxu0 0.0
    %4507 = vmatprep.subr.mxu0 0.0
    %4508 = vmatpush1.msra.mxu0 0.0
    %4509 = vmatprep.subr.mxu0 0.0
    %4510 = vmatpush1.msra.mxu0 0.0
    %4511 = vmatprep.subr.mxu0 0.0
    %4512 = vmatpush1.msra.mxu0 0.0
    %4513 = vmatprep.subr.mxu0 0.0
    %4514 = vmatpush1.msra.mxu0 0.0
    %4515 = vmatprep.subr.mxu0 0.0
    %4516 = vmatpush1.msra.mxu0 0.0
    %4517 = vmatprep.subr.mxu0 0.0
    %4518 = vmatpush1.msra.mxu0 0.0
    %4519 = vmatprep.subr.mxu0 0.0
    %4520 = vmatpush1.msra.mxu0 0.0
    %4521 = vmatprep.subr.mxu0 0.0
    %4522 = vmatpush1.msra.mxu0 0.0
    %4523 = vmatprep.subr.mxu0 0.0
    %4524 = vmatpush1.msra.mxu0 0.0
    %4525 = vmatprep.subr.mxu0 0.0
    %4526 = vmatpush1.msra.mxu0 0.0
    %4527 = vmatprep.subr.mxu0 0.0
    %4528 = vmatpush1.msra.mxu0 0.0
    %4529 = vmatprep.subr.mxu0 0.0
    %4530 = vmatpush1.msra.mxu0 0.0
    %4531 = vmatprep.subr.mxu0 0.0
    %4532 = vmatpush1.msra.mxu0 0.0
    %4533 = vmatprep.subr.mxu0 0.0
    %4534 = vmatpush1.msra.mxu0 0.0
    %4535 = vmatprep.subr.mxu0 0.0
    %4536 = vmatpush1.msra.mxu0 0.0
    %4537 = vmatprep.mubr.f32.mxu0 0.0
    %4538 = vmatmul.mubr.f32.gmra.mrb[0].mxu0 %v4455
    %v4539 = vpop.f32.mrb[0].mxu0
    %v4540 = vadd.f32 0.0, %v4539
    %v4541 = vpop.f32.mrb[0].mxu0
    %4542 = vdwg.mxu0
    %v4543 = vld [vmem:[%s7] sm:$0xff]
    %v4544 = vld [vmem:[%s7 + $0x8] sm:$0xff]
    %v4545 = vld [vmem:[%s7 + $0x10] sm:$0xff]
    %v4546 = vld [vmem:[%s7 + $0x18] sm:$0xff]
    %v4547 = vld [vmem:[%s8] sm:$0xff]
    %v4548 = vld [vmem:[%s8 + $0x8] sm:$0xff]
    %v4549 = vld [vmem:[%s8 + $0x10] sm:$0xff]
    %v4550 = vld [vmem:[%s8 + $0x18] sm:$0xff]
    %v4552 = vsel %vm82, %v4540, 0
    %4554 = vmatprep.subr.mxu0 0.0
    %4555 = vmatpush1.msra.mxu0 %v4547
    %4556 = vmatprep.subr.mxu0 0.0
    %4557 = vmatpush1.msra.mxu0 %v4548
    %4558 = vmatprep.subr.mxu0 0.0
    %4559 = vmatpush1.msra.mxu0 %v4549
    %4560 = vmatprep.subr.mxu0 0.0
    %4561 = vmatpush1.msra.mxu0 %v4550
    %4562 = vmatprep.subr.mxu0 0.0
    %4563 = vmatpush1.msra.mxu0 0.0
    %4564 = vmatprep.subr.mxu0 0.0
    %4565 = vmatpush1.msra.mxu0 0.0
    %4566 = vmatprep.subr.mxu0 0.0
    %4567 = vmatpush1.msra.mxu0 0.0
    %4568 = vmatprep.subr.mxu0 0.0
    %4569 = vmatpush1.msra.mxu0 0.0
    %4570 = vmatprep.subr.mxu0 0.0
    %4571 = vmatpush1.msra.mxu0 0.0
    %4572 = vmatprep.subr.mxu0 0.0
    %4573 = vmatpush1.msra.mxu0 0.0
    %4574 = vmatprep.subr.mxu0 0.0
    %4575 = vmatpush1.msra.mxu0 0.0
    %4576 = vmatprep.subr.mxu0 0.0
    %4577 = vmatpush1.msra.mxu0 0.0
    %4578 = vmatprep.subr.mxu0 0.0
    %4579 = vmatpush1.msra.mxu0 0.0
    %4580 = vmatprep.subr.mxu0 0.0
    %4581 = vmatpush1.msra.mxu0 0.0
    %4582 = vmatprep.subr.mxu0 0.0
    %4583 = vmatpush1.msra.mxu0 0.0
    %4584 = vmatprep.subr.mxu0 0.0
    %4585 = vmatpush1.msra.mxu0 0.0
    %4586 = vmatprep.subr.mxu0 0.0
    %4587 = vmatpush1.msra.mxu0 0.0
    %4588 = vmatprep.subr.mxu0 0.0
    %4589 = vmatpush1.msra.mxu0 0.0
    %4590 = vmatprep.subr.mxu0 0.0
    %4591 = vmatpush1.msra.mxu0 0.0
    %4592 = vmatprep.subr.mxu0 0.0
    %4593 = vmatpush1.msra.mxu0 0.0
    %4594 = vmatprep.subr.mxu0 0.0
    %4595 = vmatpush1.msra.mxu0 0.0
    %4596 = vmatprep.subr.mxu0 0.0
    %4597 = vmatpush1.msra.mxu0 0.0
    %4598 = vmatprep.subr.mxu0 0.0
    %4599 = vmatpush1.msra.mxu0 0.0
    %4600 = vmatprep.subr.mxu0 0.0
    %4601 = vmatpush1.msra.mxu0 0.0
    %4602 = vmatprep.subr.mxu0 0.0
    %4603 = vmatpush1.msra.mxu0 0.0
    %4604 = vmatprep.subr.mxu0 0.0
    %4605 = vmatpush1.msra.mxu0 0.0
    %4606 = vmatprep.subr.mxu0 0.0
    %4607 = vmatpush1.msra.mxu0 0.0
    %4608 = vmatprep.subr.mxu0 0.0
    %4609 = vmatpush1.msra.mxu0 0.0
    %4610 = vmatprep.subr.mxu0 0.0
    %4611 = vmatpush1.msra.mxu0 0.0
    %4612 = vmatprep.subr.mxu0 0.0
    %4613 = vmatpush1.msra.mxu0 0.0
    %4614 = vmatprep.subr.mxu0 0.0
    %4615 = vmatpush1.msra.mxu0 0.0
    %4616 = vmatprep.subr.mxu0 0.0
    %4617 = vmatpush1.msra.mxu0 0.0
    %4618 = vmatprep.mubr.f32.mxu0 0.0
    %4619 = vmatmul.mubr.f32.gmra.mrb[0].mxu0 %v4552
    %v4620 = vpop.f32.mrb[0].mxu0
    %v4621 = vadd.f32 0.0, %v4620
    %v4622 = vpop.f32.mrb[0].mxu0
    %4623 = vdwg.mxu0
    %4624 = vmatprep.subr.mxu0 0.0
    %4625 = vmatpush1.msra.mxu0 %v4543
    %4626 = vmatprep.subr.mxu0 0.0
    %4627 = vmatpush1.msra.mxu0 %v4544
    %4628 = vmatprep.subr.mxu0 0.0
    %4629 = vmatpush1.msra.mxu0 %v4545
    %4630 = vmatprep.subr.mxu0 0.0
    %4631 = vmatpush1.msra.mxu0 %v4546
    %4632 = vmatprep.subr.mxu0 0.0
    %4633 = vmatpush1.msra.mxu0 0.0
    %4634 = vmatprep.subr.mxu0 0.0
    %4635 = vmatpush1.msra.mxu0 0.0
    %4636 = vmatprep.subr.mxu0 0.0
    %4637 = vmatpush1.msra.mxu0 0.0
    %4638 = vmatprep.subr.mxu0 0.0
    %4639 = vmatpush1.msra.mxu0 0.0
    %4640 = vmatprep.subr.mxu0 0.0
    %4641 = vmatpush1.msra.mxu0 0.0
    %4642 = vmatprep.subr.mxu0 0.0
    %4643 = vmatpush1.msra.mxu0 0.0
    %4644 = vmatprep.subr.mxu0 0.0
    %4645 = vmatpush1.msra.mxu0 0.0
    %4646 = vmatprep.subr.mxu0 0.0
    %4647 = vmatpush1.msra.mxu0 0.0
    %4648 = vmatprep.subr.mxu0 0.0
    %4649 = vmatpush1.msra.mxu0 0.0
    %4650 = vmatprep.subr.mxu0 0.0
    %4651 = vmatpush1.msra.mxu0 0.0
    %4652 = vmatprep.subr.mxu0 0.0
    %4653 = vmatpush1.msra.mxu0 0.0
    %4654 = vmatprep.subr.mxu0 0.0
    %4655 = vmatpush1.msra.mxu0 0.0
    %4656 = vmatprep.subr.mxu0 0.0
    %4657 = vmatpush1.msra.mxu0 0.0
    %4658 = vmatprep.subr.mxu0 0.0
    %4659 = vmatpush1.msra.mxu0 0.0
    %4660 = vmatprep.subr.mxu0 0.0
    %4661 = vmatpush1.msra.mxu0 0.0
    %4662 = vmatprep.subr.mxu0 0.0
    %4663 = vmatpush1.msra.mxu0 0.0
    %4664 = vmatprep.subr.mxu0 0.0
    %4665 = vmatpush1.msra.mxu0 0.0
    %4666 = vmatprep.subr.mxu0 0.0
    %4667 = vmatpush1.msra.mxu0 0.0
    %4668 = vmatprep.subr.mxu0 0.0
    %4669 = vmatpush1.msra.mxu0 0.0
    %4670 = vmatprep.subr.mxu0 0.0
    %4671 = vmatpush1.msra.mxu0 0.0
    %4672 = vmatprep.subr.mxu0 0.0
    %4673 = vmatpush1.msra.mxu0 0.0
    %4674 = vmatprep.subr.mxu0 0.0
    %4675 = vmatpush1.msra.mxu0 0.0
    %4676 = vmatprep.subr.mxu0 0.0
    %4677 = vmatpush1.msra.mxu0 0.0
    %4678 = vmatprep.subr.mxu0 0.0
    %4679 = vmatpush1.msra.mxu0 0.0
    %4680 = vmatprep.subr.mxu0 0.0
    %4681 = vmatpush1.msra.mxu0 0.0
    %4682 = vmatprep.subr.mxu0 0.0
    %4683 = vmatpush1.msra.mxu0 0.0
    %4684 = vmatprep.subr.mxu0 0.0
    %4685 = vmatpush1.msra.mxu0 0.0
    %4686 = vmatprep.subr.mxu0 0.0
    %4687 = vmatpush1.msra.mxu0 0.0
    %4688 = vmatprep.mubr.f32.mxu0 0.0
    %4689 = vmatmul.mubr.f32.gmra.mrb[0].mxu0 %v4371
    %v4690 = vpop.f32.mrb[0].mxu0
    %v4691 = vadd.f32 %v4621, %v4690
    %v4692 = vpop.f32.mrb[0].mxu0
    %4693 = vdwg.mxu0
    %v4694 = vld [vmem:[%s9] sm:$0x1]
    %v4695 = vadd.f32 %v4691, %v4694
    %v4696 = vmax.f32 %v4695, 0.0
    %v4697 = vld [vmem:[%s10] sm:$0xff]
    %v4698 = vld [vmem:[%s10 + $0x8] sm:$0xff]
    %v4699 = vld [vmem:[%s10 + $0x10] sm:$0xff]
    %v4700 = vld [vmem:[%s10 + $0x18] sm:$0xff]
    %v4701 = vld [vmem:[%s11] sm:$0x1]
    %v4703 = vsel %vm82, %v4696, 0
    %4705 = vmatprep.subr.mxu0 0.0
    %4706 = vmatpush1.msra.mxu0 %v4697
    %4707 = vmatprep.subr.mxu0 0.0
    %4708 = vmatpush1.msra.mxu0 %v4698
    %4709 = vmatprep.subr.mxu0 0.0
    %4710 = vmatpush1.msra.mxu0 %v4699
    %4711 = vmatprep.subr.mxu0 0.0
    %4712 = vmatpush1.msra.mxu0 %v4700
    %4713 = vmatprep.subr.mxu0 0.0
    %4714 = vmatpush1.msra.mxu0 0.0
    %4715 = vmatprep.subr.mxu0 0.0
    %4716 = vmatpush1.msra.mxu0 0.0
    %4717 = vmatprep.subr.mxu0 0.0
    %4718 = vmatpush1.msra.mxu0 0.0
    %4719 = vmatprep.subr.mxu0 0.0
    %4720 = vmatpush1.msra.mxu0 0.0
    %4721 = vmatprep.subr.mxu0 0.0
    %4722 = vmatpush1.msra.mxu0 0.0
    %4723 = vmatprep.subr.mxu0 0.0
    %4724 = vmatpush1.msra.mxu0 0.0
    %4725 = vmatprep.subr.mxu0 0.0
    %4726 = vmatpush1.msra.mxu0 0.0
    %4727 = vmatprep.subr.mxu0 0.0
    %4728 = vmatpush1.msra.mxu0 0.0
    %4729 = vmatprep.subr.mxu0 0.0
    %4730 = vmatpush1.msra.mxu0 0.0
    %4731 = vmatprep.subr.mxu0 0.0
    %4732 = vmatpush1.msra.mxu0 0.0
    %4733 = vmatprep.subr.mxu0 0.0
    %4734 = vmatpush1.msra.mxu0 0.0
    %4735 = vmatprep.subr.mxu0 0.0
    %4736 = vmatpush1.msra.mxu0 0.0
    %4737 = vmatprep.subr.mxu0 0.0
    %4738 = vmatpush1.msra.mxu0 0.0
    %4739 = vmatprep.subr.mxu0 0.0
    %4740 = vmatpush1.msra.mxu0 0.0
    %4741 = vmatprep.subr.mxu0 0.0
    %4742 = vmatpush1.msra.mxu0 0.0
    %4743 = vmatprep.subr.mxu0 0.0
    %4744 = vmatpush1.msra.mxu0 0.0
    %4745 = vmatprep.subr.mxu0 0.0
    %4746 = vmatpush1.msra.mxu0 0.0
    %4747 = vmatprep.subr.mxu0 0.0
    %4748 = vmatpush1.msra.mxu0 0.0
    %4749 = vmatprep.subr.mxu0 0.0
    %4750 = vmatpush1.msra.mxu0 0.0
    %4751 = vmatprep.subr.mxu0 0.0
    %4752 = vmatpush1.msra.mxu0 0.0
    %4753 = vmatprep.subr.mxu0 0.0
    %4754 = vmatpush1.msra.mxu0 0.0
    %4755 = vmatprep.subr.mxu0 0.0
    %4756 = vmatpush1.msra.mxu0 0.0
    %4757 = vmatprep.subr.mxu0 0.0
    %4758 = vmatpush1.msra.mxu0 0.0
    %4759 = vmatprep.subr.mxu0 0.0
    %4760 = vmatpush1.msra.mxu0 0.0
    %4761 = vmatprep.subr.mxu0 0.0
    %4762 = vmatpush1.msra.mxu0 0.0
    %4763 = vmatprep.subr.mxu0 0.0
    %4764 = vmatpush1.msra.mxu0 0.0
    %4765 = vmatprep.subr.mxu0 0.0
    %4766 = vmatpush1.msra.mxu0 0.0
    %4767 = vmatprep.subr.mxu0 0.0
    %4768 = vmatpush1.msra.mxu0 0.0
    %4769 = vmatprep.mubr.f32.mxu0 0.0
    %4770 = vmatmul.mubr.f32.gmra.mrb[0].mxu0 %v4703
    %v4771 = vpop.f32.mrb[0].mxu0
    %v4772 = vadd.f32 %v4701, %v4771
    %v4773 = vpop.f32.mrb[0].mxu0
    %4774 = vdwg.mxu0
    %v4775 = vld [vmem:[%s12] sm:$0xff]
    %v4776 = vld [vmem:[%s12 + $0x8] sm:$0xff]
    %v4777 = vld [vmem:[%s12 + $0x10] sm:$0xff]
    %v4778 = vld [vmem:[%s12 + $0x18] sm:$0xff]
    %v4779 = vld [vmem:[%s13] sm:$0x1]
    %4780 = vmatprep.subr.mxu0 0.0
    %4781 = vmatpush1.msra.mxu0 %v4775
    %4782 = vmatprep.subr.mxu0 0.0
    %4783 = vmatpush1.msra.mxu0 %v4776
    %4784 = vmatprep.subr.mxu0 0.0
    %4785 = vmatpush1.msra.mxu0 %v4777
    %4786 = vmatprep.subr.mxu0 0.0
    %4787 = vmatpush1.msra.mxu0 %v4778
    %4788 = vmatprep.subr.mxu0 0.0
    %4789 = vmatpush1.msra.mxu0 0.0
    %4790 = vmatprep.subr.mxu0 0.0
    %4791 = vmatpush1.msra.mxu0 0.0
    %4792 = vmatprep.subr.mxu0 0.0
    %4793 = vmatpush1.msra.mxu0 0.0
    %4794 = vmatprep.subr.mxu0 0.0
    %4795 = vmatpush1.msra.mxu0 0.0
    %4796 = vmatprep.subr.mxu0 0.0
    %4797 = vmatpush1.msra.mxu0 0.0
    %4798 = vmatprep.subr.mxu0 0.0
    %4799 = vmatpush1.msra.mxu0 0.0
    %4800 = vmatprep.subr.mxu0 0.0
    %4801 = vmatpush1.msra.mxu0 0.0
    %4802 = vmatprep.subr.mxu0 0.0
    %4803 = vmatpush1.msra.mxu0 0.0
    %4804 = vmatprep.subr.mxu0 0.0
    %4805 = vmatpush1.msra.mxu0 0.0
    %4806 = vmatprep.subr.mxu0 0.0
    %4807 = vmatpush1.msra.mxu0 0.0
    %4808 = vmatprep.subr.mxu0 0.0
    %4809 = vmatpush1.msra.mxu0 0.0
    %4810 = vmatprep.subr.mxu0 0.0
    %4811 = vmatpush1.msra.mxu0 0.0
    %4812 = vmatprep.subr.mxu0 0.0
    %4813 = vmatpush1.msra.mxu0 0.0
    %4814 = vmatprep.subr.mxu0 0.0
    %4815 = vmatpush1.msra.mxu0 0.0
    %4816 = vmatprep.subr.mxu0 0.0
    %4817 = vmatpush1.msra.mxu0 0.0
    %4818 = vmatprep.subr.mxu0 0.0
    %4819 = vmatpush1.msra.mxu0 0.0
    %4820 = vmatprep.subr.mxu0 0.0
    %4821 = vmatpush1.msra.mxu0 0.0
    %4822 = vmatprep.subr.mxu0 0.0
    %4823 = vmatpush1.msra.mxu0 0.0
    %4824 = vmatprep.subr.mxu0 0.0
    %4825 = vmatpush1.msra.mxu0 0.0
    %4826 = vmatprep.subr.mxu0 0.0
    %4827 = vmatpush1.msra.mxu0 0.0
    %4828 = vmatprep.subr.mxu0 0.0
    %4829 = vmatpush1.msra.mxu0 0.0
    %4830 = vmatprep.subr.mxu0 0.0
    %4831 = vmatpush1.msra.mxu0 0.0
    %4832 = vmatprep.subr.mxu0 0.0
    %4833 = vmatpush1.msra.mxu0 0.0
    %4834 = vmatprep.subr.mxu0 0.0
    %4835 = vmatpush1.msra.mxu0 0.0
    %4836 = vmatprep.subr.mxu0 0.0
    %4837 = vmatpush1.msra.mxu0 0.0
    %4838 = vmatprep.subr.mxu0 0.0
    %4839 = vmatpush1.msra.mxu0 0.0
    %4840 = vmatprep.subr.mxu0 0.0
    %4841 = vmatpush1.msra.mxu0 0.0
    %4842 = vmatprep.subr.mxu0 0.0
    %4843 = vmatpush1.msra.mxu0 0.0
    %4844 = vmatprep.mubr.f32.mxu0 0.0
    %4845 = vmatmul.mubr.f32.gmra.mrb[0].mxu0 %v4298
    %v4846 = vpop.f32.mrb[0].mxu0
    %v4847 = vadd.f32 %v4779, %v4846
    %v4848 = vpop.f32.mrb[0].mxu0
    %4849 = vdwg.mxu0
    %v4850 = vadd.f32 %v4772, %v4847
    %v4851 = vxor.u32 %v4850, 2147483648
    %v4852 = vmul.f32 %v4851, 1.442695
    %v4853 = vpow.pop %v4852
    %v4854 = vadd.f32 %v4853, 1.0
    %v4855 = vrcp.pop %v4854
    %v4856 = vmul.f32 1.0, %v4855
    %4858 = vrot.lane.b32.xlu0 %v4847, 64
    %v4859 = vpop.permute.xlu0 %4858
    %v4861 = vmul.f32 %v4856, %v4859
    %4863 = vrot.lane.b32.xlu0 %v4861, 64
    %v4864 = vpop.permute.xlu0 %4863
    %v4866 = vadd.f32 %v4772, %v4864
    %v4867 = vtanh.pop %v4866
    %v4868 = vsub.f32 1.0, %v4856
    %4870 = vrot.lane.b32.xlu0 %v4867, 96
    %v4871 = vpop.permute.xlu0 %4870
    %v4873 = vmul.f32 %v4868, %v4871
    %v4874 = vlaneseq
    %v4875 = vshrl.u32 %v4874, 7
    %v4876 = vsub.s32 0, %v4875
    %v4877 = vrot.slane %v4288, %v4876
    %4878 = vrot.lane.b32.xlu0 %v4877, 32
    %v4879 = vpop.permute.xlu0 %4878
    %v4881 = vmul.f32 %v4856, %v4879
    %v4882 = vadd.f32 %v4873, %v4881
    %p4883 = scmp.lt.s32.totalorder %s4284, 6
    %s4884 = scalar_select %p4883, 1, 0
    %v4885 = vstv %s4884
    %vm4886 = vcmp.eq.s32.totalorder %v4885, 1
    %v4887 = vsel %vm4886, %v4882, %v4879
    %4889 = vrot.lane.b32.xlu0 %v4887, 96
    %v4890 = vpop.permute.xlu0 %4889
    %4892 = vst.msk [vmem:[#allocation6] sm:$0x1] %vm679, %v4890
    %v4893 = vld [vmem:[%s14] sm:$0xff]
    %v4894 = vld [vmem:[%s14 + $0x8] sm:$0xff]
    %v4895 = vld [vmem:[%s14 + $0x10] sm:$0xff]
    %v4896 = vld [vmem:[%s14 + $0x18] sm:$0xff]
    %v4897 = vld [vmem:[%s15] sm:$0x1]
    %4899 = vrot.lane.b32.xlu0 %v4882, 96
    %v4900 = vpop.permute.xlu0 %4899
    %v4901 = vsel %vm82, %v4900, 0
    %4903 = vmatprep.subr.mxu0 0.0
    %4904 = vmatpush1.msra.mxu0 %v4893
    %4905 = vmatprep.subr.mxu0 0.0
    %4906 = vmatpush1.msra.mxu0 %v4894
    %4907 = vmatprep.subr.mxu0 0.0
    %4908 = vmatpush1.msra.mxu0 %v4895
    %4909 = vmatprep.subr.mxu0 0.0
    %4910 = vmatpush1.msra.mxu0 %v4896
    %4911 = vmatprep.subr.mxu0 0.0
    %4912 = vmatpush1.msra.mxu0 0.0
    %4913 = vmatprep.subr.mxu0 0.0
    %4914 = vmatpush1.msra.mxu0 0.0
    %4915 = vmatprep.subr.mxu0 0.0
    %4916 = vmatpush1.msra.mxu0 0.0
    %4917 = vmatprep.subr.mxu0 0.0
    %4918 = vmatpush1.msra.mxu0 0.0
    %4919 = vmatprep.subr.mxu0 0.0
    %4920 = vmatpush1.msra.mxu0 0.0
    %4921 = vmatprep.subr.mxu0 0.0
    %4922 = vmatpush1.msra.mxu0 0.0
    %4923 = vmatprep.subr.mxu0 0.0
    %4924 = vmatpush1.msra.mxu0 0.0
    %4925 = vmatprep.subr.mxu0 0.0
    %4926 = vmatpush1.msra.mxu0 0.0
    %4927 = vmatprep.subr.mxu0 0.0
    %4928 = vmatpush1.msra.mxu0 0.0
    %4929 = vmatprep.subr.mxu0 0.0
    %4930 = vmatpush1.msra.mxu0 0.0
    %4931 = vmatprep.subr.mxu0 0.0
    %4932 = vmatpush1.msra.mxu0 0.0
    %4933 = vmatprep.subr.mxu0 0.0
    %4934 = vmatpush1.msra.mxu0 0.0
    %4935 = vmatprep.subr.mxu0 0.0
    %4936 = vmatpush1.msra.mxu0 0.0
    %4937 = vmatprep.subr.mxu0 0.0
    %4938 = vmatpush1.msra.mxu0 0.0
    %4939 = vmatprep.subr.mxu0 0.0
    %4940 = vmatpush1.msra.mxu0 0.0
    %4941 = vmatprep.subr.mxu0 0.0
    %4942 = vmatpush1.msra.mxu0 0.0
    %4943 = vmatprep.subr.mxu0 0.0
    %4944 = vmatpush1.msra.mxu0 0.0
    %4945 = vmatprep.subr.mxu0 0.0
    %4946 = vmatpush1.msra.mxu0 0.0
    %4947 = vmatprep.subr.mxu0 0.0
    %4948 = vmatpush1.msra.mxu0 0.0
    %4949 = vmatprep.subr.mxu0 0.0
    %4950 = vmatpush1.msra.mxu0 0.0
    %4951 = vmatprep.subr.mxu0 0.0
    %4952 = vmatpush1.msra.mxu0 0.0
    %4953 = vmatprep.subr.mxu0 0.0
    %4954 = vmatpush1.msra.mxu0 0.0
    %4955 = vmatprep.subr.mxu0 0.0
    %4956 = vmatpush1.msra.mxu0 0.0
    %4957 = vmatprep.subr.mxu0 0.0
    %4958 = vmatpush1.msra.mxu0 0.0
    %4959 = vmatprep.subr.mxu0 0.0
    %4960 = vmatpush1.msra.mxu0 0.0
    %4961 = vmatprep.subr.mxu0 0.0
    %4962 = vmatpush1.msra.mxu0 0.0
    %4963 = vmatprep.subr.mxu0 0.0
    %4964 = vmatpush1.msra.mxu0 0.0
    %4965 = vmatprep.subr.mxu0 0.0
    %4966 = vmatpush1.msra.mxu0 0.0
    %4967 = vmatprep.mubr.f32.mxu0 0.0
    %4968 = vmatmul.mubr.f32.gmra.mrb[0].mxu0 %v4901
    %v4969 = vpop.f32.mrb[0].mxu0
    %v4970 = vadd.f32 %v4897, %v4969
    %v4971 = vpop.f32.mrb[0].mxu0
    %4972 = vdwg.mxu0
    %v4973 = vsel %vm231, %v4970, -inf
    %4974 = vmax.xlane.f32.xlu0 %v4973
    %v4975 = vpop.xlane.xlu0 %4974
    %v4976 = vsub.f32 %v4970, %v4975
    %v4977 = vmul.f32 %v4976, 1.442695
    %v4978 = vpow.pop %v4977
    %v4979 = vsel %vm231, %v4978, 0.0
    %4980 = vadd.xlane.f32.xlu0 %v4979
    %v4981 = vpop.xlane.xlu0 %4980
    %v4982 = vlog2.pop %v4981
    %v4983 = vmul.f32 %v4982, 0.6931472
    %v4984 = vsub.f32 %v4976, %v4983
    %4985 = vst [vmem:[#allocation4 + $0x6] sm:$0x1] %v4984
    %s4986 = sadd.s32 %s69, 7
    %s4987 = sld [smem:[#allocation3 + %s4986]]
    %s4988 = scalar_lea.vmem %s1, %s4987
    %v4989 = vld [vmem:[%s4988] sm:$0x1]
    %v4990 = vld [vmem:[#allocation6] sm:$0x1]
    %v4991 = vld [vmem:[%s4] sm:$0xff]
    %v4992 = vld [vmem:[%s4 + $0x8] sm:$0xff]
    %v4993 = vld [vmem:[%s4 + $0x10] sm:$0xff]
    %v4994 = vld [vmem:[%s4 + $0x18] sm:$0xff]
    %v4995 = vld [vmem:[%s5] sm:$0xff]
    %v4996 = vld [vmem:[%s5 + $0x8] sm:$0xff]
    %v4997 = vld [vmem:[%s5 + $0x10] sm:$0xff]
    %v4998 = vld [vmem:[%s5 + $0x18] sm:$0xff]
    %v5000 = vsel %vm82, %v4990, 0
    %5002 = vmatprep.subr.mxu0 0.0
    %5003 = vmatpush1.msra.mxu0 %v4995
    %5004 = vmatprep.subr.mxu0 0.0
    %5005 = vmatpush1.msra.mxu0 %v4996
    %5006 = vmatprep.subr.mxu0 0.0
    %5007 = vmatpush1.msra.mxu0 %v4997
    %5008 = vmatprep.subr.mxu0 0.0
    %5009 = vmatpush1.msra.mxu0 %v4998
    %5010 = vmatprep.subr.mxu0 0.0
    %5011 = vmatpush1.msra.mxu0 0.0
    %5012 = vmatprep.subr.mxu0 0.0
    %5013 = vmatpush1.msra.mxu0 0.0
    %5014 = vmatprep.subr.mxu0 0.0
    %5015 = vmatpush1.msra.mxu0 0.0
    %5016 = vmatprep.subr.mxu0 0.0
    %5017 = vmatpush1.msra.mxu0 0.0
    %5018 = vmatprep.subr.mxu0 0.0
    %5019 = vmatpush1.msra.mxu0 0.0
    %5020 = vmatprep.subr.mxu0 0.0
    %5021 = vmatpush1.msra.mxu0 0.0
    %5022 = vmatprep.subr.mxu0 0.0
    %5023 = vmatpush1.msra.mxu0 0.0
    %5024 = vmatprep.subr.mxu0 0.0
    %5025 = vmatpush1.msra.mxu0 0.0
    %5026 = vmatprep.subr.mxu0 0.0
    %5027 = vmatpush1.msra.mxu0 0.0
    %5028 = vmatprep.subr.mxu0 0.0
    %5029 = vmatpush1.msra.mxu0 0.0
    %5030 = vmatprep.subr.mxu0 0.0
    %5031 = vmatpush1.msra.mxu0 0.0
    %5032 = vmatprep.subr.mxu0 0.0
    %5033 = vmatpush1.msra.mxu0 0.0
    %5034 = vmatprep.subr.mxu0 0.0
    %5035 = vmatpush1.msra.mxu0 0.0
    %5036 = vmatprep.subr.mxu0 0.0
    %5037 = vmatpush1.msra.mxu0 0.0
    %5038 = vmatprep.subr.mxu0 0.0
    %5039 = vmatpush1.msra.mxu0 0.0
    %5040 = vmatprep.subr.mxu0 0.0
    %5041 = vmatpush1.msra.mxu0 0.0
    %5042 = vmatprep.subr.mxu0 0.0
    %5043 = vmatpush1.msra.mxu0 0.0
    %5044 = vmatprep.subr.mxu0 0.0
    %5045 = vmatpush1.msra.mxu0 0.0
    %5046 = vmatprep.subr.mxu0 0.0
    %5047 = vmatpush1.msra.mxu0 0.0
    %5048 = vmatprep.subr.mxu0 0.0
    %5049 = vmatpush1.msra.mxu0 0.0
    %5050 = vmatprep.subr.mxu0 0.0
    %5051 = vmatpush1.msra.mxu0 0.0
    %5052 = vmatprep.subr.mxu0 0.0
    %5053 = vmatpush1.msra.mxu0 0.0
    %5054 = vmatprep.subr.mxu0 0.0
    %5055 = vmatpush1.msra.mxu0 0.0
    %5056 = vmatprep.subr.mxu0 0.0
    %5057 = vmatpush1.msra.mxu0 0.0
    %5058 = vmatprep.subr.mxu0 0.0
    %5059 = vmatpush1.msra.mxu0 0.0
    %5060 = vmatprep.subr.mxu0 0.0
    %5061 = vmatpush1.msra.mxu0 0.0
    %5062 = vmatprep.subr.mxu0 0.0
    %5063 = vmatpush1.msra.mxu0 0.0
    %5064 = vmatprep.subr.mxu0 0.0
    %5065 = vmatpush1.msra.mxu0 0.0
    %5066 = vmatprep.mubr.f32.mxu0 0.0
    %5067 = vmatmul.mubr.f32.gmra.mrb[0].mxu0 %v5000
    %v5068 = vpop.f32.mrb[0].mxu0
    %v5069 = vadd.f32 0.0, %v5068
    %v5070 = vpop.f32.mrb[0].mxu0
    %5071 = vdwg.mxu0
    %v5073 = vsel %vm82, %v4989, 0
    %5075 = vmatprep.subr.mxu0 0.0
    %5076 = vmatpush1.msra.mxu0 %v4991
    %5077 = vmatprep.subr.mxu0 0.0
    %5078 = vmatpush1.msra.mxu0 %v4992
    %5079 = vmatprep.subr.mxu0 0.0
    %5080 = vmatpush1.msra.mxu0 %v4993
    %5081 = vmatprep.subr.mxu0 0.0
    %5082 = vmatpush1.msra.mxu0 %v4994
    %5083 = vmatprep.subr.mxu0 0.0
    %5084 = vmatpush1.msra.mxu0 0.0
    %5085 = vmatprep.subr.mxu0 0.0
    %5086 = vmatpush1.msra.mxu0 0.0
    %5087 = vmatprep.subr.mxu0 0.0
    %5088 = vmatpush1.msra.mxu0 0.0
    %5089 = vmatprep.subr.mxu0 0.0
    %5090 = vmatpush1.msra.mxu0 0.0
    %5091 = vmatprep.subr.mxu0 0.0
    %5092 = vmatpush1.msra.mxu0 0.0
    %5093 = vmatprep.subr.mxu0 0.0
    %5094 = vmatpush1.msra.mxu0 0.0
    %5095 = vmatprep.subr.mxu0 0.0
    %5096 = vmatpush1.msra.mxu0 0.0
    %5097 = vmatprep.subr.mxu0 0.0
    %5098 = vmatpush1.msra.mxu0 0.0
    %5099 = vmatprep.subr.mxu0 0.0
    %5100 = vmatpush1.msra.mxu0 0.0
    %5101 = vmatprep.subr.mxu0 0.0
    %5102 = vmatpush1.msra.mxu0 0.0
    %5103 = vmatprep.subr.mxu0 0.0
    %5104 = vmatpush1.msra.mxu0 0.0
    %5105 = vmatprep.subr.mxu0 0.0
    %5106 = vmatpush1.msra.mxu0 0.0
    %5107 = vmatprep.subr.mxu0 0.0
    %5108 = vmatpush1.msra.mxu0 0.0
    %5109 = vmatprep.subr.mxu0 0.0
    %5110 = vmatpush1.msra.mxu0 0.0
    %5111 = vmatprep.subr.mxu0 0.0
    %5112 = vmatpush1.msra.mxu0 0.0
    %5113 = vmatprep.subr.mxu0 0.0
    %5114 = vmatpush1.msra.mxu0 0.0
    %5115 = vmatprep.subr.mxu0 0.0
    %5116 = vmatpush1.msra.mxu0 0.0
    %5117 = vmatprep.subr.mxu0 0.0
    %5118 = vmatpush1.msra.mxu0 0.0
    %5119 = vmatprep.subr.mxu0 0.0
    %5120 = vmatpush1.msra.mxu0 0.0
    %5121 = vmatprep.subr.mxu0 0.0
    %5122 = vmatpush1.msra.mxu0 0.0
    %5123 = vmatprep.subr.mxu0 0.0
    %5124 = vmatpush1.msra.mxu0 0.0
    %5125 = vmatprep.subr.mxu0 0.0
    %5126 = vmatpush1.msra.mxu0 0.0
    %5127 = vmatprep.subr.mxu0 0.0
    %5128 = vmatpush1.msra.mxu0 0.0
    %5129 = vmatprep.subr.mxu0 0.0
    %5130 = vmatpush1.msra.mxu0 0.0
    %5131 = vmatprep.subr.mxu0 0.0
    %5132 = vmatpush1.msra.mxu0 0.0
    %5133 = vmatprep.subr.mxu0 0.0
    %5134 = vmatpush1.msra.mxu0 0.0
    %5135 = vmatprep.subr.mxu0 0.0
    %5136 = vmatpush1.msra.mxu0 0.0
    %5137 = vmatprep.subr.mxu0 0.0
    %5138 = vmatpush1.msra.mxu0 0.0
    %5139 = vmatprep.mubr.f32.mxu0 0.0
    %5140 = vmatmul.mubr.f32.gmra.mrb[0].mxu0 %v5073
    %v5141 = vpop.f32.mrb[0].mxu0
    %v5142 = vadd.f32 %v5069, %v5141
    %v5143 = vpop.f32.mrb[0].mxu0
    %5144 = vdwg.mxu0
    %v5145 = vld [vmem:[%s6] sm:$0x1]
    %v5146 = vadd.f32 %v5142, %v5145
    %v5147 = vsel %vm231, %v5146, -inf
    %5148 = vmax.xlane.f32.xlu0 %v5147
    %v5149 = vpop.xlane.xlu0 %5148
    %v5150 = vsub.f32 %v5146, %v5149
    %v5151 = vmul.f32 %v5150, 1.442695
    %v5152 = vpow.pop %v5151
    %v5153 = vsel %vm231, %v5152, 0.0
    %5154 = vadd.xlane.f32.xlu0 %v5153
    %v5155 = vpop.xlane.xlu0 %5154
    %v5156 = vrcp.pop %v5155
    %v5157 = vmul.f32 %v5152, %v5156
    %5158 = vst [vmem:[#allocation8 + $0x7] sm:$0x1] %v5157
    %v5159 = vld [vmem:[%s3] sm:$0xff]
    %v5160 = vld [vmem:[%s3 + $0x8] sm:$0xff]
    %v5161 = vld [vmem:[%s3 + $0x10] sm:$0xff]
    %v5162 = vld [vmem:[%s3 + $0x18] sm:$0xff]
    %v5163 = vld [vmem:[%s3 + $0x20] sm:$0xff]
    %v5164 = vld [vmem:[%s3 + $0x28] sm:$0xff]
    %v5165 = vld [vmem:[%s3 + $0x30] sm:$0xff]
    %v5166 = vld [vmem:[%s3 + $0x38] sm:$0xff]
    %v5167 = vld [vmem:[%s3 + $0x40] sm:$0xff]
    %v5168 = vld [vmem:[%s3 + $0x48] sm:$0xff]
    %v5169 = vld [vmem:[%s3 + $0x50] sm:$0xff]
    %v5170 = vld [vmem:[%s3 + $0x58] sm:$0xff]
    %v5171 = vld [vmem:[%s3 + $0x60] sm:$0xff]
    %v5172 = vld [vmem:[%s3 + $0x68] sm:$0xff]
    %v5173 = vld [vmem:[%s3 + $0x70] sm:$0xff]
    %v5174 = vld [vmem:[%s3 + $0x78] sm:$0xff]
    %5175 = vmatprep.subr.mxu0 0.0
    %5176 = vmatpush1.msra.mxu0 %v5159
    %5177 = vmatprep.subr.mxu0 0.0
    %5178 = vmatpush1.msra.mxu0 %v5160
    %5179 = vmatprep.subr.mxu0 0.0
    %5180 = vmatpush1.msra.mxu0 %v5161
    %5181 = vmatprep.subr.mxu0 0.0
    %5182 = vmatpush1.msra.mxu0 %v5162
    %5183 = vmatprep.subr.mxu0 0.0
    %5184 = vmatpush1.msra.mxu0 %v5163
    %5185 = vmatprep.subr.mxu0 0.0
    %5186 = vmatpush1.msra.mxu0 %v5164
    %5187 = vmatprep.subr.mxu0 0.0
    %5188 = vmatpush1.msra.mxu0 %v5165
    %5189 = vmatprep.subr.mxu0 0.0
    %5190 = vmatpush1.msra.mxu0 %v5166
    %5191 = vmatprep.subr.mxu0 0.0
    %5192 = vmatpush1.msra.mxu0 %v5167
    %5193 = vmatprep.subr.mxu0 0.0
    %5194 = vmatpush1.msra.mxu0 %v5168
    %5195 = vmatprep.subr.mxu0 0.0
    %5196 = vmatpush1.msra.mxu0 %v5169
    %5197 = vmatprep.subr.mxu0 0.0
    %5198 = vmatpush1.msra.mxu0 %v5170
    %5199 = vmatprep.subr.mxu0 0.0
    %5200 = vmatpush1.msra.mxu0 %v5171
    %5201 = vmatprep.subr.mxu0 0.0
    %5202 = vmatpush1.msra.mxu0 %v5172
    %5203 = vmatprep.subr.mxu0 0.0
    %5204 = vmatpush1.msra.mxu0 %v5173
    %5205 = vmatprep.subr.mxu0 0.0
    %5206 = vmatpush1.msra.mxu0 %v5174
    %5207 = vmatprep.subr.mxu0 0.0
    %5208 = vmatpush1.msra.mxu0 0.0
    %5209 = vmatprep.subr.mxu0 0.0
    %5210 = vmatpush1.msra.mxu0 0.0
    %5211 = vmatprep.subr.mxu0 0.0
    %5212 = vmatpush1.msra.mxu0 0.0
    %5213 = vmatprep.subr.mxu0 0.0
    %5214 = vmatpush1.msra.mxu0 0.0
    %5215 = vmatprep.subr.mxu0 0.0
    %5216 = vmatpush1.msra.mxu0 0.0
    %5217 = vmatprep.subr.mxu0 0.0
    %5218 = vmatpush1.msra.mxu0 0.0
    %5219 = vmatprep.subr.mxu0 0.0
    %5220 = vmatpush1.msra.mxu0 0.0
    %5221 = vmatprep.subr.mxu0 0.0
    %5222 = vmatpush1.msra.mxu0 0.0
    %5223 = vmatprep.subr.mxu0 0.0
    %5224 = vmatpush1.msra.mxu0 0.0
    %5225 = vmatprep.subr.mxu0 0.0
    %5226 = vmatpush1.msra.mxu0 0.0
    %5227 = vmatprep.subr.mxu0 0.0
    %5228 = vmatpush1.msra.mxu0 0.0
    %5229 = vmatprep.subr.mxu0 0.0
    %5230 = vmatpush1.msra.mxu0 0.0
    %5231 = vmatprep.subr.mxu0 0.0
    %5232 = vmatpush1.msra.mxu0 0.0
    %5233 = vmatprep.subr.mxu0 0.0
    %5234 = vmatpush1.msra.mxu0 0.0
    %5235 = vmatprep.subr.mxu0 0.0
    %5236 = vmatpush1.msra.mxu0 0.0
    %5237 = vmatprep.subr.mxu0 0.0
    %5238 = vmatpush1.msra.mxu0 0.0
    %5239 = vmatprep.mubr.f32.mxu0 0.0
    %5240 = vmatmul.mubr.f32.gmra.mrb[0].mxu0 %v5157
    %v5241 = vpop.f32.mrb[0].mxu0
    %v5242 = vadd.f32 0.0, %v5241
    %v5243 = vpop.f32.mrb[0].mxu0
    %5244 = vdwg.mxu0
    %v5245 = vld [vmem:[%s7] sm:$0xff]
    %v5246 = vld [vmem:[%s7 + $0x8] sm:$0xff]
    %v5247 = vld [vmem:[%s7 + $0x10] sm:$0xff]
    %v5248 = vld [vmem:[%s7 + $0x18] sm:$0xff]
    %v5249 = vld [vmem:[%s8] sm:$0xff]
    %v5250 = vld [vmem:[%s8 + $0x8] sm:$0xff]
    %v5251 = vld [vmem:[%s8 + $0x10] sm:$0xff]
    %v5252 = vld [vmem:[%s8 + $0x18] sm:$0xff]
    %v5254 = vsel %vm82, %v5242, 0
    %5256 = vmatprep.subr.mxu0 0.0
    %5257 = vmatpush1.msra.mxu0 %v5249
    %5258 = vmatprep.subr.mxu0 0.0
    %5259 = vmatpush1.msra.mxu0 %v5250
    %5260 = vmatprep.subr.mxu0 0.0
    %5261 = vmatpush1.msra.mxu0 %v5251
    %5262 = vmatprep.subr.mxu0 0.0
    %5263 = vmatpush1.msra.mxu0 %v5252
    %5264 = vmatprep.subr.mxu0 0.0
    %5265 = vmatpush1.msra.mxu0 0.0
    %5266 = vmatprep.subr.mxu0 0.0
    %5267 = vmatpush1.msra.mxu0 0.0
    %5268 = vmatprep.subr.mxu0 0.0
    %5269 = vmatpush1.msra.mxu0 0.0
    %5270 = vmatprep.subr.mxu0 0.0
    %5271 = vmatpush1.msra.mxu0 0.0
    %5272 = vmatprep.subr.mxu0 0.0
    %5273 = vmatpush1.msra.mxu0 0.0
    %5274 = vmatprep.subr.mxu0 0.0
    %5275 = vmatpush1.msra.mxu0 0.0
    %5276 = vmatprep.subr.mxu0 0.0
    %5277 = vmatpush1.msra.mxu0 0.0
    %5278 = vmatprep.subr.mxu0 0.0
    %5279 = vmatpush1.msra.mxu0 0.0
    %5280 = vmatprep.subr.mxu0 0.0
    %5281 = vmatpush1.msra.mxu0 0.0
    %5282 = vmatprep.subr.mxu0 0.0
    %5283 = vmatpush1.msra.mxu0 0.0
    %5284 = vmatprep.subr.mxu0 0.0
    %5285 = vmatpush1.msra.mxu0 0.0
    %5286 = vmatprep.subr.mxu0 0.0
    %5287 = vmatpush1.msra.mxu0 0.0
    %5288 = vmatprep.subr.mxu0 0.0
    %5289 = vmatpush1.msra.mxu0 0.0
    %5290 = vmatprep.subr.mxu0 0.0
    %5291 = vmatpush1.msra.mxu0 0.0
    %5292 = vmatprep.subr.mxu0 0.0
    %5293 = vmatpush1.msra.mxu0 0.0
    %5294 = vmatprep.subr.mxu0 0.0
    %5295 = vmatpush1.msra.mxu0 0.0
    %5296 = vmatprep.subr.mxu0 0.0
    %5297 = vmatpush1.msra.mxu0 0.0
    %5298 = vmatprep.subr.mxu0 0.0
    %5299 = vmatpush1.msra.mxu0 0.0
    %5300 = vmatprep.subr.mxu0 0.0
    %5301 = vmatpush1.msra.mxu0 0.0
    %5302 = vmatprep.subr.mxu0 0.0
    %5303 = vmatpush1.msra.mxu0 0.0
    %5304 = vmatprep.subr.mxu0 0.0
    %5305 = vmatpush1.msra.mxu0 0.0
    %5306 = vmatprep.subr.mxu0 0.0
    %5307 = vmatpush1.msra.mxu0 0.0
    %5308 = vmatprep.subr.mxu0 0.0
    %5309 = vmatpush1.msra.mxu0 0.0
    %5310 = vmatprep.subr.mxu0 0.0
    %5311 = vmatpush1.msra.mxu0 0.0
    %5312 = vmatprep.subr.mxu0 0.0
    %5313 = vmatpush1.msra.mxu0 0.0
    %5314 = vmatprep.subr.mxu0 0.0
    %5315 = vmatpush1.msra.mxu0 0.0
    %5316 = vmatprep.subr.mxu0 0.0
    %5317 = vmatpush1.msra.mxu0 0.0
    %5318 = vmatprep.subr.mxu0 0.0
    %5319 = vmatpush1.msra.mxu0 0.0
    %5320 = vmatprep.mubr.f32.mxu0 0.0
    %5321 = vmatmul.mubr.f32.gmra.mrb[0].mxu0 %v5254
    %v5322 = vpop.f32.mrb[0].mxu0
    %v5323 = vadd.f32 0.0, %v5322
    %v5324 = vpop.f32.mrb[0].mxu0
    %5325 = vdwg.mxu0
    %5326 = vmatprep.subr.mxu0 0.0
    %5327 = vmatpush1.msra.mxu0 %v5245
    %5328 = vmatprep.subr.mxu0 0.0
    %5329 = vmatpush1.msra.mxu0 %v5246
    %5330 = vmatprep.subr.mxu0 0.0
    %5331 = vmatpush1.msra.mxu0 %v5247
    %5332 = vmatprep.subr.mxu0 0.0
    %5333 = vmatpush1.msra.mxu0 %v5248
    %5334 = vmatprep.subr.mxu0 0.0
    %5335 = vmatpush1.msra.mxu0 0.0
    %5336 = vmatprep.subr.mxu0 0.0
    %5337 = vmatpush1.msra.mxu0 0.0
    %5338 = vmatprep.subr.mxu0 0.0
    %5339 = vmatpush1.msra.mxu0 0.0
    %5340 = vmatprep.subr.mxu0 0.0
    %5341 = vmatpush1.msra.mxu0 0.0
    %5342 = vmatprep.subr.mxu0 0.0
    %5343 = vmatpush1.msra.mxu0 0.0
    %5344 = vmatprep.subr.mxu0 0.0
    %5345 = vmatpush1.msra.mxu0 0.0
    %5346 = vmatprep.subr.mxu0 0.0
    %5347 = vmatpush1.msra.mxu0 0.0
    %5348 = vmatprep.subr.mxu0 0.0
    %5349 = vmatpush1.msra.mxu0 0.0
    %5350 = vmatprep.subr.mxu0 0.0
    %5351 = vmatpush1.msra.mxu0 0.0
    %5352 = vmatprep.subr.mxu0 0.0
    %5353 = vmatpush1.msra.mxu0 0.0
    %5354 = vmatprep.subr.mxu0 0.0
    %5355 = vmatpush1.msra.mxu0 0.0
    %5356 = vmatprep.subr.mxu0 0.0
    %5357 = vmatpush1.msra.mxu0 0.0
    %5358 = vmatprep.subr.mxu0 0.0
    %5359 = vmatpush1.msra.mxu0 0.0
    %5360 = vmatprep.subr.mxu0 0.0
    %5361 = vmatpush1.msra.mxu0 0.0
    %5362 = vmatprep.subr.mxu0 0.0
    %5363 = vmatpush1.msra.mxu0 0.0
    %5364 = vmatprep.subr.mxu0 0.0
    %5365 = vmatpush1.msra.mxu0 0.0
    %5366 = vmatprep.subr.mxu0 0.0
    %5367 = vmatpush1.msra.mxu0 0.0
    %5368 = vmatprep.subr.mxu0 0.0
    %5369 = vmatpush1.msra.mxu0 0.0
    %5370 = vmatprep.subr.mxu0 0.0
    %5371 = vmatpush1.msra.mxu0 0.0
    %5372 = vmatprep.subr.mxu0 0.0
    %5373 = vmatpush1.msra.mxu0 0.0
    %5374 = vmatprep.subr.mxu0 0.0
    %5375 = vmatpush1.msra.mxu0 0.0
    %5376 = vmatprep.subr.mxu0 0.0
    %5377 = vmatpush1.msra.mxu0 0.0
    %5378 = vmatprep.subr.mxu0 0.0
    %5379 = vmatpush1.msra.mxu0 0.0
    %5380 = vmatprep.subr.mxu0 0.0
    %5381 = vmatpush1.msra.mxu0 0.0
    %5382 = vmatprep.subr.mxu0 0.0
    %5383 = vmatpush1.msra.mxu0 0.0
    %5384 = vmatprep.subr.mxu0 0.0
    %5385 = vmatpush1.msra.mxu0 0.0
    %5386 = vmatprep.subr.mxu0 0.0
    %5387 = vmatpush1.msra.mxu0 0.0
    %5388 = vmatprep.subr.mxu0 0.0
    %5389 = vmatpush1.msra.mxu0 0.0
    %5390 = vmatprep.mubr.f32.mxu0 0.0
    %5391 = vmatmul.mubr.f32.gmra.mrb[0].mxu0 %v5073
    %v5392 = vpop.f32.mrb[0].mxu0
    %v5393 = vadd.f32 %v5323, %v5392
    %v5394 = vpop.f32.mrb[0].mxu0
    %5395 = vdwg.mxu0
    %v5396 = vld [vmem:[%s9] sm:$0x1]
    %v5397 = vadd.f32 %v5393, %v5396
    %v5398 = vmax.f32 %v5397, 0.0
    %v5399 = vld [vmem:[%s10] sm:$0xff]
    %v5400 = vld [vmem:[%s10 + $0x8] sm:$0xff]
    %v5401 = vld [vmem:[%s10 + $0x10] sm:$0xff]
    %v5402 = vld [vmem:[%s10 + $0x18] sm:$0xff]
    %v5403 = vld [vmem:[%s11] sm:$0x1]
    %v5405 = vsel %vm82, %v5398, 0
    %5407 = vmatprep.subr.mxu0 0.0
    %5408 = vmatpush1.msra.mxu0 %v5399
    %5409 = vmatprep.subr.mxu0 0.0
    %5410 = vmatpush1.msra.mxu0 %v5400
    %5411 = vmatprep.subr.mxu0 0.0
    %5412 = vmatpush1.msra.mxu0 %v5401
    %5413 = vmatprep.subr.mxu0 0.0
    %5414 = vmatpush1.msra.mxu0 %v5402
    %5415 = vmatprep.subr.mxu0 0.0
    %5416 = vmatpush1.msra.mxu0 0.0
    %5417 = vmatprep.subr.mxu0 0.0
    %5418 = vmatpush1.msra.mxu0 0.0
    %5419 = vmatprep.subr.mxu0 0.0
    %5420 = vmatpush1.msra.mxu0 0.0
    %5421 = vmatprep.subr.mxu0 0.0
    %5422 = vmatpush1.msra.mxu0 0.0
    %5423 = vmatprep.subr.mxu0 0.0
    %5424 = vmatpush1.msra.mxu0 0.0
    %5425 = vmatprep.subr.mxu0 0.0
    %5426 = vmatpush1.msra.mxu0 0.0
    %5427 = vmatprep.subr.mxu0 0.0
    %5428 = vmatpush1.msra.mxu0 0.0
    %5429 = vmatprep.subr.mxu0 0.0
    %5430 = vmatpush1.msra.mxu0 0.0
    %5431 = vmatprep.subr.mxu0 0.0
    %5432 = vmatpush1.msra.mxu0 0.0
    %5433 = vmatprep.subr.mxu0 0.0
    %5434 = vmatpush1.msra.mxu0 0.0
    %5435 = vmatprep.subr.mxu0 0.0
    %5436 = vmatpush1.msra.mxu0 0.0
    %5437 = vmatprep.subr.mxu0 0.0
    %5438 = vmatpush1.msra.mxu0 0.0
    %5439 = vmatprep.subr.mxu0 0.0
    %5440 = vmatpush1.msra.mxu0 0.0
    %5441 = vmatprep.subr.mxu0 0.0
    %5442 = vmatpush1.msra.mxu0 0.0
    %5443 = vmatprep.subr.mxu0 0.0
    %5444 = vmatpush1.msra.mxu0 0.0
    %5445 = vmatprep.subr.mxu0 0.0
    %5446 = vmatpush1.msra.mxu0 0.0
    %5447 = vmatprep.subr.mxu0 0.0
    %5448 = vmatpush1.msra.mxu0 0.0
    %5449 = vmatprep.subr.mxu0 0.0
    %5450 = vmatpush1.msra.mxu0 0.0
    %5451 = vmatprep.subr.mxu0 0.0
    %5452 = vmatpush1.msra.mxu0 0.0
    %5453 = vmatprep.subr.mxu0 0.0
    %5454 = vmatpush1.msra.mxu0 0.0
    %5455 = vmatprep.subr.mxu0 0.0
    %5456 = vmatpush1.msra.mxu0 0.0
    %5457 = vmatprep.subr.mxu0 0.0
    %5458 = vmatpush1.msra.mxu0 0.0
    %5459 = vmatprep.subr.mxu0 0.0
    %5460 = vmatpush1.msra.mxu0 0.0
    %5461 = vmatprep.subr.mxu0 0.0
    %5462 = vmatpush1.msra.mxu0 0.0
    %5463 = vmatprep.subr.mxu0 0.0
    %5464 = vmatpush1.msra.mxu0 0.0
    %5465 = vmatprep.subr.mxu0 0.0
    %5466 = vmatpush1.msra.mxu0 0.0
    %5467 = vmatprep.subr.mxu0 0.0
    %5468 = vmatpush1.msra.mxu0 0.0
    %5469 = vmatprep.subr.mxu0 0.0
    %5470 = vmatpush1.msra.mxu0 0.0
    %5471 = vmatprep.mubr.f32.mxu0 0.0
    %5472 = vmatmul.mubr.f32.gmra.mrb[0].mxu0 %v5405
    %v5473 = vpop.f32.mrb[0].mxu0
    %v5474 = vadd.f32 %v5403, %v5473
    %v5475 = vpop.f32.mrb[0].mxu0
    %5476 = vdwg.mxu0
    %v5477 = vld [vmem:[%s12] sm:$0xff]
    %v5478 = vld [vmem:[%s12 + $0x8] sm:$0xff]
    %v5479 = vld [vmem:[%s12 + $0x10] sm:$0xff]
    %v5480 = vld [vmem:[%s12 + $0x18] sm:$0xff]
    %v5481 = vld [vmem:[%s13] sm:$0x1]
    %5482 = vmatprep.subr.mxu0 0.0
    %5483 = vmatpush1.msra.mxu0 %v5477
    %5484 = vmatprep.subr.mxu0 0.0
    %5485 = vmatpush1.msra.mxu0 %v5478
    %5486 = vmatprep.subr.mxu0 0.0
    %5487 = vmatpush1.msra.mxu0 %v5479
    %5488 = vmatprep.subr.mxu0 0.0
    %5489 = vmatpush1.msra.mxu0 %v5480
    %5490 = vmatprep.subr.mxu0 0.0
    %5491 = vmatpush1.msra.mxu0 0.0
    %5492 = vmatprep.subr.mxu0 0.0
    %5493 = vmatpush1.msra.mxu0 0.0
    %5494 = vmatprep.subr.mxu0 0.0
    %5495 = vmatpush1.msra.mxu0 0.0
    %5496 = vmatprep.subr.mxu0 0.0
    %5497 = vmatpush1.msra.mxu0 0.0
    %5498 = vmatprep.subr.mxu0 0.0
    %5499 = vmatpush1.msra.mxu0 0.0
    %5500 = vmatprep.subr.mxu0 0.0
    %5501 = vmatpush1.msra.mxu0 0.0
    %5502 = vmatprep.subr.mxu0 0.0
    %5503 = vmatpush1.msra.mxu0 0.0
    %5504 = vmatprep.subr.mxu0 0.0
    %5505 = vmatpush1.msra.mxu0 0.0
    %5506 = vmatprep.subr.mxu0 0.0
    %5507 = vmatpush1.msra.mxu0 0.0
    %5508 = vmatprep.subr.mxu0 0.0
    %5509 = vmatpush1.msra.mxu0 0.0
    %5510 = vmatprep.subr.mxu0 0.0
    %5511 = vmatpush1.msra.mxu0 0.0
    %5512 = vmatprep.subr.mxu0 0.0
    %5513 = vmatpush1.msra.mxu0 0.0
    %5514 = vmatprep.subr.mxu0 0.0
    %5515 = vmatpush1.msra.mxu0 0.0
    %5516 = vmatprep.subr.mxu0 0.0
    %5517 = vmatpush1.msra.mxu0 0.0
    %5518 = vmatprep.subr.mxu0 0.0
    %5519 = vmatpush1.msra.mxu0 0.0
    %5520 = vmatprep.subr.mxu0 0.0
    %5521 = vmatpush1.msra.mxu0 0.0
    %5522 = vmatprep.subr.mxu0 0.0
    %5523 = vmatpush1.msra.mxu0 0.0
    %5524 = vmatprep.subr.mxu0 0.0
    %5525 = vmatpush1.msra.mxu0 0.0
    %5526 = vmatprep.subr.mxu0 0.0
    %5527 = vmatpush1.msra.mxu0 0.0
    %5528 = vmatprep.subr.mxu0 0.0
    %5529 = vmatpush1.msra.mxu0 0.0
    %5530 = vmatprep.subr.mxu0 0.0
    %5531 = vmatpush1.msra.mxu0 0.0
    %5532 = vmatprep.subr.mxu0 0.0
    %5533 = vmatpush1.msra.mxu0 0.0
    %5534 = vmatprep.subr.mxu0 0.0
    %5535 = vmatpush1.msra.mxu0 0.0
    %5536 = vmatprep.subr.mxu0 0.0
    %5537 = vmatpush1.msra.mxu0 0.0
    %5538 = vmatprep.subr.mxu0 0.0
    %5539 = vmatpush1.msra.mxu0 0.0
    %5540 = vmatprep.subr.mxu0 0.0
    %5541 = vmatpush1.msra.mxu0 0.0
    %5542 = vmatprep.subr.mxu0 0.0
    %5543 = vmatpush1.msra.mxu0 0.0
    %5544 = vmatprep.subr.mxu0 0.0
    %5545 = vmatpush1.msra.mxu0 0.0
    %5546 = vmatprep.mubr.f32.mxu0 0.0
    %5547 = vmatmul.mubr.f32.gmra.mrb[0].mxu0 %v5000
    %v5548 = vpop.f32.mrb[0].mxu0
    %v5549 = vadd.f32 %v5481, %v5548
    %v5550 = vpop.f32.mrb[0].mxu0
    %5551 = vdwg.mxu0
    %v5552 = vadd.f32 %v5474, %v5549
    %v5553 = vxor.u32 %v5552, 2147483648
    %v5554 = vmul.f32 %v5553, 1.442695
    %v5555 = vpow.pop %v5554
    %v5556 = vadd.f32 %v5555, 1.0
    %v5557 = vrcp.pop %v5556
    %v5558 = vmul.f32 1.0, %v5557
    %5560 = vrot.lane.b32.xlu0 %v5549, 64
    %v5561 = vpop.permute.xlu0 %5560
    %v5563 = vmul.f32 %v5558, %v5561
    %5565 = vrot.lane.b32.xlu0 %v5563, 64
    %v5566 = vpop.permute.xlu0 %5565
    %v5568 = vadd.f32 %v5474, %v5566
    %v5569 = vtanh.pop %v5568
    %v5570 = vsub.f32 1.0, %v5558
    %5572 = vrot.lane.b32.xlu0 %v5569, 96
    %v5573 = vpop.permute.xlu0 %5572
    %v5575 = vmul.f32 %v5570, %v5573
    %v5576 = vlaneseq
    %v5577 = vshrl.u32 %v5576, 7
    %v5578 = vsub.s32 0, %v5577
    %v5579 = vrot.slane %v4990, %v5578
    %5580 = vrot.lane.b32.xlu0 %v5579, 32
    %v5581 = vpop.permute.xlu0 %5580
    %v5583 = vmul.f32 %v5558, %v5581
    %v5584 = vadd.f32 %v5575, %v5583
    %p5585 = scmp.lt.s32.totalorder %s4986, 6
    %s5586 = scalar_select %p5585, 1, 0
    %v5587 = vstv %s5586
    %vm5588 = vcmp.eq.s32.totalorder %v5587, 1
    %v5589 = vsel %vm5588, %v5584, %v5581
    %5591 = vrot.lane.b32.xlu0 %v5589, 96
    %v5592 = vpop.permute.xlu0 %5591
    %5594 = vst.msk [vmem:[#allocation6] sm:$0x1] %vm679, %v5592
    %v5595 = vld [vmem:[%s14] sm:$0xff]
    %v5596 = vld [vmem:[%s14 + $0x8] sm:$0xff]
    %v5597 = vld [vmem:[%s14 + $0x10] sm:$0xff]
    %v5598 = vld [vmem:[%s14 + $0x18] sm:$0xff]
    %v5599 = vld [vmem:[%s15] sm:$0x1]
    %5601 = vrot.lane.b32.xlu0 %v5584, 96
    %v5602 = vpop.permute.xlu0 %5601
    %v5603 = vsel %vm82, %v5602, 0
    %5605 = vmatprep.subr.mxu0 0.0
    %5606 = vmatpush1.msra.mxu0 %v5595
    %5607 = vmatprep.subr.mxu0 0.0
    %5608 = vmatpush1.msra.mxu0 %v5596
    %5609 = vmatprep.subr.mxu0 0.0
    %5610 = vmatpush1.msra.mxu0 %v5597
    %5611 = vmatprep.subr.mxu0 0.0
    %5612 = vmatpush1.msra.mxu0 %v5598
    %5613 = vmatprep.subr.mxu0 0.0
    %5614 = vmatpush1.msra.mxu0 0.0
    %5615 = vmatprep.subr.mxu0 0.0
    %5616 = vmatpush1.msra.mxu0 0.0
    %5617 = vmatprep.subr.mxu0 0.0
    %5618 = vmatpush1.msra.mxu0 0.0
    %5619 = vmatprep.subr.mxu0 0.0
    %5620 = vmatpush1.msra.mxu0 0.0
    %5621 = vmatprep.subr.mxu0 0.0
    %5622 = vmatpush1.msra.mxu0 0.0
    %5623 = vmatprep.subr.mxu0 0.0
    %5624 = vmatpush1.msra.mxu0 0.0
    %5625 = vmatprep.subr.mxu0 0.0
    %5626 = vmatpush1.msra.mxu0 0.0
    %5627 = vmatprep.subr.mxu0 0.0
    %5628 = vmatpush1.msra.mxu0 0.0
    %5629 = vmatprep.subr.mxu0 0.0
    %5630 = vmatpush1.msra.mxu0 0.0
    %5631 = vmatprep.subr.mxu0 0.0
    %5632 = vmatpush1.msra.mxu0 0.0
    %5633 = vmatprep.subr.mxu0 0.0
    %5634 = vmatpush1.msra.mxu0 0.0
    %5635 = vmatprep.subr.mxu0 0.0
    %5636 = vmatpush1.msra.mxu0 0.0
    %5637 = vmatprep.subr.mxu0 0.0
    %5638 = vmatpush1.msra.mxu0 0.0
    %5639 = vmatprep.subr.mxu0 0.0
    %5640 = vmatpush1.msra.mxu0 0.0
    %5641 = vmatprep.subr.mxu0 0.0
    %5642 = vmatpush1.msra.mxu0 0.0
    %5643 = vmatprep.subr.mxu0 0.0
    %5644 = vmatpush1.msra.mxu0 0.0
    %5645 = vmatprep.subr.mxu0 0.0
    %5646 = vmatpush1.msra.mxu0 0.0
    %5647 = vmatprep.subr.mxu0 0.0
    %5648 = vmatpush1.msra.mxu0 0.0
    %5649 = vmatprep.subr.mxu0 0.0
    %5650 = vmatpush1.msra.mxu0 0.0
    %5651 = vmatprep.subr.mxu0 0.0
    %5652 = vmatpush1.msra.mxu0 0.0
    %5653 = vmatprep.subr.mxu0 0.0
    %5654 = vmatpush1.msra.mxu0 0.0
    %5655 = vmatprep.subr.mxu0 0.0
    %5656 = vmatpush1.msra.mxu0 0.0
    %5657 = vmatprep.subr.mxu0 0.0
    %5658 = vmatpush1.msra.mxu0 0.0
    %5659 = vmatprep.subr.mxu0 0.0
    %5660 = vmatpush1.msra.mxu0 0.0
    %5661 = vmatprep.subr.mxu0 0.0
    %5662 = vmatpush1.msra.mxu0 0.0
    %5663 = vmatprep.subr.mxu0 0.0
    %5664 = vmatpush1.msra.mxu0 0.0
    %5665 = vmatprep.subr.mxu0 0.0
    %5666 = vmatpush1.msra.mxu0 0.0
    %5667 = vmatprep.subr.mxu0 0.0
    %5668 = vmatpush1.msra.mxu0 0.0
    %5669 = vmatprep.mubr.f32.mxu0 0.0
    %5670 = vmatmul.mubr.f32.gmra.mrb[0].mxu0 %v5603
    %v5671 = vpop.f32.mrb[0].mxu0
    %v5672 = vadd.f32 %v5599, %v5671
    %v5673 = vpop.f32.mrb[0].mxu0
    %5674 = vdwg.mxu0
    %v5675 = vsel %vm231, %v5672, -inf
    %5676 = vmax.xlane.f32.xlu0 %v5675
    %v5677 = vpop.xlane.xlu0 %5676
    %v5678 = vsub.f32 %v5672, %v5677
    %v5679 = vmul.f32 %v5678, 1.442695
    %v5680 = vpow.pop %v5679
    %v5681 = vsel %vm231, %v5680, 0.0
    %5682 = vadd.xlane.f32.xlu0 %v5681
    %v5683 = vpop.xlane.xlu0 %5682
    %v5684 = vlog2.pop %v5683
    %v5685 = vmul.f32 %v5684, 0.6931472
    %v5686 = vsub.f32 %v5678, %v5685
    %5687 = vst [vmem:[#allocation4 + $0x7] sm:$0x1] %v5686
    // Predicated region
    $region66: #{tpu_custom_call.1} parent=1 // pred_check
      _
    $region67: #{tpu_custom_call.1} parent=1 // pred_check_branch
      %5689 = sbr.rel (0) target = $region69
    $region68: #{tpu_custom_call.1} parent=1 // pred_region
      %s5691 = ssub.s32 128, 128
      %5692 = vsyncadd [#allocation5], %s5691
      %s5694 = sshll.u32 [#allocation4], 4
      %s5695 = int_to_ptr.vmem [resolvable:$true] %s5694
      %5697 = dma.vmem_to_hbm [thread:$0]  %s5695, 128, %s16, [#allocation5]
    $region69: #{tpu_custom_call.1} parent=1 // pred_fallthru
      _
    // Predicated region
    $region70: #{tpu_custom_call.1} parent=1 // pred_check
      _
    $region71: #{tpu_custom_call.1} parent=1 // pred_check_branch
      %5699 = sbr.rel (0) target = $region73
    $region72: #{tpu_custom_call.1} parent=1 // pred_region
      %s5701 = ssub.s32 16, 16
      %5702 = vsyncadd [#allocation7], %s5701
      %s5704 = sshll.u32 [#allocation6], 4
      %s5705 = int_to_ptr.vmem [resolvable:$true] %s5704
      %5707 = dma.vmem_to_hbm [thread:$0]  %s5705, 16, %s17, [#allocation7]
    $region73: #{tpu_custom_call.1} parent=1 // pred_fallthru
      _
    // Predicated region
    $region74: #{tpu_custom_call.1} parent=1 // pred_check
      _
    $region75: #{tpu_custom_call.1} parent=1 // pred_check_branch
      %5709 = sbr.rel (0) target = $region77
    $region76: #{tpu_custom_call.1} parent=1 // pred_region
      %s5711 = ssub.s32 128, 128
      %5712 = vsyncadd [#allocation7], %s5711
      %s5714 = sshll.u32 [#allocation8], 4
      %s5715 = int_to_ptr.vmem [resolvable:$true] %s5714
      %5717 = dma.vmem_to_hbm [thread:$0]  %s5715, 128, %s18, [#allocation7]
    $region77: #{tpu_custom_call.1} parent=1 // pred_fallthru
      _
    // Predicated region
    $region78: #{tpu_custom_call.1} parent=1 // pred_check
      _
    $region79: #{tpu_custom_call.1} parent=1 // pred_check_branch
      %5719 = sbr.rel (0) target = $region81
    $region80: #{tpu_custom_call.1} parent=1 // pred_region
      %5720 = dma.done [#allocation5], 128
    $region81: #{tpu_custom_call.1} parent=1 // pred_fallthru
      _
    // Predicated region
    $region82: #{tpu_custom_call.1} parent=1 // pred_check
      _
    $region83: #{tpu_custom_call.1} parent=1 // pred_check_branch
      %5722 = sbr.rel (0) target = $region85
    $region84: #{tpu_custom_call.1} parent=1 // pred_region
      %5723 = dma.done [#allocation7], 16
    $region85: #{tpu_custom_call.1} parent=1 // pred_fallthru
      _
    // Predicated region
    $region86: #{tpu_custom_call.1} parent=1 // pred_check
      _
    $region87: #{tpu_custom_call.1} parent=1 // pred_check_branch
      %5725 = sbr.rel (0) target = $region89
    $region88: #{tpu_custom_call.1} parent=1 // pred_region
      %5726 = dma.done [#allocation7], 128
    $region89: #{tpu_custom_call.1} parent=1 // pred_fallthru
      _
    %5727 = vsyncpa [#allocation5], 1
    %5728 = vsyncpa [#allocation7], 1

</llo_original>
